<compile_context>
chip_gen: v7x
topology: tpu7x:2x2x1
jax: 0.10.0
libtpu: 0.0.40
codegen_flags: <defaults>
</compile_context>

<pallas_src>
import jax
import jax.numpy as jnp
from jax.experimental import pallas as pl
from jax.experimental.pallas import tpu as pltpu

EPS = 1e-5  # nn.BatchNorm2d default


def _fill_patches(patches_ref, src, H, W):
    """Build the im2col matrix for a 3x3 / stride-1 conv.

    src: (TN, >=H+2, >=W+2, C) ref or value, zero-padded by >=1 in H and W.
    Writes (TN*H*W, 9*C) into patches_ref; K laid out as (kh, kw, c) to match
    the wrapper's weight reshape."""
    Mt, K9 = patches_ref.shape
    C = K9 // 9
    for kh in range(3):
        for kw in range(3):
            t = kh * 3 + kw
            patches_ref[:, t * C:(t + 1) * C] = (
                src[:, kh:kh + H, kw:kw + W, :].reshape(Mt, C))


def conv1_stats_kernel(xpad_ref, w_ref, y1_ref, s_ref, ss_ref, patches_ref):
    """conv1 (3x3, stride 1) + per-tile partial BN statistics.

    Output is UNPADDED (tile_n, H, W, Cout); conv2 re-pads on-chip."""
    TN, H, W, Cout = y1_ref.shape

    _fill_patches(patches_ref, xpad_ref, H, W)
    # Single big-K (K=9*Cin) MXU call with f32 accumulation.
    # NOTE: if a bundle dump shows vst/vld (not MXU) saturating (likely on
    # v5e's single vst slot), switch to per-kh K=3C staging instead.
    y = jnp.dot(patches_ref[...], w_ref[...],
                preferred_element_type=jnp.float32)          # (TN*H*W, Cout)

    # Partial batch statistics; reduced across tiles in the wrapper (f32).
    s_ref[...] = jnp.sum(y, axis=0, keepdims=True).reshape(s_ref.shape)
    ss_ref[...] = jnp.sum(y * y, axis=0, keepdims=True).reshape(ss_ref.shape)

    y1_ref[...] = y.reshape(TN, H, W, Cout).astype(y1_ref.dtype)


def conv2_stats_kernel(scale_ref, offset_ref, y1_ref, w_ref,
                       y2_ref, s_ref, ss_ref, hpad_ref, patches_ref):
    """bn1 + relu (folded affine) -> conv2 (3x3) + per-tile partial BN stats.

    The padded conv2 input lives only in a VMEM scratch (hpad_ref)."""
    TN, H, W, C = y1_ref.shape

    # Clear the padded staging scratch every step.  This is a tiny VPU store
    # and keeps the kernel correct under megacore grid sharding (a
    # `pl.when(program_id == 0)` init would only run on one core's scratch).
    hpad_ref[...] = jnp.zeros_like(hpad_ref)

    h = y1_ref[...].astype(jnp.float32)
    h = (h * scale_ref[...].reshape(1, 1, 1, C)
         + offset_ref[...].reshape(1, 1, 1, C))
    h = jnp.maximum(h, 0.0)
    hpad_ref[:, 1:H + 1, 1:W + 1, :] = h.astype(hpad_ref.dtype)

    _fill_patches(patches_ref, hpad_ref, H, W)
    y = jnp.dot(patches_ref[...], w_ref[...],
                preferred_element_type=jnp.float32)          # (TN*H*W, Cout)

    s_ref[...] = jnp.sum(y, axis=0, keepdims=True).reshape(s_ref.shape)
    ss_ref[...] = jnp.sum(y * y, axis=0, keepdims=True).reshape(ss_ref.shape)
    y2_ref[...] = y.astype(y2_ref.dtype)


def bn_residual_relu_kernel(scale_ref, offset_ref, y_ref, res_ref, out_ref):
    """out = relu(bn2(conv2_out) + identity), element-wise, lane-dense."""
    y = y_ref[...].astype(jnp.float32)
    r = res_ref[...].astype(jnp.float32)
    out = jnp.maximum(y * scale_ref[...] + offset_ref[...] + r, 0.0)
    out_ref[...] = out.astype(out_ref.dtype)


def _bn_scale_offset(s, ss, gamma, beta, count):
    """Reduce per-tile partial sums into a per-channel BN affine (scale, offset)."""
    c = s.shape[-1]
    s = jnp.sum(s.reshape(-1, c), axis=0)
    ss = jnp.sum(ss.reshape(-1, c), axis=0)
    mean = s / count
    # TODO(synk): E[x^2]-mean^2 can cancel if activation means are large vs.
    # spread; a centered second pass (Welford) is safer deep in a network.
    var = jnp.maximum(ss / count - mean * mean, 0.0)
    scale = gamma * jax.lax.rsqrt(var + EPS)
    offset = beta - mean * scale
    return (scale.reshape(1, c).astype(jnp.float32),
            offset.reshape(1, c).astype(jnp.float32))


def _pick_tile_n(N, HW, target_rows=512):
    """Smallest batch tile giving >=target_rows matmul rows, keeping >=2 grid steps."""
    divs = [d for d in range(1, N + 1) if N % d == 0]
    allowed = [d for d in divs if N // d >= 2] or divs
    for d in allowed:
        if d * HW >= target_rows:
            return d
    return allowed[-1]


def _row_block(M, cap=8192):
    """Largest divisor of M that is <= cap and a multiple of 8 (else M)."""
    if M <= cap:
        return M
    for d in range(cap - cap % 8, 7, -8):
        if M % d == 0:
            return d
    return M


def _vmem_limit_bytes():
    cap = 128 * 1024 * 1024
    try:
        info = pltpu.get_tpu_info()
        cap = int(getattr(info, "vmem_capacity_bytes", cap))
    except Exception:
        pass
    # ~half of physical VMEM: 32 MiB on v7x (64 MiB/TC), 64 MiB on v5e/v6e.
    return max(32 * 1024 * 1024, min(64 * 1024 * 1024, cap // 2))


def basic_block(x_nchw, w1, g1, b1, w2, g2, b2, *,
                tile_n=None, conv_dtype=jnp.bfloat16, act_dtype=jnp.bfloat16):
    """ResNet BasicBlock forward, training-mode BatchNorm (batch statistics).

    x_nchw: (N, C, H, W); w*: (Cout, Cin, 3, 3) OIHW; g*/b*: (C,).
    conv_dtype: matmul-input dtype (bf16 is MXU-native on all generations;
    accumulation is always f32).  act_dtype: HBM dtype of the inter-pass
    activations.  BN stats/affine, residual path and output stay f32.
    """
    # TODO(synk): stride > 1 and the downsample branch are not implemented
    # (covers the default stride=1, downsample=None configuration only).
    N, Cin, H, W = x_nchw.shape
    Cout = w1.shape[0]
    assert Cin == Cout, "identity path requires in_channels == out_channels"
    if tile_n is None:
        tile_n = _pick_tile_n(N, H * W)
    assert N % tile_n == 0
    gn = N // tile_n
    Hp = H + 2
    Wpad = ((W + 2 + 7) // 8) * 8            # sublane-aligned padded width
    M = N * H * W
    Mt = tile_n * H * W

    cd = jnp.dtype(conv_dtype).itemsize
    ad = jnp.dtype(act_dtype).itemsize

    # Layout prep: NCHW -> NHWC keeps channels on the lane axis in the kernels.
    x_nhwc = jnp.transpose(x_nchw, (0, 2, 3, 1))
    xpad = jnp.pad(x_nhwc.astype(conv_dtype),
                   ((0, 0), (1, 1), (1, Wpad - W - 1), (0, 0)))
    x_res = x_nhwc.reshape(M, Cin)           # residual, f32, lane-dense
    # OIHW -> row index (kh*3+kw)*Cin + cin, matching the im2col K layout.
    w1r = jnp.transpose(w1, (2, 3, 1, 0)).reshape(9 * Cin, Cout).astype(conv_dtype)
    w2r = jnp.transpose(w2, (2, 3, 1, 0)).reshape(9 * Cout, Cout).astype(conv_dtype)

    cparams = pltpu.CompilerParams(
        dimension_semantics=("parallel",),
        vmem_limit_bytes=_vmem_limit_bytes())
    # TODO(synk): for large H*W (e.g. 56x56 layer-1 maps) additionally tile
    # passes 1-2 over H row-bands with a 1-row halo (manual DMA) so each core
    # sees >= 4-8 pipeline steps and the working set stays ~8-16 MiB on v7x.

    conv1_cost = pl.CostEstimate(
        flops=2 * M * 9 * Cin * Cout, transcendentals=0,
        bytes_accessed=(cd * N * Hp * Wpad * Cin + cd * 9 * Cin * Cout
                        + ad * M * Cout + 4 * 2 * gn * Cout))
    conv2_cost = pl.CostEstimate(
        flops=2 * M * 9 * Cout * Cout, transcendentals=0,
        bytes_accessed=(ad * M * Cout + cd * 9 * Cout * Cout
                        + ad * M * Cout + 4 * 2 * gn * Cout))

    # Pass 1: conv1 + partial BN1 statistics (unpadded bf16 output). ---------
    y1, s1, ss1 = pl.pallas_call(
        conv1_stats_kernel,
        grid=(gn,),
        in_specs=[
            pl.BlockSpec((tile_n, Hp, Wpad, Cin), lambda i: (i, 0, 0, 0)),
            pl.BlockSpec((9 * Cin, Cout), lambda i: (0, 0)),
        ],
        out_specs=[
            pl.BlockSpec((tile_n, H, W, Cout), lambda i: (i, 0, 0, 0)),
            pl.BlockSpec((1, 1, Cout), lambda i: (i, 0, 0)),
            pl.BlockSpec((1, 1, Cout), lambda i: (i, 0, 0)),
        ],
        out_shape=[
            jax.ShapeDtypeStruct((N, H, W, Cout), act_dtype),
            jax.ShapeDtypeStruct((gn, 1, Cout), jnp.float32),
            jax.ShapeDtypeStruct((gn, 1, Cout), jnp.float32),
        ],
        scratch_shapes=[pltpu.VMEM((Mt, 9 * Cin), conv_dtype)],
        compiler_params=cparams,
        cost_estimate=conv1_cost,
    )(xpad, w1r)

    scale1, offset1 = _bn_scale_offset(s1, ss1, g1, b1, M)

    # Pass 2: bn1 + relu fused into conv2 + partial BN2 statistics. ----------
    y2, s2, ss2 = pl.pallas_call(
        conv2_stats_kernel,
        grid=(gn,),
        in_specs=[
            pl.BlockSpec((1, Cout), lambda i: (0, 0)),
            pl.BlockSpec((1, Cout), lambda i: (0, 0)),
            pl.BlockSpec((tile_n, H, W, Cout), lambda i: (i, 0, 0, 0)),
            pl.BlockSpec((9 * Cout, Cout), lambda i: (0, 0)),
        ],
        out_specs=[
            pl.BlockSpec((Mt, Cout), lambda i: (i, 0)),
            pl.BlockSpec((1, 1, Cout), lambda i: (i, 0, 0)),
            pl.BlockSpec((1, 1, Cout), lambda i: (i, 0, 0)),
        ],
        out_shape=[
            jax.ShapeDtypeStruct((M, Cout), act_dtype),
            jax.ShapeDtypeStruct((gn, 1, Cout), jnp.float32),
            jax.ShapeDtypeStruct((gn, 1, Cout), jnp.float32),
        ],
        scratch_shapes=[
            pltpu.VMEM((tile_n, Hp, Wpad, Cout), conv_dtype),   # padded staging
            pltpu.VMEM((Mt, 9 * Cout), conv_dtype),             # im2col patches
        ],
        compiler_params=cparams,
        cost_estimate=conv2_cost,
    )(scale1, offset1, y1, w2r)

    scale2, offset2 = _bn_scale_offset(s2, ss2, g2, b2, M)

    # Pass 3: bn2 + residual add + relu (element-wise, large lane-dense rows).
    rb = _row_block(M)
    out_flat = pl.pallas_call(
        bn_residual_relu_kernel,
        grid=(M // rb,),
        in_specs=[
            pl.BlockSpec((1, Cout), lambda i: (0, 0)),
            pl.BlockSpec((1, Cout), lambda i: (0, 0)),
            pl.BlockSpec((rb, Cout), lambda i: (i, 0)),
            pl.BlockSpec((rb, Cout), lambda i: (i, 0)),
        ],
        out_specs=pl.BlockSpec((rb, Cout), lambda i: (i, 0)),
        out_shape=jax.ShapeDtypeStruct((M, Cout), x_nchw.dtype),
        compiler_params=cparams,
        cost_estimate=pl.CostEstimate(
            flops=4 * M * Cout, transcendentals=0,
            bytes_accessed=(ad + 4 + 4) * M * Cout),
    )(scale2, offset2, y2, x_res)

    out = out_flat.reshape(N, H, W, Cout)
    return jnp.transpose(out, (0, 3, 1, 2))                   # back to NCHW


def ref_basic_block(x, w1, g1, b1, w2, g2, b2):
    """Pure-JAX f32 reference (NCHW, matches PyTorch training-mode forward)."""
    def conv(h, w):
        return jax.lax.conv_general_dilated(
            h, w, (1, 1), ((1, 1), (1, 1)),
            dimension_numbers=("NCHW", "OIHW", "NCHW"),
            precision=jax.lax.Precision.HIGHEST)

    def bn(h, g, b):
        mu = h.mean(axis=(0, 2, 3), keepdims=True)
        var = ((h - mu) ** 2).mean(axis=(0, 2, 3), keepdims=True)
        return (h - mu) * jax.lax.rsqrt(var + EPS) * g.reshape(1, -1, 1, 1) \
            + b.reshape(1, -1, 1, 1)

    h = jax.nn.relu(bn(conv(x, w1), g1, b1))
    h = bn(conv(h, w2), g2, b2)
    return jax.nn.relu(h + x)


if __name__ == "__main__":
    key = jax.random.PRNGKey(0)
    k1, k2, k3, k4, k5, k6, k7 = jax.random.split(key, 7)

    # stride=1, downsample=None; C=128 is a real ResNet-18 channel count and
    # keeps every kernel load/store fully lane-dense (128 lanes).
    N, C, H, W = 2, 128, 16, 16
    x = jax.random.normal(k1, (N, C, H, W), jnp.float32)
    w1 = 0.1 * jax.random.normal(k2, (C, C, 3, 3), jnp.float32)
    w2 = 0.1 * jax.random.normal(k3, (C, C, 3, 3), jnp.float32)
    g1 = 1.0 + 0.1 * jax.random.normal(k4, (C,), jnp.float32)
    b1 = 0.1 * jax.random.normal(k5, (C,), jnp.float32)
    g2 = 1.0 + 0.1 * jax.random.normal(k6, (C,), jnp.float32)
    b2 = 0.1 * jax.random.normal(k7, (C,), jnp.float32)

    block = jax.jit(basic_block)
    out = jax.block_until_ready(block(x, w1, g1, b1, w2, g2, b2))

    ref = ref_basic_block(x, w1, g1, b1, w2, g2, b2)
    assert out.shape == (N, C, H, W)
    # bf16 MXU path vs. f32 reference: expect ~1e-2-level differences
    # (tolerance parameterized for the bf16 default; use conv_dtype=float32
    # for tight parity).
    max_err = float(jnp.max(jnp.abs(out - ref)))
    rel_l2 = float(jnp.linalg.norm(out - ref) / jnp.linalg.norm(ref))
    assert rel_l2 < 3e-2 and max_err < 2.5e-1, (max_err, rel_l2)
    print("KERNEL_OK")
</pallas_src>

<mosaic_0001>
module attributes {stable_mosaic.version = 11 : i64} {
  func.func @bn_residual_relu_kernel(%arg0: i32, %arg1: memref<1x128xf32, #tpu.memory_space<vmem>>, %arg2: memref<1x128xf32, #tpu.memory_space<vmem>>, %arg3: memref<512x128xbf16, #tpu.memory_space<vmem>>, %arg4: memref<512x128xf32, #tpu.memory_space<vmem>>, %arg5: memref<512x128xf32, #tpu.memory_space<vmem>>) attributes {dimension_semantics = [#tpu.dimension_semantics<parallel>], iteration_bounds = array<i64: 1>, scalar_prefetch = 0 : i64, scratch_operands = 0 : i64, tpu.core_type = #tpu.core_type<tc>, window_params = [{pipeline_mode = #tpu.pipeline_mode<synchronous>, transform_indices = @transform_0, window_bounds = array<i64: 1, 128>}, {pipeline_mode = #tpu.pipeline_mode<synchronous>, transform_indices = @transform_1, window_bounds = array<i64: 1, 128>}, {transform_indices = @transform_2, window_bounds = array<i64: 512, 128>}, {transform_indices = @transform_3, window_bounds = array<i64: 512, 128>}, {transform_indices = @transform_4, window_bounds = array<i64: 512, 128>}]} {
    %c0 = arith.constant 0 : index
    %c0_0 = arith.constant 0 : index
    %0 = vector.load %arg3[%c0, %c0_0] : memref<512x128xbf16, #tpu.memory_space<vmem>>, vector<512x128xbf16>
    %1 = arith.extf %0 : vector<512x128xbf16> to vector<512x128xf32>
    %c0_1 = arith.constant 0 : index
    %c0_2 = arith.constant 0 : index
    %2 = vector.load %arg4[%c0_1, %c0_2] : memref<512x128xf32, #tpu.memory_space<vmem>>, vector<512x128xf32>
    %c0_3 = arith.constant 0 : index
    %c0_4 = arith.constant 0 : index
    %3 = vector.load %arg1[%c0_3, %c0_4] : memref<1x128xf32, #tpu.memory_space<vmem>>, vector<1x128xf32>
    %4 = vector.broadcast %3 : vector<1x128xf32> to vector<512x128xf32>
    %5 = arith.mulf %1, %4 : vector<512x128xf32>
    %c0_5 = arith.constant 0 : index
    %c0_6 = arith.constant 0 : index
    %6 = vector.load %arg2[%c0_5, %c0_6] : memref<1x128xf32, #tpu.memory_space<vmem>>, vector<1x128xf32>
    %7 = vector.broadcast %6 : vector<1x128xf32> to vector<512x128xf32>
    %8 = arith.addf %5, %7 : vector<512x128xf32>
    %9 = arith.addf %8, %2 : vector<512x128xf32>
    %cst = arith.constant 0.000000e+00 : f32
    %10 = vector.broadcast %cst : f32 to vector<512x128xf32>
    %11 = arith.maximumf %9, %10 : vector<512x128xf32>
    %c0_7 = arith.constant 0 : index
    %c0_8 = arith.constant 0 : index
    %12 = vector.load %arg5[%c0_7, %c0_8] : memref<512x128xf32, #tpu.memory_space<vmem>>, vector<512x128xf32>
    tpu.vector_store %arg5[%c0_7, %c0_8], %11 {strides = array<i32>} : memref<512x128xf32, #tpu.memory_space<vmem>>, vector<512x128xf32>,
    return
  }
  func.func @transform_0(%arg0: i32) -> (i32, i32) {
    %c0_i32 = arith.constant 0 : i32
    %c0_i32_0 = arith.constant 0 : i32
    %c0_i32_1 = arith.constant 0 : i32
    return %c0_i32, %c0_i32_0 : i32, i32
  }
  func.func @transform_1(%arg0: i32) -> (i32, i32) {
    %c0_i32 = arith.constant 0 : i32
    %c0_i32_0 = arith.constant 0 : i32
    %c0_i32_1 = arith.constant 0 : i32
    return %c0_i32, %c0_i32_0 : i32, i32
  }
  func.func @transform_2(%arg0: i32) -> (i32, i32) {
    %c0_i32 = arith.constant 0 : i32
    %c0_i32_0 = arith.constant 0 : i32
    return %arg0, %c0_i32 : i32, i32
  }
  func.func @transform_3(%arg0: i32) -> (i32, i32) {
    %c0_i32 = arith.constant 0 : i32
    %c0_i32_0 = arith.constant 0 : i32
    return %arg0, %c0_i32 : i32, i32
  }
  func.func @transform_4(%arg0: i32) -> (i32, i32) {
    %c0_i32 = arith.constant 0 : i32
    %c0_i32_0 = arith.constant 0 : i32
    return %arg0, %c0_i32 : i32, i32
  }
}

module attributes {stable_mosaic.version = 11 : i64} {
  func.func @conv1_stats_kernel(%arg0: i32, %arg1: memref<1x18x24x128xbf16, #tpu.memory_space<vmem>>, %arg2: memref<1152x128xbf16, #tpu.memory_space<vmem>>, %arg3: memref<1x16x16x128xbf16, #tpu.memory_space<vmem>>, %arg4: memref<1x1x128xf32, #tpu.memory_space<vmem>>, %arg5: memref<1x1x128xf32, #tpu.memory_space<vmem>>, %arg6: memref<256x1152xbf16, #tpu.memory_space<vmem>>) attributes {dimension_semantics = [#tpu.dimension_semantics<parallel>], iteration_bounds = array<i64: 2>, scalar_prefetch = 0 : i64, scratch_operands = 1 : i64, tpu.core_type = #tpu.core_type<tc>, window_params = [{transform_indices = @transform_0, window_bounds = array<i64: 1, 18, 24, 128>}, {pipeline_mode = #tpu.pipeline_mode<synchronous>, transform_indices = @transform_1, window_bounds = array<i64: 1152, 128>}, {transform_indices = @transform_2, window_bounds = array<i64: 1, 16, 16, 128>}, {transform_indices = @transform_3, window_bounds = array<i64: 1, 1, 128>}, {transform_indices = @transform_4, window_bounds = array<i64: 1, 1, 128>}]} {
    %c0 = arith.constant 0 : index
    %c0_0 = arith.constant 0 : index
    %c0_1 = arith.constant 0 : index
    %c0_2 = arith.constant 0 : index
    %0 = vector.load %arg1[%c0, %c0_0, %c0_1, %c0_2] : memref<1x18x24x128xbf16, #tpu.memory_space<vmem>>, vector<1x16x16x128xbf16>
    %1 = vector.shape_cast %0 : vector<1x16x16x128xbf16> to vector<256x128xbf16>
    %c0_3 = arith.constant 0 : index
    %c0_4 = arith.constant 0 : index
    %2 = vector.load %arg6[%c0_3, %c0_4] : memref<256x1152xbf16, #tpu.memory_space<vmem>>, vector<256x128xbf16>
    tpu.vector_store %arg6[%c0_3, %c0_4], %1 {strides = array<i32>} : memref<256x1152xbf16, #tpu.memory_space<vmem>>, vector<256x128xbf16>,
    %c0_5 = arith.constant 0 : index
    %c0_6 = arith.constant 0 : index
    %c1 = arith.constant 1 : index
    %c0_7 = arith.constant 0 : index
    %3 = vector.load %arg1[%c0_5, %c0_6, %c1, %c0_7] : memref<1x18x24x128xbf16, #tpu.memory_space<vmem>>, vector<1x16x16x128xbf16>
    %4 = vector.shape_cast %3 : vector<1x16x16x128xbf16> to vector<256x128xbf16>
    %c0_8 = arith.constant 0 : index
    %c128 = arith.constant 128 : index
    %5 = vector.load %arg6[%c0_8, %c128] : memref<256x1152xbf16, #tpu.memory_space<vmem>>, vector<256x128xbf16>
    tpu.vector_store %arg6[%c0_8, %c128], %4 {strides = array<i32>} : memref<256x1152xbf16, #tpu.memory_space<vmem>>, vector<256x128xbf16>,
    %c0_9 = arith.constant 0 : index
    %c0_10 = arith.constant 0 : index
    %c2 = arith.constant 2 : index
    %c0_11 = arith.constant 0 : index
    %6 = vector.load %arg1[%c0_9, %c0_10, %c2, %c0_11] : memref<1x18x24x128xbf16, #tpu.memory_space<vmem>>, vector<1x16x16x128xbf16>
    %7 = vector.shape_cast %6 : vector<1x16x16x128xbf16> to vector<256x128xbf16>
    %c0_12 = arith.constant 0 : index
    %c256 = arith.constant 256 : index
    %8 = vector.load %arg6[%c0_12, %c256] : memref<256x1152xbf16, #tpu.memory_space<vmem>>, vector<256x128xbf16>
    tpu.vector_store %arg6[%c0_12, %c256], %7 {strides = array<i32>} : memref<256x1152xbf16, #tpu.memory_space<vmem>>, vector<256x128xbf16>,
    %c0_13 = arith.constant 0 : index
    %c1_14 = arith.constant 1 : index
    %c0_15 = arith.constant 0 : index
    %c0_16 = arith.constant 0 : index
    %9 = vector.load %arg1[%c0_13, %c1_14, %c0_15, %c0_16] : memref<1x18x24x128xbf16, #tpu.memory_space<vmem>>, vector<1x16x16x128xbf16>
    %10 = vector.shape_cast %9 : vector<1x16x16x128xbf16> to vector<256x128xbf16>
    %c0_17 = arith.constant 0 : index
    %c384 = arith.constant 384 : index
    %11 = vector.load %arg6[%c0_17, %c384] : memref<256x1152xbf16, #tpu.memory_space<vmem>>, vector<256x128xbf16>
    tpu.vector_store %arg6[%c0_17, %c384], %10 {strides = array<i32>} : memref<256x1152xbf16, #tpu.memory_space<vmem>>, vector<256x128xbf16>,
    %c0_18 = arith.constant 0 : index
    %c1_19 = arith.constant 1 : index
    %c1_20 = arith.constant 1 : index
    %c0_21 = arith.constant 0 : index
    %12 = vector.load %arg1[%c0_18, %c1_19, %c1_20, %c0_21] : memref<1x18x24x128xbf16, #tpu.memory_space<vmem>>, vector<1x16x16x128xbf16>
    %13 = vector.shape_cast %12 : vector<1x16x16x128xbf16> to vector<256x128xbf16>
    %c0_22 = arith.constant 0 : index
    %c512 = arith.constant 512 : index
    %14 = vector.load %arg6[%c0_22, %c512] : memref<256x1152xbf16, #tpu.memory_space<vmem>>, vector<256x128xbf16>
    tpu.vector_store %arg6[%c0_22, %c512], %13 {strides = array<i32>} : memref<256x1152xbf16, #tpu.memory_space<vmem>>, vector<256x128xbf16>,
    %c0_23 = arith.constant 0 : index
    %c1_24 = arith.constant 1 : index
    %c2_25 = arith.constant 2 : index
    %c0_26 = arith.constant 0 : index
    %15 = vector.load %arg1[%c0_23, %c1_24, %c2_25, %c0_26] : memref<1x18x24x128xbf16, #tpu.memory_space<vmem>>, vector<1x16x16x128xbf16>
    %16 = vector.shape_cast %15 : vector<1x16x16x128xbf16> to vector<256x128xbf16>
    %c0_27 = arith.constant 0 : index
    %c640 = arith.constant 640 : index
    %17 = vector.load %arg6[%c0_27, %c640] : memref<256x1152xbf16, #tpu.memory_space<vmem>>, vector<256x128xbf16>
    tpu.vector_store %arg6[%c0_27, %c640], %16 {strides = array<i32>} : memref<256x1152xbf16, #tpu.memory_space<vmem>>, vector<256x128xbf16>,
    %c0_28 = arith.constant 0 : index
    %c2_29 = arith.constant 2 : index
    %c0_30 = arith.constant 0 : index
    %c0_31 = arith.constant 0 : index
    %18 = vector.load %arg1[%c0_28, %c2_29, %c0_30, %c0_31] : memref<1x18x24x128xbf16, #tpu.memory_space<vmem>>, vector<1x16x16x128xbf16>
    %19 = vector.shape_cast %18 : vector<1x16x16x128xbf16> to vector<256x128xbf16>
    %c0_32 = arith.constant 0 : index
    %c768 = arith.constant 768 : index
    %20 = vector.load %arg6[%c0_32, %c768] : memref<256x1152xbf16, #tpu.memory_space<vmem>>, vector<256x128xbf16>
    tpu.vector_store %arg6[%c0_32, %c768], %19 {strides = array<i32>} : memref<256x1152xbf16, #tpu.memory_space<vmem>>, vector<256x128xbf16>,
    %c0_33 = arith.constant 0 : index
    %c2_34 = arith.constant 2 : index
    %c1_35 = arith.constant 1 : index
    %c0_36 = arith.constant 0 : index
    %21 = vector.load %arg1[%c0_33, %c2_34, %c1_35, %c0_36] : memref<1x18x24x128xbf16, #tpu.memory_space<vmem>>, vector<1x16x16x128xbf16>
    %22 = vector.shape_cast %21 : vector<1x16x16x128xbf16> to vector<256x128xbf16>
    %c0_37 = arith.constant 0 : index
    %c896 = arith.constant 896 : index
    %23 = vector.load %arg6[%c0_37, %c896] : memref<256x1152xbf16, #tpu.memory_space<vmem>>, vector<256x128xbf16>
    tpu.vector_store %arg6[%c0_37, %c896], %22 {strides = array<i32>} : memref<256x1152xbf16, #tpu.memory_space<vmem>>, vector<256x128xbf16>,
    %c0_38 = arith.constant 0 : index
    %c2_39 = arith.constant 2 : index
    %c2_40 = arith.constant 2 : index
    %c0_41 = arith.constant 0 : index
    %24 = vector.load %arg1[%c0_38, %c2_39, %c2_40, %c0_41] : memref<1x18x24x128xbf16, #tpu.memory_space<vmem>>, vector<1x16x16x128xbf16>
    %25 = vector.shape_cast %24 : vector<1x16x16x128xbf16> to vector<256x128xbf16>
    %c0_42 = arith.constant 0 : index
    %c1024 = arith.constant 1024 : index
    %26 = vector.load %arg6[%c0_42, %c1024] : memref<256x1152xbf16, #tpu.memory_space<vmem>>, vector<256x128xbf16>
    tpu.vector_store %arg6[%c0_42, %c1024], %25 {strides = array<i32>} : memref<256x1152xbf16, #tpu.memory_space<vmem>>, vector<256x128xbf16>,
    %c0_43 = arith.constant 0 : index
    %c0_44 = arith.constant 0 : index
    %27 = vector.load %arg6[%c0_43, %c0_44] : memref<256x1152xbf16, #tpu.memory_space<vmem>>, vector<256x1152xbf16>
    %c0_45 = arith.constant 0 : index
    %c0_46 = arith.constant 0 : index
    %28 = vector.load %arg2[%c0_45, %c0_46] : memref<1152x128xbf16, #tpu.memory_space<vmem>>, vector<1152x128xbf16>
    %cst = arith.constant dense<0.000000e+00> : vector<256x128xf32>
    %29 = tpu.matmul %27, %28, %cst {dimension_numbers = #tpu.dot_dimension_numbers<[1], [0], [0], [1], [0, 0, 1, 1], [], []>} : vector<256x1152xbf16>, vector<1152x128xbf16>, vector<256x128xf32> -> vector<256x128xf32>
    %cst_47 = arith.constant dense<0.000000e+00> : vector<128xf32>
    %30 = vector.multi_reduction <add>, %29, %cst_47 [0] : vector<256x128xf32> to vector<128xf32>
    %31 = vector.shape_cast %30 : vector<128xf32> to vector<1x128xf32>
    %32 = vector.shape_cast %31 : vector<1x128xf32> to vector<1x1x128xf32>
    %c0_48 = arith.constant 0 : index
    %c0_49 = arith.constant 0 : index
    %c0_50 = arith.constant 0 : index
    %33 = vector.load %arg4[%c0_48, %c0_49, %c0_50] : memref<1x1x128xf32, #tpu.memory_space<vmem>>, vector<1x1x128xf32>
    tpu.vector_store %arg4[%c0_48, %c0_49, %c0_50], %32 {strides = array<i32>} : memref<1x1x128xf32, #tpu.memory_space<vmem>>, vector<1x1x128xf32>,
    %34 = arith.mulf %29, %29 : vector<256x128xf32>
    %cst_51 = arith.constant dense<0.000000e+00> : vector<128xf32>
    %35 = vector.multi_reduction <add>, %34, %cst_51 [0] : vector<256x128xf32> to vector<128xf32>
    %36 = vector.shape_cast %35 : vector<128xf32> to vector<1x128xf32>
    %37 = vector.shape_cast %36 : vector<1x128xf32> to vector<1x1x128xf32>
    %c0_52 = arith.constant 0 : index
    %c0_53 = arith.constant 0 : index
    %c0_54 = arith.constant 0 : index
    %38 = vector.load %arg5[%c0_52, %c0_53, %c0_54] : memref<1x1x128xf32, #tpu.memory_space<vmem>>, vector<1x1x128xf32>
    tpu.vector_store %arg5[%c0_52, %c0_53, %c0_54], %37 {strides = array<i32>} : memref<1x1x128xf32, #tpu.memory_space<vmem>>, vector<1x1x128xf32>,
    %39 = vector.shape_cast %29 : vector<256x128xf32> to vector<1x16x16x128xf32>
    %40 = arith.truncf %39 : vector<1x16x16x128xf32> to vector<1x16x16x128xbf16>
    %c0_55 = arith.constant 0 : index
    %c0_56 = arith.constant 0 : index
    %c0_57 = arith.constant 0 : index
    %c0_58 = arith.constant 0 : index
    %41 = vector.load %arg3[%c0_55, %c0_56, %c0_57, %c0_58] : memref<1x16x16x128xbf16, #tpu.memory_space<vmem>>, vector<1x16x16x128xbf16>
    tpu.vector_store %arg3[%c0_55, %c0_56, %c0_57, %c0_58], %40 {strides = array<i32>} : memref<1x16x16x128xbf16, #tpu.memory_space<vmem>>, vector<1x16x16x128xbf16>,
    return
  }
  func.func @transform_0(%arg0: i32) -> (i32, i32, i32, i32) {
    %c0_i32 = arith.constant 0 : i32
    %c0_i32_0 = arith.constant 0 : i32
    %c0_i32_1 = arith.constant 0 : i32
    %c0_i32_2 = arith.constant 0 : i32
    return %arg0, %c0_i32, %c0_i32_0, %c0_i32_1 : i32, i32, i32, i32
  }
  func.func @transform_1(%arg0: i32) -> (i32, i32) {
    %c0_i32 = arith.constant 0 : i32
    %c0_i32_0 = arith.constant 0 : i32
    %c0_i32_1 = arith.constant 0 : i32
    return %c0_i32, %c0_i32_0 : i32, i32
  }
  func.func @transform_2(%arg0: i32) -> (i32, i32, i32, i32) {
    %c0_i32 = arith.constant 0 : i32
    %c0_i32_0 = arith.constant 0 : i32
    %c0_i32_1 = arith.constant 0 : i32
    %c0_i32_2 = arith.constant 0 : i32
    return %arg0, %c0_i32, %c0_i32_0, %c0_i32_1 : i32, i32, i32, i32
  }
  func.func @transform_3(%arg0: i32) -> (i32, i32, i32) {
    %c0_i32 = arith.constant 0 : i32
    %c0_i32_0 = arith.constant 0 : i32
    %c0_i32_1 = arith.constant 0 : i32
    return %arg0, %c0_i32, %c0_i32_0 : i32, i32, i32
  }
  func.func @transform_4(%arg0: i32) -> (i32, i32, i32) {
    %c0_i32 = arith.constant 0 : i32
    %c0_i32_0 = arith.constant 0 : i32
    %c0_i32_1 = arith.constant 0 : i32
    return %arg0, %c0_i32, %c0_i32_0 : i32, i32, i32
  }
}

module attributes {stable_mosaic.version = 11 : i64} {
  func.func @conv2_stats_kernel(%arg0: i32, %arg1: memref<1x128xf32, #tpu.memory_space<vmem>>, %arg2: memref<1x128xf32, #tpu.memory_space<vmem>>, %arg3: memref<1x16x16x128xbf16, #tpu.memory_space<vmem>>, %arg4: memref<1152x128xbf16, #tpu.memory_space<vmem>>, %arg5: memref<256x128xbf16, #tpu.memory_space<vmem>>, %arg6: memref<1x1x128xf32, #tpu.memory_space<vmem>>, %arg7: memref<1x1x128xf32, #tpu.memory_space<vmem>>, %arg8: memref<1x18x24x128xbf16, #tpu.memory_space<vmem>>, %arg9: memref<256x1152xbf16, #tpu.memory_space<vmem>>) attributes {dimension_semantics = [#tpu.dimension_semantics<parallel>], iteration_bounds = array<i64: 2>, scalar_prefetch = 0 : i64, scratch_operands = 2 : i64, tpu.core_type = #tpu.core_type<tc>, window_params = [{pipeline_mode = #tpu.pipeline_mode<synchronous>, transform_indices = @transform_0, window_bounds = array<i64: 1, 128>}, {pipeline_mode = #tpu.pipeline_mode<synchronous>, transform_indices = @transform_1, window_bounds = array<i64: 1, 128>}, {transform_indices = @transform_2, window_bounds = array<i64: 1, 16, 16, 128>}, {pipeline_mode = #tpu.pipeline_mode<synchronous>, transform_indices = @transform_3, window_bounds = array<i64: 1152, 128>}, {transform_indices = @transform_4, window_bounds = array<i64: 256, 128>}, {transform_indices = @transform_5, window_bounds = array<i64: 1, 1, 128>}, {transform_indices = @transform_6, window_bounds = array<i64: 1, 1, 128>}]} {
    %cst = arith.constant 0.000000e+00 : bf16
    %0 = vector.broadcast %cst : bf16 to vector<1x18x24x128xbf16>
    %c0 = arith.constant 0 : index
    %c0_0 = arith.constant 0 : index
    %c0_1 = arith.constant 0 : index
    %c0_2 = arith.constant 0 : index
    %1 = vector.load %arg8[%c0, %c0_0, %c0_1, %c0_2] : memref<1x18x24x128xbf16, #tpu.memory_space<vmem>>, vector<1x18x24x128xbf16>
    tpu.vector_store %arg8[%c0, %c0_0, %c0_1, %c0_2], %0 {strides = array<i32>} : memref<1x18x24x128xbf16, #tpu.memory_space<vmem>>, vector<1x18x24x128xbf16>,
    %c0_3 = arith.constant 0 : index
    %c0_4 = arith.constant 0 : index
    %c0_5 = arith.constant 0 : index
    %c0_6 = arith.constant 0 : index
    %2 = vector.load %arg3[%c0_3, %c0_4, %c0_5, %c0_6] : memref<1x16x16x128xbf16, #tpu.memory_space<vmem>>, vector<1x16x16x128xbf16>
    %3 = arith.extf %2 : vector<1x16x16x128xbf16> to vector<1x16x16x128xf32>
    %c0_7 = arith.constant 0 : index
    %c0_8 = arith.constant 0 : index
    %4 = vector.load %arg1[%c0_7, %c0_8] : memref<1x128xf32, #tpu.memory_space<vmem>>, vector<1x128xf32>
    %5 = vector.shape_cast %4 : vector<1x128xf32> to vector<1x1x1x128xf32>
    %6 = vector.broadcast %5 : vector<1x1x1x128xf32> to vector<1x16x16x128xf32>
    %7 = arith.mulf %3, %6 : vector<1x16x16x128xf32>
    %c0_9 = arith.constant 0 : index
    %c0_10 = arith.constant 0 : index
    %8 = vector.load %arg2[%c0_9, %c0_10] : memref<1x128xf32, #tpu.memory_space<vmem>>, vector<1x128xf32>
    %9 = vector.shape_cast %8 : vector<1x128xf32> to vector<1x1x1x128xf32>
    %10 = vector.broadcast %9 : vector<1x1x1x128xf32> to vector<1x16x16x128xf32>
    %11 = arith.addf %7, %10 : vector<1x16x16x128xf32>
    %cst_11 = arith.constant 0.000000e+00 : f32
    %12 = vector.broadcast %cst_11 : f32 to vector<1x16x16x128xf32>
    %13 = arith.maximumf %11, %12 : vector<1x16x16x128xf32>
    %14 = arith.truncf %13 : vector<1x16x16x128xf32> to vector<1x16x16x128xbf16>
    %c0_12 = arith.constant 0 : index
    %c1 = arith.constant 1 : index
    %c1_13 = arith.constant 1 : index
    %c0_14 = arith.constant 0 : index
    %15 = vector.load %arg8[%c0_12, %c1, %c1_13, %c0_14] : memref<1x18x24x128xbf16, #tpu.memory_space<vmem>>, vector<1x16x16x128xbf16>
    tpu.vector_store %arg8[%c0_12, %c1, %c1_13, %c0_14], %14 {strides = array<i32>} : memref<1x18x24x128xbf16, #tpu.memory_space<vmem>>, vector<1x16x16x128xbf16>,
    %c0_15 = arith.constant 0 : index
    %c0_16 = arith.constant 0 : index
    %c0_17 = arith.constant 0 : index
    %c0_18 = arith.constant 0 : index
    %16 = vector.load %arg8[%c0_15, %c0_16, %c0_17, %c0_18] : memref<1x18x24x128xbf16, #tpu.memory_space<vmem>>, vector<1x16x16x128xbf16>
    %17 = vector.shape_cast %16 : vector<1x16x16x128xbf16> to vector<256x128xbf16>
    %c0_19 = arith.constant 0 : index
    %c0_20 = arith.constant 0 : index
    %18 = vector.load %arg9[%c0_19, %c0_20] : memref<256x1152xbf16, #tpu.memory_space<vmem>>, vector<256x128xbf16>
    tpu.vector_store %arg9[%c0_19, %c0_20], %17 {strides = array<i32>} : memref<256x1152xbf16, #tpu.memory_space<vmem>>, vector<256x128xbf16>,
    %c0_21 = arith.constant 0 : index
    %c0_22 = arith.constant 0 : index
    %c1_23 = arith.constant 1 : index
    %c0_24 = arith.constant 0 : index
    %19 = vector.load %arg8[%c0_21, %c0_22, %c1_23, %c0_24] : memref<1x18x24x128xbf16, #tpu.memory_space<vmem>>, vector<1x16x16x128xbf16>
    %20 = vector.shape_cast %19 : vector<1x16x16x128xbf16> to vector<256x128xbf16>
    %c0_25 = arith.constant 0 : index
    %c128 = arith.constant 128 : index
    %21 = vector.load %arg9[%c0_25, %c128] : memref<256x1152xbf16, #tpu.memory_space<vmem>>, vector<256x128xbf16>
    tpu.vector_store %arg9[%c0_25, %c128], %20 {strides = array<i32>} : memref<256x1152xbf16, #tpu.memory_space<vmem>>, vector<256x128xbf16>,
    %c0_26 = arith.constant 0 : index
    %c0_27 = arith.constant 0 : index
    %c2 = arith.constant 2 : index
    %c0_28 = arith.constant 0 : index
    %22 = vector.load %arg8[%c0_26, %c0_27, %c2, %c0_28] : memref<1x18x24x128xbf16, #tpu.memory_space<vmem>>, vector<1x16x16x128xbf16>
    %23 = vector.shape_cast %22 : vector<1x16x16x128xbf16> to vector<256x128xbf16>
    %c0_29 = arith.constant 0 : index
    %c256 = arith.constant 256 : index
    %24 = vector.load %arg9[%c0_29, %c256] : memref<256x1152xbf16, #tpu.memory_space<vmem>>, vector<256x128xbf16>
    tpu.vector_store %arg9[%c0_29, %c256], %23 {strides = array<i32>} : memref<256x1152xbf16, #tpu.memory_space<vmem>>, vector<256x128xbf16>,
    %c0_30 = arith.constant 0 : index
    %c1_31 = arith.constant 1 : index
    %c0_32 = arith.constant 0 : index
    %c0_33 = arith.constant 0 : index
    %25 = vector.load %arg8[%c0_30, %c1_31, %c0_32, %c0_33] : memref<1x18x24x128xbf16, #tpu.memory_space<vmem>>, vector<1x16x16x128xbf16>
    %26 = vector.shape_cast %25 : vector<1x16x16x128xbf16> to vector<256x128xbf16>
    %c0_34 = arith.constant 0 : index
    %c384 = arith.constant 384 : index
    %27 = vector.load %arg9[%c0_34, %c384] : memref<256x1152xbf16, #tpu.memory_space<vmem>>, vector<256x128xbf16>
    tpu.vector_store %arg9[%c0_34, %c384], %26 {strides = array<i32>} : memref<256x1152xbf16, #tpu.memory_space<vmem>>, vector<256x128xbf16>,
    %c0_35 = arith.constant 0 : index
    %c1_36 = arith.constant 1 : index
    %c1_37 = arith.constant 1 : index
    %c0_38 = arith.constant 0 : index
    %28 = vector.load %arg8[%c0_35, %c1_36, %c1_37, %c0_38] : memref<1x18x24x128xbf16, #tpu.memory_space<vmem>>, vector<1x16x16x128xbf16>
    %29 = vector.shape_cast %28 : vector<1x16x16x128xbf16> to vector<256x128xbf16>
    %c0_39 = arith.constant 0 : index
    %c512 = arith.constant 512 : index
    %30 = vector.load %arg9[%c0_39, %c512] : memref<256x1152xbf16, #tpu.memory_space<vmem>>, vector<256x128xbf16>
    tpu.vector_store %arg9[%c0_39, %c512], %29 {strides = array<i32>} : memref<256x1152xbf16, #tpu.memory_space<vmem>>, vector<256x128xbf16>,
    %c0_40 = arith.constant 0 : index
    %c1_41 = arith.constant 1 : index
    %c2_42 = arith.constant 2 : index
    %c0_43 = arith.constant 0 : index
    %31 = vector.load %arg8[%c0_40, %c1_41, %c2_42, %c0_43] : memref<1x18x24x128xbf16, #tpu.memory_space<vmem>>, vector<1x16x16x128xbf16>
    %32 = vector.shape_cast %31 : vector<1x16x16x128xbf16> to vector<256x128xbf16>
    %c0_44 = arith.constant 0 : index
    %c640 = arith.constant 640 : index
    %33 = vector.load %arg9[%c0_44, %c640] : memref<256x1152xbf16, #tpu.memory_space<vmem>>, vector<256x128xbf16>
    tpu.vector_store %arg9[%c0_44, %c640], %32 {strides = array<i32>} : memref<256x1152xbf16, #tpu.memory_space<vmem>>, vector<256x128xbf16>,
    %c0_45 = arith.constant 0 : index
    %c2_46 = arith.constant 2 : index
    %c0_47 = arith.constant 0 : index
    %c0_48 = arith.constant 0 : index
    %34 = vector.load %arg8[%c0_45, %c2_46, %c0_47, %c0_48] : memref<1x18x24x128xbf16, #tpu.memory_space<vmem>>, vector<1x16x16x128xbf16>
    %35 = vector.shape_cast %34 : vector<1x16x16x128xbf16> to vector<256x128xbf16>
    %c0_49 = arith.constant 0 : index
    %c768 = arith.constant 768 : index
    %36 = vector.load %arg9[%c0_49, %c768] : memref<256x1152xbf16, #tpu.memory_space<vmem>>, vector<256x128xbf16>
    tpu.vector_store %arg9[%c0_49, %c768], %35 {strides = array<i32>} : memref<256x1152xbf16, #tpu.memory_space<vmem>>, vector<256x128xbf16>,
    %c0_50 = arith.constant 0 : index
    %c2_51 = arith.constant 2 : index
    %c1_52 = arith.constant 1 : index
    %c0_53 = arith.constant 0 : index
    %37 = vector.load %arg8[%c0_50, %c2_51, %c1_52, %c0_53] : memref<1x18x24x128xbf16, #tpu.memory_space<vmem>>, vector<1x16x16x128xbf16>
    %38 = vector.shape_cast %37 : vector<1x16x16x128xbf16> to vector<256x128xbf16>
    %c0_54 = arith.constant 0 : index
    %c896 = arith.constant 896 : index
    %39 = vector.load %arg9[%c0_54, %c896] : memref<256x1152xbf16, #tpu.memory_space<vmem>>, vector<256x128xbf16>
    tpu.vector_store %arg9[%c0_54, %c896], %38 {strides = array<i32>} : memref<256x1152xbf16, #tpu.memory_space<vmem>>, vector<256x128xbf16>,
    %c0_55 = arith.constant 0 : index
    %c2_56 = arith.constant 2 : index
    %c2_57 = arith.constant 2 : index
    %c0_58 = arith.constant 0 : index
    %40 = vector.load %arg8[%c0_55, %c2_56, %c2_57, %c0_58] : memref<1x18x24x128xbf16, #tpu.memory_space<vmem>>, vector<1x16x16x128xbf16>
    %41 = vector.shape_cast %40 : vector<1x16x16x128xbf16> to vector<256x128xbf16>
    %c0_59 = arith.constant 0 : index
    %c1024 = arith.constant 1024 : index
    %42 = vector.load %arg9[%c0_59, %c1024] : memref<256x1152xbf16, #tpu.memory_space<vmem>>, vector<256x128xbf16>
    tpu.vector_store %arg9[%c0_59, %c1024], %41 {strides = array<i32>} : memref<256x1152xbf16, #tpu.memory_space<vmem>>, vector<256x128xbf16>,
    %c0_60 = arith.constant 0 : index
    %c0_61 = arith.constant 0 : index
    %43 = vector.load %arg9[%c0_60, %c0_61] : memref<256x1152xbf16, #tpu.memory_space<vmem>>, vector<256x1152xbf16>
    %c0_62 = arith.constant 0 : index
    %c0_63 = arith.constant 0 : index
    %44 = vector.load %arg4[%c0_62, %c0_63] : memref<1152x128xbf16, #tpu.memory_space<vmem>>, vector<1152x128xbf16>
    %cst_64 = arith.constant dense<0.000000e+00> : vector<256x128xf32>
    %45 = tpu.matmul %43, %44, %cst_64 {dimension_numbers = #tpu.dot_dimension_numbers<[1], [0], [0], [1], [0, 0, 1, 1], [], []>} : vector<256x1152xbf16>, vector<1152x128xbf16>, vector<256x128xf32> -> vector<256x128xf32>
    %cst_65 = arith.constant dense<0.000000e+00> : vector<128xf32>
    %46 = vector.multi_reduction <add>, %45, %cst_65 [0] : vector<256x128xf32> to vector<128xf32>
    %47 = vector.shape_cast %46 : vector<128xf32> to vector<1x128xf32>
    %48 = vector.shape_cast %47 : vector<1x128xf32> to vector<1x1x128xf32>
    %c0_66 = arith.constant 0 : index
    %c0_67 = arith.constant 0 : index
    %c0_68 = arith.constant 0 : index
    %49 = vector.load %arg6[%c0_66, %c0_67, %c0_68] : memref<1x1x128xf32, #tpu.memory_space<vmem>>, vector<1x1x128xf32>
    tpu.vector_store %arg6[%c0_66, %c0_67, %c0_68], %48 {strides = array<i32>} : memref<1x1x128xf32, #tpu.memory_space<vmem>>, vector<1x1x128xf32>,
    %50 = arith.mulf %45, %45 : vector<256x128xf32>
    %cst_69 = arith.constant dense<0.000000e+00> : vector<128xf32>
    %51 = vector.multi_reduction <add>, %50, %cst_69 [0] : vector<256x128xf32> to vector<128xf32>
    %52 = vector.shape_cast %51 : vector<128xf32> to vector<1x128xf32>
    %53 = vector.shape_cast %52 : vector<1x128xf32> to vector<1x1x128xf32>
    %c0_70 = arith.constant 0 : index
    %c0_71 = arith.constant 0 : index
    %c0_72 = arith.constant 0 : index
    %54 = vector.load %arg7[%c0_70, %c0_71, %c0_72] : memref<1x1x128xf32, #tpu.memory_space<vmem>>, vector<1x1x128xf32>
    tpu.vector_store %arg7[%c0_70, %c0_71, %c0_72], %53 {strides = array<i32>} : memref<1x1x128xf32, #tpu.memory_space<vmem>>, vector<1x1x128xf32>,
    %55 = arith.truncf %45 : vector<256x128xf32> to vector<256x128xbf16>
    %c0_73 = arith.constant 0 : index
    %c0_74 = arith.constant 0 : index
    %56 = vector.load %arg5[%c0_73, %c0_74] : memref<256x128xbf16, #tpu.memory_space<vmem>>, vector<256x128xbf16>
    tpu.vector_store %arg5[%c0_73, %c0_74], %55 {strides = array<i32>} : memref<256x128xbf16, #tpu.memory_space<vmem>>, vector<256x128xbf16>,
    return
  }
  func.func @transform_0(%arg0: i32) -> (i32, i32) {
    %c0_i32 = arith.constant 0 : i32
    %c0_i32_0 = arith.constant 0 : i32
    %c0_i32_1 = arith.constant 0 : i32
    return %c0_i32, %c0_i32_0 : i32, i32
  }
  func.func @transform_1(%arg0: i32) -> (i32, i32) {
    %c0_i32 = arith.constant 0 : i32
    %c0_i32_0 = arith.constant 0 : i32
    %c0_i32_1 = arith.constant 0 : i32
    return %c0_i32, %c0_i32_0 : i32, i32
  }
  func.func @transform_2(%arg0: i32) -> (i32, i32, i32, i32) {
    %c0_i32 = arith.constant 0 : i32
    %c0_i32_0 = arith.constant 0 : i32
    %c0_i32_1 = arith.constant 0 : i32
    %c0_i32_2 = arith.constant 0 : i32
    return %arg0, %c0_i32, %c0_i32_0, %c0_i32_1 : i32, i32, i32, i32
  }
  func.func @transform_3(%arg0: i32) -> (i32, i32) {
    %c0_i32 = arith.constant 0 : i32
    %c0_i32_0 = arith.constant 0 : i32
    %c0_i32_1 = arith.constant 0 : i32
    return %c0_i32, %c0_i32_0 : i32, i32
  }
  func.func @transform_4(%arg0: i32) -> (i32, i32) {
    %c0_i32 = arith.constant 0 : i32
    %c0_i32_0 = arith.constant 0 : i32
    return %arg0, %c0_i32 : i32, i32
  }
  func.func @transform_5(%arg0: i32) -> (i32, i32, i32) {
    %c0_i32 = arith.constant 0 : i32
    %c0_i32_0 = arith.constant 0 : i32
    %c0_i32_1 = arith.constant 0 : i32
    return %arg0, %c0_i32, %c0_i32_0 : i32, i32, i32
  }
  func.func @transform_6(%arg0: i32) -> (i32, i32, i32) {
    %c0_i32 = arith.constant 0 : i32
    %c0_i32_0 = arith.constant 0 : i32
    %c0_i32_1 = arith.constant 0 : i32
    return %arg0, %c0_i32, %c0_i32_0 : i32, i32, i32
  }
}

</mosaic_0001>

<llo_original>
// kernel: basic_block.5
$region0: #{basic_block.5}
  #allocation0 [shape = 'u32[]', space=smem, size = 0x4, offset = 0x4, fixed_abs, tag = 'smem constant byte address 0x4 - core index']
  #allocation1 [shape = 'u32[144,128]{1,0:T(1,128)}', space=vmem, size = 0x12000, scoped, tag = 'internal scratch']
  %s0 = inlined_call_operand.hbm [shape: f32[1,128], index: 0, kind: input, shape index: {}]
  %s1 = inlined_call_operand.hbm [shape: f32[1,128], index: 1, kind: input, shape index: {}]
  %s2 = inlined_call_operand.hbm [shape: bf16[512,128], index: 2, kind: input, shape index: {}]
  %s3 = inlined_call_operand.hbm [shape: f32[512,128], index: 3, kind: input, shape index: {}]
  %s4 = inlined_call_operand.hbm [shape: f32[512,128], index: 4, kind: output, shape index: {}]
  %s5 = sld [smem:[#allocation0]]
  $region42: #{basic_block.5} parent=0
    _
  %s7 = ssub.s32 1, %s5
  %s8 = scalar_select 0, %s7, %s5
  $region1: #{basic_block.5} parent=0
    #allocation2 [shape = 'u8[512]{0}', space=vmem, size = 0x400, scoped, tag = 'input window, operand 0, single buffered']
    #allocation3 [shape = 's32[1]{0}', space=sflag, size = 0x4, scoped, tag = 'scoped memory for basic_block.5']
    #allocation4 [shape = 's32[1]{0}', space=sflag, size = 0x4, scoped, tag = 'scoped memory for basic_block.5']
    #allocation5 [shape = 'u8[512]{0}', space=vmem, size = 0x400, scoped, tag = 'input window, operand 1, single buffered']
    #allocation6 [shape = 's32[1]{0}', space=sflag, size = 0x4, scoped, tag = 'scoped memory for basic_block.5']
    #allocation7 [shape = 'u8[131072]{0}', space=vmem, size = 0x20000, scoped, tag = 'input window, operand 2, single buffered']
    #allocation8 [shape = 'u8[262144]{0}', space=vmem, size = 0x40000, scoped, tag = 'input window, operand 3, single buffered']
    #allocation9 [shape = 's32[1]{0}', space=sflag, size = 0x4, scoped, tag = 'scoped memory for basic_block.5']
    #allocation10 [shape = 'u8[262144]{0}', space=vmem, size = 0x40000, scoped, tag = 'output window, operand 0, single buffered']
    %9 = vsyncpa [#allocation3], 0
    %10 = vsyncpa [#allocation6], 0
    %11 = vsyncpa [#allocation9], 0
    %12 = vsyncpa [#allocation4], 0
    // Predicated region
    $region2: #{basic_block.5} parent=1 // pred_check
      _
    $region3: #{basic_block.5} parent=1 // pred_check_branch
      %14 = sbr.rel (0) target = $region5
    $region4: #{basic_block.5} parent=1 // pred_region
      %s16 = ssub.s32 16, 16
      %17 = vsyncadd [#allocation3], %s16
      %s19 = sshll.u32 [#allocation2], 4
      %s20 = int_to_ptr.vmem [resolvable:$true] %s19
      %22 = dma.hbm_to_vmem [thread:$0]  %s0, 16, %s20, [#allocation3]
    $region5: #{basic_block.5} parent=1 // pred_fallthru
      _
    // Predicated region
    $region6: #{basic_block.5} parent=1 // pred_check
      _
    $region7: #{basic_block.5} parent=1 // pred_check_branch
      %24 = sbr.rel (0) target = $region9
    $region8: #{basic_block.5} parent=1 // pred_region
      %s26 = ssub.s32 16, 16
      %27 = vsyncadd [#allocation6], %s26
      %s29 = sshll.u32 [#allocation5], 4
      %s30 = int_to_ptr.vmem [resolvable:$true] %s29
      %32 = dma.hbm_to_vmem [thread:$0]  %s1, 16, %s30, [#allocation6]
    $region9: #{basic_block.5} parent=1 // pred_fallthru
      _
    // Predicated region
    $region10: #{basic_block.5} parent=1 // pred_check
      _
    $region11: #{basic_block.5} parent=1 // pred_check_branch
      %34 = sbr.rel (0) target = $region13
    $region12: #{basic_block.5} parent=1 // pred_region
      %s36 = ssub.s32 4096, 4096
      %37 = vsyncadd [#allocation6], %s36
      %s38 = sshll.u32 [#allocation7], 4
      %s39 = int_to_ptr.vmem [resolvable:$true] %s38
      %44 = dma.hbm_to_vmem [thread:$0]  %s2, 4096, %s39, [#allocation6], 64, 64, 4
    $region13: #{basic_block.5} parent=1 // pred_fallthru
      _
    // Predicated region
    $region14: #{basic_block.5} parent=1 // pred_check
      _
    $region15: #{basic_block.5} parent=1 // pred_check_branch
      %46 = sbr.rel (0) target = $region17
    $region16: #{basic_block.5} parent=1 // pred_region
      %s48 = ssub.s32 8192, 8192
      %49 = vsyncadd [#allocation9], %s48
      %s50 = sshll.u32 [#allocation8], 4
      %s51 = int_to_ptr.vmem [resolvable:$true] %s50
      %56 = dma.hbm_to_vmem [thread:$0]  %s3, 8192, %s51, [#allocation9], 128, 128, 8
    $region17: #{basic_block.5} parent=1 // pred_fallthru
      _
    // Predicated region
    $region18: #{basic_block.5} parent=1 // pred_check
      _
    $region19: #{basic_block.5} parent=1 // pred_check_branch
      %58 = sbr.rel (0) target = $region21
    $region20: #{basic_block.5} parent=1 // pred_region
      %59 = dma.done [#allocation3], 16
    $region21: #{basic_block.5} parent=1 // pred_fallthru
      _
    // Predicated region
    $region22: #{basic_block.5} parent=1 // pred_check
      _
    $region23: #{basic_block.5} parent=1 // pred_check_branch
      %61 = sbr.rel (0) target = $region25
    $region24: #{basic_block.5} parent=1 // pred_region
      %62 = dma.done [#allocation6], 16
    $region25: #{basic_block.5} parent=1 // pred_fallthru
      _
    // Predicated region
    $region26: #{basic_block.5} parent=1 // pred_check
      _
    $region27: #{basic_block.5} parent=1 // pred_check_branch
      %64 = sbr.rel (0) target = $region29
    $region28: #{basic_block.5} parent=1 // pred_region
      %65 = dma.done [#allocation6], 4096
    $region29: #{basic_block.5} parent=1 // pred_fallthru
      _
    // Predicated region
    $region30: #{basic_block.5} parent=1 // pred_check
      _
    $region31: #{basic_block.5} parent=1 // pred_check_branch
      %67 = sbr.rel (0) target = $region33
    $region32: #{basic_block.5} parent=1 // pred_region
      %68 = dma.done [#allocation9], 8192
    $region33: #{basic_block.5} parent=1 // pred_fallthru
      _
    %v69 = vld [vmem:[#allocation7] sm:$0xf]
    %v70 = vld [vmem:[#allocation7 + $0x4] sm:$0xf]
    %v71 = vld [vmem:[#allocation7 + $0x8] sm:$0xf]
    %v72 = vld [vmem:[#allocation7 + $0xc] sm:$0xf]
    %v73 = vld [vmem:[#allocation7 + $0x10] sm:$0xf]
    %v74 = vld [vmem:[#allocation7 + $0x14] sm:$0xf]
    %v75 = vld [vmem:[#allocation7 + $0x18] sm:$0xf]
    %v76 = vld [vmem:[#allocation7 + $0x1c] sm:$0xf]
    %v77 = vld [vmem:[#allocation7 + $0x20] sm:$0xf]
    %v78 = vld [vmem:[#allocation7 + $0x24] sm:$0xf]
    %v79 = vld [vmem:[#allocation7 + $0x28] sm:$0xf]
    %v80 = vld [vmem:[#allocation7 + $0x2c] sm:$0xf]
    %v81 = vld [vmem:[#allocation7 + $0x30] sm:$0xf]
    %v82 = vld [vmem:[#allocation7 + $0x34] sm:$0xf]
    %v83 = vld [vmem:[#allocation7 + $0x38] sm:$0xf]
    %v84 = vld [vmem:[#allocation7 + $0x3c] sm:$0xf]
    %v85 = vld [vmem:[#allocation7 + $0x40] sm:$0xf]
    %v86 = vld [vmem:[#allocation7 + $0x44] sm:$0xf]
    %v87 = vld [vmem:[#allocation7 + $0x48] sm:$0xf]
    %v88 = vld [vmem:[#allocation7 + $0x4c] sm:$0xf]
    %v89 = vld [vmem:[#allocation7 + $0x50] sm:$0xf]
    %v90 = vld [vmem:[#allocation7 + $0x54] sm:$0xf]
    %v91 = vld [vmem:[#allocation7 + $0x58] sm:$0xf]
    %v92 = vld [vmem:[#allocation7 + $0x5c] sm:$0xf]
    %v93 = vld [vmem:[#allocation7 + $0x60] sm:$0xf]
    %v94 = vld [vmem:[#allocation7 + $0x64] sm:$0xf]
    %v95 = vld [vmem:[#allocation7 + $0x68] sm:$0xf]
    %v96 = vld [vmem:[#allocation7 + $0x6c] sm:$0xf]
    %v97 = vld [vmem:[#allocation7 + $0x70] sm:$0xf]
    %v98 = vld [vmem:[#allocation7 + $0x74] sm:$0xf]
    %v99 = vld [vmem:[#allocation7 + $0x78] sm:$0xf]
    %v100 = vld [vmem:[#allocation7 + $0x7c] sm:$0xf]
    %v101 = vld [vmem:[#allocation7 + $0x80] sm:$0xf]
    %v102 = vld [vmem:[#allocation7 + $0x84] sm:$0xf]
    %v103 = vld [vmem:[#allocation7 + $0x88] sm:$0xf]
    %v104 = vld [vmem:[#allocation7 + $0x8c] sm:$0xf]
    %v105 = vld [vmem:[#allocation7 + $0x90] sm:$0xf]
    %v106 = vld [vmem:[#allocation7 + $0x94] sm:$0xf]
    %v107 = vld [vmem:[#allocation7 + $0x98] sm:$0xf]
    %v108 = vld [vmem:[#allocation7 + $0x9c] sm:$0xf]
    %v109 = vld [vmem:[#allocation7 + $0xa0] sm:$0xf]
    %v110 = vld [vmem:[#allocation7 + $0xa4] sm:$0xf]
    %v111 = vld [vmem:[#allocation7 + $0xa8] sm:$0xf]
    %v112 = vld [vmem:[#allocation7 + $0xac] sm:$0xf]
    %v113 = vld [vmem:[#allocation7 + $0xb0] sm:$0xf]
    %v114 = vld [vmem:[#allocation7 + $0xb4] sm:$0xf]
    %v115 = vld [vmem:[#allocation7 + $0xb8] sm:$0xf]
    %v116 = vld [vmem:[#allocation7 + $0xbc] sm:$0xf]
    %v117 = vld [vmem:[#allocation7 + $0xc0] sm:$0xf]
    %v118 = vld [vmem:[#allocation7 + $0xc4] sm:$0xf]
    %v119 = vld [vmem:[#allocation7 + $0xc8] sm:$0xf]
    %v120 = vld [vmem:[#allocation7 + $0xcc] sm:$0xf]
    %v121 = vld [vmem:[#allocation7 + $0xd0] sm:$0xf]
    %v122 = vld [vmem:[#allocation7 + $0xd4] sm:$0xf]
    %v123 = vld [vmem:[#allocation7 + $0xd8] sm:$0xf]
    %v124 = vld [vmem:[#allocation7 + $0xdc] sm:$0xf]
    %v125 = vld [vmem:[#allocation7 + $0xe0] sm:$0xf]
    %v126 = vld [vmem:[#allocation7 + $0xe4] sm:$0xf]
    %v127 = vld [vmem:[#allocation7 + $0xe8] sm:$0xf]
    %v128 = vld [vmem:[#allocation7 + $0xec] sm:$0xf]
    %v129 = vld [vmem:[#allocation7 + $0xf0] sm:$0xf]
    %v130 = vld [vmem:[#allocation7 + $0xf4] sm:$0xf]
    %v131 = vld [vmem:[#allocation7 + $0xf8] sm:$0xf]
    %v132 = vld [vmem:[#allocation7 + $0xfc] sm:$0xf]
    %v133 = vunpack.c.l.bf16 %v69
    %v134 = vunpack.c.l.bf16 %v70
    %v135 = vunpack.c.l.bf16 %v71
    %v136 = vunpack.c.l.bf16 %v72
    %v137 = vunpack.c.l.bf16 %v73
    %v138 = vunpack.c.l.bf16 %v74
    %v139 = vunpack.c.l.bf16 %v75
    %v140 = vunpack.c.l.bf16 %v76
    %v141 = vunpack.c.l.bf16 %v77
    %v142 = vunpack.c.l.bf16 %v78
    %v143 = vunpack.c.l.bf16 %v79
    %v144 = vunpack.c.l.bf16 %v80
    %v145 = vunpack.c.l.bf16 %v81
    %v146 = vunpack.c.l.bf16 %v82
    %v147 = vunpack.c.l.bf16 %v83
    %v148 = vunpack.c.l.bf16 %v84
    %v149 = vunpack.c.l.bf16 %v85
    %v150 = vunpack.c.l.bf16 %v86
    %v151 = vunpack.c.l.bf16 %v87
    %v152 = vunpack.c.l.bf16 %v88
    %v153 = vunpack.c.l.bf16 %v89
    %v154 = vunpack.c.l.bf16 %v90
    %v155 = vunpack.c.l.bf16 %v91
    %v156 = vunpack.c.l.bf16 %v92
    %v157 = vunpack.c.l.bf16 %v93
    %v158 = vunpack.c.l.bf16 %v94
    %v159 = vunpack.c.l.bf16 %v95
    %v160 = vunpack.c.l.bf16 %v96
    %v161 = vunpack.c.l.bf16 %v97
    %v162 = vunpack.c.l.bf16 %v98
    %v163 = vunpack.c.l.bf16 %v99
    %v164 = vunpack.c.l.bf16 %v100
    %v165 = vunpack.c.l.bf16 %v101
    %v166 = vunpack.c.l.bf16 %v102
    %v167 = vunpack.c.l.bf16 %v103
    %v168 = vunpack.c.l.bf16 %v104
    %v169 = vunpack.c.l.bf16 %v105
    %v170 = vunpack.c.l.bf16 %v106
    %v171 = vunpack.c.l.bf16 %v107
    %v172 = vunpack.c.l.bf16 %v108
    %v173 = vunpack.c.l.bf16 %v109
    %v174 = vunpack.c.l.bf16 %v110
    %v175 = vunpack.c.l.bf16 %v111
    %v176 = vunpack.c.l.bf16 %v112
    %v177 = vunpack.c.l.bf16 %v113
    %v178 = vunpack.c.l.bf16 %v114
    %v179 = vunpack.c.l.bf16 %v115
    %v180 = vunpack.c.l.bf16 %v116
    %v181 = vunpack.c.l.bf16 %v117
    %v182 = vunpack.c.l.bf16 %v118
    %v183 = vunpack.c.l.bf16 %v119
    %v184 = vunpack.c.l.bf16 %v120
    %v185 = vunpack.c.l.bf16 %v121
    %v186 = vunpack.c.l.bf16 %v122
    %v187 = vunpack.c.l.bf16 %v123
    %v188 = vunpack.c.l.bf16 %v124
    %v189 = vunpack.c.l.bf16 %v125
    %v190 = vunpack.c.l.bf16 %v126
    %v191 = vunpack.c.l.bf16 %v127
    %v192 = vunpack.c.l.bf16 %v128
    %v193 = vunpack.c.l.bf16 %v129
    %v194 = vunpack.c.l.bf16 %v130
    %v195 = vunpack.c.l.bf16 %v131
    %v196 = vunpack.c.l.bf16 %v132
    %v197 = vld [vmem:[#allocation8] sm:$0xff]
    %v198 = vld [vmem:[#allocation8 + $0x8] sm:$0xff]
    %v199 = vld [vmem:[#allocation8 + $0x10] sm:$0xff]
    %v200 = vld [vmem:[#allocation8 + $0x18] sm:$0xff]
    %v201 = vld [vmem:[#allocation8 + $0x20] sm:$0xff]
    %v202 = vld [vmem:[#allocation8 + $0x28] sm:$0xff]
    %v203 = vld [vmem:[#allocation8 + $0x30] sm:$0xff]
    %v204 = vld [vmem:[#allocation8 + $0x38] sm:$0xff]
    %v205 = vld [vmem:[#allocation8 + $0x40] sm:$0xff]
    %v206 = vld [vmem:[#allocation8 + $0x48] sm:$0xff]
    %v207 = vld [vmem:[#allocation8 + $0x50] sm:$0xff]
    %v208 = vld [vmem:[#allocation8 + $0x58] sm:$0xff]
    %v209 = vld [vmem:[#allocation8 + $0x60] sm:$0xff]
    %v210 = vld [vmem:[#allocation8 + $0x68] sm:$0xff]
    %v211 = vld [vmem:[#allocation8 + $0x70] sm:$0xff]
    %v212 = vld [vmem:[#allocation8 + $0x78] sm:$0xff]
    %v213 = vld [vmem:[#allocation8 + $0x80] sm:$0xff]
    %v214 = vld [vmem:[#allocation8 + $0x88] sm:$0xff]
    %v215 = vld [vmem:[#allocation8 + $0x90] sm:$0xff]
    %v216 = vld [vmem:[#allocation8 + $0x98] sm:$0xff]
    %v217 = vld [vmem:[#allocation8 + $0xa0] sm:$0xff]
    %v218 = vld [vmem:[#allocation8 + $0xa8] sm:$0xff]
    %v219 = vld [vmem:[#allocation8 + $0xb0] sm:$0xff]
    %v220 = vld [vmem:[#allocation8 + $0xb8] sm:$0xff]
    %v221 = vld [vmem:[#allocation8 + $0xc0] sm:$0xff]
    %v222 = vld [vmem:[#allocation8 + $0xc8] sm:$0xff]
    %v223 = vld [vmem:[#allocation8 + $0xd0] sm:$0xff]
    %v224 = vld [vmem:[#allocation8 + $0xd8] sm:$0xff]
    %v225 = vld [vmem:[#allocation8 + $0xe0] sm:$0xff]
    %v226 = vld [vmem:[#allocation8 + $0xe8] sm:$0xff]
    %v227 = vld [vmem:[#allocation8 + $0xf0] sm:$0xff]
    %v228 = vld [vmem:[#allocation8 + $0xf8] sm:$0xff]
    %v229 = vld [vmem:[#allocation8 + $0x100] sm:$0xff]
    %v230 = vld [vmem:[#allocation8 + $0x108] sm:$0xff]
    %v231 = vld [vmem:[#allocation8 + $0x110] sm:$0xff]
    %v232 = vld [vmem:[#allocation8 + $0x118] sm:$0xff]
    %v233 = vld [vmem:[#allocation8 + $0x120] sm:$0xff]
    %v234 = vld [vmem:[#allocation8 + $0x128] sm:$0xff]
    %v235 = vld [vmem:[#allocation8 + $0x130] sm:$0xff]
    %v236 = vld [vmem:[#allocation8 + $0x138] sm:$0xff]
    %v237 = vld [vmem:[#allocation8 + $0x140] sm:$0xff]
    %v238 = vld [vmem:[#allocation8 + $0x148] sm:$0xff]
    %v239 = vld [vmem:[#allocation8 + $0x150] sm:$0xff]
    %v240 = vld [vmem:[#allocation8 + $0x158] sm:$0xff]
    %v241 = vld [vmem:[#allocation8 + $0x160] sm:$0xff]
    %v242 = vld [vmem:[#allocation8 + $0x168] sm:$0xff]
    %v243 = vld [vmem:[#allocation8 + $0x170] sm:$0xff]
    %v244 = vld [vmem:[#allocation8 + $0x178] sm:$0xff]
    %v245 = vld [vmem:[#allocation8 + $0x180] sm:$0xff]
    %v246 = vld [vmem:[#allocation8 + $0x188] sm:$0xff]
    %v247 = vld [vmem:[#allocation8 + $0x190] sm:$0xff]
    %v248 = vld [vmem:[#allocation8 + $0x198] sm:$0xff]
    %v249 = vld [vmem:[#allocation8 + $0x1a0] sm:$0xff]
    %v250 = vld [vmem:[#allocation8 + $0x1a8] sm:$0xff]
    %v251 = vld [vmem:[#allocation8 + $0x1b0] sm:$0xff]
    %v252 = vld [vmem:[#allocation8 + $0x1b8] sm:$0xff]
    %v253 = vld [vmem:[#allocation8 + $0x1c0] sm:$0xff]
    %v254 = vld [vmem:[#allocation8 + $0x1c8] sm:$0xff]
    %v255 = vld [vmem:[#allocation8 + $0x1d0] sm:$0xff]
    %v256 = vld [vmem:[#allocation8 + $0x1d8] sm:$0xff]
    %v257 = vld [vmem:[#allocation8 + $0x1e0] sm:$0xff]
    %v258 = vld [vmem:[#allocation8 + $0x1e8] sm:$0xff]
    %v259 = vld [vmem:[#allocation8 + $0x1f0] sm:$0xff]
    %v260 = vld [vmem:[#allocation8 + $0x1f8] sm:$0xff]
    %v261 = vld [vmem:[#allocation2] sm:$0x1]
    %v263 = vlaneseq
    %v264 = vshrl.u32 %v263, 7
    %v265 = vsub.s32 0, %v264
    %v266 = vrot.slane %v261, %v265
    %v268 = vmul.f32 %v133, %v266
    %v269 = vmul.f32 %v134, %v266
    %v270 = vmul.f32 %v135, %v266
    %v271 = vmul.f32 %v136, %v266
    %v272 = vmul.f32 %v137, %v266
    %v273 = vmul.f32 %v138, %v266
    %v274 = vmul.f32 %v139, %v266
    %v275 = vmul.f32 %v140, %v266
    %v276 = vmul.f32 %v141, %v266
    %v277 = vmul.f32 %v142, %v266
    %v278 = vmul.f32 %v143, %v266
    %v279 = vmul.f32 %v144, %v266
    %v280 = vmul.f32 %v145, %v266
    %v281 = vmul.f32 %v146, %v266
    %v282 = vmul.f32 %v147, %v266
    %v283 = vmul.f32 %v148, %v266
    %v284 = vmul.f32 %v149, %v266
    %v285 = vmul.f32 %v150, %v266
    %v286 = vmul.f32 %v151, %v266
    %v287 = vmul.f32 %v152, %v266
    %v288 = vmul.f32 %v153, %v266
    %v289 = vmul.f32 %v154, %v266
    %v290 = vmul.f32 %v155, %v266
    %v291 = vmul.f32 %v156, %v266
    %v292 = vmul.f32 %v157, %v266
    %v293 = vmul.f32 %v158, %v266
    %v294 = vmul.f32 %v159, %v266
    %v295 = vmul.f32 %v160, %v266
    %v296 = vmul.f32 %v161, %v266
    %v297 = vmul.f32 %v162, %v266
    %v298 = vmul.f32 %v163, %v266
    %v299 = vmul.f32 %v164, %v266
    %v300 = vmul.f32 %v165, %v266
    %v301 = vmul.f32 %v166, %v266
    %v302 = vmul.f32 %v167, %v266
    %v303 = vmul.f32 %v168, %v266
    %v304 = vmul.f32 %v169, %v266
    %v305 = vmul.f32 %v170, %v266
    %v306 = vmul.f32 %v171, %v266
    %v307 = vmul.f32 %v172, %v266
    %v308 = vmul.f32 %v173, %v266
    %v309 = vmul.f32 %v174, %v266
    %v310 = vmul.f32 %v175, %v266
    %v311 = vmul.f32 %v176, %v266
    %v312 = vmul.f32 %v177, %v266
    %v313 = vmul.f32 %v178, %v266
    %v314 = vmul.f32 %v179, %v266
    %v315 = vmul.f32 %v180, %v266
    %v316 = vmul.f32 %v181, %v266
    %v317 = vmul.f32 %v182, %v266
    %v318 = vmul.f32 %v183, %v266
    %v319 = vmul.f32 %v184, %v266
    %v320 = vmul.f32 %v185, %v266
    %v321 = vmul.f32 %v186, %v266
    %v322 = vmul.f32 %v187, %v266
    %v323 = vmul.f32 %v188, %v266
    %v324 = vmul.f32 %v189, %v266
    %v325 = vmul.f32 %v190, %v266
    %v326 = vmul.f32 %v191, %v266
    %v327 = vmul.f32 %v192, %v266
    %v328 = vmul.f32 %v193, %v266
    %v329 = vmul.f32 %v194, %v266
    %v330 = vmul.f32 %v195, %v266
    %v331 = vmul.f32 %v196, %v266
    %v332 = vld [vmem:[#allocation5] sm:$0x1]
    %v334 = vlaneseq
    %v335 = vshrl.u32 %v334, 7
    %v336 = vsub.s32 0, %v335
    %v337 = vrot.slane %v332, %v336
    %v339 = vadd.f32 %v268, %v337
    %v340 = vadd.f32 %v269, %v337
    %v341 = vadd.f32 %v270, %v337
    %v342 = vadd.f32 %v271, %v337
    %v343 = vadd.f32 %v272, %v337
    %v344 = vadd.f32 %v273, %v337
    %v345 = vadd.f32 %v274, %v337
    %v346 = vadd.f32 %v275, %v337
    %v347 = vadd.f32 %v276, %v337
    %v348 = vadd.f32 %v277, %v337
    %v349 = vadd.f32 %v278, %v337
    %v350 = vadd.f32 %v279, %v337
    %v351 = vadd.f32 %v280, %v337
    %v352 = vadd.f32 %v281, %v337
    %v353 = vadd.f32 %v282, %v337
    %v354 = vadd.f32 %v283, %v337
    %v355 = vadd.f32 %v284, %v337
    %v356 = vadd.f32 %v285, %v337
    %v357 = vadd.f32 %v286, %v337
    %v358 = vadd.f32 %v287, %v337
    %v359 = vadd.f32 %v288, %v337
    %v360 = vadd.f32 %v289, %v337
    %v361 = vadd.f32 %v290, %v337
    %v362 = vadd.f32 %v291, %v337
    %v363 = vadd.f32 %v292, %v337
    %v364 = vadd.f32 %v293, %v337
    %v365 = vadd.f32 %v294, %v337
    %v366 = vadd.f32 %v295, %v337
    %v367 = vadd.f32 %v296, %v337
    %v368 = vadd.f32 %v297, %v337
    %v369 = vadd.f32 %v298, %v337
    %v370 = vadd.f32 %v299, %v337
    %v371 = vadd.f32 %v300, %v337
    %v372 = vadd.f32 %v301, %v337
    %v373 = vadd.f32 %v302, %v337
    %v374 = vadd.f32 %v303, %v337
    %v375 = vadd.f32 %v304, %v337
    %v376 = vadd.f32 %v305, %v337
    %v377 = vadd.f32 %v306, %v337
    %v378 = vadd.f32 %v307, %v337
    %v379 = vadd.f32 %v308, %v337
    %v380 = vadd.f32 %v309, %v337
    %v381 = vadd.f32 %v310, %v337
    %v382 = vadd.f32 %v311, %v337
    %v383 = vadd.f32 %v312, %v337
    %v384 = vadd.f32 %v313, %v337
    %v385 = vadd.f32 %v314, %v337
    %v386 = vadd.f32 %v315, %v337
    %v387 = vadd.f32 %v316, %v337
    %v388 = vadd.f32 %v317, %v337
    %v389 = vadd.f32 %v318, %v337
    %v390 = vadd.f32 %v319, %v337
    %v391 = vadd.f32 %v320, %v337
    %v392 = vadd.f32 %v321, %v337
    %v393 = vadd.f32 %v322, %v337
    %v394 = vadd.f32 %v323, %v337
    %v395 = vadd.f32 %v324, %v337
    %v396 = vadd.f32 %v325, %v337
    %v397 = vadd.f32 %v326, %v337
    %v398 = vadd.f32 %v327, %v337
    %v399 = vadd.f32 %v328, %v337
    %v400 = vadd.f32 %v329, %v337
    %v401 = vadd.f32 %v330, %v337
    %v402 = vadd.f32 %v331, %v337
    %v403 = vadd.f32 %v339, %v197
    %v404 = vadd.f32 %v340, %v198
    %v405 = vadd.f32 %v341, %v199
    %v406 = vadd.f32 %v342, %v200
    %v407 = vadd.f32 %v343, %v201
    %v408 = vadd.f32 %v344, %v202
    %v409 = vadd.f32 %v345, %v203
    %v410 = vadd.f32 %v346, %v204
    %v411 = vadd.f32 %v347, %v205
    %v412 = vadd.f32 %v348, %v206
    %v413 = vadd.f32 %v349, %v207
    %v414 = vadd.f32 %v350, %v208
    %v415 = vadd.f32 %v351, %v209
    %v416 = vadd.f32 %v352, %v210
    %v417 = vadd.f32 %v353, %v211
    %v418 = vadd.f32 %v354, %v212
    %v419 = vadd.f32 %v355, %v213
    %v420 = vadd.f32 %v356, %v214
    %v421 = vadd.f32 %v357, %v215
    %v422 = vadd.f32 %v358, %v216
    %v423 = vadd.f32 %v359, %v217
    %v424 = vadd.f32 %v360, %v218
    %v425 = vadd.f32 %v361, %v219
    %v426 = vadd.f32 %v362, %v220
    %v427 = vadd.f32 %v363, %v221
    %v428 = vadd.f32 %v364, %v222
    %v429 = vadd.f32 %v365, %v223
    %v430 = vadd.f32 %v366, %v224
    %v431 = vadd.f32 %v367, %v225
    %v432 = vadd.f32 %v368, %v226
    %v433 = vadd.f32 %v369, %v227
    %v434 = vadd.f32 %v370, %v228
    %v435 = vadd.f32 %v371, %v229
    %v436 = vadd.f32 %v372, %v230
    %v437 = vadd.f32 %v373, %v231
    %v438 = vadd.f32 %v374, %v232
    %v439 = vadd.f32 %v375, %v233
    %v440 = vadd.f32 %v376, %v234
    %v441 = vadd.f32 %v377, %v235
    %v442 = vadd.f32 %v378, %v236
    %v443 = vadd.f32 %v379, %v237
    %v444 = vadd.f32 %v380, %v238
    %v445 = vadd.f32 %v381, %v239
    %v446 = vadd.f32 %v382, %v240
    %v447 = vadd.f32 %v383, %v241
    %v448 = vadd.f32 %v384, %v242
    %v449 = vadd.f32 %v385, %v243
    %v450 = vadd.f32 %v386, %v244
    %v451 = vadd.f32 %v387, %v245
    %v452 = vadd.f32 %v388, %v246
    %v453 = vadd.f32 %v389, %v247
    %v454 = vadd.f32 %v390, %v248
    %v455 = vadd.f32 %v391, %v249
    %v456 = vadd.f32 %v392, %v250
    %v457 = vadd.f32 %v393, %v251
    %v458 = vadd.f32 %v394, %v252
    %v459 = vadd.f32 %v395, %v253
    %v460 = vadd.f32 %v396, %v254
    %v461 = vadd.f32 %v397, %v255
    %v462 = vadd.f32 %v398, %v256
    %v463 = vadd.f32 %v399, %v257
    %v464 = vadd.f32 %v400, %v258
    %v465 = vadd.f32 %v401, %v259
    %v466 = vadd.f32 %v402, %v260
    %v467 = vmax.f32 %v403, 0.0
    %v468 = vmax.f32 %v404, 0.0
    %v469 = vmax.f32 %v405, 0.0
    %v470 = vmax.f32 %v406, 0.0
    %v471 = vmax.f32 %v407, 0.0
    %v472 = vmax.f32 %v408, 0.0
    %v473 = vmax.f32 %v409, 0.0
    %v474 = vmax.f32 %v410, 0.0
    %v475 = vmax.f32 %v411, 0.0
    %v476 = vmax.f32 %v412, 0.0
    %v477 = vmax.f32 %v413, 0.0
    %v478 = vmax.f32 %v414, 0.0
    %v479 = vmax.f32 %v415, 0.0
    %v480 = vmax.f32 %v416, 0.0
    %v481 = vmax.f32 %v417, 0.0
    %v482 = vmax.f32 %v418, 0.0
    %v483 = vmax.f32 %v419, 0.0
    %v484 = vmax.f32 %v420, 0.0
    %v485 = vmax.f32 %v421, 0.0
    %v486 = vmax.f32 %v422, 0.0
    %v487 = vmax.f32 %v423, 0.0
    %v488 = vmax.f32 %v424, 0.0
    %v489 = vmax.f32 %v425, 0.0
    %v490 = vmax.f32 %v426, 0.0
    %v491 = vmax.f32 %v427, 0.0
    %v492 = vmax.f32 %v428, 0.0
    %v493 = vmax.f32 %v429, 0.0
    %v494 = vmax.f32 %v430, 0.0
    %v495 = vmax.f32 %v431, 0.0
    %v496 = vmax.f32 %v432, 0.0
    %v497 = vmax.f32 %v433, 0.0
    %v498 = vmax.f32 %v434, 0.0
    %v499 = vmax.f32 %v435, 0.0
    %v500 = vmax.f32 %v436, 0.0
    %v501 = vmax.f32 %v437, 0.0
    %v502 = vmax.f32 %v438, 0.0
    %v503 = vmax.f32 %v439, 0.0
    %v504 = vmax.f32 %v440, 0.0
    %v505 = vmax.f32 %v441, 0.0
    %v506 = vmax.f32 %v442, 0.0
    %v507 = vmax.f32 %v443, 0.0
    %v508 = vmax.f32 %v444, 0.0
    %v509 = vmax.f32 %v445, 0.0
    %v510 = vmax.f32 %v446, 0.0
    %v511 = vmax.f32 %v447, 0.0
    %v512 = vmax.f32 %v448, 0.0
    %v513 = vmax.f32 %v449, 0.0
    %v514 = vmax.f32 %v450, 0.0
    %v515 = vmax.f32 %v451, 0.0
    %v516 = vmax.f32 %v452, 0.0
    %v517 = vmax.f32 %v453, 0.0
    %v518 = vmax.f32 %v454, 0.0
    %v519 = vmax.f32 %v455, 0.0
    %v520 = vmax.f32 %v456, 0.0
    %v521 = vmax.f32 %v457, 0.0
    %v522 = vmax.f32 %v458, 0.0
    %v523 = vmax.f32 %v459, 0.0
    %v524 = vmax.f32 %v460, 0.0
    %v525 = vmax.f32 %v461, 0.0
    %v526 = vmax.f32 %v462, 0.0
    %v527 = vmax.f32 %v463, 0.0
    %v528 = vmax.f32 %v464, 0.0
    %v529 = vmax.f32 %v465, 0.0
    %v530 = vmax.f32 %v466, 0.0
    %531 = vst [vmem:[#allocation10] sm:$0xff] %v467
    %532 = vst [vmem:[#allocation10 + $0x8] sm:$0xff] %v468
    %533 = vst [vmem:[#allocation10 + $0x10] sm:$0xff] %v469
    %534 = vst [vmem:[#allocation10 + $0x18] sm:$0xff] %v470
    %535 = vst [vmem:[#allocation10 + $0x20] sm:$0xff] %v471
    %536 = vst [vmem:[#allocation10 + $0x28] sm:$0xff] %v472
    %537 = vst [vmem:[#allocation10 + $0x30] sm:$0xff] %v473
    %538 = vst [vmem:[#allocation10 + $0x38] sm:$0xff] %v474
    %539 = vst [vmem:[#allocation10 + $0x40] sm:$0xff] %v475
    %540 = vst [vmem:[#allocation10 + $0x48] sm:$0xff] %v476
    %541 = vst [vmem:[#allocation10 + $0x50] sm:$0xff] %v477
    %542 = vst [vmem:[#allocation10 + $0x58] sm:$0xff] %v478
    %543 = vst [vmem:[#allocation10 + $0x60] sm:$0xff] %v479
    %544 = vst [vmem:[#allocation10 + $0x68] sm:$0xff] %v480
    %545 = vst [vmem:[#allocation10 + $0x70] sm:$0xff] %v481
    %546 = vst [vmem:[#allocation10 + $0x78] sm:$0xff] %v482
    %547 = vst [vmem:[#allocation10 + $0x80] sm:$0xff] %v483
    %548 = vst [vmem:[#allocation10 + $0x88] sm:$0xff] %v484
    %549 = vst [vmem:[#allocation10 + $0x90] sm:$0xff] %v485
    %550 = vst [vmem:[#allocation10 + $0x98] sm:$0xff] %v486
    %551 = vst [vmem:[#allocation10 + $0xa0] sm:$0xff] %v487
    %552 = vst [vmem:[#allocation10 + $0xa8] sm:$0xff] %v488
    %553 = vst [vmem:[#allocation10 + $0xb0] sm:$0xff] %v489
    %554 = vst [vmem:[#allocation10 + $0xb8] sm:$0xff] %v490
    %555 = vst [vmem:[#allocation10 + $0xc0] sm:$0xff] %v491
    %556 = vst [vmem:[#allocation10 + $0xc8] sm:$0xff] %v492
    %557 = vst [vmem:[#allocation10 + $0xd0] sm:$0xff] %v493
    %558 = vst [vmem:[#allocation10 + $0xd8] sm:$0xff] %v494
    %559 = vst [vmem:[#allocation10 + $0xe0] sm:$0xff] %v495
    %560 = vst [vmem:[#allocation10 + $0xe8] sm:$0xff] %v496
    %561 = vst [vmem:[#allocation10 + $0xf0] sm:$0xff] %v497
    %562 = vst [vmem:[#allocation10 + $0xf8] sm:$0xff] %v498
    %563 = vst [vmem:[#allocation10 + $0x100] sm:$0xff] %v499
    %564 = vst [vmem:[#allocation10 + $0x108] sm:$0xff] %v500
    %565 = vst [vmem:[#allocation10 + $0x110] sm:$0xff] %v501
    %566 = vst [vmem:[#allocation10 + $0x118] sm:$0xff] %v502
    %567 = vst [vmem:[#allocation10 + $0x120] sm:$0xff] %v503
    %568 = vst [vmem:[#allocation10 + $0x128] sm:$0xff] %v504
    %569 = vst [vmem:[#allocation10 + $0x130] sm:$0xff] %v505
    %570 = vst [vmem:[#allocation10 + $0x138] sm:$0xff] %v506
    %571 = vst [vmem:[#allocation10 + $0x140] sm:$0xff] %v507
    %572 = vst [vmem:[#allocation10 + $0x148] sm:$0xff] %v508
    %573 = vst [vmem:[#allocation10 + $0x150] sm:$0xff] %v509
    %574 = vst [vmem:[#allocation10 + $0x158] sm:$0xff] %v510
    %575 = vst [vmem:[#allocation10 + $0x160] sm:$0xff] %v511
    %576 = vst [vmem:[#allocation10 + $0x168] sm:$0xff] %v512
    %577 = vst [vmem:[#allocation10 + $0x170] sm:$0xff] %v513
    %578 = vst [vmem:[#allocation10 + $0x178] sm:$0xff] %v514
    %579 = vst [vmem:[#allocation10 + $0x180] sm:$0xff] %v515
    %580 = vst [vmem:[#allocation10 + $0x188] sm:$0xff] %v516
    %581 = vst [vmem:[#allocation10 + $0x190] sm:$0xff] %v517
    %582 = vst [vmem:[#allocation10 + $0x198] sm:$0xff] %v518
    %583 = vst [vmem:[#allocation10 + $0x1a0] sm:$0xff] %v519
    %584 = vst [vmem:[#allocation10 + $0x1a8] sm:$0xff] %v520
    %585 = vst [vmem:[#allocation10 + $0x1b0] sm:$0xff] %v521
    %586 = vst [vmem:[#allocation10 + $0x1b8] sm:$0xff] %v522
    %587 = vst [vmem:[#allocation10 + $0x1c0] sm:$0xff] %v523
    %588 = vst [vmem:[#allocation10 + $0x1c8] sm:$0xff] %v524
    %589 = vst [vmem:[#allocation10 + $0x1d0] sm:$0xff] %v525
    %590 = vst [vmem:[#allocation10 + $0x1d8] sm:$0xff] %v526
    %591 = vst [vmem:[#allocation10 + $0x1e0] sm:$0xff] %v527
    %592 = vst [vmem:[#allocation10 + $0x1e8] sm:$0xff] %v528
    %593 = vst [vmem:[#allocation10 + $0x1f0] sm:$0xff] %v529
    %594 = vst [vmem:[#allocation10 + $0x1f8] sm:$0xff] %v530
    // Predicated region
    $region34: #{basic_block.5} parent=1 // pred_check
      _
    $region35: #{basic_block.5} parent=1 // pred_check_branch
      %596 = sbr.rel (0) target = $region37
    $region36: #{basic_block.5} parent=1 // pred_region
      %s598 = ssub.s32 8192, 8192
      %599 = vsyncadd [#allocation4], %s598
      %s600 = sshll.u32 [#allocation10], 4
      %s601 = int_to_ptr.vmem [resolvable:$true] %s600
      %606 = dma.vmem_to_hbm [thread:$0]  %s601, 8192, %s4, [#allocation4], 128, 128, 8
    $region37: #{basic_block.5} parent=1 // pred_fallthru
      _
    // Predicated region
    $region38: #{basic_block.5} parent=1 // pred_check
      _
    $region39: #{basic_block.5} parent=1 // pred_check_branch
      %608 = sbr.rel (0) target = $region41
    $region40: #{basic_block.5} parent=1 // pred_region
      %609 = dma.done [#allocation4], 8192
    $region41: #{basic_block.5} parent=1 // pred_fallthru
      _
    %610 = vsyncpa [#allocation3], 1
    %611 = vsyncpa [#allocation6], 1
    %612 = vsyncpa [#allocation9], 1
    %613 = vsyncpa [#allocation4], 1

// kernel: basic_block.3
$region0: #{basic_block.3}
  #allocation0 [shape = 'u32[]', space=smem, size = 0x4, offset = 0x4, fixed_abs, tag = 'smem constant byte address 0x4 - core index']
  #allocation1 [shape = 'u32[144,128]{1,0:T(1,128)}', space=vmem, size = 0x12000, scoped, tag = 'internal scratch']
  #allocation2 [shape = 'bf16[256,1152]{1,0:T(16,128)(2,1)}', space=vmem, size = 0x90000, scoped, tag = 'scratch operand']
  %s0 = inlined_call_operand.hbm [shape: bf16[2,18,24,128], index: 0, kind: input, shape index: {}]
  %s1 = inlined_call_operand.hbm [shape: bf16[1152,128], index: 1, kind: input, shape index: {}]
  %s2 = inlined_call_operand.hbm [shape: bf16[2,16,16,128], index: 2, kind: output, shape index: {0}]
  %s3 = inlined_call_operand.hbm [shape: f32[2,1,128], index: 3, kind: output, shape index: {1}]
  %s4 = inlined_call_operand.hbm [shape: f32[2,1,128], index: 4, kind: output, shape index: {2}]
  %5 = xla_tuple %s2, %s3, %s4
  %s6 = sld [smem:[#allocation0]]
  $region65: #{basic_block.3} parent=0
    _
  %s8 = ssub.s32 1, %s6
  %s9 = scalar_select 0, %s8, %s6
  $region1: #{basic_block.3} parent=0
    #allocation3 [shape = 'u8[221184]{0}', space=vmem, size = 0x36000, scoped, tag = 'input window, operand 0']
    #allocation4 [shape = 's32[2]{0}', space=sflag, size = 0x8, scoped, tag = 'scoped memory for basic_block.3']
    #allocation5 [shape = 's32[2]{0}', space=sflag, size = 0x8, scoped, tag = 'scoped memory for basic_block.3']
    #allocation6 [shape = 'u8[294912]{0}', space=vmem, size = 0x48000, scoped, tag = 'input window, operand 1, single buffered']
    #allocation7 [shape = 's32[1]{0}', space=sflag, size = 0x4, scoped, tag = 'scoped memory for basic_block.3']
    #allocation8 [shape = 'u8[131072]{0}', space=vmem, size = 0x20000, scoped, tag = 'output window, operand 0']
    #allocation9 [shape = 'u8[1024]{0}', space=vmem, size = 0x400, scoped, tag = 'output window, operand 1']
    #allocation10 [shape = 's32[2]{0}', space=sflag, size = 0x8, scoped, tag = 'scoped memory for basic_block.3']
    #allocation11 [shape = 'u8[1024]{0}', space=vmem, size = 0x400, scoped, tag = 'output window, operand 2']
    %10 = vsyncpa [#allocation4], 0
    %s11 = scalar_lea.sflag [#allocation4], 1
    %12 = vsyncpa %s11, 0
    %13 = vsyncpa [#allocation7], 0
    %14 = vsyncpa [#allocation5], 0
    %s15 = scalar_lea.sflag [#allocation5], 1
    %16 = vsyncpa %s15, 0
    %17 = vsyncpa [#allocation10], 0
    %s18 = scalar_lea.sflag [#allocation10], 1
    %19 = vsyncpa %s18, 0
    loop: start=0, step=1, limit=4
    $region2: #{basic_block.3} parent=1 // loop_pre_header
      _
    $region3: #{basic_block.3} parent=1 // loop_header
      %s21 = sphi 0, %s25
      %p22 = scmp.ge.s32.totalorder %s21, 4
      %s31 = sphi 0, %s33
      %s34 = sphi 0, %s31
      %s35 = sphi 0, %s34
      %s51 = sphi 0, %s35
      %s55 = sphi 0, %s55
      %s57 = sphi 0, %s55
      %s58 = sphi 0, %s57
      %s72 = sphi 0, %s58
      %s78 = sphi 0, %s80
      %s81 = sphi 0, %s78
      %s82 = sphi 0, %s81
      %s98 = sphi 0, %s82
      %s104 = sphi 0, %s106
      %s107 = sphi 0, %s104
      %s108 = sphi 0, %s107
      %s124 = sphi 0, %s108
      %s130 = sphi 0, %s132
      %s133 = sphi 0, %s130
      %s134 = sphi 0, %s133
      %s150 = sphi 0, %s134
    $region4: #{basic_block.3} parent=1 // loop_header_branch
      %24 = sbr.rel (%p22) target = $region8
    $region5: #{basic_block.3} parent=1 // loop_body
      %s26 = ssub.s32 %s21, 1
      %s27 = ssub.s32 %s21, 2
      %s28 = sadd.s32 %s21, 1
      %s29 = ssub.s32 %s21, %s28
      %p30 = scmp.eq.s32.totalorder %s29, 0
      %s32 = sadd.s32 %s31, 1
      %s33 = scalar_select %p30, %s31, %s32
      %p36 = pneg %p30
      %p37 = scmp.eq.s32.totalorder %s21, 1
      %p38 = por %p36, %p37
      %p39 = scmp.ne.s32.totalorder %s31, %s34
      %p40 = scmp.eq.s32.totalorder %s21, 0
      %p41 = por %p39, %p40
      %p42 = scmp.ne.s32.totalorder %s31, %s34
      %p43 = scmp.eq.s32.totalorder %s26, 1
      %p44 = por %p42, %p43
      %p45 = scmp.ne.s32.totalorder %s34, %s35
      %p46 = scmp.eq.s32.totalorder %s26, 0
      %p47 = por %p45, %p46
      %p48 = scmp.ne.s32.totalorder %s34, %s35
      %p49 = scmp.eq.s32.totalorder %s27, 1
      %p50 = por %p48, %p49
      %p52 = scmp.ne.s32.totalorder %s35, %s51
      %p53 = scmp.eq.s32.totalorder %s27, 0
      %p54 = por %p52, %p53
      %s56 = sadd.s32 %s55, 1
      %p59 = scmp.eq.s32.totalorder %s21, 1
      %p60 = scmp.ne.s32.totalorder %s55, %s57
      %p61 = scmp.eq.s32.totalorder %s21, 0
      %p62 = por %p60, %p61
      %p63 = scmp.ne.s32.totalorder %s55, %s57
      %p64 = scmp.eq.s32.totalorder %s26, 1
      %p65 = por %p63, %p64
      %p66 = scmp.ne.s32.totalorder %s57, %s58
      %p67 = scmp.eq.s32.totalorder %s26, 0
      %p68 = por %p66, %p67
      %p69 = scmp.ne.s32.totalorder %s57, %s58
      %p70 = scmp.eq.s32.totalorder %s27, 1
      %p71 = por %p69, %p70
      %p73 = scmp.ne.s32.totalorder %s58, %s72
      %p74 = scmp.eq.s32.totalorder %s27, 0
      %p75 = por %p73, %p74
      %s76 = ssub.s32 %s21, %s28
      %p77 = scmp.eq.s32.totalorder %s76, 0
      %s79 = sadd.s32 %s78, 1
      %s80 = scalar_select %p77, %s78, %s79
      %p83 = pneg %p77
      %p84 = scmp.eq.s32.totalorder %s21, 1
      %p85 = por %p83, %p84
      %p86 = scmp.ne.s32.totalorder %s78, %s81
      %p87 = scmp.eq.s32.totalorder %s21, 0
      %p88 = por %p86, %p87
      %p89 = scmp.ne.s32.totalorder %s78, %s81
      %p90 = scmp.eq.s32.totalorder %s26, 1
      %p91 = por %p89, %p90
      %p92 = scmp.ne.s32.totalorder %s81, %s82
      %p93 = scmp.eq.s32.totalorder %s26, 0
      %p94 = por %p92, %p93
      %p95 = scmp.ne.s32.totalorder %s81, %s82
      %p96 = scmp.eq.s32.totalorder %s27, 1
      %p97 = por %p95, %p96
      %p99 = scmp.ne.s32.totalorder %s82, %s98
      %p100 = scmp.eq.s32.totalorder %s27, 0
      %p101 = por %p99, %p100
      %s102 = ssub.s32 %s21, %s28
      %p103 = scmp.eq.s32.totalorder %s102, 0
      %s105 = sadd.s32 %s104, 1
      %s106 = scalar_select %p103, %s104, %s105
      %p109 = pneg %p103
      %p110 = scmp.eq.s32.totalorder %s21, 1
      %p111 = por %p109, %p110
      %p112 = scmp.ne.s32.totalorder %s104, %s107
      %p113 = scmp.eq.s32.totalorder %s21, 0
      %p114 = por %p112, %p113
      %p115 = scmp.ne.s32.totalorder %s104, %s107
      %p116 = scmp.eq.s32.totalorder %s26, 1
      %p117 = por %p115, %p116
      %p118 = scmp.ne.s32.totalorder %s107, %s108
      %p119 = scmp.eq.s32.totalorder %s26, 0
      %p120 = por %p118, %p119
      %p121 = scmp.ne.s32.totalorder %s107, %s108
      %p122 = scmp.eq.s32.totalorder %s27, 1
      %p123 = por %p121, %p122
      %p125 = scmp.ne.s32.totalorder %s108, %s124
      %p126 = scmp.eq.s32.totalorder %s27, 0
      %p127 = por %p125, %p126
      %s128 = ssub.s32 %s21, %s28
      %p129 = scmp.eq.s32.totalorder %s128, 0
      %s131 = sadd.s32 %s130, 1
      %s132 = scalar_select %p129, %s130, %s131
      %p135 = pneg %p129
      %p136 = scmp.eq.s32.totalorder %s21, 1
      %p137 = por %p135, %p136
      %p138 = scmp.ne.s32.totalorder %s130, %s133
      %p139 = scmp.eq.s32.totalorder %s21, 0
      %p140 = por %p138, %p139
      %p141 = scmp.ne.s32.totalorder %s130, %s133
      %p142 = scmp.eq.s32.totalorder %s26, 1
      %p143 = por %p141, %p142
      %p144 = scmp.ne.s32.totalorder %s133, %s134
      %p145 = scmp.eq.s32.totalorder %s26, 0
      %p146 = por %p144, %p145
      %p147 = scmp.ne.s32.totalorder %s133, %s134
      %p148 = scmp.eq.s32.totalorder %s27, 1
      %p149 = por %p147, %p148
      %p151 = scmp.ne.s32.totalorder %s134, %s150
      %p152 = scmp.eq.s32.totalorder %s27, 0
      %p153 = por %p151, %p152
      %p154 = scmp.le.s32.totalorder 1, %s21
      %p155 = scmp.lt.s32.totalorder %s21, 3
      %p156 = pnand %p154, %p155
      %p157 = pneg %p156
      // Predicated region
      $region9: #{basic_block.3} parent=5 // pred_check
        _
      $region10: #{basic_block.3} parent=5 // pred_check_branch
        %159 = sbr.rel (%p156) target = $region12
      $region11: #{basic_block.3} parent=5 // pred_region
        %s160 = ssub.s32 %s21, 1
        // Predicated region
        $region13: #{basic_block.3} parent=11 // pred_check
          %p161 = pneg %p68
        $region14: #{basic_block.3} parent=11 // pred_check_branch
          %163 = sbr.rel (%p161) target = $region16
        $region15: #{basic_block.3} parent=11 // pred_region
          %s165 = ssub.s32 9216, 9216
          %166 = vsyncadd [#allocation7], %s165
          %s167 = sshll.u32 [#allocation6], 4
          %s168 = int_to_ptr.vmem [resolvable:$true] %s167
          %173 = dma.hbm_to_vmem [thread:$0]  %s1, 9216, %s168, [#allocation7], 64, 64, 4
        $region16: #{basic_block.3} parent=11 // pred_fallthru
          _
      $region12: #{basic_block.3} parent=5 // pred_fallthru
        _
      %p174 = scmp.lt.s32.totalorder %s21, 2
      // Predicated region
      $region17: #{basic_block.3} parent=5 // pred_check
        %p175 = pneg %p174
      $region18: #{basic_block.3} parent=5 // pred_check_branch
        %177 = sbr.rel (%p175) target = $region20
      $region19: #{basic_block.3} parent=5 // pred_region
        // Predicated region
        $region21: #{basic_block.3} parent=19 // pred_check
          %p178 = pneg %p41
        $region22: #{basic_block.3} parent=19 // pred_check_branch
          %180 = sbr.rel (%p178) target = $region24
        $region23: #{basic_block.3} parent=19 // pred_region
          %s181 = sand.u32 %s31, 1
          %s182 = scalar_lea.sflag [#allocation4], %s181
          %s183 = sand.u32 %s31, 1
          %s184 = smul.addr %s183, 216
          %s185 = scalar_lea.vmem [#allocation3], %s184
          %s187 = ssub.s32 3456, 3456
          %188 = vsyncadd %s182, %s187
          %s189 = smul.addr %s21, 54
          %s190 = smul.addr %s189, 64
          %s191 = scalar_lea.hbm %s0, %s190
          %s192 = sshll.u32 %s185, 4
          %s193 = int_to_ptr.vmem [resolvable:$true] %s192
          %198 = dma.hbm_to_vmem [thread:$0]  %s191, 3456, %s193, %s182, 64, 64, 4
        $region24: #{basic_block.3} parent=19 // pred_fallthru
          _
      $region20: #{basic_block.3} parent=5 // pred_fallthru
        _
      %p199 = scmp.le.s32.totalorder 1, %s21
      %p200 = scmp.lt.s32.totalorder %s21, 3
      %p201 = pnand %p199, %p200
      %p202 = pneg %p201
      // Predicated region
      $region25: #{basic_block.3} parent=5 // pred_check
        _
      $region26: #{basic_block.3} parent=5 // pred_check_branch
        %204 = sbr.rel (%p201) target = $region28
      $region27: #{basic_block.3} parent=5 // pred_region
        %s205 = ssub.s32 %s21, 1
        %s206 = sand.u32 %s34, 1
        %s207 = scalar_lea.sflag [#allocation4], %s206
        %s208 = sand.u32 %s34, 1
        %s209 = smul.addr %s208, 216
        %s210 = scalar_lea.vmem [#allocation3], %s209
        // Predicated region
        $region29: #{basic_block.3} parent=27 // pred_check
          %p211 = pneg %p47
        $region30: #{basic_block.3} parent=27 // pred_check_branch
          %213 = sbr.rel (%p211) target = $region32
        $region31: #{basic_block.3} parent=27 // pred_region
          %214 = dma.done %s207, 3456
        $region32: #{basic_block.3} parent=27 // pred_fallthru
          _
        // Predicated region
        $region33: #{basic_block.3} parent=27 // pred_check
          %p215 = pneg %p68
        $region34: #{basic_block.3} parent=27 // pred_check_branch
          %217 = sbr.rel (%p215) target = $region36
        $region35: #{basic_block.3} parent=27 // pred_region
          %218 = dma.done [#allocation7], 9216
        $region36: #{basic_block.3} parent=27 // pred_fallthru
          _
        %s219 = sand.u32 %s34, 1
        %s220 = scalar_lea.sflag [#allocation4], %s219
        %s221 = sand.u32 %s34, 1
        %s222 = smul.addr %s221, 216
        %s223 = scalar_lea.vmem [#allocation3], %s222
        %p224 = pneg %p47
        %p225 = pneg %p44
        %p226 = pneg %p68
        %p227 = pneg %p65
        %p228 = pneg %p94
        %p229 = pneg %p91
        %s230 = sand.u32 %s81, 1
        %s231 = scalar_lea.sflag [#allocation5], %s230
        %s232 = sand.u32 %s81, 1
        %s233 = smul.addr %s232, 128
        %s234 = scalar_lea.vmem [#allocation8], %s233
        %p235 = pneg %p120
        %p236 = pneg %p117
        %s237 = sand.u32 %s26, 1
        %s238 = scalar_lea.sflag [#allocation10], %s237
        %s239 = sand.u32 %s107, 1
        %s240 = scalar_lea.vmem [#allocation9], %s239
        %p241 = pneg %p146
        %p242 = pneg %p143
        %s243 = sand.u32 %s26, 1
        %s244 = scalar_lea.sflag [#allocation10], %s243
        %s245 = sand.u32 %s133, 1
        %s246 = scalar_lea.vmem [#allocation11], %s245
        %v248 = vld [vmem:[%s210] sm:$0xf]
        %v249 = vld [vmem:[%s210 + $0x4] sm:$0xf]
        %v250 = vld [vmem:[%s210 + $0xc] sm:$0xf]
        %v251 = vld [vmem:[%s210 + $0x10] sm:$0xf]
        %v252 = vld [vmem:[%s210 + $0x18] sm:$0xf]
        %v253 = vld [vmem:[%s210 + $0x1c] sm:$0xf]
        %v254 = vld [vmem:[%s210 + $0x24] sm:$0xf]
        %v255 = vld [vmem:[%s210 + $0x28] sm:$0xf]
        %v256 = vld [vmem:[%s210 + $0x30] sm:$0xf]
        %v257 = vld [vmem:[%s210 + $0x34] sm:$0xf]
        %v258 = vld [vmem:[%s210 + $0x3c] sm:$0xf]
        %v259 = vld [vmem:[%s210 + $0x40] sm:$0xf]
        %v260 = vld [vmem:[%s210 + $0x48] sm:$0xf]
        %v261 = vld [vmem:[%s210 + $0x4c] sm:$0xf]
        %v262 = vld [vmem:[%s210 + $0x54] sm:$0xf]
        %v263 = vld [vmem:[%s210 + $0x58] sm:$0xf]
        %v264 = vld [vmem:[%s210 + $0x60] sm:$0xf]
        %v265 = vld [vmem:[%s210 + $0x64] sm:$0xf]
        %v266 = vld [vmem:[%s210 + $0x6c] sm:$0xf]
        %v267 = vld [vmem:[%s210 + $0x70] sm:$0xf]
        %v268 = vld [vmem:[%s210 + $0x78] sm:$0xf]
        %v269 = vld [vmem:[%s210 + $0x7c] sm:$0xf]
        %v270 = vld [vmem:[%s210 + $0x84] sm:$0xf]
        %v271 = vld [vmem:[%s210 + $0x88] sm:$0xf]
        %v272 = vld [vmem:[%s210 + $0x90] sm:$0xf]
        %v273 = vld [vmem:[%s210 + $0x94] sm:$0xf]
        %v274 = vld [vmem:[%s210 + $0x9c] sm:$0xf]
        %v275 = vld [vmem:[%s210 + $0xa0] sm:$0xf]
        %v276 = vld [vmem:[%s210 + $0xa8] sm:$0xf]
        %v277 = vld [vmem:[%s210 + $0xac] sm:$0xf]
        %v278 = vld [vmem:[%s210 + $0xb4] sm:$0xf]
        %v279 = vld [vmem:[%s210 + $0xb8] sm:$0xf]
        %v312 = vunpack.c.l.b16 %v248
        %v313 = vunpack.c.l.b16 %v249
        %v314 = vunpack.c.l.b16 %v250
        %v315 = vunpack.c.l.b16 %v251
        %v316 = vunpack.c.l.b16 %v252
        %v317 = vunpack.c.l.b16 %v253
        %v318 = vunpack.c.l.b16 %v254
        %v319 = vunpack.c.l.b16 %v255
        %v320 = vunpack.c.l.b16 %v256
        %v321 = vunpack.c.l.b16 %v257
        %v322 = vunpack.c.l.b16 %v258
        %v323 = vunpack.c.l.b16 %v259
        %v324 = vunpack.c.l.b16 %v260
        %v325 = vunpack.c.l.b16 %v261
        %v326 = vunpack.c.l.b16 %v262
        %v327 = vunpack.c.l.b16 %v263
        %v328 = vunpack.c.l.b16 %v264
        %v329 = vunpack.c.l.b16 %v265
        %v330 = vunpack.c.l.b16 %v266
        %v331 = vunpack.c.l.b16 %v267
        %v332 = vunpack.c.l.b16 %v268
        %v333 = vunpack.c.l.b16 %v269
        %v334 = vunpack.c.l.b16 %v270
        %v335 = vunpack.c.l.b16 %v271
        %v336 = vunpack.c.l.b16 %v272
        %v337 = vunpack.c.l.b16 %v273
        %v338 = vunpack.c.l.b16 %v274
        %v339 = vunpack.c.l.b16 %v275
        %v340 = vunpack.c.l.b16 %v276
        %v341 = vunpack.c.l.b16 %v277
        %v342 = vunpack.c.l.b16 %v278
        %v343 = vunpack.c.l.b16 %v279
        %v344 = vpack.c.b16 %v313, %v312
        %v345 = vpack.c.b16 %v315, %v314
        %v346 = vpack.c.b16 %v317, %v316
        %v347 = vpack.c.b16 %v319, %v318
        %v348 = vpack.c.b16 %v321, %v320
        %v349 = vpack.c.b16 %v323, %v322
        %v350 = vpack.c.b16 %v325, %v324
        %v351 = vpack.c.b16 %v327, %v326
        %v352 = vpack.c.b16 %v329, %v328
        %v353 = vpack.c.b16 %v331, %v330
        %v354 = vpack.c.b16 %v333, %v332
        %v355 = vpack.c.b16 %v335, %v334
        %v356 = vpack.c.b16 %v337, %v336
        %v357 = vpack.c.b16 %v339, %v338
        %v358 = vpack.c.b16 %v341, %v340
        %v359 = vpack.c.b16 %v343, %v342
        %376 = vst [vmem:[#allocation2] sm:$0xff] %v344
        %377 = vst [vmem:[#allocation2 + $0x48] sm:$0xff] %v345
        %378 = vst [vmem:[#allocation2 + $0x90] sm:$0xff] %v346
        %379 = vst [vmem:[#allocation2 + $0xd8] sm:$0xff] %v347
        %380 = vst [vmem:[#allocation2 + $0x120] sm:$0xff] %v348
        %381 = vst [vmem:[#allocation2 + $0x168] sm:$0xff] %v349
        %382 = vst [vmem:[#allocation2 + $0x1b0] sm:$0xff] %v350
        %383 = vst [vmem:[#allocation2 + $0x1f8] sm:$0xff] %v351
        %384 = vst [vmem:[#allocation2 + $0x240] sm:$0xff] %v352
        %385 = vst [vmem:[#allocation2 + $0x288] sm:$0xff] %v353
        %386 = vst [vmem:[#allocation2 + $0x2d0] sm:$0xff] %v354
        %387 = vst [vmem:[#allocation2 + $0x318] sm:$0xff] %v355
        %388 = vst [vmem:[#allocation2 + $0x360] sm:$0xff] %v356
        %389 = vst [vmem:[#allocation2 + $0x3a8] sm:$0xff] %v357
        %390 = vst [vmem:[#allocation2 + $0x3f0] sm:$0xff] %v358
        %391 = vst [vmem:[#allocation2 + $0x438] sm:$0xff] %v359
        %v392 = vld [vmem:[%s210] sm:$0xf]
        %v393 = vld [vmem:[%s210 + $0x4] sm:$0xf]
        %v394 = vld [vmem:[%s210 + $0x8] sm:$0x1]
        %v395 = vld [vmem:[%s210 + $0xc] sm:$0xf]
        %v396 = vld [vmem:[%s210 + $0x10] sm:$0xf]
        %v397 = vld [vmem:[%s210 + $0x14] sm:$0x1]
        %v398 = vld [vmem:[%s210 + $0x18] sm:$0xf]
        %v399 = vld [vmem:[%s210 + $0x1c] sm:$0xf]
        %v400 = vld [vmem:[%s210 + $0x20] sm:$0x1]
        %v401 = vld [vmem:[%s210 + $0x24] sm:$0xf]
        %v402 = vld [vmem:[%s210 + $0x28] sm:$0xf]
        %v403 = vld [vmem:[%s210 + $0x2c] sm:$0x1]
        %v404 = vld [vmem:[%s210 + $0x30] sm:$0xf]
        %v405 = vld [vmem:[%s210 + $0x34] sm:$0xf]
        %v406 = vld [vmem:[%s210 + $0x38] sm:$0x1]
        %v407 = vld [vmem:[%s210 + $0x3c] sm:$0xf]
        %v408 = vld [vmem:[%s210 + $0x40] sm:$0xf]
        %v409 = vld [vmem:[%s210 + $0x44] sm:$0x1]
        %v410 = vld [vmem:[%s210 + $0x48] sm:$0xf]
        %v411 = vld [vmem:[%s210 + $0x4c] sm:$0xf]
        %v412 = vld [vmem:[%s210 + $0x50] sm:$0x1]
        %v413 = vld [vmem:[%s210 + $0x54] sm:$0xf]
        %v414 = vld [vmem:[%s210 + $0x58] sm:$0xf]
        %v415 = vld [vmem:[%s210 + $0x5c] sm:$0x1]
        %v416 = vld [vmem:[%s210 + $0x60] sm:$0xf]
        %v417 = vld [vmem:[%s210 + $0x64] sm:$0xf]
        %v418 = vld [vmem:[%s210 + $0x68] sm:$0x1]
        %v419 = vld [vmem:[%s210 + $0x6c] sm:$0xf]
        %v420 = vld [vmem:[%s210 + $0x70] sm:$0xf]
        %v421 = vld [vmem:[%s210 + $0x74] sm:$0x1]
        %v422 = vld [vmem:[%s210 + $0x78] sm:$0xf]
        %v423 = vld [vmem:[%s210 + $0x7c] sm:$0xf]
        %v424 = vld [vmem:[%s210 + $0x80] sm:$0x1]
        %v425 = vld [vmem:[%s210 + $0x84] sm:$0xf]
        %v426 = vld [vmem:[%s210 + $0x88] sm:$0xf]
        %v427 = vld [vmem:[%s210 + $0x8c] sm:$0x1]
        %v428 = vld [vmem:[%s210 + $0x90] sm:$0xf]
        %v429 = vld [vmem:[%s210 + $0x94] sm:$0xf]
        %v430 = vld [vmem:[%s210 + $0x98] sm:$0x1]
        %v431 = vld [vmem:[%s210 + $0x9c] sm:$0xf]
        %v432 = vld [vmem:[%s210 + $0xa0] sm:$0xf]
        %v433 = vld [vmem:[%s210 + $0xa4] sm:$0x1]
        %v434 = vld [vmem:[%s210 + $0xa8] sm:$0xf]
        %v435 = vld [vmem:[%s210 + $0xac] sm:$0xf]
        %v436 = vld [vmem:[%s210 + $0xb0] sm:$0x1]
        %v437 = vld [vmem:[%s210 + $0xb4] sm:$0xf]
        %v438 = vld [vmem:[%s210 + $0xb8] sm:$0xf]
        %v439 = vld [vmem:[%s210 + $0xbc] sm:$0x1]
        %vm440 = vsmask.f32 3328
        %vm441 = vsmask.f32 7440
        %vm442 = vmor %vm440, %vm441
        %v444 = vshrl.u32 %v392, 16
        %v446 = vrot.slane %v444, 4
        %v447 = vshll.u32 %v392, 16
        %v449 = vrot.slane %v447, 5
        %v450 = vor.u32 %v446, %v449
        %v451 = vrot.slane %v450, 4
        %v453 = vshll.u32 %v393, 16
        %v455 = vrot.slane %v453, 5
        %v456 = vsel %vm442, %v451, %v455
        %v457 = vshrl.u32 %v393, 16
        %v459 = vrot.slane %v457, 4
        %v460 = vor.u32 %v459, %v455
        %v461 = vrot.slane %v460, 4
        %v463 = vshll.u32 %v394, 16
        %v465 = vrot.slane %v463, 5
        %v466 = vsel %vm442, %v461, %v465
        %v468 = vshrl.u32 %v395, 16
        %v470 = vrot.slane %v468, 4
        %v471 = vshll.u32 %v395, 16
        %v473 = vrot.slane %v471, 5
        %v474 = vor.u32 %v470, %v473
        %v475 = vrot.slane %v474, 4
        %v477 = vshll.u32 %v396, 16
        %v479 = vrot.slane %v477, 5
        %v480 = vsel %vm442, %v475, %v479
        %v481 = vshrl.u32 %v396, 16
        %v483 = vrot.slane %v481, 4
        %v484 = vor.u32 %v483, %v479
        %v485 = vrot.slane %v484, 4
        %v487 = vshll.u32 %v397, 16
        %v489 = vrot.slane %v487, 5
        %v490 = vsel %vm442, %v485, %v489
        %v492 = vshrl.u32 %v398, 16
        %v494 = vrot.slane %v492, 4
        %v495 = vshll.u32 %v398, 16
        %v497 = vrot.slane %v495, 5
        %v498 = vor.u32 %v494, %v497
        %v499 = vrot.slane %v498, 4
        %v501 = vshll.u32 %v399, 16
        %v503 = vrot.slane %v501, 5
        %v504 = vsel %vm442, %v499, %v503
        %v505 = vshrl.u32 %v399, 16
        %v507 = vrot.slane %v505, 4
        %v508 = vor.u32 %v507, %v503
        %v509 = vrot.slane %v508, 4
        %v511 = vshll.u32 %v400, 16
        %v513 = vrot.slane %v511, 5
        %v514 = vsel %vm442, %v509, %v513
        %v516 = vshrl.u32 %v401, 16
        %v518 = vrot.slane %v516, 4
        %v519 = vshll.u32 %v401, 16
        %v521 = vrot.slane %v519, 5
        %v522 = vor.u32 %v518, %v521
        %v523 = vrot.slane %v522, 4
        %v525 = vshll.u32 %v402, 16
        %v527 = vrot.slane %v525, 5
        %v528 = vsel %vm442, %v523, %v527
        %v529 = vshrl.u32 %v402, 16
        %v531 = vrot.slane %v529, 4
        %v532 = vor.u32 %v531, %v527
        %v533 = vrot.slane %v532, 4
        %v535 = vshll.u32 %v403, 16
        %v537 = vrot.slane %v535, 5
        %v538 = vsel %vm442, %v533, %v537
        %v540 = vshrl.u32 %v404, 16
        %v542 = vrot.slane %v540, 4
        %v543 = vshll.u32 %v404, 16
        %v545 = vrot.slane %v543, 5
        %v546 = vor.u32 %v542, %v545
        %v547 = vrot.slane %v546, 4
        %v549 = vshll.u32 %v405, 16
        %v551 = vrot.slane %v549, 5
        %v552 = vsel %vm442, %v547, %v551
        %v553 = vshrl.u32 %v405, 16
        %v555 = vrot.slane %v553, 4
        %v556 = vor.u32 %v555, %v551
        %v557 = vrot.slane %v556, 4
        %v559 = vshll.u32 %v406, 16
        %v561 = vrot.slane %v559, 5
        %v562 = vsel %vm442, %v557, %v561
        %v564 = vshrl.u32 %v407, 16
        %v566 = vrot.slane %v564, 4
        %v567 = vshll.u32 %v407, 16
        %v569 = vrot.slane %v567, 5
        %v570 = vor.u32 %v566, %v569
        %v571 = vrot.slane %v570, 4
        %v573 = vshll.u32 %v408, 16
        %v575 = vrot.slane %v573, 5
        %v576 = vsel %vm442, %v571, %v575
        %v577 = vshrl.u32 %v408, 16
        %v579 = vrot.slane %v577, 4
        %v580 = vor.u32 %v579, %v575
        %v581 = vrot.slane %v580, 4
        %v583 = vshll.u32 %v409, 16
        %v585 = vrot.slane %v583, 5
        %v586 = vsel %vm442, %v581, %v585
        %v588 = vshrl.u32 %v410, 16
        %v590 = vrot.slane %v588, 4
        %v591 = vshll.u32 %v410, 16
        %v593 = vrot.slane %v591, 5
        %v594 = vor.u32 %v590, %v593
        %v595 = vrot.slane %v594, 4
        %v597 = vshll.u32 %v411, 16
        %v599 = vrot.slane %v597, 5
        %v600 = vsel %vm442, %v595, %v599
        %v601 = vshrl.u32 %v411, 16
        %v603 = vrot.slane %v601, 4
        %v604 = vor.u32 %v603, %v599
        %v605 = vrot.slane %v604, 4
        %v607 = vshll.u32 %v412, 16
        %v609 = vrot.slane %v607, 5
        %v610 = vsel %vm442, %v605, %v609
        %v612 = vshrl.u32 %v413, 16
        %v614 = vrot.slane %v612, 4
        %v615 = vshll.u32 %v413, 16
        %v617 = vrot.slane %v615, 5
        %v618 = vor.u32 %v614, %v617
        %v619 = vrot.slane %v618, 4
        %v621 = vshll.u32 %v414, 16
        %v623 = vrot.slane %v621, 5
        %v624 = vsel %vm442, %v619, %v623
        %v625 = vshrl.u32 %v414, 16
        %v627 = vrot.slane %v625, 4
        %v628 = vor.u32 %v627, %v623
        %v629 = vrot.slane %v628, 4
        %v631 = vshll.u32 %v415, 16
        %v633 = vrot.slane %v631, 5
        %v634 = vsel %vm442, %v629, %v633
        %v636 = vshrl.u32 %v416, 16
        %v638 = vrot.slane %v636, 4
        %v639 = vshll.u32 %v416, 16
        %v641 = vrot.slane %v639, 5
        %v642 = vor.u32 %v638, %v641
        %v643 = vrot.slane %v642, 4
        %v645 = vshll.u32 %v417, 16
        %v647 = vrot.slane %v645, 5
        %v648 = vsel %vm442, %v643, %v647
        %v649 = vshrl.u32 %v417, 16
        %v651 = vrot.slane %v649, 4
        %v652 = vor.u32 %v651, %v647
        %v653 = vrot.slane %v652, 4
        %v655 = vshll.u32 %v418, 16
        %v657 = vrot.slane %v655, 5
        %v658 = vsel %vm442, %v653, %v657
        %v660 = vshrl.u32 %v419, 16
        %v662 = vrot.slane %v660, 4
        %v663 = vshll.u32 %v419, 16
        %v665 = vrot.slane %v663, 5
        %v666 = vor.u32 %v662, %v665
        %v667 = vrot.slane %v666, 4
        %v669 = vshll.u32 %v420, 16
        %v671 = vrot.slane %v669, 5
        %v672 = vsel %vm442, %v667, %v671
        %v673 = vshrl.u32 %v420, 16
        %v675 = vrot.slane %v673, 4
        %v676 = vor.u32 %v675, %v671
        %v677 = vrot.slane %v676, 4
        %v679 = vshll.u32 %v421, 16
        %v681 = vrot.slane %v679, 5
        %v682 = vsel %vm442, %v677, %v681
        %v684 = vshrl.u32 %v422, 16
        %v686 = vrot.slane %v684, 4
        %v687 = vshll.u32 %v422, 16
        %v689 = vrot.slane %v687, 5
        %v690 = vor.u32 %v686, %v689
        %v691 = vrot.slane %v690, 4
        %v693 = vshll.u32 %v423, 16
        %v695 = vrot.slane %v693, 5
        %v696 = vsel %vm442, %v691, %v695
        %v697 = vshrl.u32 %v423, 16
        %v699 = vrot.slane %v697, 4
        %v700 = vor.u32 %v699, %v695
        %v701 = vrot.slane %v700, 4
        %v703 = vshll.u32 %v424, 16
        %v705 = vrot.slane %v703, 5
        %v706 = vsel %vm442, %v701, %v705
        %v708 = vshrl.u32 %v425, 16
        %v710 = vrot.slane %v708, 4
        %v711 = vshll.u32 %v425, 16
        %v713 = vrot.slane %v711, 5
        %v714 = vor.u32 %v710, %v713
        %v715 = vrot.slane %v714, 4
        %v717 = vshll.u32 %v426, 16
        %v719 = vrot.slane %v717, 5
        %v720 = vsel %vm442, %v715, %v719
        %v721 = vshrl.u32 %v426, 16
        %v723 = vrot.slane %v721, 4
        %v724 = vor.u32 %v723, %v719
        %v725 = vrot.slane %v724, 4
        %v727 = vshll.u32 %v427, 16
        %v729 = vrot.slane %v727, 5
        %v730 = vsel %vm442, %v725, %v729
        %v732 = vshrl.u32 %v428, 16
        %v734 = vrot.slane %v732, 4
        %v735 = vshll.u32 %v428, 16
        %v737 = vrot.slane %v735, 5
        %v738 = vor.u32 %v734, %v737
        %v739 = vrot.slane %v738, 4
        %v741 = vshll.u32 %v429, 16
        %v743 = vrot.slane %v741, 5
        %v744 = vsel %vm442, %v739, %v743
        %v745 = vshrl.u32 %v429, 16
        %v747 = vrot.slane %v745, 4
        %v748 = vor.u32 %v747, %v743
        %v749 = vrot.slane %v748, 4
        %v751 = vshll.u32 %v430, 16
        %v753 = vrot.slane %v751, 5
        %v754 = vsel %vm442, %v749, %v753
        %v756 = vshrl.u32 %v431, 16
        %v758 = vrot.slane %v756, 4
        %v759 = vshll.u32 %v431, 16
        %v761 = vrot.slane %v759, 5
        %v762 = vor.u32 %v758, %v761
        %v763 = vrot.slane %v762, 4
        %v765 = vshll.u32 %v432, 16
        %v767 = vrot.slane %v765, 5
        %v768 = vsel %vm442, %v763, %v767
        %v769 = vshrl.u32 %v432, 16
        %v771 = vrot.slane %v769, 4
        %v772 = vor.u32 %v771, %v767
        %v773 = vrot.slane %v772, 4
        %v775 = vshll.u32 %v433, 16
        %v777 = vrot.slane %v775, 5
        %v778 = vsel %vm442, %v773, %v777
        %v780 = vshrl.u32 %v434, 16
        %v782 = vrot.slane %v780, 4
        %v783 = vshll.u32 %v434, 16
        %v785 = vrot.slane %v783, 5
        %v786 = vor.u32 %v782, %v785
        %v787 = vrot.slane %v786, 4
        %v789 = vshll.u32 %v435, 16
        %v791 = vrot.slane %v789, 5
        %v792 = vsel %vm442, %v787, %v791
        %v793 = vshrl.u32 %v435, 16
        %v795 = vrot.slane %v793, 4
        %v796 = vor.u32 %v795, %v791
        %v797 = vrot.slane %v796, 4
        %v799 = vshll.u32 %v436, 16
        %v801 = vrot.slane %v799, 5
        %v802 = vsel %vm442, %v797, %v801
        %v804 = vshrl.u32 %v437, 16
        %v806 = vrot.slane %v804, 4
        %v807 = vshll.u32 %v437, 16
        %v809 = vrot.slane %v807, 5
        %v810 = vor.u32 %v806, %v809
        %v811 = vrot.slane %v810, 4
        %v813 = vshll.u32 %v438, 16
        %v815 = vrot.slane %v813, 5
        %v816 = vsel %vm442, %v811, %v815
        %v817 = vshrl.u32 %v438, 16
        %v819 = vrot.slane %v817, 4
        %v820 = vor.u32 %v819, %v815
        %v821 = vrot.slane %v820, 4
        %v823 = vshll.u32 %v439, 16
        %v825 = vrot.slane %v823, 5
        %v826 = vsel %vm442, %v821, %v825
        %v827 = vunpack.c.l.b16 %v456
        %v828 = vunpack.c.l.b16 %v466
        %v829 = vunpack.c.l.b16 %v480
        %v830 = vunpack.c.l.b16 %v490
        %v831 = vunpack.c.l.b16 %v504
        %v832 = vunpack.c.l.b16 %v514
        %v833 = vunpack.c.l.b16 %v528
        %v834 = vunpack.c.l.b16 %v538
        %v835 = vunpack.c.l.b16 %v552
        %v836 = vunpack.c.l.b16 %v562
        %v837 = vunpack.c.l.b16 %v576
        %v838 = vunpack.c.l.b16 %v586
        %v839 = vunpack.c.l.b16 %v600
        %v840 = vunpack.c.l.b16 %v610
        %v841 = vunpack.c.l.b16 %v624
        %v842 = vunpack.c.l.b16 %v634
        %v843 = vunpack.c.l.b16 %v648
        %v844 = vunpack.c.l.b16 %v658
        %v845 = vunpack.c.l.b16 %v672
        %v846 = vunpack.c.l.b16 %v682
        %v847 = vunpack.c.l.b16 %v696
        %v848 = vunpack.c.l.b16 %v706
        %v849 = vunpack.c.l.b16 %v720
        %v850 = vunpack.c.l.b16 %v730
        %v851 = vunpack.c.l.b16 %v744
        %v852 = vunpack.c.l.b16 %v754
        %v853 = vunpack.c.l.b16 %v768
        %v854 = vunpack.c.l.b16 %v778
        %v855 = vunpack.c.l.b16 %v792
        %v856 = vunpack.c.l.b16 %v802
        %v857 = vunpack.c.l.b16 %v816
        %v858 = vunpack.c.l.b16 %v826
        %v859 = vpack.c.b16 %v828, %v827
        %v860 = vpack.c.b16 %v830, %v829
        %v861 = vpack.c.b16 %v832, %v831
        %v862 = vpack.c.b16 %v834, %v833
        %v863 = vpack.c.b16 %v836, %v835
        %v864 = vpack.c.b16 %v838, %v837
        %v865 = vpack.c.b16 %v840, %v839
        %v866 = vpack.c.b16 %v842, %v841
        %v867 = vpack.c.b16 %v844, %v843
        %v868 = vpack.c.b16 %v846, %v845
        %v869 = vpack.c.b16 %v848, %v847
        %v870 = vpack.c.b16 %v850, %v849
        %v871 = vpack.c.b16 %v852, %v851
        %v872 = vpack.c.b16 %v854, %v853
        %v873 = vpack.c.b16 %v856, %v855
        %v874 = vpack.c.b16 %v858, %v857
        %891 = vst [vmem:[#allocation2 + $0x8] sm:$0xff] %v859
        %892 = vst [vmem:[#allocation2 + $0x50] sm:$0xff] %v860
        %893 = vst [vmem:[#allocation2 + $0x98] sm:$0xff] %v861
        %894 = vst [vmem:[#allocation2 + $0xe0] sm:$0xff] %v862
        %895 = vst [vmem:[#allocation2 + $0x128] sm:$0xff] %v863
        %896 = vst [vmem:[#allocation2 + $0x170] sm:$0xff] %v864
        %897 = vst [vmem:[#allocation2 + $0x1b8] sm:$0xff] %v865
        %898 = vst [vmem:[#allocation2 + $0x200] sm:$0xff] %v866
        %899 = vst [vmem:[#allocation2 + $0x248] sm:$0xff] %v867
        %900 = vst [vmem:[#allocation2 + $0x290] sm:$0xff] %v868
        %901 = vst [vmem:[#allocation2 + $0x2d8] sm:$0xff] %v869
        %902 = vst [vmem:[#allocation2 + $0x320] sm:$0xff] %v870
        %903 = vst [vmem:[#allocation2 + $0x368] sm:$0xff] %v871
        %904 = vst [vmem:[#allocation2 + $0x3b0] sm:$0xff] %v872
        %905 = vst [vmem:[#allocation2 + $0x3f8] sm:$0xff] %v873
        %906 = vst [vmem:[#allocation2 + $0x440] sm:$0xff] %v874
        %v907 = vld [vmem:[%s210] sm:$0xe]
        %v908 = vld [vmem:[%s210 + $0x4] sm:$0xf]
        %v909 = vld [vmem:[%s210 + $0x8] sm:$0x1]
        %v910 = vld [vmem:[%s210 + $0xc] sm:$0xe]
        %v911 = vld [vmem:[%s210 + $0x10] sm:$0xf]
        %v912 = vld [vmem:[%s210 + $0x14] sm:$0x1]
        %v913 = vld [vmem:[%s210 + $0x18] sm:$0xe]
        %v914 = vld [vmem:[%s210 + $0x1c] sm:$0xf]
        %v915 = vld [vmem:[%s210 + $0x20] sm:$0x1]
        %v916 = vld [vmem:[%s210 + $0x24] sm:$0xe]
        %v917 = vld [vmem:[%s210 + $0x28] sm:$0xf]
        %v918 = vld [vmem:[%s210 + $0x2c] sm:$0x1]
        %v919 = vld [vmem:[%s210 + $0x30] sm:$0xe]
        %v920 = vld [vmem:[%s210 + $0x34] sm:$0xf]
        %v921 = vld [vmem:[%s210 + $0x38] sm:$0x1]
        %v922 = vld [vmem:[%s210 + $0x3c] sm:$0xe]
        %v923 = vld [vmem:[%s210 + $0x40] sm:$0xf]
        %v924 = vld [vmem:[%s210 + $0x44] sm:$0x1]
        %v925 = vld [vmem:[%s210 + $0x48] sm:$0xe]
        %v926 = vld [vmem:[%s210 + $0x4c] sm:$0xf]
        %v927 = vld [vmem:[%s210 + $0x50] sm:$0x1]
        %v928 = vld [vmem:[%s210 + $0x54] sm:$0xe]
        %v929 = vld [vmem:[%s210 + $0x58] sm:$0xf]
        %v930 = vld [vmem:[%s210 + $0x5c] sm:$0x1]
        %v931 = vld [vmem:[%s210 + $0x60] sm:$0xe]
        %v932 = vld [vmem:[%s210 + $0x64] sm:$0xf]
        %v933 = vld [vmem:[%s210 + $0x68] sm:$0x1]
        %v934 = vld [vmem:[%s210 + $0x6c] sm:$0xe]
        %v935 = vld [vmem:[%s210 + $0x70] sm:$0xf]
        %v936 = vld [vmem:[%s210 + $0x74] sm:$0x1]
        %v937 = vld [vmem:[%s210 + $0x78] sm:$0xe]
        %v938 = vld [vmem:[%s210 + $0x7c] sm:$0xf]
        %v939 = vld [vmem:[%s210 + $0x80] sm:$0x1]
        %v940 = vld [vmem:[%s210 + $0x84] sm:$0xe]
        %v941 = vld [vmem:[%s210 + $0x88] sm:$0xf]
        %v942 = vld [vmem:[%s210 + $0x8c] sm:$0x1]
        %v943 = vld [vmem:[%s210 + $0x90] sm:$0xe]
        %v944 = vld [vmem:[%s210 + $0x94] sm:$0xf]
        %v945 = vld [vmem:[%s210 + $0x98] sm:$0x1]
        %v946 = vld [vmem:[%s210 + $0x9c] sm:$0xe]
        %v947 = vld [vmem:[%s210 + $0xa0] sm:$0xf]
        %v948 = vld [vmem:[%s210 + $0xa4] sm:$0x1]
        %v949 = vld [vmem:[%s210 + $0xa8] sm:$0xe]
        %v950 = vld [vmem:[%s210 + $0xac] sm:$0xf]
        %v951 = vld [vmem:[%s210 + $0xb0] sm:$0x1]
        %v952 = vld [vmem:[%s210 + $0xb4] sm:$0xe]
        %v953 = vld [vmem:[%s210 + $0xb8] sm:$0xf]
        %v954 = vld [vmem:[%s210 + $0xbc] sm:$0x1]
        %vm1003 = vcmask 1042432
        %vm1004 = vcmask 1046532
        %vm1005 = vmor %vm1003, %vm1004
        %v1006 = vrot.slane %v907, 5
        %v1007 = vrot.slane %v1006, 4
        %v1008 = vrot.slane %v908, 5
        %v1009 = vsel %vm1005, %v1007, %v1008
        %v1010 = vrot.slane %v1008, 4
        %v1011 = vrot.slane %v909, 5
        %v1012 = vsel %vm1005, %v1010, %v1011
        %v1013 = vrot.slane %v910, 5
        %v1014 = vrot.slane %v1013, 4
        %v1015 = vrot.slane %v911, 5
        %v1016 = vsel %vm1005, %v1014, %v1015
        %v1017 = vrot.slane %v1015, 4
        %v1018 = vrot.slane %v912, 5
        %v1019 = vsel %vm1005, %v1017, %v1018
        %v1020 = vrot.slane %v913, 5
        %v1021 = vrot.slane %v1020, 4
        %v1022 = vrot.slane %v914, 5
        %v1023 = vsel %vm1005, %v1021, %v1022
        %v1024 = vrot.slane %v1022, 4
        %v1025 = vrot.slane %v915, 5
        %v1026 = vsel %vm1005, %v1024, %v1025
        %v1027 = vrot.slane %v916, 5
        %v1028 = vrot.slane %v1027, 4
        %v1029 = vrot.slane %v917, 5
        %v1030 = vsel %vm1005, %v1028, %v1029
        %v1031 = vrot.slane %v1029, 4
        %v1032 = vrot.slane %v918, 5
        %v1033 = vsel %vm1005, %v1031, %v1032
        %v1034 = vrot.slane %v919, 5
        %v1035 = vrot.slane %v1034, 4
        %v1036 = vrot.slane %v920, 5
        %v1037 = vsel %vm1005, %v1035, %v1036
        %v1038 = vrot.slane %v1036, 4
        %v1039 = vrot.slane %v921, 5
        %v1040 = vsel %vm1005, %v1038, %v1039
        %v1041 = vrot.slane %v922, 5
        %v1042 = vrot.slane %v1041, 4
        %v1043 = vrot.slane %v923, 5
        %v1044 = vsel %vm1005, %v1042, %v1043
        %v1045 = vrot.slane %v1043, 4
        %v1046 = vrot.slane %v924, 5
        %v1047 = vsel %vm1005, %v1045, %v1046
        %v1048 = vrot.slane %v925, 5
        %v1049 = vrot.slane %v1048, 4
        %v1050 = vrot.slane %v926, 5
        %v1051 = vsel %vm1005, %v1049, %v1050
        %v1052 = vrot.slane %v1050, 4
        %v1053 = vrot.slane %v927, 5
        %v1054 = vsel %vm1005, %v1052, %v1053
        %v1055 = vrot.slane %v928, 5
        %v1056 = vrot.slane %v1055, 4
        %v1057 = vrot.slane %v929, 5
        %v1058 = vsel %vm1005, %v1056, %v1057
        %v1059 = vrot.slane %v1057, 4
        %v1060 = vrot.slane %v930, 5
        %v1061 = vsel %vm1005, %v1059, %v1060
        %v1062 = vrot.slane %v931, 5
        %v1063 = vrot.slane %v1062, 4
        %v1064 = vrot.slane %v932, 5
        %v1065 = vsel %vm1005, %v1063, %v1064
        %v1066 = vrot.slane %v1064, 4
        %v1067 = vrot.slane %v933, 5
        %v1068 = vsel %vm1005, %v1066, %v1067
        %v1069 = vrot.slane %v934, 5
        %v1070 = vrot.slane %v1069, 4
        %v1071 = vrot.slane %v935, 5
        %v1072 = vsel %vm1005, %v1070, %v1071
        %v1073 = vrot.slane %v1071, 4
        %v1074 = vrot.slane %v936, 5
        %v1075 = vsel %vm1005, %v1073, %v1074
        %v1076 = vrot.slane %v937, 5
        %v1077 = vrot.slane %v1076, 4
        %v1078 = vrot.slane %v938, 5
        %v1079 = vsel %vm1005, %v1077, %v1078
        %v1080 = vrot.slane %v1078, 4
        %v1081 = vrot.slane %v939, 5
        %v1082 = vsel %vm1005, %v1080, %v1081
        %v1083 = vrot.slane %v940, 5
        %v1084 = vrot.slane %v1083, 4
        %v1085 = vrot.slane %v941, 5
        %v1086 = vsel %vm1005, %v1084, %v1085
        %v1087 = vrot.slane %v1085, 4
        %v1088 = vrot.slane %v942, 5
        %v1089 = vsel %vm1005, %v1087, %v1088
        %v1090 = vrot.slane %v943, 5
        %v1091 = vrot.slane %v1090, 4
        %v1092 = vrot.slane %v944, 5
        %v1093 = vsel %vm1005, %v1091, %v1092
        %v1094 = vrot.slane %v1092, 4
        %v1095 = vrot.slane %v945, 5
        %v1096 = vsel %vm1005, %v1094, %v1095
        %v1097 = vrot.slane %v946, 5
        %v1098 = vrot.slane %v1097, 4
        %v1099 = vrot.slane %v947, 5
        %v1100 = vsel %vm1005, %v1098, %v1099
        %v1101 = vrot.slane %v1099, 4
        %v1102 = vrot.slane %v948, 5
        %v1103 = vsel %vm1005, %v1101, %v1102
        %v1104 = vrot.slane %v949, 5
        %v1105 = vrot.slane %v1104, 4
        %v1106 = vrot.slane %v950, 5
        %v1107 = vsel %vm1005, %v1105, %v1106
        %v1108 = vrot.slane %v1106, 4
        %v1109 = vrot.slane %v951, 5
        %v1110 = vsel %vm1005, %v1108, %v1109
        %v1111 = vrot.slane %v952, 5
        %v1112 = vrot.slane %v1111, 4
        %v1113 = vrot.slane %v953, 5
        %v1114 = vsel %vm1005, %v1112, %v1113
        %v1115 = vrot.slane %v1113, 4
        %v1116 = vrot.slane %v954, 5
        %v1117 = vsel %vm1005, %v1115, %v1116
        %v1118 = vunpack.c.l.b16 %v1009
        %v1119 = vunpack.c.l.b16 %v1012
        %v1120 = vunpack.c.l.b16 %v1016
        %v1121 = vunpack.c.l.b16 %v1019
        %v1122 = vunpack.c.l.b16 %v1023
        %v1123 = vunpack.c.l.b16 %v1026
        %v1124 = vunpack.c.l.b16 %v1030
        %v1125 = vunpack.c.l.b16 %v1033
        %v1126 = vunpack.c.l.b16 %v1037
        %v1127 = vunpack.c.l.b16 %v1040
        %v1128 = vunpack.c.l.b16 %v1044
        %v1129 = vunpack.c.l.b16 %v1047
        %v1130 = vunpack.c.l.b16 %v1051
        %v1131 = vunpack.c.l.b16 %v1054
        %v1132 = vunpack.c.l.b16 %v1058
        %v1133 = vunpack.c.l.b16 %v1061
        %v1134 = vunpack.c.l.b16 %v1065
        %v1135 = vunpack.c.l.b16 %v1068
        %v1136 = vunpack.c.l.b16 %v1072
        %v1137 = vunpack.c.l.b16 %v1075
        %v1138 = vunpack.c.l.b16 %v1079
        %v1139 = vunpack.c.l.b16 %v1082
        %v1140 = vunpack.c.l.b16 %v1086
        %v1141 = vunpack.c.l.b16 %v1089
        %v1142 = vunpack.c.l.b16 %v1093
        %v1143 = vunpack.c.l.b16 %v1096
        %v1144 = vunpack.c.l.b16 %v1100
        %v1145 = vunpack.c.l.b16 %v1103
        %v1146 = vunpack.c.l.b16 %v1107
        %v1147 = vunpack.c.l.b16 %v1110
        %v1148 = vunpack.c.l.b16 %v1114
        %v1149 = vunpack.c.l.b16 %v1117
        %v1150 = vpack.c.b16 %v1119, %v1118
        %v1151 = vpack.c.b16 %v1121, %v1120
        %v1152 = vpack.c.b16 %v1123, %v1122
        %v1153 = vpack.c.b16 %v1125, %v1124
        %v1154 = vpack.c.b16 %v1127, %v1126
        %v1155 = vpack.c.b16 %v1129, %v1128
        %v1156 = vpack.c.b16 %v1131, %v1130
        %v1157 = vpack.c.b16 %v1133, %v1132
        %v1158 = vpack.c.b16 %v1135, %v1134
        %v1159 = vpack.c.b16 %v1137, %v1136
        %v1160 = vpack.c.b16 %v1139, %v1138
        %v1161 = vpack.c.b16 %v1141, %v1140
        %v1162 = vpack.c.b16 %v1143, %v1142
        %v1163 = vpack.c.b16 %v1145, %v1144
        %v1164 = vpack.c.b16 %v1147, %v1146
        %v1165 = vpack.c.b16 %v1149, %v1148
        %1182 = vst [vmem:[#allocation2 + $0x10] sm:$0xff] %v1150
        %1183 = vst [vmem:[#allocation2 + $0x58] sm:$0xff] %v1151
        %1184 = vst [vmem:[#allocation2 + $0xa0] sm:$0xff] %v1152
        %1185 = vst [vmem:[#allocation2 + $0xe8] sm:$0xff] %v1153
        %1186 = vst [vmem:[#allocation2 + $0x130] sm:$0xff] %v1154
        %1187 = vst [vmem:[#allocation2 + $0x178] sm:$0xff] %v1155
        %1188 = vst [vmem:[#allocation2 + $0x1c0] sm:$0xff] %v1156
        %1189 = vst [vmem:[#allocation2 + $0x208] sm:$0xff] %v1157
        %1190 = vst [vmem:[#allocation2 + $0x250] sm:$0xff] %v1158
        %1191 = vst [vmem:[#allocation2 + $0x298] sm:$0xff] %v1159
        %1192 = vst [vmem:[#allocation2 + $0x2e0] sm:$0xff] %v1160
        %1193 = vst [vmem:[#allocation2 + $0x328] sm:$0xff] %v1161
        %1194 = vst [vmem:[#allocation2 + $0x370] sm:$0xff] %v1162
        %1195 = vst [vmem:[#allocation2 + $0x3b8] sm:$0xff] %v1163
        %1196 = vst [vmem:[#allocation2 + $0x400] sm:$0xff] %v1164
        %1197 = vst [vmem:[#allocation2 + $0x448] sm:$0xff] %v1165
        %s1198 = scalar_lea.vmem %s210, 12 [#allocation3]
        %v1199 = vld [vmem:[%s1198] sm:$0xf]
        %v1200 = vld [vmem:[%s1198 + $0x4] sm:$0xf]
        %v1201 = vld [vmem:[%s1198 + $0xc] sm:$0xf]
        %v1202 = vld [vmem:[%s1198 + $0x10] sm:$0xf]
        %v1203 = vld [vmem:[%s1198 + $0x18] sm:$0xf]
        %v1204 = vld [vmem:[%s1198 + $0x1c] sm:$0xf]
        %v1205 = vld [vmem:[%s1198 + $0x24] sm:$0xf]
        %v1206 = vld [vmem:[%s1198 + $0x28] sm:$0xf]
        %v1207 = vld [vmem:[%s1198 + $0x30] sm:$0xf]
        %v1208 = vld [vmem:[%s1198 + $0x34] sm:$0xf]
        %v1209 = vld [vmem:[%s1198 + $0x3c] sm:$0xf]
        %v1210 = vld [vmem:[%s1198 + $0x40] sm:$0xf]
        %v1211 = vld [vmem:[%s1198 + $0x48] sm:$0xf]
        %v1212 = vld [vmem:[%s1198 + $0x4c] sm:$0xf]
        %v1213 = vld [vmem:[%s1198 + $0x54] sm:$0xf]
        %v1214 = vld [vmem:[%s1198 + $0x58] sm:$0xf]
        %v1215 = vld [vmem:[%s1198 + $0x60] sm:$0xf]
        %v1216 = vld [vmem:[%s1198 + $0x64] sm:$0xf]
        %v1217 = vld [vmem:[%s1198 + $0x6c] sm:$0xf]
        %v1218 = vld [vmem:[%s1198 + $0x70] sm:$0xf]
        %v1219 = vld [vmem:[%s1198 + $0x78] sm:$0xf]
        %v1220 = vld [vmem:[%s1198 + $0x7c] sm:$0xf]
        %v1221 = vld [vmem:[%s1198 + $0x84] sm:$0xf]
        %v1222 = vld [vmem:[%s1198 + $0x88] sm:$0xf]
        %v1223 = vld [vmem:[%s1198 + $0x90] sm:$0xf]
        %v1224 = vld [vmem:[%s1198 + $0x94] sm:$0xf]
        %v1225 = vld [vmem:[%s1198 + $0x9c] sm:$0xf]
        %v1226 = vld [vmem:[%s1198 + $0xa0] sm:$0xf]
        %v1227 = vld [vmem:[%s1198 + $0xa8] sm:$0xf]
        %v1228 = vld [vmem:[%s1198 + $0xac] sm:$0xf]
        %v1229 = vld [vmem:[%s1198 + $0xb4] sm:$0xf]
        %v1230 = vld [vmem:[%s1198 + $0xb8] sm:$0xf]
        %v1263 = vunpack.c.l.b16 %v1199
        %v1264 = vunpack.c.l.b16 %v1200
        %v1265 = vunpack.c.l.b16 %v1201
        %v1266 = vunpack.c.l.b16 %v1202
        %v1267 = vunpack.c.l.b16 %v1203
        %v1268 = vunpack.c.l.b16 %v1204
        %v1269 = vunpack.c.l.b16 %v1205
        %v1270 = vunpack.c.l.b16 %v1206
        %v1271 = vunpack.c.l.b16 %v1207
        %v1272 = vunpack.c.l.b16 %v1208
        %v1273 = vunpack.c.l.b16 %v1209
        %v1274 = vunpack.c.l.b16 %v1210
        %v1275 = vunpack.c.l.b16 %v1211
        %v1276 = vunpack.c.l.b16 %v1212
        %v1277 = vunpack.c.l.b16 %v1213
        %v1278 = vunpack.c.l.b16 %v1214
        %v1279 = vunpack.c.l.b16 %v1215
        %v1280 = vunpack.c.l.b16 %v1216
        %v1281 = vunpack.c.l.b16 %v1217
        %v1282 = vunpack.c.l.b16 %v1218
        %v1283 = vunpack.c.l.b16 %v1219
        %v1284 = vunpack.c.l.b16 %v1220
        %v1285 = vunpack.c.l.b16 %v1221
        %v1286 = vunpack.c.l.b16 %v1222
        %v1287 = vunpack.c.l.b16 %v1223
        %v1288 = vunpack.c.l.b16 %v1224
        %v1289 = vunpack.c.l.b16 %v1225
        %v1290 = vunpack.c.l.b16 %v1226
        %v1291 = vunpack.c.l.b16 %v1227
        %v1292 = vunpack.c.l.b16 %v1228
        %v1293 = vunpack.c.l.b16 %v1229
        %v1294 = vunpack.c.l.b16 %v1230
        %v1295 = vpack.c.b16 %v1264, %v1263
        %v1296 = vpack.c.b16 %v1266, %v1265
        %v1297 = vpack.c.b16 %v1268, %v1267
        %v1298 = vpack.c.b16 %v1270, %v1269
        %v1299 = vpack.c.b16 %v1272, %v1271
        %v1300 = vpack.c.b16 %v1274, %v1273
        %v1301 = vpack.c.b16 %v1276, %v1275
        %v1302 = vpack.c.b16 %v1278, %v1277
        %v1303 = vpack.c.b16 %v1280, %v1279
        %v1304 = vpack.c.b16 %v1282, %v1281
        %v1305 = vpack.c.b16 %v1284, %v1283
        %v1306 = vpack.c.b16 %v1286, %v1285
        %v1307 = vpack.c.b16 %v1288, %v1287
        %v1308 = vpack.c.b16 %v1290, %v1289
        %v1309 = vpack.c.b16 %v1292, %v1291
        %v1310 = vpack.c.b16 %v1294, %v1293
        %1327 = vst [vmem:[#allocation2 + $0x18] sm:$0xff] %v1295
        %1328 = vst [vmem:[#allocation2 + $0x60] sm:$0xff] %v1296
        %1329 = vst [vmem:[#allocation2 + $0xa8] sm:$0xff] %v1297
        %1330 = vst [vmem:[#allocation2 + $0xf0] sm:$0xff] %v1298
        %1331 = vst [vmem:[#allocation2 + $0x138] sm:$0xff] %v1299
        %1332 = vst [vmem:[#allocation2 + $0x180] sm:$0xff] %v1300
        %1333 = vst [vmem:[#allocation2 + $0x1c8] sm:$0xff] %v1301
        %1334 = vst [vmem:[#allocation2 + $0x210] sm:$0xff] %v1302
        %1335 = vst [vmem:[#allocation2 + $0x258] sm:$0xff] %v1303
        %1336 = vst [vmem:[#allocation2 + $0x2a0] sm:$0xff] %v1304
        %1337 = vst [vmem:[#allocation2 + $0x2e8] sm:$0xff] %v1305
        %1338 = vst [vmem:[#allocation2 + $0x330] sm:$0xff] %v1306
        %1339 = vst [vmem:[#allocation2 + $0x378] sm:$0xff] %v1307
        %1340 = vst [vmem:[#allocation2 + $0x3c0] sm:$0xff] %v1308
        %1341 = vst [vmem:[#allocation2 + $0x408] sm:$0xff] %v1309
        %1342 = vst [vmem:[#allocation2 + $0x450] sm:$0xff] %v1310
        %v1343 = vld [vmem:[%s1198] sm:$0xf]
        %v1344 = vld [vmem:[%s1198 + $0x4] sm:$0xf]
        %v1345 = vld [vmem:[%s1198 + $0x8] sm:$0x1]
        %v1346 = vld [vmem:[%s1198 + $0xc] sm:$0xf]
        %v1347 = vld [vmem:[%s1198 + $0x10] sm:$0xf]
        %v1348 = vld [vmem:[%s1198 + $0x14] sm:$0x1]
        %v1349 = vld [vmem:[%s1198 + $0x18] sm:$0xf]
        %v1350 = vld [vmem:[%s1198 + $0x1c] sm:$0xf]
        %v1351 = vld [vmem:[%s1198 + $0x20] sm:$0x1]
        %v1352 = vld [vmem:[%s1198 + $0x24] sm:$0xf]
        %v1353 = vld [vmem:[%s1198 + $0x28] sm:$0xf]
        %v1354 = vld [vmem:[%s1198 + $0x2c] sm:$0x1]
        %v1355 = vld [vmem:[%s1198 + $0x30] sm:$0xf]
        %v1356 = vld [vmem:[%s1198 + $0x34] sm:$0xf]
        %v1357 = vld [vmem:[%s1198 + $0x38] sm:$0x1]
        %v1358 = vld [vmem:[%s1198 + $0x3c] sm:$0xf]
        %v1359 = vld [vmem:[%s1198 + $0x40] sm:$0xf]
        %v1360 = vld [vmem:[%s1198 + $0x44] sm:$0x1]
        %v1361 = vld [vmem:[%s1198 + $0x48] sm:$0xf]
        %v1362 = vld [vmem:[%s1198 + $0x4c] sm:$0xf]
        %v1363 = vld [vmem:[%s1198 + $0x50] sm:$0x1]
        %v1364 = vld [vmem:[%s1198 + $0x54] sm:$0xf]
        %v1365 = vld [vmem:[%s1198 + $0x58] sm:$0xf]
        %v1366 = vld [vmem:[%s1198 + $0x5c] sm:$0x1]
        %v1367 = vld [vmem:[%s1198 + $0x60] sm:$0xf]
        %v1368 = vld [vmem:[%s1198 + $0x64] sm:$0xf]
        %v1369 = vld [vmem:[%s1198 + $0x68] sm:$0x1]
        %v1370 = vld [vmem:[%s1198 + $0x6c] sm:$0xf]
        %v1371 = vld [vmem:[%s1198 + $0x70] sm:$0xf]
        %v1372 = vld [vmem:[%s1198 + $0x74] sm:$0x1]
        %v1373 = vld [vmem:[%s1198 + $0x78] sm:$0xf]
        %v1374 = vld [vmem:[%s1198 + $0x7c] sm:$0xf]
        %v1375 = vld [vmem:[%s1198 + $0x80] sm:$0x1]
        %v1376 = vld [vmem:[%s1198 + $0x84] sm:$0xf]
        %v1377 = vld [vmem:[%s1198 + $0x88] sm:$0xf]
        %v1378 = vld [vmem:[%s1198 + $0x8c] sm:$0x1]
        %v1379 = vld [vmem:[%s1198 + $0x90] sm:$0xf]
        %v1380 = vld [vmem:[%s1198 + $0x94] sm:$0xf]
        %v1381 = vld [vmem:[%s1198 + $0x98] sm:$0x1]
        %v1382 = vld [vmem:[%s1198 + $0x9c] sm:$0xf]
        %v1383 = vld [vmem:[%s1198 + $0xa0] sm:$0xf]
        %v1384 = vld [vmem:[%s1198 + $0xa4] sm:$0x1]
        %v1385 = vld [vmem:[%s1198 + $0xa8] sm:$0xf]
        %v1386 = vld [vmem:[%s1198 + $0xac] sm:$0xf]
        %v1387 = vld [vmem:[%s1198 + $0xb0] sm:$0x1]
        %v1388 = vld [vmem:[%s1198 + $0xb4] sm:$0xf]
        %v1389 = vld [vmem:[%s1198 + $0xb8] sm:$0xf]
        %v1390 = vld [vmem:[%s1198 + $0xbc] sm:$0x1]
        %v1392 = vshrl.u32 %v1343, 16
        %v1394 = vrot.slane %v1392, 4
        %v1395 = vshll.u32 %v1343, 16
        %v1397 = vrot.slane %v1395, 5
        %v1398 = vor.u32 %v1394, %v1397
        %v1399 = vrot.slane %v1398, 4
        %v1401 = vshll.u32 %v1344, 16
        %v1403 = vrot.slane %v1401, 5
        %v1404 = vsel %vm442, %v1399, %v1403
        %v1405 = vshrl.u32 %v1344, 16
        %v1407 = vrot.slane %v1405, 4
        %v1408 = vor.u32 %v1407, %v1403
        %v1409 = vrot.slane %v1408, 4
        %v1411 = vshll.u32 %v1345, 16
        %v1413 = vrot.slane %v1411, 5
        %v1414 = vsel %vm442, %v1409, %v1413
        %v1416 = vshrl.u32 %v1346, 16
        %v1418 = vrot.slane %v1416, 4
        %v1419 = vshll.u32 %v1346, 16
        %v1421 = vrot.slane %v1419, 5
        %v1422 = vor.u32 %v1418, %v1421
        %v1423 = vrot.slane %v1422, 4
        %v1425 = vshll.u32 %v1347, 16
        %v1427 = vrot.slane %v1425, 5
        %v1428 = vsel %vm442, %v1423, %v1427
        %v1429 = vshrl.u32 %v1347, 16
        %v1431 = vrot.slane %v1429, 4
        %v1432 = vor.u32 %v1431, %v1427
        %v1433 = vrot.slane %v1432, 4
        %v1435 = vshll.u32 %v1348, 16
        %v1437 = vrot.slane %v1435, 5
        %v1438 = vsel %vm442, %v1433, %v1437
        %v1440 = vshrl.u32 %v1349, 16
        %v1442 = vrot.slane %v1440, 4
        %v1443 = vshll.u32 %v1349, 16
        %v1445 = vrot.slane %v1443, 5
        %v1446 = vor.u32 %v1442, %v1445
        %v1447 = vrot.slane %v1446, 4
        %v1449 = vshll.u32 %v1350, 16
        %v1451 = vrot.slane %v1449, 5
        %v1452 = vsel %vm442, %v1447, %v1451
        %v1453 = vshrl.u32 %v1350, 16
        %v1455 = vrot.slane %v1453, 4
        %v1456 = vor.u32 %v1455, %v1451
        %v1457 = vrot.slane %v1456, 4
        %v1459 = vshll.u32 %v1351, 16
        %v1461 = vrot.slane %v1459, 5
        %v1462 = vsel %vm442, %v1457, %v1461
        %v1464 = vshrl.u32 %v1352, 16
        %v1466 = vrot.slane %v1464, 4
        %v1467 = vshll.u32 %v1352, 16
        %v1469 = vrot.slane %v1467, 5
        %v1470 = vor.u32 %v1466, %v1469
        %v1471 = vrot.slane %v1470, 4
        %v1473 = vshll.u32 %v1353, 16
        %v1475 = vrot.slane %v1473, 5
        %v1476 = vsel %vm442, %v1471, %v1475
        %v1477 = vshrl.u32 %v1353, 16
        %v1479 = vrot.slane %v1477, 4
        %v1480 = vor.u32 %v1479, %v1475
        %v1481 = vrot.slane %v1480, 4
        %v1483 = vshll.u32 %v1354, 16
        %v1485 = vrot.slane %v1483, 5
        %v1486 = vsel %vm442, %v1481, %v1485
        %v1488 = vshrl.u32 %v1355, 16
        %v1490 = vrot.slane %v1488, 4
        %v1491 = vshll.u32 %v1355, 16
        %v1493 = vrot.slane %v1491, 5
        %v1494 = vor.u32 %v1490, %v1493
        %v1495 = vrot.slane %v1494, 4
        %v1497 = vshll.u32 %v1356, 16
        %v1499 = vrot.slane %v1497, 5
        %v1500 = vsel %vm442, %v1495, %v1499
        %v1501 = vshrl.u32 %v1356, 16
        %v1503 = vrot.slane %v1501, 4
        %v1504 = vor.u32 %v1503, %v1499
        %v1505 = vrot.slane %v1504, 4
        %v1507 = vshll.u32 %v1357, 16
        %v1509 = vrot.slane %v1507, 5
        %v1510 = vsel %vm442, %v1505, %v1509
        %v1512 = vshrl.u32 %v1358, 16
        %v1514 = vrot.slane %v1512, 4
        %v1515 = vshll.u32 %v1358, 16
        %v1517 = vrot.slane %v1515, 5
        %v1518 = vor.u32 %v1514, %v1517
        %v1519 = vrot.slane %v1518, 4
        %v1521 = vshll.u32 %v1359, 16
        %v1523 = vrot.slane %v1521, 5
        %v1524 = vsel %vm442, %v1519, %v1523
        %v1525 = vshrl.u32 %v1359, 16
        %v1527 = vrot.slane %v1525, 4
        %v1528 = vor.u32 %v1527, %v1523
        %v1529 = vrot.slane %v1528, 4
        %v1531 = vshll.u32 %v1360, 16
        %v1533 = vrot.slane %v1531, 5
        %v1534 = vsel %vm442, %v1529, %v1533
        %v1536 = vshrl.u32 %v1361, 16
        %v1538 = vrot.slane %v1536, 4
        %v1539 = vshll.u32 %v1361, 16
        %v1541 = vrot.slane %v1539, 5
        %v1542 = vor.u32 %v1538, %v1541
        %v1543 = vrot.slane %v1542, 4
        %v1545 = vshll.u32 %v1362, 16
        %v1547 = vrot.slane %v1545, 5
        %v1548 = vsel %vm442, %v1543, %v1547
        %v1549 = vshrl.u32 %v1362, 16
        %v1551 = vrot.slane %v1549, 4
        %v1552 = vor.u32 %v1551, %v1547
        %v1553 = vrot.slane %v1552, 4
        %v1555 = vshll.u32 %v1363, 16
        %v1557 = vrot.slane %v1555, 5
        %v1558 = vsel %vm442, %v1553, %v1557
        %v1560 = vshrl.u32 %v1364, 16
        %v1562 = vrot.slane %v1560, 4
        %v1563 = vshll.u32 %v1364, 16
        %v1565 = vrot.slane %v1563, 5
        %v1566 = vor.u32 %v1562, %v1565
        %v1567 = vrot.slane %v1566, 4
        %v1569 = vshll.u32 %v1365, 16
        %v1571 = vrot.slane %v1569, 5
        %v1572 = vsel %vm442, %v1567, %v1571
        %v1573 = vshrl.u32 %v1365, 16
        %v1575 = vrot.slane %v1573, 4
        %v1576 = vor.u32 %v1575, %v1571
        %v1577 = vrot.slane %v1576, 4
        %v1579 = vshll.u32 %v1366, 16
        %v1581 = vrot.slane %v1579, 5
        %v1582 = vsel %vm442, %v1577, %v1581
        %v1584 = vshrl.u32 %v1367, 16
        %v1586 = vrot.slane %v1584, 4
        %v1587 = vshll.u32 %v1367, 16
        %v1589 = vrot.slane %v1587, 5
        %v1590 = vor.u32 %v1586, %v1589
        %v1591 = vrot.slane %v1590, 4
        %v1593 = vshll.u32 %v1368, 16
        %v1595 = vrot.slane %v1593, 5
        %v1596 = vsel %vm442, %v1591, %v1595
        %v1597 = vshrl.u32 %v1368, 16
        %v1599 = vrot.slane %v1597, 4
        %v1600 = vor.u32 %v1599, %v1595
        %v1601 = vrot.slane %v1600, 4
        %v1603 = vshll.u32 %v1369, 16
        %v1605 = vrot.slane %v1603, 5
        %v1606 = vsel %vm442, %v1601, %v1605
        %v1608 = vshrl.u32 %v1370, 16
        %v1610 = vrot.slane %v1608, 4
        %v1611 = vshll.u32 %v1370, 16
        %v1613 = vrot.slane %v1611, 5
        %v1614 = vor.u32 %v1610, %v1613
        %v1615 = vrot.slane %v1614, 4
        %v1617 = vshll.u32 %v1371, 16
        %v1619 = vrot.slane %v1617, 5
        %v1620 = vsel %vm442, %v1615, %v1619
        %v1621 = vshrl.u32 %v1371, 16
        %v1623 = vrot.slane %v1621, 4
        %v1624 = vor.u32 %v1623, %v1619
        %v1625 = vrot.slane %v1624, 4
        %v1627 = vshll.u32 %v1372, 16
        %v1629 = vrot.slane %v1627, 5
        %v1630 = vsel %vm442, %v1625, %v1629
        %v1632 = vshrl.u32 %v1373, 16
        %v1634 = vrot.slane %v1632, 4
        %v1635 = vshll.u32 %v1373, 16
        %v1637 = vrot.slane %v1635, 5
        %v1638 = vor.u32 %v1634, %v1637
        %v1639 = vrot.slane %v1638, 4
        %v1641 = vshll.u32 %v1374, 16
        %v1643 = vrot.slane %v1641, 5
        %v1644 = vsel %vm442, %v1639, %v1643
        %v1645 = vshrl.u32 %v1374, 16
        %v1647 = vrot.slane %v1645, 4
        %v1648 = vor.u32 %v1647, %v1643
        %v1649 = vrot.slane %v1648, 4
        %v1651 = vshll.u32 %v1375, 16
        %v1653 = vrot.slane %v1651, 5
        %v1654 = vsel %vm442, %v1649, %v1653
        %v1656 = vshrl.u32 %v1376, 16
        %v1658 = vrot.slane %v1656, 4
        %v1659 = vshll.u32 %v1376, 16
        %v1661 = vrot.slane %v1659, 5
        %v1662 = vor.u32 %v1658, %v1661
        %v1663 = vrot.slane %v1662, 4
        %v1665 = vshll.u32 %v1377, 16
        %v1667 = vrot.slane %v1665, 5
        %v1668 = vsel %vm442, %v1663, %v1667
        %v1669 = vshrl.u32 %v1377, 16
        %v1671 = vrot.slane %v1669, 4
        %v1672 = vor.u32 %v1671, %v1667
        %v1673 = vrot.slane %v1672, 4
        %v1675 = vshll.u32 %v1378, 16
        %v1677 = vrot.slane %v1675, 5
        %v1678 = vsel %vm442, %v1673, %v1677
        %v1680 = vshrl.u32 %v1379, 16
        %v1682 = vrot.slane %v1680, 4
        %v1683 = vshll.u32 %v1379, 16
        %v1685 = vrot.slane %v1683, 5
        %v1686 = vor.u32 %v1682, %v1685
        %v1687 = vrot.slane %v1686, 4
        %v1689 = vshll.u32 %v1380, 16
        %v1691 = vrot.slane %v1689, 5
        %v1692 = vsel %vm442, %v1687, %v1691
        %v1693 = vshrl.u32 %v1380, 16
        %v1695 = vrot.slane %v1693, 4
        %v1696 = vor.u32 %v1695, %v1691
        %v1697 = vrot.slane %v1696, 4
        %v1699 = vshll.u32 %v1381, 16
        %v1701 = vrot.slane %v1699, 5
        %v1702 = vsel %vm442, %v1697, %v1701
        %v1704 = vshrl.u32 %v1382, 16
        %v1706 = vrot.slane %v1704, 4
        %v1707 = vshll.u32 %v1382, 16
        %v1709 = vrot.slane %v1707, 5
        %v1710 = vor.u32 %v1706, %v1709
        %v1711 = vrot.slane %v1710, 4
        %v1713 = vshll.u32 %v1383, 16
        %v1715 = vrot.slane %v1713, 5
        %v1716 = vsel %vm442, %v1711, %v1715
        %v1717 = vshrl.u32 %v1383, 16
        %v1719 = vrot.slane %v1717, 4
        %v1720 = vor.u32 %v1719, %v1715
        %v1721 = vrot.slane %v1720, 4
        %v1723 = vshll.u32 %v1384, 16
        %v1725 = vrot.slane %v1723, 5
        %v1726 = vsel %vm442, %v1721, %v1725
        %v1728 = vshrl.u32 %v1385, 16
        %v1730 = vrot.slane %v1728, 4
        %v1731 = vshll.u32 %v1385, 16
        %v1733 = vrot.slane %v1731, 5
        %v1734 = vor.u32 %v1730, %v1733
        %v1735 = vrot.slane %v1734, 4
        %v1737 = vshll.u32 %v1386, 16
        %v1739 = vrot.slane %v1737, 5
        %v1740 = vsel %vm442, %v1735, %v1739
        %v1741 = vshrl.u32 %v1386, 16
        %v1743 = vrot.slane %v1741, 4
        %v1744 = vor.u32 %v1743, %v1739
        %v1745 = vrot.slane %v1744, 4
        %v1747 = vshll.u32 %v1387, 16
        %v1749 = vrot.slane %v1747, 5
        %v1750 = vsel %vm442, %v1745, %v1749
        %v1752 = vshrl.u32 %v1388, 16
        %v1754 = vrot.slane %v1752, 4
        %v1755 = vshll.u32 %v1388, 16
        %v1757 = vrot.slane %v1755, 5
        %v1758 = vor.u32 %v1754, %v1757
        %v1759 = vrot.slane %v1758, 4
        %v1761 = vshll.u32 %v1389, 16
        %v1763 = vrot.slane %v1761, 5
        %v1764 = vsel %vm442, %v1759, %v1763
        %v1765 = vshrl.u32 %v1389, 16
        %v1767 = vrot.slane %v1765, 4
        %v1768 = vor.u32 %v1767, %v1763
        %v1769 = vrot.slane %v1768, 4
        %v1771 = vshll.u32 %v1390, 16
        %v1773 = vrot.slane %v1771, 5
        %v1774 = vsel %vm442, %v1769, %v1773
        %v1775 = vunpack.c.l.b16 %v1404
        %v1776 = vunpack.c.l.b16 %v1414
        %v1777 = vunpack.c.l.b16 %v1428
        %v1778 = vunpack.c.l.b16 %v1438
        %v1779 = vunpack.c.l.b16 %v1452
        %v1780 = vunpack.c.l.b16 %v1462
        %v1781 = vunpack.c.l.b16 %v1476
        %v1782 = vunpack.c.l.b16 %v1486
        %v1783 = vunpack.c.l.b16 %v1500
        %v1784 = vunpack.c.l.b16 %v1510
        %v1785 = vunpack.c.l.b16 %v1524
        %v1786 = vunpack.c.l.b16 %v1534
        %v1787 = vunpack.c.l.b16 %v1548
        %v1788 = vunpack.c.l.b16 %v1558
        %v1789 = vunpack.c.l.b16 %v1572
        %v1790 = vunpack.c.l.b16 %v1582
        %v1791 = vunpack.c.l.b16 %v1596
        %v1792 = vunpack.c.l.b16 %v1606
        %v1793 = vunpack.c.l.b16 %v1620
        %v1794 = vunpack.c.l.b16 %v1630
        %v1795 = vunpack.c.l.b16 %v1644
        %v1796 = vunpack.c.l.b16 %v1654
        %v1797 = vunpack.c.l.b16 %v1668
        %v1798 = vunpack.c.l.b16 %v1678
        %v1799 = vunpack.c.l.b16 %v1692
        %v1800 = vunpack.c.l.b16 %v1702
        %v1801 = vunpack.c.l.b16 %v1716
        %v1802 = vunpack.c.l.b16 %v1726
        %v1803 = vunpack.c.l.b16 %v1740
        %v1804 = vunpack.c.l.b16 %v1750
        %v1805 = vunpack.c.l.b16 %v1764
        %v1806 = vunpack.c.l.b16 %v1774
        %v1807 = vpack.c.b16 %v1776, %v1775
        %v1808 = vpack.c.b16 %v1778, %v1777
        %v1809 = vpack.c.b16 %v1780, %v1779
        %v1810 = vpack.c.b16 %v1782, %v1781
        %v1811 = vpack.c.b16 %v1784, %v1783
        %v1812 = vpack.c.b16 %v1786, %v1785
        %v1813 = vpack.c.b16 %v1788, %v1787
        %v1814 = vpack.c.b16 %v1790, %v1789
        %v1815 = vpack.c.b16 %v1792, %v1791
        %v1816 = vpack.c.b16 %v1794, %v1793
        %v1817 = vpack.c.b16 %v1796, %v1795
        %v1818 = vpack.c.b16 %v1798, %v1797
        %v1819 = vpack.c.b16 %v1800, %v1799
        %v1820 = vpack.c.b16 %v1802, %v1801
        %v1821 = vpack.c.b16 %v1804, %v1803
        %v1822 = vpack.c.b16 %v1806, %v1805
        %1839 = vst [vmem:[#allocation2 + $0x20] sm:$0xff] %v1807
        %1840 = vst [vmem:[#allocation2 + $0x68] sm:$0xff] %v1808
        %1841 = vst [vmem:[#allocation2 + $0xb0] sm:$0xff] %v1809
        %1842 = vst [vmem:[#allocation2 + $0xf8] sm:$0xff] %v1810
        %1843 = vst [vmem:[#allocation2 + $0x140] sm:$0xff] %v1811
        %1844 = vst [vmem:[#allocation2 + $0x188] sm:$0xff] %v1812
        %1845 = vst [vmem:[#allocation2 + $0x1d0] sm:$0xff] %v1813
        %1846 = vst [vmem:[#allocation2 + $0x218] sm:$0xff] %v1814
        %1847 = vst [vmem:[#allocation2 + $0x260] sm:$0xff] %v1815
        %1848 = vst [vmem:[#allocation2 + $0x2a8] sm:$0xff] %v1816
        %1849 = vst [vmem:[#allocation2 + $0x2f0] sm:$0xff] %v1817
        %1850 = vst [vmem:[#allocation2 + $0x338] sm:$0xff] %v1818
        %1851 = vst [vmem:[#allocation2 + $0x380] sm:$0xff] %v1819
        %1852 = vst [vmem:[#allocation2 + $0x3c8] sm:$0xff] %v1820
        %1853 = vst [vmem:[#allocation2 + $0x410] sm:$0xff] %v1821
        %1854 = vst [vmem:[#allocation2 + $0x458] sm:$0xff] %v1822
        %v1855 = vld [vmem:[%s1198] sm:$0xe]
        %v1856 = vld [vmem:[%s1198 + $0x4] sm:$0xf]
        %v1857 = vld [vmem:[%s1198 + $0x8] sm:$0x1]
        %v1858 = vld [vmem:[%s1198 + $0xc] sm:$0xe]
        %v1859 = vld [vmem:[%s1198 + $0x10] sm:$0xf]
        %v1860 = vld [vmem:[%s1198 + $0x14] sm:$0x1]
        %v1861 = vld [vmem:[%s1198 + $0x18] sm:$0xe]
        %v1862 = vld [vmem:[%s1198 + $0x1c] sm:$0xf]
        %v1863 = vld [vmem:[%s1198 + $0x20] sm:$0x1]
        %v1864 = vld [vmem:[%s1198 + $0x24] sm:$0xe]
        %v1865 = vld [vmem:[%s1198 + $0x28] sm:$0xf]
        %v1866 = vld [vmem:[%s1198 + $0x2c] sm:$0x1]
        %v1867 = vld [vmem:[%s1198 + $0x30] sm:$0xe]
        %v1868 = vld [vmem:[%s1198 + $0x34] sm:$0xf]
        %v1869 = vld [vmem:[%s1198 + $0x38] sm:$0x1]
        %v1870 = vld [vmem:[%s1198 + $0x3c] sm:$0xe]
        %v1871 = vld [vmem:[%s1198 + $0x40] sm:$0xf]
        %v1872 = vld [vmem:[%s1198 + $0x44] sm:$0x1]
        %v1873 = vld [vmem:[%s1198 + $0x48] sm:$0xe]
        %v1874 = vld [vmem:[%s1198 + $0x4c] sm:$0xf]
        %v1875 = vld [vmem:[%s1198 + $0x50] sm:$0x1]
        %v1876 = vld [vmem:[%s1198 + $0x54] sm:$0xe]
        %v1877 = vld [vmem:[%s1198 + $0x58] sm:$0xf]
        %v1878 = vld [vmem:[%s1198 + $0x5c] sm:$0x1]
        %v1879 = vld [vmem:[%s1198 + $0x60] sm:$0xe]
        %v1880 = vld [vmem:[%s1198 + $0x64] sm:$0xf]
        %v1881 = vld [vmem:[%s1198 + $0x68] sm:$0x1]
        %v1882 = vld [vmem:[%s1198 + $0x6c] sm:$0xe]
        %v1883 = vld [vmem:[%s1198 + $0x70] sm:$0xf]
        %v1884 = vld [vmem:[%s1198 + $0x74] sm:$0x1]
        %v1885 = vld [vmem:[%s1198 + $0x78] sm:$0xe]
        %v1886 = vld [vmem:[%s1198 + $0x7c] sm:$0xf]
        %v1887 = vld [vmem:[%s1198 + $0x80] sm:$0x1]
        %v1888 = vld [vmem:[%s1198 + $0x84] sm:$0xe]
        %v1889 = vld [vmem:[%s1198 + $0x88] sm:$0xf]
        %v1890 = vld [vmem:[%s1198 + $0x8c] sm:$0x1]
        %v1891 = vld [vmem:[%s1198 + $0x90] sm:$0xe]
        %v1892 = vld [vmem:[%s1198 + $0x94] sm:$0xf]
        %v1893 = vld [vmem:[%s1198 + $0x98] sm:$0x1]
        %v1894 = vld [vmem:[%s1198 + $0x9c] sm:$0xe]
        %v1895 = vld [vmem:[%s1198 + $0xa0] sm:$0xf]
        %v1896 = vld [vmem:[%s1198 + $0xa4] sm:$0x1]
        %v1897 = vld [vmem:[%s1198 + $0xa8] sm:$0xe]
        %v1898 = vld [vmem:[%s1198 + $0xac] sm:$0xf]
        %v1899 = vld [vmem:[%s1198 + $0xb0] sm:$0x1]
        %v1900 = vld [vmem:[%s1198 + $0xb4] sm:$0xe]
        %v1901 = vld [vmem:[%s1198 + $0xb8] sm:$0xf]
        %v1902 = vld [vmem:[%s1198 + $0xbc] sm:$0x1]
        %v1951 = vrot.slane %v1855, 5
        %v1952 = vrot.slane %v1951, 4
        %v1953 = vrot.slane %v1856, 5
        %v1954 = vsel %vm1005, %v1952, %v1953
        %v1955 = vrot.slane %v1953, 4
        %v1956 = vrot.slane %v1857, 5
        %v1957 = vsel %vm1005, %v1955, %v1956
        %v1958 = vrot.slane %v1858, 5
        %v1959 = vrot.slane %v1958, 4
        %v1960 = vrot.slane %v1859, 5
        %v1961 = vsel %vm1005, %v1959, %v1960
        %v1962 = vrot.slane %v1960, 4
        %v1963 = vrot.slane %v1860, 5
        %v1964 = vsel %vm1005, %v1962, %v1963
        %v1965 = vrot.slane %v1861, 5
        %v1966 = vrot.slane %v1965, 4
        %v1967 = vrot.slane %v1862, 5
        %v1968 = vsel %vm1005, %v1966, %v1967
        %v1969 = vrot.slane %v1967, 4
        %v1970 = vrot.slane %v1863, 5
        %v1971 = vsel %vm1005, %v1969, %v1970
        %v1972 = vrot.slane %v1864, 5
        %v1973 = vrot.slane %v1972, 4
        %v1974 = vrot.slane %v1865, 5
        %v1975 = vsel %vm1005, %v1973, %v1974
        %v1976 = vrot.slane %v1974, 4
        %v1977 = vrot.slane %v1866, 5
        %v1978 = vsel %vm1005, %v1976, %v1977
        %v1979 = vrot.slane %v1867, 5
        %v1980 = vrot.slane %v1979, 4
        %v1981 = vrot.slane %v1868, 5
        %v1982 = vsel %vm1005, %v1980, %v1981
        %v1983 = vrot.slane %v1981, 4
        %v1984 = vrot.slane %v1869, 5
        %v1985 = vsel %vm1005, %v1983, %v1984
        %v1986 = vrot.slane %v1870, 5
        %v1987 = vrot.slane %v1986, 4
        %v1988 = vrot.slane %v1871, 5
        %v1989 = vsel %vm1005, %v1987, %v1988
        %v1990 = vrot.slane %v1988, 4
        %v1991 = vrot.slane %v1872, 5
        %v1992 = vsel %vm1005, %v1990, %v1991
        %v1993 = vrot.slane %v1873, 5
        %v1994 = vrot.slane %v1993, 4
        %v1995 = vrot.slane %v1874, 5
        %v1996 = vsel %vm1005, %v1994, %v1995
        %v1997 = vrot.slane %v1995, 4
        %v1998 = vrot.slane %v1875, 5
        %v1999 = vsel %vm1005, %v1997, %v1998
        %v2000 = vrot.slane %v1876, 5
        %v2001 = vrot.slane %v2000, 4
        %v2002 = vrot.slane %v1877, 5
        %v2003 = vsel %vm1005, %v2001, %v2002
        %v2004 = vrot.slane %v2002, 4
        %v2005 = vrot.slane %v1878, 5
        %v2006 = vsel %vm1005, %v2004, %v2005
        %v2007 = vrot.slane %v1879, 5
        %v2008 = vrot.slane %v2007, 4
        %v2009 = vrot.slane %v1880, 5
        %v2010 = vsel %vm1005, %v2008, %v2009
        %v2011 = vrot.slane %v2009, 4
        %v2012 = vrot.slane %v1881, 5
        %v2013 = vsel %vm1005, %v2011, %v2012
        %v2014 = vrot.slane %v1882, 5
        %v2015 = vrot.slane %v2014, 4
        %v2016 = vrot.slane %v1883, 5
        %v2017 = vsel %vm1005, %v2015, %v2016
        %v2018 = vrot.slane %v2016, 4
        %v2019 = vrot.slane %v1884, 5
        %v2020 = vsel %vm1005, %v2018, %v2019
        %v2021 = vrot.slane %v1885, 5
        %v2022 = vrot.slane %v2021, 4
        %v2023 = vrot.slane %v1886, 5
        %v2024 = vsel %vm1005, %v2022, %v2023
        %v2025 = vrot.slane %v2023, 4
        %v2026 = vrot.slane %v1887, 5
        %v2027 = vsel %vm1005, %v2025, %v2026
        %v2028 = vrot.slane %v1888, 5
        %v2029 = vrot.slane %v2028, 4
        %v2030 = vrot.slane %v1889, 5
        %v2031 = vsel %vm1005, %v2029, %v2030
        %v2032 = vrot.slane %v2030, 4
        %v2033 = vrot.slane %v1890, 5
        %v2034 = vsel %vm1005, %v2032, %v2033
        %v2035 = vrot.slane %v1891, 5
        %v2036 = vrot.slane %v2035, 4
        %v2037 = vrot.slane %v1892, 5
        %v2038 = vsel %vm1005, %v2036, %v2037
        %v2039 = vrot.slane %v2037, 4
        %v2040 = vrot.slane %v1893, 5
        %v2041 = vsel %vm1005, %v2039, %v2040
        %v2042 = vrot.slane %v1894, 5
        %v2043 = vrot.slane %v2042, 4
        %v2044 = vrot.slane %v1895, 5
        %v2045 = vsel %vm1005, %v2043, %v2044
        %v2046 = vrot.slane %v2044, 4
        %v2047 = vrot.slane %v1896, 5
        %v2048 = vsel %vm1005, %v2046, %v2047
        %v2049 = vrot.slane %v1897, 5
        %v2050 = vrot.slane %v2049, 4
        %v2051 = vrot.slane %v1898, 5
        %v2052 = vsel %vm1005, %v2050, %v2051
        %v2053 = vrot.slane %v2051, 4
        %v2054 = vrot.slane %v1899, 5
        %v2055 = vsel %vm1005, %v2053, %v2054
        %v2056 = vrot.slane %v1900, 5
        %v2057 = vrot.slane %v2056, 4
        %v2058 = vrot.slane %v1901, 5
        %v2059 = vsel %vm1005, %v2057, %v2058
        %v2060 = vrot.slane %v2058, 4
        %v2061 = vrot.slane %v1902, 5
        %v2062 = vsel %vm1005, %v2060, %v2061
        %v2063 = vunpack.c.l.b16 %v1954
        %v2064 = vunpack.c.l.b16 %v1957
        %v2065 = vunpack.c.l.b16 %v1961
        %v2066 = vunpack.c.l.b16 %v1964
        %v2067 = vunpack.c.l.b16 %v1968
        %v2068 = vunpack.c.l.b16 %v1971
        %v2069 = vunpack.c.l.b16 %v1975
        %v2070 = vunpack.c.l.b16 %v1978
        %v2071 = vunpack.c.l.b16 %v1982
        %v2072 = vunpack.c.l.b16 %v1985
        %v2073 = vunpack.c.l.b16 %v1989
        %v2074 = vunpack.c.l.b16 %v1992
        %v2075 = vunpack.c.l.b16 %v1996
        %v2076 = vunpack.c.l.b16 %v1999
        %v2077 = vunpack.c.l.b16 %v2003
        %v2078 = vunpack.c.l.b16 %v2006
        %v2079 = vunpack.c.l.b16 %v2010
        %v2080 = vunpack.c.l.b16 %v2013
        %v2081 = vunpack.c.l.b16 %v2017
        %v2082 = vunpack.c.l.b16 %v2020
        %v2083 = vunpack.c.l.b16 %v2024
        %v2084 = vunpack.c.l.b16 %v2027
        %v2085 = vunpack.c.l.b16 %v2031
        %v2086 = vunpack.c.l.b16 %v2034
        %v2087 = vunpack.c.l.b16 %v2038
        %v2088 = vunpack.c.l.b16 %v2041
        %v2089 = vunpack.c.l.b16 %v2045
        %v2090 = vunpack.c.l.b16 %v2048
        %v2091 = vunpack.c.l.b16 %v2052
        %v2092 = vunpack.c.l.b16 %v2055
        %v2093 = vunpack.c.l.b16 %v2059
        %v2094 = vunpack.c.l.b16 %v2062
        %v2095 = vpack.c.b16 %v2064, %v2063
        %v2096 = vpack.c.b16 %v2066, %v2065
        %v2097 = vpack.c.b16 %v2068, %v2067
        %v2098 = vpack.c.b16 %v2070, %v2069
        %v2099 = vpack.c.b16 %v2072, %v2071
        %v2100 = vpack.c.b16 %v2074, %v2073
        %v2101 = vpack.c.b16 %v2076, %v2075
        %v2102 = vpack.c.b16 %v2078, %v2077
        %v2103 = vpack.c.b16 %v2080, %v2079
        %v2104 = vpack.c.b16 %v2082, %v2081
        %v2105 = vpack.c.b16 %v2084, %v2083
        %v2106 = vpack.c.b16 %v2086, %v2085
        %v2107 = vpack.c.b16 %v2088, %v2087
        %v2108 = vpack.c.b16 %v2090, %v2089
        %v2109 = vpack.c.b16 %v2092, %v2091
        %v2110 = vpack.c.b16 %v2094, %v2093
        %2127 = vst [vmem:[#allocation2 + $0x28] sm:$0xff] %v2095
        %2128 = vst [vmem:[#allocation2 + $0x70] sm:$0xff] %v2096
        %2129 = vst [vmem:[#allocation2 + $0xb8] sm:$0xff] %v2097
        %2130 = vst [vmem:[#allocation2 + $0x100] sm:$0xff] %v2098
        %2131 = vst [vmem:[#allocation2 + $0x148] sm:$0xff] %v2099
        %2132 = vst [vmem:[#allocation2 + $0x190] sm:$0xff] %v2100
        %2133 = vst [vmem:[#allocation2 + $0x1d8] sm:$0xff] %v2101
        %2134 = vst [vmem:[#allocation2 + $0x220] sm:$0xff] %v2102
        %2135 = vst [vmem:[#allocation2 + $0x268] sm:$0xff] %v2103
        %2136 = vst [vmem:[#allocation2 + $0x2b0] sm:$0xff] %v2104
        %2137 = vst [vmem:[#allocation2 + $0x2f8] sm:$0xff] %v2105
        %2138 = vst [vmem:[#allocation2 + $0x340] sm:$0xff] %v2106
        %2139 = vst [vmem:[#allocation2 + $0x388] sm:$0xff] %v2107
        %2140 = vst [vmem:[#allocation2 + $0x3d0] sm:$0xff] %v2108
        %2141 = vst [vmem:[#allocation2 + $0x418] sm:$0xff] %v2109
        %2142 = vst [vmem:[#allocation2 + $0x460] sm:$0xff] %v2110
        %s2143 = scalar_lea.vmem %s210, 24 [#allocation3]
        %v2144 = vld [vmem:[%s2143] sm:$0xf]
        %v2145 = vld [vmem:[%s2143 + $0x4] sm:$0xf]
        %v2146 = vld [vmem:[%s2143 + $0xc] sm:$0xf]
        %v2147 = vld [vmem:[%s2143 + $0x10] sm:$0xf]
        %v2148 = vld [vmem:[%s2143 + $0x18] sm:$0xf]
        %v2149 = vld [vmem:[%s2143 + $0x1c] sm:$0xf]
        %v2150 = vld [vmem:[%s2143 + $0x24] sm:$0xf]
        %v2151 = vld [vmem:[%s2143 + $0x28] sm:$0xf]
        %v2152 = vld [vmem:[%s2143 + $0x30] sm:$0xf]
        %v2153 = vld [vmem:[%s2143 + $0x34] sm:$0xf]
        %v2154 = vld [vmem:[%s2143 + $0x3c] sm:$0xf]
        %v2155 = vld [vmem:[%s2143 + $0x40] sm:$0xf]
        %v2156 = vld [vmem:[%s2143 + $0x48] sm:$0xf]
        %v2157 = vld [vmem:[%s2143 + $0x4c] sm:$0xf]
        %v2158 = vld [vmem:[%s2143 + $0x54] sm:$0xf]
        %v2159 = vld [vmem:[%s2143 + $0x58] sm:$0xf]
        %v2160 = vld [vmem:[%s2143 + $0x60] sm:$0xf]
        %v2161 = vld [vmem:[%s2143 + $0x64] sm:$0xf]
        %v2162 = vld [vmem:[%s2143 + $0x6c] sm:$0xf]
        %v2163 = vld [vmem:[%s2143 + $0x70] sm:$0xf]
        %v2164 = vld [vmem:[%s2143 + $0x78] sm:$0xf]
        %v2165 = vld [vmem:[%s2143 + $0x7c] sm:$0xf]
        %v2166 = vld [vmem:[%s2143 + $0x84] sm:$0xf]
        %v2167 = vld [vmem:[%s2143 + $0x88] sm:$0xf]
        %v2168 = vld [vmem:[%s2143 + $0x90] sm:$0xf]
        %v2169 = vld [vmem:[%s2143 + $0x94] sm:$0xf]
        %v2170 = vld [vmem:[%s2143 + $0x9c] sm:$0xf]
        %v2171 = vld [vmem:[%s2143 + $0xa0] sm:$0xf]
        %v2172 = vld [vmem:[%s2143 + $0xa8] sm:$0xf]
        %v2173 = vld [vmem:[%s2143 + $0xac] sm:$0xf]
        %v2174 = vld [vmem:[%s2143 + $0xb4] sm:$0xf]
        %v2175 = vld [vmem:[%s2143 + $0xb8] sm:$0xf]
        %v2208 = vunpack.c.l.b16 %v2144
        %v2209 = vunpack.c.l.b16 %v2145
        %v2210 = vunpack.c.l.b16 %v2146
        %v2211 = vunpack.c.l.b16 %v2147
        %v2212 = vunpack.c.l.b16 %v2148
        %v2213 = vunpack.c.l.b16 %v2149
        %v2214 = vunpack.c.l.b16 %v2150
        %v2215 = vunpack.c.l.b16 %v2151
        %v2216 = vunpack.c.l.b16 %v2152
        %v2217 = vunpack.c.l.b16 %v2153
        %v2218 = vunpack.c.l.b16 %v2154
        %v2219 = vunpack.c.l.b16 %v2155
        %v2220 = vunpack.c.l.b16 %v2156
        %v2221 = vunpack.c.l.b16 %v2157
        %v2222 = vunpack.c.l.b16 %v2158
        %v2223 = vunpack.c.l.b16 %v2159
        %v2224 = vunpack.c.l.b16 %v2160
        %v2225 = vunpack.c.l.b16 %v2161
        %v2226 = vunpack.c.l.b16 %v2162
        %v2227 = vunpack.c.l.b16 %v2163
        %v2228 = vunpack.c.l.b16 %v2164
        %v2229 = vunpack.c.l.b16 %v2165
        %v2230 = vunpack.c.l.b16 %v2166
        %v2231 = vunpack.c.l.b16 %v2167
        %v2232 = vunpack.c.l.b16 %v2168
        %v2233 = vunpack.c.l.b16 %v2169
        %v2234 = vunpack.c.l.b16 %v2170
        %v2235 = vunpack.c.l.b16 %v2171
        %v2236 = vunpack.c.l.b16 %v2172
        %v2237 = vunpack.c.l.b16 %v2173
        %v2238 = vunpack.c.l.b16 %v2174
        %v2239 = vunpack.c.l.b16 %v2175
        %v2240 = vpack.c.b16 %v2209, %v2208
        %v2241 = vpack.c.b16 %v2211, %v2210
        %v2242 = vpack.c.b16 %v2213, %v2212
        %v2243 = vpack.c.b16 %v2215, %v2214
        %v2244 = vpack.c.b16 %v2217, %v2216
        %v2245 = vpack.c.b16 %v2219, %v2218
        %v2246 = vpack.c.b16 %v2221, %v2220
        %v2247 = vpack.c.b16 %v2223, %v2222
        %v2248 = vpack.c.b16 %v2225, %v2224
        %v2249 = vpack.c.b16 %v2227, %v2226
        %v2250 = vpack.c.b16 %v2229, %v2228
        %v2251 = vpack.c.b16 %v2231, %v2230
        %v2252 = vpack.c.b16 %v2233, %v2232
        %v2253 = vpack.c.b16 %v2235, %v2234
        %v2254 = vpack.c.b16 %v2237, %v2236
        %v2255 = vpack.c.b16 %v2239, %v2238
        %2272 = vst [vmem:[#allocation2 + $0x30] sm:$0xff] %v2240
        %2273 = vst [vmem:[#allocation2 + $0x78] sm:$0xff] %v2241
        %2274 = vst [vmem:[#allocation2 + $0xc0] sm:$0xff] %v2242
        %2275 = vst [vmem:[#allocation2 + $0x108] sm:$0xff] %v2243
        %2276 = vst [vmem:[#allocation2 + $0x150] sm:$0xff] %v2244
        %2277 = vst [vmem:[#allocation2 + $0x198] sm:$0xff] %v2245
        %2278 = vst [vmem:[#allocation2 + $0x1e0] sm:$0xff] %v2246
        %2279 = vst [vmem:[#allocation2 + $0x228] sm:$0xff] %v2247
        %2280 = vst [vmem:[#allocation2 + $0x270] sm:$0xff] %v2248
        %2281 = vst [vmem:[#allocation2 + $0x2b8] sm:$0xff] %v2249
        %2282 = vst [vmem:[#allocation2 + $0x300] sm:$0xff] %v2250
        %2283 = vst [vmem:[#allocation2 + $0x348] sm:$0xff] %v2251
        %2284 = vst [vmem:[#allocation2 + $0x390] sm:$0xff] %v2252
        %2285 = vst [vmem:[#allocation2 + $0x3d8] sm:$0xff] %v2253
        %2286 = vst [vmem:[#allocation2 + $0x420] sm:$0xff] %v2254
        %2287 = vst [vmem:[#allocation2 + $0x468] sm:$0xff] %v2255
        %v2288 = vld [vmem:[%s2143] sm:$0xf]
        %v2289 = vld [vmem:[%s2143 + $0x4] sm:$0xf]
        %v2290 = vld [vmem:[%s2143 + $0x8] sm:$0x1]
        %v2291 = vld [vmem:[%s2143 + $0xc] sm:$0xf]
        %v2292 = vld [vmem:[%s2143 + $0x10] sm:$0xf]
        %v2293 = vld [vmem:[%s2143 + $0x14] sm:$0x1]
        %v2294 = vld [vmem:[%s2143 + $0x18] sm:$0xf]
        %v2295 = vld [vmem:[%s2143 + $0x1c] sm:$0xf]
        %v2296 = vld [vmem:[%s2143 + $0x20] sm:$0x1]
        %v2297 = vld [vmem:[%s2143 + $0x24] sm:$0xf]
        %v2298 = vld [vmem:[%s2143 + $0x28] sm:$0xf]
        %v2299 = vld [vmem:[%s2143 + $0x2c] sm:$0x1]
        %v2300 = vld [vmem:[%s2143 + $0x30] sm:$0xf]
        %v2301 = vld [vmem:[%s2143 + $0x34] sm:$0xf]
        %v2302 = vld [vmem:[%s2143 + $0x38] sm:$0x1]
        %v2303 = vld [vmem:[%s2143 + $0x3c] sm:$0xf]
        %v2304 = vld [vmem:[%s2143 + $0x40] sm:$0xf]
        %v2305 = vld [vmem:[%s2143 + $0x44] sm:$0x1]
        %v2306 = vld [vmem:[%s2143 + $0x48] sm:$0xf]
        %v2307 = vld [vmem:[%s2143 + $0x4c] sm:$0xf]
        %v2308 = vld [vmem:[%s2143 + $0x50] sm:$0x1]
        %v2309 = vld [vmem:[%s2143 + $0x54] sm:$0xf]
        %v2310 = vld [vmem:[%s2143 + $0x58] sm:$0xf]
        %v2311 = vld [vmem:[%s2143 + $0x5c] sm:$0x1]
        %v2312 = vld [vmem:[%s2143 + $0x60] sm:$0xf]
        %v2313 = vld [vmem:[%s2143 + $0x64] sm:$0xf]
        %v2314 = vld [vmem:[%s2143 + $0x68] sm:$0x1]
        %v2315 = vld [vmem:[%s2143 + $0x6c] sm:$0xf]
        %v2316 = vld [vmem:[%s2143 + $0x70] sm:$0xf]
        %v2317 = vld [vmem:[%s2143 + $0x74] sm:$0x1]
        %v2318 = vld [vmem:[%s2143 + $0x78] sm:$0xf]
        %v2319 = vld [vmem:[%s2143 + $0x7c] sm:$0xf]
        %v2320 = vld [vmem:[%s2143 + $0x80] sm:$0x1]
        %v2321 = vld [vmem:[%s2143 + $0x84] sm:$0xf]
        %v2322 = vld [vmem:[%s2143 + $0x88] sm:$0xf]
        %v2323 = vld [vmem:[%s2143 + $0x8c] sm:$0x1]
        %v2324 = vld [vmem:[%s2143 + $0x90] sm:$0xf]
        %v2325 = vld [vmem:[%s2143 + $0x94] sm:$0xf]
        %v2326 = vld [vmem:[%s2143 + $0x98] sm:$0x1]
        %v2327 = vld [vmem:[%s2143 + $0x9c] sm:$0xf]
        %v2328 = vld [vmem:[%s2143 + $0xa0] sm:$0xf]
        %v2329 = vld [vmem:[%s2143 + $0xa4] sm:$0x1]
        %v2330 = vld [vmem:[%s2143 + $0xa8] sm:$0xf]
        %v2331 = vld [vmem:[%s2143 + $0xac] sm:$0xf]
        %v2332 = vld [vmem:[%s2143 + $0xb0] sm:$0x1]
        %v2333 = vld [vmem:[%s2143 + $0xb4] sm:$0xf]
        %v2334 = vld [vmem:[%s2143 + $0xb8] sm:$0xf]
        %v2335 = vld [vmem:[%s2143 + $0xbc] sm:$0x1]
        %v2337 = vshrl.u32 %v2288, 16
        %v2339 = vrot.slane %v2337, 4
        %v2340 = vshll.u32 %v2288, 16
        %v2342 = vrot.slane %v2340, 5
        %v2343 = vor.u32 %v2339, %v2342
        %v2344 = vrot.slane %v2343, 4
        %v2346 = vshll.u32 %v2289, 16
        %v2348 = vrot.slane %v2346, 5
        %v2349 = vsel %vm442, %v2344, %v2348
        %v2350 = vshrl.u32 %v2289, 16
        %v2352 = vrot.slane %v2350, 4
        %v2353 = vor.u32 %v2352, %v2348
        %v2354 = vrot.slane %v2353, 4
        %v2356 = vshll.u32 %v2290, 16
        %v2358 = vrot.slane %v2356, 5
        %v2359 = vsel %vm442, %v2354, %v2358
        %v2361 = vshrl.u32 %v2291, 16
        %v2363 = vrot.slane %v2361, 4
        %v2364 = vshll.u32 %v2291, 16
        %v2366 = vrot.slane %v2364, 5
        %v2367 = vor.u32 %v2363, %v2366
        %v2368 = vrot.slane %v2367, 4
        %v2370 = vshll.u32 %v2292, 16
        %v2372 = vrot.slane %v2370, 5
        %v2373 = vsel %vm442, %v2368, %v2372
        %v2374 = vshrl.u32 %v2292, 16
        %v2376 = vrot.slane %v2374, 4
        %v2377 = vor.u32 %v2376, %v2372
        %v2378 = vrot.slane %v2377, 4
        %v2380 = vshll.u32 %v2293, 16
        %v2382 = vrot.slane %v2380, 5
        %v2383 = vsel %vm442, %v2378, %v2382
        %v2385 = vshrl.u32 %v2294, 16
        %v2387 = vrot.slane %v2385, 4
        %v2388 = vshll.u32 %v2294, 16
        %v2390 = vrot.slane %v2388, 5
        %v2391 = vor.u32 %v2387, %v2390
        %v2392 = vrot.slane %v2391, 4
        %v2394 = vshll.u32 %v2295, 16
        %v2396 = vrot.slane %v2394, 5
        %v2397 = vsel %vm442, %v2392, %v2396
        %v2398 = vshrl.u32 %v2295, 16
        %v2400 = vrot.slane %v2398, 4
        %v2401 = vor.u32 %v2400, %v2396
        %v2402 = vrot.slane %v2401, 4
        %v2404 = vshll.u32 %v2296, 16
        %v2406 = vrot.slane %v2404, 5
        %v2407 = vsel %vm442, %v2402, %v2406
        %v2409 = vshrl.u32 %v2297, 16
        %v2411 = vrot.slane %v2409, 4
        %v2412 = vshll.u32 %v2297, 16
        %v2414 = vrot.slane %v2412, 5
        %v2415 = vor.u32 %v2411, %v2414
        %v2416 = vrot.slane %v2415, 4
        %v2418 = vshll.u32 %v2298, 16
        %v2420 = vrot.slane %v2418, 5
        %v2421 = vsel %vm442, %v2416, %v2420
        %v2422 = vshrl.u32 %v2298, 16
        %v2424 = vrot.slane %v2422, 4
        %v2425 = vor.u32 %v2424, %v2420
        %v2426 = vrot.slane %v2425, 4
        %v2428 = vshll.u32 %v2299, 16
        %v2430 = vrot.slane %v2428, 5
        %v2431 = vsel %vm442, %v2426, %v2430
        %v2433 = vshrl.u32 %v2300, 16
        %v2435 = vrot.slane %v2433, 4
        %v2436 = vshll.u32 %v2300, 16
        %v2438 = vrot.slane %v2436, 5
        %v2439 = vor.u32 %v2435, %v2438
        %v2440 = vrot.slane %v2439, 4
        %v2442 = vshll.u32 %v2301, 16
        %v2444 = vrot.slane %v2442, 5
        %v2445 = vsel %vm442, %v2440, %v2444
        %v2446 = vshrl.u32 %v2301, 16
        %v2448 = vrot.slane %v2446, 4
        %v2449 = vor.u32 %v2448, %v2444
        %v2450 = vrot.slane %v2449, 4
        %v2452 = vshll.u32 %v2302, 16
        %v2454 = vrot.slane %v2452, 5
        %v2455 = vsel %vm442, %v2450, %v2454
        %v2457 = vshrl.u32 %v2303, 16
        %v2459 = vrot.slane %v2457, 4
        %v2460 = vshll.u32 %v2303, 16
        %v2462 = vrot.slane %v2460, 5
        %v2463 = vor.u32 %v2459, %v2462
        %v2464 = vrot.slane %v2463, 4
        %v2466 = vshll.u32 %v2304, 16
        %v2468 = vrot.slane %v2466, 5
        %v2469 = vsel %vm442, %v2464, %v2468
        %v2470 = vshrl.u32 %v2304, 16
        %v2472 = vrot.slane %v2470, 4
        %v2473 = vor.u32 %v2472, %v2468
        %v2474 = vrot.slane %v2473, 4
        %v2476 = vshll.u32 %v2305, 16
        %v2478 = vrot.slane %v2476, 5
        %v2479 = vsel %vm442, %v2474, %v2478
        %v2481 = vshrl.u32 %v2306, 16
        %v2483 = vrot.slane %v2481, 4
        %v2484 = vshll.u32 %v2306, 16
        %v2486 = vrot.slane %v2484, 5
        %v2487 = vor.u32 %v2483, %v2486
        %v2488 = vrot.slane %v2487, 4
        %v2490 = vshll.u32 %v2307, 16
        %v2492 = vrot.slane %v2490, 5
        %v2493 = vsel %vm442, %v2488, %v2492
        %v2494 = vshrl.u32 %v2307, 16
        %v2496 = vrot.slane %v2494, 4
        %v2497 = vor.u32 %v2496, %v2492
        %v2498 = vrot.slane %v2497, 4
        %v2500 = vshll.u32 %v2308, 16
        %v2502 = vrot.slane %v2500, 5
        %v2503 = vsel %vm442, %v2498, %v2502
        %v2505 = vshrl.u32 %v2309, 16
        %v2507 = vrot.slane %v2505, 4
        %v2508 = vshll.u32 %v2309, 16
        %v2510 = vrot.slane %v2508, 5
        %v2511 = vor.u32 %v2507, %v2510
        %v2512 = vrot.slane %v2511, 4
        %v2514 = vshll.u32 %v2310, 16
        %v2516 = vrot.slane %v2514, 5
        %v2517 = vsel %vm442, %v2512, %v2516
        %v2518 = vshrl.u32 %v2310, 16
        %v2520 = vrot.slane %v2518, 4
        %v2521 = vor.u32 %v2520, %v2516
        %v2522 = vrot.slane %v2521, 4
        %v2524 = vshll.u32 %v2311, 16
        %v2526 = vrot.slane %v2524, 5
        %v2527 = vsel %vm442, %v2522, %v2526
        %v2529 = vshrl.u32 %v2312, 16
        %v2531 = vrot.slane %v2529, 4
        %v2532 = vshll.u32 %v2312, 16
        %v2534 = vrot.slane %v2532, 5
        %v2535 = vor.u32 %v2531, %v2534
        %v2536 = vrot.slane %v2535, 4
        %v2538 = vshll.u32 %v2313, 16
        %v2540 = vrot.slane %v2538, 5
        %v2541 = vsel %vm442, %v2536, %v2540
        %v2542 = vshrl.u32 %v2313, 16
        %v2544 = vrot.slane %v2542, 4
        %v2545 = vor.u32 %v2544, %v2540
        %v2546 = vrot.slane %v2545, 4
        %v2548 = vshll.u32 %v2314, 16
        %v2550 = vrot.slane %v2548, 5
        %v2551 = vsel %vm442, %v2546, %v2550
        %v2553 = vshrl.u32 %v2315, 16
        %v2555 = vrot.slane %v2553, 4
        %v2556 = vshll.u32 %v2315, 16
        %v2558 = vrot.slane %v2556, 5
        %v2559 = vor.u32 %v2555, %v2558
        %v2560 = vrot.slane %v2559, 4
        %v2562 = vshll.u32 %v2316, 16
        %v2564 = vrot.slane %v2562, 5
        %v2565 = vsel %vm442, %v2560, %v2564
        %v2566 = vshrl.u32 %v2316, 16
        %v2568 = vrot.slane %v2566, 4
        %v2569 = vor.u32 %v2568, %v2564
        %v2570 = vrot.slane %v2569, 4
        %v2572 = vshll.u32 %v2317, 16
        %v2574 = vrot.slane %v2572, 5
        %v2575 = vsel %vm442, %v2570, %v2574
        %v2577 = vshrl.u32 %v2318, 16
        %v2579 = vrot.slane %v2577, 4
        %v2580 = vshll.u32 %v2318, 16
        %v2582 = vrot.slane %v2580, 5
        %v2583 = vor.u32 %v2579, %v2582
        %v2584 = vrot.slane %v2583, 4
        %v2586 = vshll.u32 %v2319, 16
        %v2588 = vrot.slane %v2586, 5
        %v2589 = vsel %vm442, %v2584, %v2588
        %v2590 = vshrl.u32 %v2319, 16
        %v2592 = vrot.slane %v2590, 4
        %v2593 = vor.u32 %v2592, %v2588
        %v2594 = vrot.slane %v2593, 4
        %v2596 = vshll.u32 %v2320, 16
        %v2598 = vrot.slane %v2596, 5
        %v2599 = vsel %vm442, %v2594, %v2598
        %v2601 = vshrl.u32 %v2321, 16
        %v2603 = vrot.slane %v2601, 4
        %v2604 = vshll.u32 %v2321, 16
        %v2606 = vrot.slane %v2604, 5
        %v2607 = vor.u32 %v2603, %v2606
        %v2608 = vrot.slane %v2607, 4
        %v2610 = vshll.u32 %v2322, 16
        %v2612 = vrot.slane %v2610, 5
        %v2613 = vsel %vm442, %v2608, %v2612
        %v2614 = vshrl.u32 %v2322, 16
        %v2616 = vrot.slane %v2614, 4
        %v2617 = vor.u32 %v2616, %v2612
        %v2618 = vrot.slane %v2617, 4
        %v2620 = vshll.u32 %v2323, 16
        %v2622 = vrot.slane %v2620, 5
        %v2623 = vsel %vm442, %v2618, %v2622
        %v2625 = vshrl.u32 %v2324, 16
        %v2627 = vrot.slane %v2625, 4
        %v2628 = vshll.u32 %v2324, 16
        %v2630 = vrot.slane %v2628, 5
        %v2631 = vor.u32 %v2627, %v2630
        %v2632 = vrot.slane %v2631, 4
        %v2634 = vshll.u32 %v2325, 16
        %v2636 = vrot.slane %v2634, 5
        %v2637 = vsel %vm442, %v2632, %v2636
        %v2638 = vshrl.u32 %v2325, 16
        %v2640 = vrot.slane %v2638, 4
        %v2641 = vor.u32 %v2640, %v2636
        %v2642 = vrot.slane %v2641, 4
        %v2644 = vshll.u32 %v2326, 16
        %v2646 = vrot.slane %v2644, 5
        %v2647 = vsel %vm442, %v2642, %v2646
        %v2649 = vshrl.u32 %v2327, 16
        %v2651 = vrot.slane %v2649, 4
        %v2652 = vshll.u32 %v2327, 16
        %v2654 = vrot.slane %v2652, 5
        %v2655 = vor.u32 %v2651, %v2654
        %v2656 = vrot.slane %v2655, 4
        %v2658 = vshll.u32 %v2328, 16
        %v2660 = vrot.slane %v2658, 5
        %v2661 = vsel %vm442, %v2656, %v2660
        %v2662 = vshrl.u32 %v2328, 16
        %v2664 = vrot.slane %v2662, 4
        %v2665 = vor.u32 %v2664, %v2660
        %v2666 = vrot.slane %v2665, 4
        %v2668 = vshll.u32 %v2329, 16
        %v2670 = vrot.slane %v2668, 5
        %v2671 = vsel %vm442, %v2666, %v2670
        %v2673 = vshrl.u32 %v2330, 16
        %v2675 = vrot.slane %v2673, 4
        %v2676 = vshll.u32 %v2330, 16
        %v2678 = vrot.slane %v2676, 5
        %v2679 = vor.u32 %v2675, %v2678
        %v2680 = vrot.slane %v2679, 4
        %v2682 = vshll.u32 %v2331, 16
        %v2684 = vrot.slane %v2682, 5
        %v2685 = vsel %vm442, %v2680, %v2684
        %v2686 = vshrl.u32 %v2331, 16
        %v2688 = vrot.slane %v2686, 4
        %v2689 = vor.u32 %v2688, %v2684
        %v2690 = vrot.slane %v2689, 4
        %v2692 = vshll.u32 %v2332, 16
        %v2694 = vrot.slane %v2692, 5
        %v2695 = vsel %vm442, %v2690, %v2694
        %v2697 = vshrl.u32 %v2333, 16
        %v2699 = vrot.slane %v2697, 4
        %v2700 = vshll.u32 %v2333, 16
        %v2702 = vrot.slane %v2700, 5
        %v2703 = vor.u32 %v2699, %v2702
        %v2704 = vrot.slane %v2703, 4
        %v2706 = vshll.u32 %v2334, 16
        %v2708 = vrot.slane %v2706, 5
        %v2709 = vsel %vm442, %v2704, %v2708
        %v2710 = vshrl.u32 %v2334, 16
        %v2712 = vrot.slane %v2710, 4
        %v2713 = vor.u32 %v2712, %v2708
        %v2714 = vrot.slane %v2713, 4
        %v2716 = vshll.u32 %v2335, 16
        %v2718 = vrot.slane %v2716, 5
        %v2719 = vsel %vm442, %v2714, %v2718
        %v2720 = vunpack.c.l.b16 %v2349
        %v2721 = vunpack.c.l.b16 %v2359
        %v2722 = vunpack.c.l.b16 %v2373
        %v2723 = vunpack.c.l.b16 %v2383
        %v2724 = vunpack.c.l.b16 %v2397
        %v2725 = vunpack.c.l.b16 %v2407
        %v2726 = vunpack.c.l.b16 %v2421
        %v2727 = vunpack.c.l.b16 %v2431
        %v2728 = vunpack.c.l.b16 %v2445
        %v2729 = vunpack.c.l.b16 %v2455
        %v2730 = vunpack.c.l.b16 %v2469
        %v2731 = vunpack.c.l.b16 %v2479
        %v2732 = vunpack.c.l.b16 %v2493
        %v2733 = vunpack.c.l.b16 %v2503
        %v2734 = vunpack.c.l.b16 %v2517
        %v2735 = vunpack.c.l.b16 %v2527
        %v2736 = vunpack.c.l.b16 %v2541
        %v2737 = vunpack.c.l.b16 %v2551
        %v2738 = vunpack.c.l.b16 %v2565
        %v2739 = vunpack.c.l.b16 %v2575
        %v2740 = vunpack.c.l.b16 %v2589
        %v2741 = vunpack.c.l.b16 %v2599
        %v2742 = vunpack.c.l.b16 %v2613
        %v2743 = vunpack.c.l.b16 %v2623
        %v2744 = vunpack.c.l.b16 %v2637
        %v2745 = vunpack.c.l.b16 %v2647
        %v2746 = vunpack.c.l.b16 %v2661
        %v2747 = vunpack.c.l.b16 %v2671
        %v2748 = vunpack.c.l.b16 %v2685
        %v2749 = vunpack.c.l.b16 %v2695
        %v2750 = vunpack.c.l.b16 %v2709
        %v2751 = vunpack.c.l.b16 %v2719
        %v2752 = vpack.c.b16 %v2721, %v2720
        %v2753 = vpack.c.b16 %v2723, %v2722
        %v2754 = vpack.c.b16 %v2725, %v2724
        %v2755 = vpack.c.b16 %v2727, %v2726
        %v2756 = vpack.c.b16 %v2729, %v2728
        %v2757 = vpack.c.b16 %v2731, %v2730
        %v2758 = vpack.c.b16 %v2733, %v2732
        %v2759 = vpack.c.b16 %v2735, %v2734
        %v2760 = vpack.c.b16 %v2737, %v2736
        %v2761 = vpack.c.b16 %v2739, %v2738
        %v2762 = vpack.c.b16 %v2741, %v2740
        %v2763 = vpack.c.b16 %v2743, %v2742
        %v2764 = vpack.c.b16 %v2745, %v2744
        %v2765 = vpack.c.b16 %v2747, %v2746
        %v2766 = vpack.c.b16 %v2749, %v2748
        %v2767 = vpack.c.b16 %v2751, %v2750
        %2784 = vst [vmem:[#allocation2 + $0x38] sm:$0xff] %v2752
        %2785 = vst [vmem:[#allocation2 + $0x80] sm:$0xff] %v2753
        %2786 = vst [vmem:[#allocation2 + $0xc8] sm:$0xff] %v2754
        %2787 = vst [vmem:[#allocation2 + $0x110] sm:$0xff] %v2755
        %2788 = vst [vmem:[#allocation2 + $0x158] sm:$0xff] %v2756
        %2789 = vst [vmem:[#allocation2 + $0x1a0] sm:$0xff] %v2757
        %2790 = vst [vmem:[#allocation2 + $0x1e8] sm:$0xff] %v2758
        %2791 = vst [vmem:[#allocation2 + $0x230] sm:$0xff] %v2759
        %2792 = vst [vmem:[#allocation2 + $0x278] sm:$0xff] %v2760
        %2793 = vst [vmem:[#allocation2 + $0x2c0] sm:$0xff] %v2761
        %2794 = vst [vmem:[#allocation2 + $0x308] sm:$0xff] %v2762
        %2795 = vst [vmem:[#allocation2 + $0x350] sm:$0xff] %v2763
        %2796 = vst [vmem:[#allocation2 + $0x398] sm:$0xff] %v2764
        %2797 = vst [vmem:[#allocation2 + $0x3e0] sm:$0xff] %v2765
        %2798 = vst [vmem:[#allocation2 + $0x428] sm:$0xff] %v2766
        %2799 = vst [vmem:[#allocation2 + $0x470] sm:$0xff] %v2767
        %v2800 = vld [vmem:[%s2143] sm:$0xe]
        %v2801 = vld [vmem:[%s2143 + $0x4] sm:$0xf]
        %v2802 = vld [vmem:[%s2143 + $0x8] sm:$0x1]
        %v2803 = vld [vmem:[%s2143 + $0xc] sm:$0xe]
        %v2804 = vld [vmem:[%s2143 + $0x10] sm:$0xf]
        %v2805 = vld [vmem:[%s2143 + $0x14] sm:$0x1]
        %v2806 = vld [vmem:[%s2143 + $0x18] sm:$0xe]
        %v2807 = vld [vmem:[%s2143 + $0x1c] sm:$0xf]
        %v2808 = vld [vmem:[%s2143 + $0x20] sm:$0x1]
        %v2809 = vld [vmem:[%s2143 + $0x24] sm:$0xe]
        %v2810 = vld [vmem:[%s2143 + $0x28] sm:$0xf]
        %v2811 = vld [vmem:[%s2143 + $0x2c] sm:$0x1]
        %v2812 = vld [vmem:[%s2143 + $0x30] sm:$0xe]
        %v2813 = vld [vmem:[%s2143 + $0x34] sm:$0xf]
        %v2814 = vld [vmem:[%s2143 + $0x38] sm:$0x1]
        %v2815 = vld [vmem:[%s2143 + $0x3c] sm:$0xe]
        %v2816 = vld [vmem:[%s2143 + $0x40] sm:$0xf]
        %v2817 = vld [vmem:[%s2143 + $0x44] sm:$0x1]
        %v2818 = vld [vmem:[%s2143 + $0x48] sm:$0xe]
        %v2819 = vld [vmem:[%s2143 + $0x4c] sm:$0xf]
        %v2820 = vld [vmem:[%s2143 + $0x50] sm:$0x1]
        %v2821 = vld [vmem:[%s2143 + $0x54] sm:$0xe]
        %v2822 = vld [vmem:[%s2143 + $0x58] sm:$0xf]
        %v2823 = vld [vmem:[%s2143 + $0x5c] sm:$0x1]
        %v2824 = vld [vmem:[%s2143 + $0x60] sm:$0xe]
        %v2825 = vld [vmem:[%s2143 + $0x64] sm:$0xf]
        %v2826 = vld [vmem:[%s2143 + $0x68] sm:$0x1]
        %v2827 = vld [vmem:[%s2143 + $0x6c] sm:$0xe]
        %v2828 = vld [vmem:[%s2143 + $0x70] sm:$0xf]
        %v2829 = vld [vmem:[%s2143 + $0x74] sm:$0x1]
        %v2830 = vld [vmem:[%s2143 + $0x78] sm:$0xe]
        %v2831 = vld [vmem:[%s2143 + $0x7c] sm:$0xf]
        %v2832 = vld [vmem:[%s2143 + $0x80] sm:$0x1]
        %v2833 = vld [vmem:[%s2143 + $0x84] sm:$0xe]
        %v2834 = vld [vmem:[%s2143 + $0x88] sm:$0xf]
        %v2835 = vld [vmem:[%s2143 + $0x8c] sm:$0x1]
        %v2836 = vld [vmem:[%s2143 + $0x90] sm:$0xe]
        %v2837 = vld [vmem:[%s2143 + $0x94] sm:$0xf]
        %v2838 = vld [vmem:[%s2143 + $0x98] sm:$0x1]
        %v2839 = vld [vmem:[%s2143 + $0x9c] sm:$0xe]
        %v2840 = vld [vmem:[%s2143 + $0xa0] sm:$0xf]
        %v2841 = vld [vmem:[%s2143 + $0xa4] sm:$0x1]
        %v2842 = vld [vmem:[%s2143 + $0xa8] sm:$0xe]
        %v2843 = vld [vmem:[%s2143 + $0xac] sm:$0xf]
        %v2844 = vld [vmem:[%s2143 + $0xb0] sm:$0x1]
        %v2845 = vld [vmem:[%s2143 + $0xb4] sm:$0xe]
        %v2846 = vld [vmem:[%s2143 + $0xb8] sm:$0xf]
        %v2847 = vld [vmem:[%s2143 + $0xbc] sm:$0x1]
        %v2896 = vrot.slane %v2800, 5
        %v2897 = vrot.slane %v2896, 4
        %v2898 = vrot.slane %v2801, 5
        %v2899 = vsel %vm1005, %v2897, %v2898
        %v2900 = vrot.slane %v2898, 4
        %v2901 = vrot.slane %v2802, 5
        %v2902 = vsel %vm1005, %v2900, %v2901
        %v2903 = vrot.slane %v2803, 5
        %v2904 = vrot.slane %v2903, 4
        %v2905 = vrot.slane %v2804, 5
        %v2906 = vsel %vm1005, %v2904, %v2905
        %v2907 = vrot.slane %v2905, 4
        %v2908 = vrot.slane %v2805, 5
        %v2909 = vsel %vm1005, %v2907, %v2908
        %v2910 = vrot.slane %v2806, 5
        %v2911 = vrot.slane %v2910, 4
        %v2912 = vrot.slane %v2807, 5
        %v2913 = vsel %vm1005, %v2911, %v2912
        %v2914 = vrot.slane %v2912, 4
        %v2915 = vrot.slane %v2808, 5
        %v2916 = vsel %vm1005, %v2914, %v2915
        %v2917 = vrot.slane %v2809, 5
        %v2918 = vrot.slane %v2917, 4
        %v2919 = vrot.slane %v2810, 5
        %v2920 = vsel %vm1005, %v2918, %v2919
        %v2921 = vrot.slane %v2919, 4
        %v2922 = vrot.slane %v2811, 5
        %v2923 = vsel %vm1005, %v2921, %v2922
        %v2924 = vrot.slane %v2812, 5
        %v2925 = vrot.slane %v2924, 4
        %v2926 = vrot.slane %v2813, 5
        %v2927 = vsel %vm1005, %v2925, %v2926
        %v2928 = vrot.slane %v2926, 4
        %v2929 = vrot.slane %v2814, 5
        %v2930 = vsel %vm1005, %v2928, %v2929
        %v2931 = vrot.slane %v2815, 5
        %v2932 = vrot.slane %v2931, 4
        %v2933 = vrot.slane %v2816, 5
        %v2934 = vsel %vm1005, %v2932, %v2933
        %v2935 = vrot.slane %v2933, 4
        %v2936 = vrot.slane %v2817, 5
        %v2937 = vsel %vm1005, %v2935, %v2936
        %v2938 = vrot.slane %v2818, 5
        %v2939 = vrot.slane %v2938, 4
        %v2940 = vrot.slane %v2819, 5
        %v2941 = vsel %vm1005, %v2939, %v2940
        %v2942 = vrot.slane %v2940, 4
        %v2943 = vrot.slane %v2820, 5
        %v2944 = vsel %vm1005, %v2942, %v2943
        %v2945 = vrot.slane %v2821, 5
        %v2946 = vrot.slane %v2945, 4
        %v2947 = vrot.slane %v2822, 5
        %v2948 = vsel %vm1005, %v2946, %v2947
        %v2949 = vrot.slane %v2947, 4
        %v2950 = vrot.slane %v2823, 5
        %v2951 = vsel %vm1005, %v2949, %v2950
        %v2952 = vrot.slane %v2824, 5
        %v2953 = vrot.slane %v2952, 4
        %v2954 = vrot.slane %v2825, 5
        %v2955 = vsel %vm1005, %v2953, %v2954
        %v2956 = vrot.slane %v2954, 4
        %v2957 = vrot.slane %v2826, 5
        %v2958 = vsel %vm1005, %v2956, %v2957
        %v2959 = vrot.slane %v2827, 5
        %v2960 = vrot.slane %v2959, 4
        %v2961 = vrot.slane %v2828, 5
        %v2962 = vsel %vm1005, %v2960, %v2961
        %v2963 = vrot.slane %v2961, 4
        %v2964 = vrot.slane %v2829, 5
        %v2965 = vsel %vm1005, %v2963, %v2964
        %v2966 = vrot.slane %v2830, 5
        %v2967 = vrot.slane %v2966, 4
        %v2968 = vrot.slane %v2831, 5
        %v2969 = vsel %vm1005, %v2967, %v2968
        %v2970 = vrot.slane %v2968, 4
        %v2971 = vrot.slane %v2832, 5
        %v2972 = vsel %vm1005, %v2970, %v2971
        %v2973 = vrot.slane %v2833, 5
        %v2974 = vrot.slane %v2973, 4
        %v2975 = vrot.slane %v2834, 5
        %v2976 = vsel %vm1005, %v2974, %v2975
        %v2977 = vrot.slane %v2975, 4
        %v2978 = vrot.slane %v2835, 5
        %v2979 = vsel %vm1005, %v2977, %v2978
        %v2980 = vrot.slane %v2836, 5
        %v2981 = vrot.slane %v2980, 4
        %v2982 = vrot.slane %v2837, 5
        %v2983 = vsel %vm1005, %v2981, %v2982
        %v2984 = vrot.slane %v2982, 4
        %v2985 = vrot.slane %v2838, 5
        %v2986 = vsel %vm1005, %v2984, %v2985
        %v2987 = vrot.slane %v2839, 5
        %v2988 = vrot.slane %v2987, 4
        %v2989 = vrot.slane %v2840, 5
        %v2990 = vsel %vm1005, %v2988, %v2989
        %v2991 = vrot.slane %v2989, 4
        %v2992 = vrot.slane %v2841, 5
        %v2993 = vsel %vm1005, %v2991, %v2992
        %v2994 = vrot.slane %v2842, 5
        %v2995 = vrot.slane %v2994, 4
        %v2996 = vrot.slane %v2843, 5
        %v2997 = vsel %vm1005, %v2995, %v2996
        %v2998 = vrot.slane %v2996, 4
        %v2999 = vrot.slane %v2844, 5
        %v3000 = vsel %vm1005, %v2998, %v2999
        %v3001 = vrot.slane %v2845, 5
        %v3002 = vrot.slane %v3001, 4
        %v3003 = vrot.slane %v2846, 5
        %v3004 = vsel %vm1005, %v3002, %v3003
        %v3005 = vrot.slane %v3003, 4
        %v3006 = vrot.slane %v2847, 5
        %v3007 = vsel %vm1005, %v3005, %v3006
        %v3008 = vunpack.c.l.b16 %v2899
        %v3009 = vunpack.c.l.b16 %v2902
        %v3010 = vunpack.c.l.b16 %v2906
        %v3011 = vunpack.c.l.b16 %v2909
        %v3012 = vunpack.c.l.b16 %v2913
        %v3013 = vunpack.c.l.b16 %v2916
        %v3014 = vunpack.c.l.b16 %v2920
        %v3015 = vunpack.c.l.b16 %v2923
        %v3016 = vunpack.c.l.b16 %v2927
        %v3017 = vunpack.c.l.b16 %v2930
        %v3018 = vunpack.c.l.b16 %v2934
        %v3019 = vunpack.c.l.b16 %v2937
        %v3020 = vunpack.c.l.b16 %v2941
        %v3021 = vunpack.c.l.b16 %v2944
        %v3022 = vunpack.c.l.b16 %v2948
        %v3023 = vunpack.c.l.b16 %v2951
        %v3024 = vunpack.c.l.b16 %v2955
        %v3025 = vunpack.c.l.b16 %v2958
        %v3026 = vunpack.c.l.b16 %v2962
        %v3027 = vunpack.c.l.b16 %v2965
        %v3028 = vunpack.c.l.b16 %v2969
        %v3029 = vunpack.c.l.b16 %v2972
        %v3030 = vunpack.c.l.b16 %v2976
        %v3031 = vunpack.c.l.b16 %v2979
        %v3032 = vunpack.c.l.b16 %v2983
        %v3033 = vunpack.c.l.b16 %v2986
        %v3034 = vunpack.c.l.b16 %v2990
        %v3035 = vunpack.c.l.b16 %v2993
        %v3036 = vunpack.c.l.b16 %v2997
        %v3037 = vunpack.c.l.b16 %v3000
        %v3038 = vunpack.c.l.b16 %v3004
        %v3039 = vunpack.c.l.b16 %v3007
        %v3040 = vpack.c.b16 %v3009, %v3008
        %v3041 = vpack.c.b16 %v3011, %v3010
        %v3042 = vpack.c.b16 %v3013, %v3012
        %v3043 = vpack.c.b16 %v3015, %v3014
        %v3044 = vpack.c.b16 %v3017, %v3016
        %v3045 = vpack.c.b16 %v3019, %v3018
        %v3046 = vpack.c.b16 %v3021, %v3020
        %v3047 = vpack.c.b16 %v3023, %v3022
        %v3048 = vpack.c.b16 %v3025, %v3024
        %v3049 = vpack.c.b16 %v3027, %v3026
        %v3050 = vpack.c.b16 %v3029, %v3028
        %v3051 = vpack.c.b16 %v3031, %v3030
        %v3052 = vpack.c.b16 %v3033, %v3032
        %v3053 = vpack.c.b16 %v3035, %v3034
        %v3054 = vpack.c.b16 %v3037, %v3036
        %v3055 = vpack.c.b16 %v3039, %v3038
        %3072 = vst [vmem:[#allocation2 + $0x40] sm:$0xff] %v3040
        %3073 = vst [vmem:[#allocation2 + $0x88] sm:$0xff] %v3041
        %3074 = vst [vmem:[#allocation2 + $0xd0] sm:$0xff] %v3042
        %3075 = vst [vmem:[#allocation2 + $0x118] sm:$0xff] %v3043
        %3076 = vst [vmem:[#allocation2 + $0x160] sm:$0xff] %v3044
        %3077 = vst [vmem:[#allocation2 + $0x1a8] sm:$0xff] %v3045
        %3078 = vst [vmem:[#allocation2 + $0x1f0] sm:$0xff] %v3046
        %3079 = vst [vmem:[#allocation2 + $0x238] sm:$0xff] %v3047
        %3080 = vst [vmem:[#allocation2 + $0x280] sm:$0xff] %v3048
        %3081 = vst [vmem:[#allocation2 + $0x2c8] sm:$0xff] %v3049
        %3082 = vst [vmem:[#allocation2 + $0x310] sm:$0xff] %v3050
        %3083 = vst [vmem:[#allocation2 + $0x358] sm:$0xff] %v3051
        %3084 = vst [vmem:[#allocation2 + $0x3a0] sm:$0xff] %v3052
        %3085 = vst [vmem:[#allocation2 + $0x3e8] sm:$0xff] %v3053
        %3086 = vst [vmem:[#allocation2 + $0x430] sm:$0xff] %v3054
        %3087 = vst [vmem:[#allocation2 + $0x478] sm:$0xff] %v3055
        %v3088 = vld [vmem:[#allocation2] sm:$0xff]
        %v3089 = vld [vmem:[#allocation2 + $0x8] sm:$0xff]
        %v3090 = vld [vmem:[#allocation2 + $0x10] sm:$0xff]
        %v3091 = vld [vmem:[#allocation2 + $0x18] sm:$0xff]
        %v3092 = vld [vmem:[#allocation2 + $0x20] sm:$0xff]
        %v3093 = vld [vmem:[#allocation2 + $0x28] sm:$0xff]
        %v3094 = vld [vmem:[#allocation2 + $0x30] sm:$0xff]
        %v3095 = vld [vmem:[#allocation2 + $0x38] sm:$0xff]
        %v3096 = vld [vmem:[#allocation2 + $0x40] sm:$0xff]
        %v3097 = vld [vmem:[#allocation2 + $0x48] sm:$0xff]
        %v3098 = vld [vmem:[#allocation2 + $0x50] sm:$0xff]
        %v3099 = vld [vmem:[#allocation2 + $0x58] sm:$0xff]
        %v3100 = vld [vmem:[#allocation2 + $0x60] sm:$0xff]
        %v3101 = vld [vmem:[#allocation2 + $0x68] sm:$0xff]
        %v3102 = vld [vmem:[#allocation2 + $0x70] sm:$0xff]
        %v3103 = vld [vmem:[#allocation2 + $0x78] sm:$0xff]
        %v3104 = vld [vmem:[#allocation2 + $0x80] sm:$0xff]
        %v3105 = vld [vmem:[#allocation2 + $0x88] sm:$0xff]
        %v3106 = vld [vmem:[#allocation2 + $0x90] sm:$0xff]
        %v3107 = vld [vmem:[#allocation2 + $0x98] sm:$0xff]
        %v3108 = vld [vmem:[#allocation2 + $0xa0] sm:$0xff]
        %v3109 = vld [vmem:[#allocation2 + $0xa8] sm:$0xff]
        %v3110 = vld [vmem:[#allocation2 + $0xb0] sm:$0xff]
        %v3111 = vld [vmem:[#allocation2 + $0xb8] sm:$0xff]
        %v3112 = vld [vmem:[#allocation2 + $0xc0] sm:$0xff]
        %v3113 = vld [vmem:[#allocation2 + $0xc8] sm:$0xff]
        %v3114 = vld [vmem:[#allocation2 + $0xd0] sm:$0xff]
        %v3115 = vld [vmem:[#allocation2 + $0xd8] sm:$0xff]
        %v3116 = vld [vmem:[#allocation2 + $0xe0] sm:$0xff]
        %v3117 = vld [vmem:[#allocation2 + $0xe8] sm:$0xff]
        %v3118 = vld [vmem:[#allocation2 + $0xf0] sm:$0xff]
        %v3119 = vld [vmem:[#allocation2 + $0xf8] sm:$0xff]
        %v3120 = vld [vmem:[#allocation2 + $0x100] sm:$0xff]
        %v3121 = vld [vmem:[#allocation2 + $0x108] sm:$0xff]
        %v3122 = vld [vmem:[#allocation2 + $0x110] sm:$0xff]
        %v3123 = vld [vmem:[#allocation2 + $0x118] sm:$0xff]
        %v3124 = vld [vmem:[#allocation2 + $0x120] sm:$0xff]
        %v3125 = vld [vmem:[#allocation2 + $0x128] sm:$0xff]
        %v3126 = vld [vmem:[#allocation2 + $0x130] sm:$0xff]
        %v3127 = vld [vmem:[#allocation2 + $0x138] sm:$0xff]
        %v3128 = vld [vmem:[#allocation2 + $0x140] sm:$0xff]
        %v3129 = vld [vmem:[#allocation2 + $0x148] sm:$0xff]
        %v3130 = vld [vmem:[#allocation2 + $0x150] sm:$0xff]
        %v3131 = vld [vmem:[#allocation2 + $0x158] sm:$0xff]
        %v3132 = vld [vmem:[#allocation2 + $0x160] sm:$0xff]
        %v3133 = vld [vmem:[#allocation2 + $0x168] sm:$0xff]
        %v3134 = vld [vmem:[#allocation2 + $0x170] sm:$0xff]
        %v3135 = vld [vmem:[#allocation2 + $0x178] sm:$0xff]
        %v3136 = vld [vmem:[#allocation2 + $0x180] sm:$0xff]
        %v3137 = vld [vmem:[#allocation2 + $0x188] sm:$0xff]
        %v3138 = vld [vmem:[#allocation2 + $0x190] sm:$0xff]
        %v3139 = vld [vmem:[#allocation2 + $0x198] sm:$0xff]
        %v3140 = vld [vmem:[#allocation2 + $0x1a0] sm:$0xff]
        %v3141 = vld [vmem:[#allocation2 + $0x1a8] sm:$0xff]
        %v3142 = vld [vmem:[#allocation2 + $0x1b0] sm:$0xff]
        %v3143 = vld [vmem:[#allocation2 + $0x1b8] sm:$0xff]
        %v3144 = vld [vmem:[#allocation2 + $0x1c0] sm:$0xff]
        %v3145 = vld [vmem:[#allocation2 + $0x1c8] sm:$0xff]
        %v3146 = vld [vmem:[#allocation2 + $0x1d0] sm:$0xff]
        %v3147 = vld [vmem:[#allocation2 + $0x1d8] sm:$0xff]
        %v3148 = vld [vmem:[#allocation2 + $0x1e0] sm:$0xff]
        %v3149 = vld [vmem:[#allocation2 + $0x1e8] sm:$0xff]
        %v3150 = vld [vmem:[#allocation2 + $0x1f0] sm:$0xff]
        %v3151 = vld [vmem:[#allocation2 + $0x1f8] sm:$0xff]
        %v3152 = vld [vmem:[#allocation2 + $0x200] sm:$0xff]
        %v3153 = vld [vmem:[#allocation2 + $0x208] sm:$0xff]
        %v3154 = vld [vmem:[#allocation2 + $0x210] sm:$0xff]
        %v3155 = vld [vmem:[#allocation2 + $0x218] sm:$0xff]
        %v3156 = vld [vmem:[#allocation2 + $0x220] sm:$0xff]
        %v3157 = vld [vmem:[#allocation2 + $0x228] sm:$0xff]
        %v3158 = vld [vmem:[#allocation2 + $0x230] sm:$0xff]
        %v3159 = vld [vmem:[#allocation2 + $0x238] sm:$0xff]
        %v3160 = vld [vmem:[#allocation2 + $0x240] sm:$0xff]
        %v3161 = vld [vmem:[#allocation2 + $0x248] sm:$0xff]
        %v3162 = vld [vmem:[#allocation2 + $0x250] sm:$0xff]
        %v3163 = vld [vmem:[#allocation2 + $0x258] sm:$0xff]
        %v3164 = vld [vmem:[#allocation2 + $0x260] sm:$0xff]
        %v3165 = vld [vmem:[#allocation2 + $0x268] sm:$0xff]
        %v3166 = vld [vmem:[#allocation2 + $0x270] sm:$0xff]
        %v3167 = vld [vmem:[#allocation2 + $0x278] sm:$0xff]
        %v3168 = vld [vmem:[#allocation2 + $0x280] sm:$0xff]
        %v3169 = vld [vmem:[#allocation2 + $0x288] sm:$0xff]
        %v3170 = vld [vmem:[#allocation2 + $0x290] sm:$0xff]
        %v3171 = vld [vmem:[#allocation2 + $0x298] sm:$0xff]
        %v3172 = vld [vmem:[#allocation2 + $0x2a0] sm:$0xff]
        %v3173 = vld [vmem:[#allocation2 + $0x2a8] sm:$0xff]
        %v3174 = vld [vmem:[#allocation2 + $0x2b0] sm:$0xff]
        %v3175 = vld [vmem:[#allocation2 + $0x2b8] sm:$0xff]
        %v3176 = vld [vmem:[#allocation2 + $0x2c0] sm:$0xff]
        %v3177 = vld [vmem:[#allocation2 + $0x2c8] sm:$0xff]
        %v3178 = vld [vmem:[#allocation2 + $0x2d0] sm:$0xff]
        %v3179 = vld [vmem:[#allocation2 + $0x2d8] sm:$0xff]
        %v3180 = vld [vmem:[#allocation2 + $0x2e0] sm:$0xff]
        %v3181 = vld [vmem:[#allocation2 + $0x2e8] sm:$0xff]
        %v3182 = vld [vmem:[#allocation2 + $0x2f0] sm:$0xff]
        %v3183 = vld [vmem:[#allocation2 + $0x2f8] sm:$0xff]
        %v3184 = vld [vmem:[#allocation2 + $0x300] sm:$0xff]
        %v3185 = vld [vmem:[#allocation2 + $0x308] sm:$0xff]
        %v3186 = vld [vmem:[#allocation2 + $0x310] sm:$0xff]
        %v3187 = vld [vmem:[#allocation2 + $0x318] sm:$0xff]
        %v3188 = vld [vmem:[#allocation2 + $0x320] sm:$0xff]
        %v3189 = vld [vmem:[#allocation2 + $0x328] sm:$0xff]
        %v3190 = vld [vmem:[#allocation2 + $0x330] sm:$0xff]
        %v3191 = vld [vmem:[#allocation2 + $0x338] sm:$0xff]
        %v3192 = vld [vmem:[#allocation2 + $0x340] sm:$0xff]
        %v3193 = vld [vmem:[#allocation2 + $0x348] sm:$0xff]
        %v3194 = vld [vmem:[#allocation2 + $0x350] sm:$0xff]
        %v3195 = vld [vmem:[#allocation2 + $0x358] sm:$0xff]
        %v3196 = vld [vmem:[#allocation2 + $0x360] sm:$0xff]
        %v3197 = vld [vmem:[#allocation2 + $0x368] sm:$0xff]
        %v3198 = vld [vmem:[#allocation2 + $0x370] sm:$0xff]
        %v3199 = vld [vmem:[#allocation2 + $0x378] sm:$0xff]
        %v3200 = vld [vmem:[#allocation2 + $0x380] sm:$0xff]
        %v3201 = vld [vmem:[#allocation2 + $0x388] sm:$0xff]
        %v3202 = vld [vmem:[#allocation2 + $0x390] sm:$0xff]
        %v3203 = vld [vmem:[#allocation2 + $0x398] sm:$0xff]
        %v3204 = vld [vmem:[#allocation2 + $0x3a0] sm:$0xff]
        %v3205 = vld [vmem:[#allocation2 + $0x3a8] sm:$0xff]
        %v3206 = vld [vmem:[#allocation2 + $0x3b0] sm:$0xff]
        %v3207 = vld [vmem:[#allocation2 + $0x3b8] sm:$0xff]
        %v3208 = vld [vmem:[#allocation2 + $0x3c0] sm:$0xff]
        %v3209 = vld [vmem:[#allocation2 + $0x3c8] sm:$0xff]
        %v3210 = vld [vmem:[#allocation2 + $0x3d0] sm:$0xff]
        %v3211 = vld [vmem:[#allocation2 + $0x3d8] sm:$0xff]
        %v3212 = vld [vmem:[#allocation2 + $0x3e0] sm:$0xff]
        %v3213 = vld [vmem:[#allocation2 + $0x3e8] sm:$0xff]
        %v3214 = vld [vmem:[#allocation2 + $0x3f0] sm:$0xff]
        %v3215 = vld [vmem:[#allocation2 + $0x3f8] sm:$0xff]
        %v3216 = vld [vmem:[#allocation2 + $0x400] sm:$0xff]
        %v3217 = vld [vmem:[#allocation2 + $0x408] sm:$0xff]
        %v3218 = vld [vmem:[#allocation2 + $0x410] sm:$0xff]
        %v3219 = vld [vmem:[#allocation2 + $0x418] sm:$0xff]
        %v3220 = vld [vmem:[#allocation2 + $0x420] sm:$0xff]
        %v3221 = vld [vmem:[#allocation2 + $0x428] sm:$0xff]
        %v3222 = vld [vmem:[#allocation2 + $0x430] sm:$0xff]
        %v3223 = vld [vmem:[#allocation2 + $0x438] sm:$0xff]
        %v3224 = vld [vmem:[#allocation2 + $0x440] sm:$0xff]
        %v3225 = vld [vmem:[#allocation2 + $0x448] sm:$0xff]
        %v3226 = vld [vmem:[#allocation2 + $0x450] sm:$0xff]
        %v3227 = vld [vmem:[#allocation2 + $0x458] sm:$0xff]
        %v3228 = vld [vmem:[#allocation2 + $0x460] sm:$0xff]
        %v3229 = vld [vmem:[#allocation2 + $0x468] sm:$0xff]
        %v3230 = vld [vmem:[#allocation2 + $0x470] sm:$0xff]
        %v3231 = vld [vmem:[#allocation2 + $0x478] sm:$0xff]
        %v3232 = vld [vmem:[#allocation6] sm:$0xf]
        %v3233 = vld [vmem:[#allocation6 + $0x4] sm:$0xf]
        %v3234 = vld [vmem:[#allocation6 + $0x8] sm:$0xf]
        %v3235 = vld [vmem:[#allocation6 + $0xc] sm:$0xf]
        %v3236 = vld [vmem:[#allocation6 + $0x10] sm:$0xf]
        %v3237 = vld [vmem:[#allocation6 + $0x14] sm:$0xf]
        %v3238 = vld [vmem:[#allocation6 + $0x18] sm:$0xf]
        %v3239 = vld [vmem:[#allocation6 + $0x1c] sm:$0xf]
        %v3240 = vld [vmem:[#allocation6 + $0x20] sm:$0xf]
        %v3241 = vld [vmem:[#allocation6 + $0x24] sm:$0xf]
        %v3242 = vld [vmem:[#allocation6 + $0x28] sm:$0xf]
        %v3243 = vld [vmem:[#allocation6 + $0x2c] sm:$0xf]
        %v3244 = vld [vmem:[#allocation6 + $0x30] sm:$0xf]
        %v3245 = vld [vmem:[#allocation6 + $0x34] sm:$0xf]
        %v3246 = vld [vmem:[#allocation6 + $0x38] sm:$0xf]
        %v3247 = vld [vmem:[#allocation6 + $0x3c] sm:$0xf]
        %v3248 = vld [vmem:[#allocation6 + $0x40] sm:$0xf]
        %v3249 = vld [vmem:[#allocation6 + $0x44] sm:$0xf]
        %v3250 = vld [vmem:[#allocation6 + $0x48] sm:$0xf]
        %v3251 = vld [vmem:[#allocation6 + $0x4c] sm:$0xf]
        %v3252 = vld [vmem:[#allocation6 + $0x50] sm:$0xf]
        %v3253 = vld [vmem:[#allocation6 + $0x54] sm:$0xf]
        %v3254 = vld [vmem:[#allocation6 + $0x58] sm:$0xf]
        %v3255 = vld [vmem:[#allocation6 + $0x5c] sm:$0xf]
        %v3256 = vld [vmem:[#allocation6 + $0x60] sm:$0xf]
        %v3257 = vld [vmem:[#allocation6 + $0x64] sm:$0xf]
        %v3258 = vld [vmem:[#allocation6 + $0x68] sm:$0xf]
        %v3259 = vld [vmem:[#allocation6 + $0x6c] sm:$0xf]
        %v3260 = vld [vmem:[#allocation6 + $0x70] sm:$0xf]
        %v3261 = vld [vmem:[#allocation6 + $0x74] sm:$0xf]
        %v3262 = vld [vmem:[#allocation6 + $0x78] sm:$0xf]
        %v3263 = vld [vmem:[#allocation6 + $0x7c] sm:$0xf]
        %v3264 = vld [vmem:[#allocation6 + $0x80] sm:$0xf]
        %v3265 = vld [vmem:[#allocation6 + $0x84] sm:$0xf]
        %v3266 = vld [vmem:[#allocation6 + $0x88] sm:$0xf]
        %v3267 = vld [vmem:[#allocation6 + $0x8c] sm:$0xf]
        %v3268 = vld [vmem:[#allocation6 + $0x90] sm:$0xf]
        %v3269 = vld [vmem:[#allocation6 + $0x94] sm:$0xf]
        %v3270 = vld [vmem:[#allocation6 + $0x98] sm:$0xf]
        %v3271 = vld [vmem:[#allocation6 + $0x9c] sm:$0xf]
        %v3272 = vld [vmem:[#allocation6 + $0xa0] sm:$0xf]
        %v3273 = vld [vmem:[#allocation6 + $0xa4] sm:$0xf]
        %v3274 = vld [vmem:[#allocation6 + $0xa8] sm:$0xf]
        %v3275 = vld [vmem:[#allocation6 + $0xac] sm:$0xf]
        %v3276 = vld [vmem:[#allocation6 + $0xb0] sm:$0xf]
        %v3277 = vld [vmem:[#allocation6 + $0xb4] sm:$0xf]
        %v3278 = vld [vmem:[#allocation6 + $0xb8] sm:$0xf]
        %v3279 = vld [vmem:[#allocation6 + $0xbc] sm:$0xf]
        %v3280 = vld [vmem:[#allocation6 + $0xc0] sm:$0xf]
        %v3281 = vld [vmem:[#allocation6 + $0xc4] sm:$0xf]
        %v3282 = vld [vmem:[#allocation6 + $0xc8] sm:$0xf]
        %v3283 = vld [vmem:[#allocation6 + $0xcc] sm:$0xf]
        %v3284 = vld [vmem:[#allocation6 + $0xd0] sm:$0xf]
        %v3285 = vld [vmem:[#allocation6 + $0xd4] sm:$0xf]
        %v3286 = vld [vmem:[#allocation6 + $0xd8] sm:$0xf]
        %v3287 = vld [vmem:[#allocation6 + $0xdc] sm:$0xf]
        %v3288 = vld [vmem:[#allocation6 + $0xe0] sm:$0xf]
        %v3289 = vld [vmem:[#allocation6 + $0xe4] sm:$0xf]
        %v3290 = vld [vmem:[#allocation6 + $0xe8] sm:$0xf]
        %v3291 = vld [vmem:[#allocation6 + $0xec] sm:$0xf]
        %v3292 = vld [vmem:[#allocation6 + $0xf0] sm:$0xf]
        %v3293 = vld [vmem:[#allocation6 + $0xf4] sm:$0xf]
        %v3294 = vld [vmem:[#allocation6 + $0xf8] sm:$0xf]
        %v3295 = vld [vmem:[#allocation6 + $0xfc] sm:$0xf]
        %v3296 = vld [vmem:[#allocation6 + $0x100] sm:$0xf]
        %v3297 = vld [vmem:[#allocation6 + $0x104] sm:$0xf]
        %v3298 = vld [vmem:[#allocation6 + $0x108] sm:$0xf]
        %v3299 = vld [vmem:[#allocation6 + $0x10c] sm:$0xf]
        %v3300 = vld [vmem:[#allocation6 + $0x110] sm:$0xf]
        %v3301 = vld [vmem:[#allocation6 + $0x114] sm:$0xf]
        %v3302 = vld [vmem:[#allocation6 + $0x118] sm:$0xf]
        %v3303 = vld [vmem:[#allocation6 + $0x11c] sm:$0xf]
        %v3304 = vld [vmem:[#allocation6 + $0x120] sm:$0xf]
        %v3305 = vld [vmem:[#allocation6 + $0x124] sm:$0xf]
        %v3306 = vld [vmem:[#allocation6 + $0x128] sm:$0xf]
        %v3307 = vld [vmem:[#allocation6 + $0x12c] sm:$0xf]
        %v3308 = vld [vmem:[#allocation6 + $0x130] sm:$0xf]
        %v3309 = vld [vmem:[#allocation6 + $0x134] sm:$0xf]
        %v3310 = vld [vmem:[#allocation6 + $0x138] sm:$0xf]
        %v3311 = vld [vmem:[#allocation6 + $0x13c] sm:$0xf]
        %v3312 = vld [vmem:[#allocation6 + $0x140] sm:$0xf]
        %v3313 = vld [vmem:[#allocation6 + $0x144] sm:$0xf]
        %v3314 = vld [vmem:[#allocation6 + $0x148] sm:$0xf]
        %v3315 = vld [vmem:[#allocation6 + $0x14c] sm:$0xf]
        %v3316 = vld [vmem:[#allocation6 + $0x150] sm:$0xf]
        %v3317 = vld [vmem:[#allocation6 + $0x154] sm:$0xf]
        %v3318 = vld [vmem:[#allocation6 + $0x158] sm:$0xf]
        %v3319 = vld [vmem:[#allocation6 + $0x15c] sm:$0xf]
        %v3320 = vld [vmem:[#allocation6 + $0x160] sm:$0xf]
        %v3321 = vld [vmem:[#allocation6 + $0x164] sm:$0xf]
        %v3322 = vld [vmem:[#allocation6 + $0x168] sm:$0xf]
        %v3323 = vld [vmem:[#allocation6 + $0x16c] sm:$0xf]
        %v3324 = vld [vmem:[#allocation6 + $0x170] sm:$0xf]
        %v3325 = vld [vmem:[#allocation6 + $0x174] sm:$0xf]
        %v3326 = vld [vmem:[#allocation6 + $0x178] sm:$0xf]
        %v3327 = vld [vmem:[#allocation6 + $0x17c] sm:$0xf]
        %v3328 = vld [vmem:[#allocation6 + $0x180] sm:$0xf]
        %v3329 = vld [vmem:[#allocation6 + $0x184] sm:$0xf]
        %v3330 = vld [vmem:[#allocation6 + $0x188] sm:$0xf]
        %v3331 = vld [vmem:[#allocation6 + $0x18c] sm:$0xf]
        %v3332 = vld [vmem:[#allocation6 + $0x190] sm:$0xf]
        %v3333 = vld [vmem:[#allocation6 + $0x194] sm:$0xf]
        %v3334 = vld [vmem:[#allocation6 + $0x198] sm:$0xf]
        %v3335 = vld [vmem:[#allocation6 + $0x19c] sm:$0xf]
        %v3336 = vld [vmem:[#allocation6 + $0x1a0] sm:$0xf]
        %v3337 = vld [vmem:[#allocation6 + $0x1a4] sm:$0xf]
        %v3338 = vld [vmem:[#allocation6 + $0x1a8] sm:$0xf]
        %v3339 = vld [vmem:[#allocation6 + $0x1ac] sm:$0xf]
        %v3340 = vld [vmem:[#allocation6 + $0x1b0] sm:$0xf]
        %v3341 = vld [vmem:[#allocation6 + $0x1b4] sm:$0xf]
        %v3342 = vld [vmem:[#allocation6 + $0x1b8] sm:$0xf]
        %v3343 = vld [vmem:[#allocation6 + $0x1bc] sm:$0xf]
        %v3344 = vld [vmem:[#allocation6 + $0x1c0] sm:$0xf]
        %v3345 = vld [vmem:[#allocation6 + $0x1c4] sm:$0xf]
        %v3346 = vld [vmem:[#allocation6 + $0x1c8] sm:$0xf]
        %v3347 = vld [vmem:[#allocation6 + $0x1cc] sm:$0xf]
        %v3348 = vld [vmem:[#allocation6 + $0x1d0] sm:$0xf]
        %v3349 = vld [vmem:[#allocation6 + $0x1d4] sm:$0xf]
        %v3350 = vld [vmem:[#allocation6 + $0x1d8] sm:$0xf]
        %v3351 = vld [vmem:[#allocation6 + $0x1dc] sm:$0xf]
        %v3352 = vld [vmem:[#allocation6 + $0x1e0] sm:$0xf]
        %v3353 = vld [vmem:[#allocation6 + $0x1e4] sm:$0xf]
        %v3354 = vld [vmem:[#allocation6 + $0x1e8] sm:$0xf]
        %v3355 = vld [vmem:[#allocation6 + $0x1ec] sm:$0xf]
        %v3356 = vld [vmem:[#allocation6 + $0x1f0] sm:$0xf]
        %v3357 = vld [vmem:[#allocation6 + $0x1f4] sm:$0xf]
        %v3358 = vld [vmem:[#allocation6 + $0x1f8] sm:$0xf]
        %v3359 = vld [vmem:[#allocation6 + $0x1fc] sm:$0xf]
        %v3360 = vld [vmem:[#allocation6 + $0x200] sm:$0xf]
        %v3361 = vld [vmem:[#allocation6 + $0x204] sm:$0xf]
        %v3362 = vld [vmem:[#allocation6 + $0x208] sm:$0xf]
        %v3363 = vld [vmem:[#allocation6 + $0x20c] sm:$0xf]
        %v3364 = vld [vmem:[#allocation6 + $0x210] sm:$0xf]
        %v3365 = vld [vmem:[#allocation6 + $0x214] sm:$0xf]
        %v3366 = vld [vmem:[#allocation6 + $0x218] sm:$0xf]
        %v3367 = vld [vmem:[#allocation6 + $0x21c] sm:$0xf]
        %v3368 = vld [vmem:[#allocation6 + $0x220] sm:$0xf]
        %v3369 = vld [vmem:[#allocation6 + $0x224] sm:$0xf]
        %v3370 = vld [vmem:[#allocation6 + $0x228] sm:$0xf]
        %v3371 = vld [vmem:[#allocation6 + $0x22c] sm:$0xf]
        %v3372 = vld [vmem:[#allocation6 + $0x230] sm:$0xf]
        %v3373 = vld [vmem:[#allocation6 + $0x234] sm:$0xf]
        %v3374 = vld [vmem:[#allocation6 + $0x238] sm:$0xf]
        %v3375 = vld [vmem:[#allocation6 + $0x23c] sm:$0xf]
        %v3520 = vunpack.c.l.b16 %v3232
        %v3521 = vunpack.c.l.b16 %v3233
        %v3522 = vunpack.c.l.b16 %v3234
        %v3523 = vunpack.c.l.b16 %v3235
        %v3524 = vunpack.c.l.b16 %v3236
        %v3525 = vunpack.c.l.b16 %v3237
        %v3526 = vunpack.c.l.b16 %v3238
        %v3527 = vunpack.c.l.b16 %v3239
        %v3528 = vunpack.c.l.b16 %v3240
        %v3529 = vunpack.c.l.b16 %v3241
        %v3530 = vunpack.c.l.b16 %v3242
        %v3531 = vunpack.c.l.b16 %v3243
        %v3532 = vunpack.c.l.b16 %v3244
        %v3533 = vunpack.c.l.b16 %v3245
        %v3534 = vunpack.c.l.b16 %v3246
        %v3535 = vunpack.c.l.b16 %v3247
        %v3536 = vunpack.c.l.b16 %v3248
        %v3537 = vunpack.c.l.b16 %v3249
        %v3538 = vunpack.c.l.b16 %v3250
        %v3539 = vunpack.c.l.b16 %v3251
        %v3540 = vunpack.c.l.b16 %v3252
        %v3541 = vunpack.c.l.b16 %v3253
        %v3542 = vunpack.c.l.b16 %v3254
        %v3543 = vunpack.c.l.b16 %v3255
        %v3544 = vunpack.c.l.b16 %v3256
        %v3545 = vunpack.c.l.b16 %v3257
        %v3546 = vunpack.c.l.b16 %v3258
        %v3547 = vunpack.c.l.b16 %v3259
        %v3548 = vunpack.c.l.b16 %v3260
        %v3549 = vunpack.c.l.b16 %v3261
        %v3550 = vunpack.c.l.b16 %v3262
        %v3551 = vunpack.c.l.b16 %v3263
        %v3552 = vunpack.c.l.b16 %v3264
        %v3553 = vunpack.c.l.b16 %v3265
        %v3554 = vunpack.c.l.b16 %v3266
        %v3555 = vunpack.c.l.b16 %v3267
        %v3556 = vunpack.c.l.b16 %v3268
        %v3557 = vunpack.c.l.b16 %v3269
        %v3558 = vunpack.c.l.b16 %v3270
        %v3559 = vunpack.c.l.b16 %v3271
        %v3560 = vunpack.c.l.b16 %v3272
        %v3561 = vunpack.c.l.b16 %v3273
        %v3562 = vunpack.c.l.b16 %v3274
        %v3563 = vunpack.c.l.b16 %v3275
        %v3564 = vunpack.c.l.b16 %v3276
        %v3565 = vunpack.c.l.b16 %v3277
        %v3566 = vunpack.c.l.b16 %v3278
        %v3567 = vunpack.c.l.b16 %v3279
        %v3568 = vunpack.c.l.b16 %v3280
        %v3569 = vunpack.c.l.b16 %v3281
        %v3570 = vunpack.c.l.b16 %v3282
        %v3571 = vunpack.c.l.b16 %v3283
        %v3572 = vunpack.c.l.b16 %v3284
        %v3573 = vunpack.c.l.b16 %v3285
        %v3574 = vunpack.c.l.b16 %v3286
        %v3575 = vunpack.c.l.b16 %v3287
        %v3576 = vunpack.c.l.b16 %v3288
        %v3577 = vunpack.c.l.b16 %v3289
        %v3578 = vunpack.c.l.b16 %v3290
        %v3579 = vunpack.c.l.b16 %v3291
        %v3580 = vunpack.c.l.b16 %v3292
        %v3581 = vunpack.c.l.b16 %v3293
        %v3582 = vunpack.c.l.b16 %v3294
        %v3583 = vunpack.c.l.b16 %v3295
        %v3584 = vunpack.c.l.b16 %v3296
        %v3585 = vunpack.c.l.b16 %v3297
        %v3586 = vunpack.c.l.b16 %v3298
        %v3587 = vunpack.c.l.b16 %v3299
        %v3588 = vunpack.c.l.b16 %v3300
        %v3589 = vunpack.c.l.b16 %v3301
        %v3590 = vunpack.c.l.b16 %v3302
        %v3591 = vunpack.c.l.b16 %v3303
        %v3592 = vunpack.c.l.b16 %v3304
        %v3593 = vunpack.c.l.b16 %v3305
        %v3594 = vunpack.c.l.b16 %v3306
        %v3595 = vunpack.c.l.b16 %v3307
        %v3596 = vunpack.c.l.b16 %v3308
        %v3597 = vunpack.c.l.b16 %v3309
        %v3598 = vunpack.c.l.b16 %v3310
        %v3599 = vunpack.c.l.b16 %v3311
        %v3600 = vunpack.c.l.b16 %v3312
        %v3601 = vunpack.c.l.b16 %v3313
        %v3602 = vunpack.c.l.b16 %v3314
        %v3603 = vunpack.c.l.b16 %v3315
        %v3604 = vunpack.c.l.b16 %v3316
        %v3605 = vunpack.c.l.b16 %v3317
        %v3606 = vunpack.c.l.b16 %v3318
        %v3607 = vunpack.c.l.b16 %v3319
        %v3608 = vunpack.c.l.b16 %v3320
        %v3609 = vunpack.c.l.b16 %v3321
        %v3610 = vunpack.c.l.b16 %v3322
        %v3611 = vunpack.c.l.b16 %v3323
        %v3612 = vunpack.c.l.b16 %v3324
        %v3613 = vunpack.c.l.b16 %v3325
        %v3614 = vunpack.c.l.b16 %v3326
        %v3615 = vunpack.c.l.b16 %v3327
        %v3616 = vunpack.c.l.b16 %v3328
        %v3617 = vunpack.c.l.b16 %v3329
        %v3618 = vunpack.c.l.b16 %v3330
        %v3619 = vunpack.c.l.b16 %v3331
        %v3620 = vunpack.c.l.b16 %v3332
        %v3621 = vunpack.c.l.b16 %v3333
        %v3622 = vunpack.c.l.b16 %v3334
        %v3623 = vunpack.c.l.b16 %v3335
        %v3624 = vunpack.c.l.b16 %v3336
        %v3625 = vunpack.c.l.b16 %v3337
        %v3626 = vunpack.c.l.b16 %v3338
        %v3627 = vunpack.c.l.b16 %v3339
        %v3628 = vunpack.c.l.b16 %v3340
        %v3629 = vunpack.c.l.b16 %v3341
        %v3630 = vunpack.c.l.b16 %v3342
        %v3631 = vunpack.c.l.b16 %v3343
        %v3632 = vunpack.c.l.b16 %v3344
        %v3633 = vunpack.c.l.b16 %v3345
        %v3634 = vunpack.c.l.b16 %v3346
        %v3635 = vunpack.c.l.b16 %v3347
        %v3636 = vunpack.c.l.b16 %v3348
        %v3637 = vunpack.c.l.b16 %v3349
        %v3638 = vunpack.c.l.b16 %v3350
        %v3639 = vunpack.c.l.b16 %v3351
        %v3640 = vunpack.c.l.b16 %v3352
        %v3641 = vunpack.c.l.b16 %v3353
        %v3642 = vunpack.c.l.b16 %v3354
        %v3643 = vunpack.c.l.b16 %v3355
        %v3644 = vunpack.c.l.b16 %v3356
        %v3645 = vunpack.c.l.b16 %v3357
        %v3646 = vunpack.c.l.b16 %v3358
        %v3647 = vunpack.c.l.b16 %v3359
        %v3648 = vunpack.c.l.b16 %v3360
        %v3649 = vunpack.c.l.b16 %v3361
        %v3650 = vunpack.c.l.b16 %v3362
        %v3651 = vunpack.c.l.b16 %v3363
        %v3652 = vunpack.c.l.b16 %v3364
        %v3653 = vunpack.c.l.b16 %v3365
        %v3654 = vunpack.c.l.b16 %v3366
        %v3655 = vunpack.c.l.b16 %v3367
        %v3656 = vunpack.c.l.b16 %v3368
        %v3657 = vunpack.c.l.b16 %v3369
        %v3658 = vunpack.c.l.b16 %v3370
        %v3659 = vunpack.c.l.b16 %v3371
        %v3660 = vunpack.c.l.b16 %v3372
        %v3661 = vunpack.c.l.b16 %v3373
        %v3662 = vunpack.c.l.b16 %v3374
        %v3663 = vunpack.c.l.b16 %v3375
        %v3664 = vpack.c.b16 %v3521, %v3520
        %v3665 = vpack.c.b16 %v3523, %v3522
        %v3666 = vpack.c.b16 %v3525, %v3524
        %v3667 = vpack.c.b16 %v3527, %v3526
        %v3668 = vpack.c.b16 %v3529, %v3528
        %v3669 = vpack.c.b16 %v3531, %v3530
        %v3670 = vpack.c.b16 %v3533, %v3532
        %v3671 = vpack.c.b16 %v3535, %v3534
        %v3672 = vpack.c.b16 %v3537, %v3536
        %v3673 = vpack.c.b16 %v3539, %v3538
        %v3674 = vpack.c.b16 %v3541, %v3540
        %v3675 = vpack.c.b16 %v3543, %v3542
        %v3676 = vpack.c.b16 %v3545, %v3544
        %v3677 = vpack.c.b16 %v3547, %v3546
        %v3678 = vpack.c.b16 %v3549, %v3548
        %v3679 = vpack.c.b16 %v3551, %v3550
        %v3680 = vpack.c.b16 %v3553, %v3552
        %v3681 = vpack.c.b16 %v3555, %v3554
        %v3682 = vpack.c.b16 %v3557, %v3556
        %v3683 = vpack.c.b16 %v3559, %v3558
        %v3684 = vpack.c.b16 %v3561, %v3560
        %v3685 = vpack.c.b16 %v3563, %v3562
        %v3686 = vpack.c.b16 %v3565, %v3564
        %v3687 = vpack.c.b16 %v3567, %v3566
        %v3688 = vpack.c.b16 %v3569, %v3568
        %v3689 = vpack.c.b16 %v3571, %v3570
        %v3690 = vpack.c.b16 %v3573, %v3572
        %v3691 = vpack.c.b16 %v3575, %v3574
        %v3692 = vpack.c.b16 %v3577, %v3576
        %v3693 = vpack.c.b16 %v3579, %v3578
        %v3694 = vpack.c.b16 %v3581, %v3580
        %v3695 = vpack.c.b16 %v3583, %v3582
        %v3696 = vpack.c.b16 %v3585, %v3584
        %v3697 = vpack.c.b16 %v3587, %v3586
        %v3698 = vpack.c.b16 %v3589, %v3588
        %v3699 = vpack.c.b16 %v3591, %v3590
        %v3700 = vpack.c.b16 %v3593, %v3592
        %v3701 = vpack.c.b16 %v3595, %v3594
        %v3702 = vpack.c.b16 %v3597, %v3596
        %v3703 = vpack.c.b16 %v3599, %v3598
        %v3704 = vpack.c.b16 %v3601, %v3600
        %v3705 = vpack.c.b16 %v3603, %v3602
        %v3706 = vpack.c.b16 %v3605, %v3604
        %v3707 = vpack.c.b16 %v3607, %v3606
        %v3708 = vpack.c.b16 %v3609, %v3608
        %v3709 = vpack.c.b16 %v3611, %v3610
        %v3710 = vpack.c.b16 %v3613, %v3612
        %v3711 = vpack.c.b16 %v3615, %v3614
        %v3712 = vpack.c.b16 %v3617, %v3616
        %v3713 = vpack.c.b16 %v3619, %v3618
        %v3714 = vpack.c.b16 %v3621, %v3620
        %v3715 = vpack.c.b16 %v3623, %v3622
        %v3716 = vpack.c.b16 %v3625, %v3624
        %v3717 = vpack.c.b16 %v3627, %v3626
        %v3718 = vpack.c.b16 %v3629, %v3628
        %v3719 = vpack.c.b16 %v3631, %v3630
        %v3720 = vpack.c.b16 %v3633, %v3632
        %v3721 = vpack.c.b16 %v3635, %v3634
        %v3722 = vpack.c.b16 %v3637, %v3636
        %v3723 = vpack.c.b16 %v3639, %v3638
        %v3724 = vpack.c.b16 %v3641, %v3640
        %v3725 = vpack.c.b16 %v3643, %v3642
        %v3726 = vpack.c.b16 %v3645, %v3644
        %v3727 = vpack.c.b16 %v3647, %v3646
        %v3728 = vpack.c.b16 %v3649, %v3648
        %v3729 = vpack.c.b16 %v3651, %v3650
        %v3730 = vpack.c.b16 %v3653, %v3652
        %v3731 = vpack.c.b16 %v3655, %v3654
        %v3732 = vpack.c.b16 %v3657, %v3656
        %v3733 = vpack.c.b16 %v3659, %v3658
        %v3734 = vpack.c.b16 %v3661, %v3660
        %v3735 = vpack.c.b16 %v3663, %v3662
        %3808 = vmatprep.subr.bf16.mxu0 0
        %3809 = vmatpush1.bf16.msra.mxu0 %v3664
        %3810 = vmatprep.subr.bf16.mxu0 0
        %3811 = vmatpush1.bf16.msra.mxu0 %v3665
        %3812 = vmatprep.subr.bf16.mxu0 0
        %3813 = vmatpush1.bf16.msra.mxu0 %v3666
        %3814 = vmatprep.subr.bf16.mxu0 0
        %3815 = vmatpush1.bf16.msra.mxu0 %v3667
        %3816 = vmatprep.subr.bf16.mxu0 0
        %3817 = vmatpush1.bf16.msra.mxu0 %v3668
        %3818 = vmatprep.subr.bf16.mxu0 0
        %3819 = vmatpush1.bf16.msra.mxu0 %v3669
        %3820 = vmatprep.subr.bf16.mxu0 0
        %3821 = vmatpush1.bf16.msra.mxu0 %v3670
        %3822 = vmatprep.subr.bf16.mxu0 0
        %3823 = vmatpush1.bf16.msra.mxu0 %v3671
        %3824 = vmatprep.subr.bf16.mxu0 0
        %3825 = vmatpush1.bf16.msra.mxu0 %v3672
        %3826 = vmatprep.subr.bf16.mxu0 0
        %3827 = vmatpush1.bf16.msra.mxu0 %v3673
        %3828 = vmatprep.subr.bf16.mxu0 0
        %3829 = vmatpush1.bf16.msra.mxu0 %v3674
        %3830 = vmatprep.subr.bf16.mxu0 0
        %3831 = vmatpush1.bf16.msra.mxu0 %v3675
        %3832 = vmatprep.subr.bf16.mxu0 0
        %3833 = vmatpush1.bf16.msra.mxu0 %v3676
        %3834 = vmatprep.subr.bf16.mxu0 0
        %3835 = vmatpush1.bf16.msra.mxu0 %v3677
        %3836 = vmatprep.subr.bf16.mxu0 0
        %3837 = vmatpush1.bf16.msra.mxu0 %v3678
        %3838 = vmatprep.subr.bf16.mxu0 0
        %3839 = vmatpush1.bf16.msra.mxu0 %v3679
        %3840 = vmatprep.mubr.bf16.mxu0 %v3089
        %3841 = vmatmul.mubr.bf16.gmra.mrb[0].mxu0 %v3088
        %v3842 = vpop.f32.mrb[0].mxu0
        %v3843 = vadd.f32 0.0, %v3842
        %v3844 = vpop.f32.mrb[0].mxu0
        %v3845 = vpop.f32.mrb[0].mxu0
        %v3846 = vadd.f32 0.0, %v3845
        %v3847 = vpop.f32.mrb[0].mxu0
        %3848 = vmatprep.mubr.bf16.mxu0 %v3098
        %3849 = vmatmul.mubr.bf16.gmra.mrb[0].mxu0 %v3097
        %v3850 = vpop.f32.mrb[0].mxu0
        %v3851 = vadd.f32 0.0, %v3850
        %v3852 = vpop.f32.mrb[0].mxu0
        %v3853 = vpop.f32.mrb[0].mxu0
        %v3854 = vadd.f32 0.0, %v3853
        %v3855 = vpop.f32.mrb[0].mxu0
        %3856 = vmatprep.mubr.bf16.mxu0 %v3107
        %3857 = vmatmul.mubr.bf16.gmra.mrb[0].mxu0 %v3106
        %v3858 = vpop.f32.mrb[0].mxu0
        %v3859 = vadd.f32 0.0, %v3858
        %v3860 = vpop.f32.mrb[0].mxu0
        %v3861 = vpop.f32.mrb[0].mxu0
        %v3862 = vadd.f32 0.0, %v3861
        %v3863 = vpop.f32.mrb[0].mxu0
        %3864 = vmatprep.mubr.bf16.mxu0 %v3116
        %3865 = vmatmul.mubr.bf16.gmra.mrb[0].mxu0 %v3115
        %v3866 = vpop.f32.mrb[0].mxu0
        %v3867 = vadd.f32 0.0, %v3866
        %v3868 = vpop.f32.mrb[0].mxu0
        %v3869 = vpop.f32.mrb[0].mxu0
        %v3870 = vadd.f32 0.0, %v3869
        %v3871 = vpop.f32.mrb[0].mxu0
        %3872 = vmatprep.mubr.bf16.mxu0 %v3125
        %3873 = vmatmul.mubr.bf16.gmra.mrb[0].mxu0 %v3124
        %v3874 = vpop.f32.mrb[0].mxu0
        %v3875 = vadd.f32 0.0, %v3874
        %v3876 = vpop.f32.mrb[0].mxu0
        %v3877 = vpop.f32.mrb[0].mxu0
        %v3878 = vadd.f32 0.0, %v3877
        %v3879 = vpop.f32.mrb[0].mxu0
        %3880 = vmatprep.mubr.bf16.mxu0 %v3134
        %3881 = vmatmul.mubr.bf16.gmra.mrb[0].mxu0 %v3133
        %v3882 = vpop.f32.mrb[0].mxu0
        %v3883 = vadd.f32 0.0, %v3882
        %v3884 = vpop.f32.mrb[0].mxu0
        %v3885 = vpop.f32.mrb[0].mxu0
        %v3886 = vadd.f32 0.0, %v3885
        %v3887 = vpop.f32.mrb[0].mxu0
        %3888 = vmatprep.mubr.bf16.mxu0 %v3143
        %3889 = vmatmul.mubr.bf16.gmra.mrb[0].mxu0 %v3142
        %v3890 = vpop.f32.mrb[0].mxu0
        %v3891 = vadd.f32 0.0, %v3890
        %v3892 = vpop.f32.mrb[0].mxu0
        %v3893 = vpop.f32.mrb[0].mxu0
        %v3894 = vadd.f32 0.0, %v3893
        %v3895 = vpop.f32.mrb[0].mxu0
        %3896 = vmatprep.mubr.bf16.mxu0 %v3152
        %3897 = vmatmul.mubr.bf16.gmra.mrb[0].mxu0 %v3151
        %v3898 = vpop.f32.mrb[0].mxu0
        %v3899 = vadd.f32 0.0, %v3898
        %v3900 = vpop.f32.mrb[0].mxu0
        %v3901 = vpop.f32.mrb[0].mxu0
        %v3902 = vadd.f32 0.0, %v3901
        %v3903 = vpop.f32.mrb[0].mxu0
        %3904 = vmatprep.mubr.bf16.mxu0 %v3161
        %3905 = vmatmul.mubr.bf16.gmra.mrb[0].mxu0 %v3160
        %v3906 = vpop.f32.mrb[0].mxu0
        %v3907 = vadd.f32 0.0, %v3906
        %v3908 = vpop.f32.mrb[0].mxu0
        %v3909 = vpop.f32.mrb[0].mxu0
        %v3910 = vadd.f32 0.0, %v3909
        %v3911 = vpop.f32.mrb[0].mxu0
        %3912 = vmatprep.mubr.bf16.mxu0 %v3170
        %3913 = vmatmul.mubr.bf16.gmra.mrb[0].mxu0 %v3169
        %v3914 = vpop.f32.mrb[0].mxu0
        %v3915 = vadd.f32 0.0, %v3914
        %v3916 = vpop.f32.mrb[0].mxu0
        %v3917 = vpop.f32.mrb[0].mxu0
        %v3918 = vadd.f32 0.0, %v3917
        %v3919 = vpop.f32.mrb[0].mxu0
        %3920 = vmatprep.mubr.bf16.mxu0 %v3179
        %3921 = vmatmul.mubr.bf16.gmra.mrb[0].mxu0 %v3178
        %v3922 = vpop.f32.mrb[0].mxu0
        %v3923 = vadd.f32 0.0, %v3922
        %v3924 = vpop.f32.mrb[0].mxu0
        %v3925 = vpop.f32.mrb[0].mxu0
        %v3926 = vadd.f32 0.0, %v3925
        %v3927 = vpop.f32.mrb[0].mxu0
        %3928 = vmatprep.mubr.bf16.mxu0 %v3188
        %3929 = vmatmul.mubr.bf16.gmra.mrb[0].mxu0 %v3187
        %v3930 = vpop.f32.mrb[0].mxu0
        %v3931 = vadd.f32 0.0, %v3930
        %v3932 = vpop.f32.mrb[0].mxu0
        %v3933 = vpop.f32.mrb[0].mxu0
        %v3934 = vadd.f32 0.0, %v3933
        %v3935 = vpop.f32.mrb[0].mxu0
        %3936 = vmatprep.mubr.bf16.mxu0 %v3197
        %3937 = vmatmul.mubr.bf16.gmra.mrb[0].mxu0 %v3196
        %v3938 = vpop.f32.mrb[0].mxu0
        %v3939 = vadd.f32 0.0, %v3938
        %v3940 = vpop.f32.mrb[0].mxu0
        %v3941 = vpop.f32.mrb[0].mxu0
        %v3942 = vadd.f32 0.0, %v3941
        %v3943 = vpop.f32.mrb[0].mxu0
        %3944 = vmatprep.mubr.bf16.mxu0 %v3206
        %3945 = vmatmul.mubr.bf16.gmra.mrb[0].mxu0 %v3205
        %v3946 = vpop.f32.mrb[0].mxu0
        %v3947 = vadd.f32 0.0, %v3946
        %v3948 = vpop.f32.mrb[0].mxu0
        %v3949 = vpop.f32.mrb[0].mxu0
        %v3950 = vadd.f32 0.0, %v3949
        %v3951 = vpop.f32.mrb[0].mxu0
        %3952 = vmatprep.mubr.bf16.mxu0 %v3215
        %3953 = vmatmul.mubr.bf16.gmra.mrb[0].mxu0 %v3214
        %v3954 = vpop.f32.mrb[0].mxu0
        %v3955 = vadd.f32 0.0, %v3954
        %v3956 = vpop.f32.mrb[0].mxu0
        %v3957 = vpop.f32.mrb[0].mxu0
        %v3958 = vadd.f32 0.0, %v3957
        %v3959 = vpop.f32.mrb[0].mxu0
        %3960 = vmatprep.mubr.bf16.mxu0 %v3224
        %3961 = vmatmul.mubr.bf16.gmra.mrb[0].mxu0 %v3223
        %v3962 = vpop.f32.mrb[0].mxu0
        %v3963 = vadd.f32 0.0, %v3962
        %v3964 = vpop.f32.mrb[0].mxu0
        %v3965 = vpop.f32.mrb[0].mxu0
        %v3966 = vadd.f32 0.0, %v3965
        %v3967 = vpop.f32.mrb[0].mxu0
        %3968 = vdwg.mxu0
        %3969 = vmatprep.subr.bf16.mxu0 0
        %3970 = vmatpush1.bf16.msra.mxu0 %v3680
        %3971 = vmatprep.subr.bf16.mxu0 0
        %3972 = vmatpush1.bf16.msra.mxu0 %v3681
        %3973 = vmatprep.subr.bf16.mxu0 0
        %3974 = vmatpush1.bf16.msra.mxu0 %v3682
        %3975 = vmatprep.subr.bf16.mxu0 0
        %3976 = vmatpush1.bf16.msra.mxu0 %v3683
        %3977 = vmatprep.subr.bf16.mxu0 0
        %3978 = vmatpush1.bf16.msra.mxu0 %v3684
        %3979 = vmatprep.subr.bf16.mxu0 0
        %3980 = vmatpush1.bf16.msra.mxu0 %v3685
        %3981 = vmatprep.subr.bf16.mxu0 0
        %3982 = vmatpush1.bf16.msra.mxu0 %v3686
        %3983 = vmatprep.subr.bf16.mxu0 0
        %3984 = vmatpush1.bf16.msra.mxu0 %v3687
        %3985 = vmatprep.subr.bf16.mxu0 0
        %3986 = vmatpush1.bf16.msra.mxu0 %v3688
        %3987 = vmatprep.subr.bf16.mxu0 0
        %3988 = vmatpush1.bf16.msra.mxu0 %v3689
        %3989 = vmatprep.subr.bf16.mxu0 0
        %3990 = vmatpush1.bf16.msra.mxu0 %v3690
        %3991 = vmatprep.subr.bf16.mxu0 0
        %3992 = vmatpush1.bf16.msra.mxu0 %v3691
        %3993 = vmatprep.subr.bf16.mxu0 0
        %3994 = vmatpush1.bf16.msra.mxu0 %v3692
        %3995 = vmatprep.subr.bf16.mxu0 0
        %3996 = vmatpush1.bf16.msra.mxu0 %v3693
        %3997 = vmatprep.subr.bf16.mxu0 0
        %3998 = vmatpush1.bf16.msra.mxu0 %v3694
        %3999 = vmatprep.subr.bf16.mxu0 0
        %4000 = vmatpush1.bf16.msra.mxu0 %v3695
        %4001 = vmatprep.mubr.bf16.mxu0 %v3091
        %4002 = vmatmul.mubr.bf16.gmra.mrb[0].mxu0 %v3090
        %v4003 = vpop.f32.mrb[0].mxu0
        %v4004 = vadd.f32 %v3843, %v4003
        %v4005 = vpop.f32.mrb[0].mxu0
        %v4006 = vpop.f32.mrb[0].mxu0
        %v4007 = vadd.f32 %v3846, %v4006
        %v4008 = vpop.f32.mrb[0].mxu0
        %4009 = vmatprep.mubr.bf16.mxu0 %v3100
        %4010 = vmatmul.mubr.bf16.gmra.mrb[0].mxu0 %v3099
        %v4011 = vpop.f32.mrb[0].mxu0
        %v4012 = vadd.f32 %v3851, %v4011
        %v4013 = vpop.f32.mrb[0].mxu0
        %v4014 = vpop.f32.mrb[0].mxu0
        %v4015 = vadd.f32 %v3854, %v4014
        %v4016 = vpop.f32.mrb[0].mxu0
        %4017 = vmatprep.mubr.bf16.mxu0 %v3109
        %4018 = vmatmul.mubr.bf16.gmra.mrb[0].mxu0 %v3108
        %v4019 = vpop.f32.mrb[0].mxu0
        %v4020 = vadd.f32 %v3859, %v4019
        %v4021 = vpop.f32.mrb[0].mxu0
        %v4022 = vpop.f32.mrb[0].mxu0
        %v4023 = vadd.f32 %v3862, %v4022
        %v4024 = vpop.f32.mrb[0].mxu0
        %4025 = vmatprep.mubr.bf16.mxu0 %v3118
        %4026 = vmatmul.mubr.bf16.gmra.mrb[0].mxu0 %v3117
        %v4027 = vpop.f32.mrb[0].mxu0
        %v4028 = vadd.f32 %v3867, %v4027
        %v4029 = vpop.f32.mrb[0].mxu0
        %v4030 = vpop.f32.mrb[0].mxu0
        %v4031 = vadd.f32 %v3870, %v4030
        %v4032 = vpop.f32.mrb[0].mxu0
        %4033 = vmatprep.mubr.bf16.mxu0 %v3127
        %4034 = vmatmul.mubr.bf16.gmra.mrb[0].mxu0 %v3126
        %v4035 = vpop.f32.mrb[0].mxu0
        %v4036 = vadd.f32 %v3875, %v4035
        %v4037 = vpop.f32.mrb[0].mxu0
        %v4038 = vpop.f32.mrb[0].mxu0
        %v4039 = vadd.f32 %v3878, %v4038
        %v4040 = vpop.f32.mrb[0].mxu0
        %4041 = vmatprep.mubr.bf16.mxu0 %v3136
        %4042 = vmatmul.mubr.bf16.gmra.mrb[0].mxu0 %v3135
        %v4043 = vpop.f32.mrb[0].mxu0
        %v4044 = vadd.f32 %v3883, %v4043
        %v4045 = vpop.f32.mrb[0].mxu0
        %v4046 = vpop.f32.mrb[0].mxu0
        %v4047 = vadd.f32 %v3886, %v4046
        %v4048 = vpop.f32.mrb[0].mxu0
        %4049 = vmatprep.mubr.bf16.mxu0 %v3145
        %4050 = vmatmul.mubr.bf16.gmra.mrb[0].mxu0 %v3144
        %v4051 = vpop.f32.mrb[0].mxu0
        %v4052 = vadd.f32 %v3891, %v4051
        %v4053 = vpop.f32.mrb[0].mxu0
        %v4054 = vpop.f32.mrb[0].mxu0
        %v4055 = vadd.f32 %v3894, %v4054
        %v4056 = vpop.f32.mrb[0].mxu0
        %4057 = vmatprep.mubr.bf16.mxu0 %v3154
        %4058 = vmatmul.mubr.bf16.gmra.mrb[0].mxu0 %v3153
        %v4059 = vpop.f32.mrb[0].mxu0
        %v4060 = vadd.f32 %v3899, %v4059
        %v4061 = vpop.f32.mrb[0].mxu0
        %v4062 = vpop.f32.mrb[0].mxu0
        %v4063 = vadd.f32 %v3902, %v4062
        %v4064 = vpop.f32.mrb[0].mxu0
        %4065 = vmatprep.mubr.bf16.mxu0 %v3163
        %4066 = vmatmul.mubr.bf16.gmra.mrb[0].mxu0 %v3162
        %v4067 = vpop.f32.mrb[0].mxu0
        %v4068 = vadd.f32 %v3907, %v4067
        %v4069 = vpop.f32.mrb[0].mxu0
        %v4070 = vpop.f32.mrb[0].mxu0
        %v4071 = vadd.f32 %v3910, %v4070
        %v4072 = vpop.f32.mrb[0].mxu0
        %4073 = vmatprep.mubr.bf16.mxu0 %v3172
        %4074 = vmatmul.mubr.bf16.gmra.mrb[0].mxu0 %v3171
        %v4075 = vpop.f32.mrb[0].mxu0
        %v4076 = vadd.f32 %v3915, %v4075
        %v4077 = vpop.f32.mrb[0].mxu0
        %v4078 = vpop.f32.mrb[0].mxu0
        %v4079 = vadd.f32 %v3918, %v4078
        %v4080 = vpop.f32.mrb[0].mxu0
        %4081 = vmatprep.mubr.bf16.mxu0 %v3181
        %4082 = vmatmul.mubr.bf16.gmra.mrb[0].mxu0 %v3180
        %v4083 = vpop.f32.mrb[0].mxu0
        %v4084 = vadd.f32 %v3923, %v4083
        %v4085 = vpop.f32.mrb[0].mxu0
        %v4086 = vpop.f32.mrb[0].mxu0
        %v4087 = vadd.f32 %v3926, %v4086
        %v4088 = vpop.f32.mrb[0].mxu0
        %4089 = vmatprep.mubr.bf16.mxu0 %v3190
        %4090 = vmatmul.mubr.bf16.gmra.mrb[0].mxu0 %v3189
        %v4091 = vpop.f32.mrb[0].mxu0
        %v4092 = vadd.f32 %v3931, %v4091
        %v4093 = vpop.f32.mrb[0].mxu0
        %v4094 = vpop.f32.mrb[0].mxu0
        %v4095 = vadd.f32 %v3934, %v4094
        %v4096 = vpop.f32.mrb[0].mxu0
        %4097 = vmatprep.mubr.bf16.mxu0 %v3199
        %4098 = vmatmul.mubr.bf16.gmra.mrb[0].mxu0 %v3198
        %v4099 = vpop.f32.mrb[0].mxu0
        %v4100 = vadd.f32 %v3939, %v4099
        %v4101 = vpop.f32.mrb[0].mxu0
        %v4102 = vpop.f32.mrb[0].mxu0
        %v4103 = vadd.f32 %v3942, %v4102
        %v4104 = vpop.f32.mrb[0].mxu0
        %4105 = vmatprep.mubr.bf16.mxu0 %v3208
        %4106 = vmatmul.mubr.bf16.gmra.mrb[0].mxu0 %v3207
        %v4107 = vpop.f32.mrb[0].mxu0
        %v4108 = vadd.f32 %v3947, %v4107
        %v4109 = vpop.f32.mrb[0].mxu0
        %v4110 = vpop.f32.mrb[0].mxu0
        %v4111 = vadd.f32 %v3950, %v4110
        %v4112 = vpop.f32.mrb[0].mxu0
        %4113 = vmatprep.mubr.bf16.mxu0 %v3217
        %4114 = vmatmul.mubr.bf16.gmra.mrb[0].mxu0 %v3216
        %v4115 = vpop.f32.mrb[0].mxu0
        %v4116 = vadd.f32 %v3955, %v4115
        %v4117 = vpop.f32.mrb[0].mxu0
        %v4118 = vpop.f32.mrb[0].mxu0
        %v4119 = vadd.f32 %v3958, %v4118
        %v4120 = vpop.f32.mrb[0].mxu0
        %4121 = vmatprep.mubr.bf16.mxu0 %v3226
        %4122 = vmatmul.mubr.bf16.gmra.mrb[0].mxu0 %v3225
        %v4123 = vpop.f32.mrb[0].mxu0
        %v4124 = vadd.f32 %v3963, %v4123
        %v4125 = vpop.f32.mrb[0].mxu0
        %v4126 = vpop.f32.mrb[0].mxu0
        %v4127 = vadd.f32 %v3966, %v4126
        %v4128 = vpop.f32.mrb[0].mxu0
        %4129 = vdwg.mxu0
        %4130 = vmatprep.subr.bf16.mxu0 0
        %4131 = vmatpush1.bf16.msra.mxu0 %v3696
        %4132 = vmatprep.subr.bf16.mxu0 0
        %4133 = vmatpush1.bf16.msra.mxu0 %v3697
        %4134 = vmatprep.subr.bf16.mxu0 0
        %4135 = vmatpush1.bf16.msra.mxu0 %v3698
        %4136 = vmatprep.subr.bf16.mxu0 0
        %4137 = vmatpush1.bf16.msra.mxu0 %v3699
        %4138 = vmatprep.subr.bf16.mxu0 0
        %4139 = vmatpush1.bf16.msra.mxu0 %v3700
        %4140 = vmatprep.subr.bf16.mxu0 0
        %4141 = vmatpush1.bf16.msra.mxu0 %v3701
        %4142 = vmatprep.subr.bf16.mxu0 0
        %4143 = vmatpush1.bf16.msra.mxu0 %v3702
        %4144 = vmatprep.subr.bf16.mxu0 0
        %4145 = vmatpush1.bf16.msra.mxu0 %v3703
        %4146 = vmatprep.subr.bf16.mxu0 0
        %4147 = vmatpush1.bf16.msra.mxu0 %v3704
        %4148 = vmatprep.subr.bf16.mxu0 0
        %4149 = vmatpush1.bf16.msra.mxu0 %v3705
        %4150 = vmatprep.subr.bf16.mxu0 0
        %4151 = vmatpush1.bf16.msra.mxu0 %v3706
        %4152 = vmatprep.subr.bf16.mxu0 0
        %4153 = vmatpush1.bf16.msra.mxu0 %v3707
        %4154 = vmatprep.subr.bf16.mxu0 0
        %4155 = vmatpush1.bf16.msra.mxu0 %v3708
        %4156 = vmatprep.subr.bf16.mxu0 0
        %4157 = vmatpush1.bf16.msra.mxu0 %v3709
        %4158 = vmatprep.subr.bf16.mxu0 0
        %4159 = vmatpush1.bf16.msra.mxu0 %v3710
        %4160 = vmatprep.subr.bf16.mxu0 0
        %4161 = vmatpush1.bf16.msra.mxu0 %v3711
        %4162 = vmatprep.mubr.bf16.mxu0 %v3093
        %4163 = vmatmul.mubr.bf16.gmra.mrb[0].mxu0 %v3092
        %v4164 = vpop.f32.mrb[0].mxu0
        %v4165 = vadd.f32 %v4004, %v4164
        %v4166 = vpop.f32.mrb[0].mxu0
        %v4167 = vpop.f32.mrb[0].mxu0
        %v4168 = vadd.f32 %v4007, %v4167
        %v4169 = vpop.f32.mrb[0].mxu0
        %4170 = vmatprep.mubr.bf16.mxu0 %v3102
        %4171 = vmatmul.mubr.bf16.gmra.mrb[0].mxu0 %v3101
        %v4172 = vpop.f32.mrb[0].mxu0
        %v4173 = vadd.f32 %v4012, %v4172
        %v4174 = vpop.f32.mrb[0].mxu0
        %v4175 = vpop.f32.mrb[0].mxu0
        %v4176 = vadd.f32 %v4015, %v4175
        %v4177 = vpop.f32.mrb[0].mxu0
        %4178 = vmatprep.mubr.bf16.mxu0 %v3111
        %4179 = vmatmul.mubr.bf16.gmra.mrb[0].mxu0 %v3110
        %v4180 = vpop.f32.mrb[0].mxu0
        %v4181 = vadd.f32 %v4020, %v4180
        %v4182 = vpop.f32.mrb[0].mxu0
        %v4183 = vpop.f32.mrb[0].mxu0
        %v4184 = vadd.f32 %v4023, %v4183
        %v4185 = vpop.f32.mrb[0].mxu0
        %4186 = vmatprep.mubr.bf16.mxu0 %v3120
        %4187 = vmatmul.mubr.bf16.gmra.mrb[0].mxu0 %v3119
        %v4188 = vpop.f32.mrb[0].mxu0
        %v4189 = vadd.f32 %v4028, %v4188
        %v4190 = vpop.f32.mrb[0].mxu0
        %v4191 = vpop.f32.mrb[0].mxu0
        %v4192 = vadd.f32 %v4031, %v4191
        %v4193 = vpop.f32.mrb[0].mxu0
        %4194 = vmatprep.mubr.bf16.mxu0 %v3129
        %4195 = vmatmul.mubr.bf16.gmra.mrb[0].mxu0 %v3128
        %v4196 = vpop.f32.mrb[0].mxu0
        %v4197 = vadd.f32 %v4036, %v4196
        %v4198 = vpop.f32.mrb[0].mxu0
        %v4199 = vpop.f32.mrb[0].mxu0
        %v4200 = vadd.f32 %v4039, %v4199
        %v4201 = vpop.f32.mrb[0].mxu0
        %4202 = vmatprep.mubr.bf16.mxu0 %v3138
        %4203 = vmatmul.mubr.bf16.gmra.mrb[0].mxu0 %v3137
        %v4204 = vpop.f32.mrb[0].mxu0
        %v4205 = vadd.f32 %v4044, %v4204
        %v4206 = vpop.f32.mrb[0].mxu0
        %v4207 = vpop.f32.mrb[0].mxu0
        %v4208 = vadd.f32 %v4047, %v4207
        %v4209 = vpop.f32.mrb[0].mxu0
        %4210 = vmatprep.mubr.bf16.mxu0 %v3147
        %4211 = vmatmul.mubr.bf16.gmra.mrb[0].mxu0 %v3146
        %v4212 = vpop.f32.mrb[0].mxu0
        %v4213 = vadd.f32 %v4052, %v4212
        %v4214 = vpop.f32.mrb[0].mxu0
        %v4215 = vpop.f32.mrb[0].mxu0
        %v4216 = vadd.f32 %v4055, %v4215
        %v4217 = vpop.f32.mrb[0].mxu0
        %4218 = vmatprep.mubr.bf16.mxu0 %v3156
        %4219 = vmatmul.mubr.bf16.gmra.mrb[0].mxu0 %v3155
        %v4220 = vpop.f32.mrb[0].mxu0
        %v4221 = vadd.f32 %v4060, %v4220
        %v4222 = vpop.f32.mrb[0].mxu0
        %v4223 = vpop.f32.mrb[0].mxu0
        %v4224 = vadd.f32 %v4063, %v4223
        %v4225 = vpop.f32.mrb[0].mxu0
        %4226 = vmatprep.mubr.bf16.mxu0 %v3165
        %4227 = vmatmul.mubr.bf16.gmra.mrb[0].mxu0 %v3164
        %v4228 = vpop.f32.mrb[0].mxu0
        %v4229 = vadd.f32 %v4068, %v4228
        %v4230 = vpop.f32.mrb[0].mxu0
        %v4231 = vpop.f32.mrb[0].mxu0
        %v4232 = vadd.f32 %v4071, %v4231
        %v4233 = vpop.f32.mrb[0].mxu0
        %4234 = vmatprep.mubr.bf16.mxu0 %v3174
        %4235 = vmatmul.mubr.bf16.gmra.mrb[0].mxu0 %v3173
        %v4236 = vpop.f32.mrb[0].mxu0
        %v4237 = vadd.f32 %v4076, %v4236
        %v4238 = vpop.f32.mrb[0].mxu0
        %v4239 = vpop.f32.mrb[0].mxu0
        %v4240 = vadd.f32 %v4079, %v4239
        %v4241 = vpop.f32.mrb[0].mxu0
        %4242 = vmatprep.mubr.bf16.mxu0 %v3183
        %4243 = vmatmul.mubr.bf16.gmra.mrb[0].mxu0 %v3182
        %v4244 = vpop.f32.mrb[0].mxu0
        %v4245 = vadd.f32 %v4084, %v4244
        %v4246 = vpop.f32.mrb[0].mxu0
        %v4247 = vpop.f32.mrb[0].mxu0
        %v4248 = vadd.f32 %v4087, %v4247
        %v4249 = vpop.f32.mrb[0].mxu0
        %4250 = vmatprep.mubr.bf16.mxu0 %v3192
        %4251 = vmatmul.mubr.bf16.gmra.mrb[0].mxu0 %v3191
        %v4252 = vpop.f32.mrb[0].mxu0
        %v4253 = vadd.f32 %v4092, %v4252
        %v4254 = vpop.f32.mrb[0].mxu0
        %v4255 = vpop.f32.mrb[0].mxu0
        %v4256 = vadd.f32 %v4095, %v4255
        %v4257 = vpop.f32.mrb[0].mxu0
        %4258 = vmatprep.mubr.bf16.mxu0 %v3201
        %4259 = vmatmul.mubr.bf16.gmra.mrb[0].mxu0 %v3200
        %v4260 = vpop.f32.mrb[0].mxu0
        %v4261 = vadd.f32 %v4100, %v4260
        %v4262 = vpop.f32.mrb[0].mxu0
        %v4263 = vpop.f32.mrb[0].mxu0
        %v4264 = vadd.f32 %v4103, %v4263
        %v4265 = vpop.f32.mrb[0].mxu0
        %4266 = vmatprep.mubr.bf16.mxu0 %v3210
        %4267 = vmatmul.mubr.bf16.gmra.mrb[0].mxu0 %v3209
        %v4268 = vpop.f32.mrb[0].mxu0
        %v4269 = vadd.f32 %v4108, %v4268
        %v4270 = vpop.f32.mrb[0].mxu0
        %v4271 = vpop.f32.mrb[0].mxu0
        %v4272 = vadd.f32 %v4111, %v4271
        %v4273 = vpop.f32.mrb[0].mxu0
        %4274 = vmatprep.mubr.bf16.mxu0 %v3219
        %4275 = vmatmul.mubr.bf16.gmra.mrb[0].mxu0 %v3218
        %v4276 = vpop.f32.mrb[0].mxu0
        %v4277 = vadd.f32 %v4116, %v4276
        %v4278 = vpop.f32.mrb[0].mxu0
        %v4279 = vpop.f32.mrb[0].mxu0
        %v4280 = vadd.f32 %v4119, %v4279
        %v4281 = vpop.f32.mrb[0].mxu0
        %4282 = vmatprep.mubr.bf16.mxu0 %v3228
        %4283 = vmatmul.mubr.bf16.gmra.mrb[0].mxu0 %v3227
        %v4284 = vpop.f32.mrb[0].mxu0
        %v4285 = vadd.f32 %v4124, %v4284
        %v4286 = vpop.f32.mrb[0].mxu0
        %v4287 = vpop.f32.mrb[0].mxu0
        %v4288 = vadd.f32 %v4127, %v4287
        %v4289 = vpop.f32.mrb[0].mxu0
        %4290 = vdwg.mxu0
        %4291 = vmatprep.subr.bf16.mxu0 0
        %4292 = vmatpush1.bf16.msra.mxu0 %v3712
        %4293 = vmatprep.subr.bf16.mxu0 0
        %4294 = vmatpush1.bf16.msra.mxu0 %v3713
        %4295 = vmatprep.subr.bf16.mxu0 0
        %4296 = vmatpush1.bf16.msra.mxu0 %v3714
        %4297 = vmatprep.subr.bf16.mxu0 0
        %4298 = vmatpush1.bf16.msra.mxu0 %v3715
        %4299 = vmatprep.subr.bf16.mxu0 0
        %4300 = vmatpush1.bf16.msra.mxu0 %v3716
        %4301 = vmatprep.subr.bf16.mxu0 0
        %4302 = vmatpush1.bf16.msra.mxu0 %v3717
        %4303 = vmatprep.subr.bf16.mxu0 0
        %4304 = vmatpush1.bf16.msra.mxu0 %v3718
        %4305 = vmatprep.subr.bf16.mxu0 0
        %4306 = vmatpush1.bf16.msra.mxu0 %v3719
        %4307 = vmatprep.subr.bf16.mxu0 0
        %4308 = vmatpush1.bf16.msra.mxu0 %v3720
        %4309 = vmatprep.subr.bf16.mxu0 0
        %4310 = vmatpush1.bf16.msra.mxu0 %v3721
        %4311 = vmatprep.subr.bf16.mxu0 0
        %4312 = vmatpush1.bf16.msra.mxu0 %v3722
        %4313 = vmatprep.subr.bf16.mxu0 0
        %4314 = vmatpush1.bf16.msra.mxu0 %v3723
        %4315 = vmatprep.subr.bf16.mxu0 0
        %4316 = vmatpush1.bf16.msra.mxu0 %v3724
        %4317 = vmatprep.subr.bf16.mxu0 0
        %4318 = vmatpush1.bf16.msra.mxu0 %v3725
        %4319 = vmatprep.subr.bf16.mxu0 0
        %4320 = vmatpush1.bf16.msra.mxu0 %v3726
        %4321 = vmatprep.subr.bf16.mxu0 0
        %4322 = vmatpush1.bf16.msra.mxu0 %v3727
        %4323 = vmatprep.mubr.bf16.mxu0 %v3095
        %4324 = vmatmul.mubr.bf16.gmra.mrb[0].mxu0 %v3094
        %v4325 = vpop.f32.mrb[0].mxu0
        %v4326 = vadd.f32 %v4165, %v4325
        %v4327 = vpop.f32.mrb[0].mxu0
        %v4328 = vpop.f32.mrb[0].mxu0
        %v4329 = vadd.f32 %v4168, %v4328
        %v4330 = vpop.f32.mrb[0].mxu0
        %4331 = vmatprep.mubr.bf16.mxu0 %v3104
        %4332 = vmatmul.mubr.bf16.gmra.mrb[0].mxu0 %v3103
        %v4333 = vpop.f32.mrb[0].mxu0
        %v4334 = vadd.f32 %v4173, %v4333
        %v4335 = vpop.f32.mrb[0].mxu0
        %v4336 = vpop.f32.mrb[0].mxu0
        %v4337 = vadd.f32 %v4176, %v4336
        %v4338 = vpop.f32.mrb[0].mxu0
        %4339 = vmatprep.mubr.bf16.mxu0 %v3113
        %4340 = vmatmul.mubr.bf16.gmra.mrb[0].mxu0 %v3112
        %v4341 = vpop.f32.mrb[0].mxu0
        %v4342 = vadd.f32 %v4181, %v4341
        %v4343 = vpop.f32.mrb[0].mxu0
        %v4344 = vpop.f32.mrb[0].mxu0
        %v4345 = vadd.f32 %v4184, %v4344
        %v4346 = vpop.f32.mrb[0].mxu0
        %4347 = vmatprep.mubr.bf16.mxu0 %v3122
        %4348 = vmatmul.mubr.bf16.gmra.mrb[0].mxu0 %v3121
        %v4349 = vpop.f32.mrb[0].mxu0
        %v4350 = vadd.f32 %v4189, %v4349
        %v4351 = vpop.f32.mrb[0].mxu0
        %v4352 = vpop.f32.mrb[0].mxu0
        %v4353 = vadd.f32 %v4192, %v4352
        %v4354 = vpop.f32.mrb[0].mxu0
        %4355 = vmatprep.mubr.bf16.mxu0 %v3131
        %4356 = vmatmul.mubr.bf16.gmra.mrb[0].mxu0 %v3130
        %v4357 = vpop.f32.mrb[0].mxu0
        %v4358 = vadd.f32 %v4197, %v4357
        %v4359 = vpop.f32.mrb[0].mxu0
        %v4360 = vpop.f32.mrb[0].mxu0
        %v4361 = vadd.f32 %v4200, %v4360
        %v4362 = vpop.f32.mrb[0].mxu0
        %4363 = vmatprep.mubr.bf16.mxu0 %v3140
        %4364 = vmatmul.mubr.bf16.gmra.mrb[0].mxu0 %v3139
        %v4365 = vpop.f32.mrb[0].mxu0
        %v4366 = vadd.f32 %v4205, %v4365
        %v4367 = vpop.f32.mrb[0].mxu0
        %v4368 = vpop.f32.mrb[0].mxu0
        %v4369 = vadd.f32 %v4208, %v4368
        %v4370 = vpop.f32.mrb[0].mxu0
        %4371 = vmatprep.mubr.bf16.mxu0 %v3149
        %4372 = vmatmul.mubr.bf16.gmra.mrb[0].mxu0 %v3148
        %v4373 = vpop.f32.mrb[0].mxu0
        %v4374 = vadd.f32 %v4213, %v4373
        %v4375 = vpop.f32.mrb[0].mxu0
        %v4376 = vpop.f32.mrb[0].mxu0
        %v4377 = vadd.f32 %v4216, %v4376
        %v4378 = vpop.f32.mrb[0].mxu0
        %4379 = vmatprep.mubr.bf16.mxu0 %v3158
        %4380 = vmatmul.mubr.bf16.gmra.mrb[0].mxu0 %v3157
        %v4381 = vpop.f32.mrb[0].mxu0
        %v4382 = vadd.f32 %v4221, %v4381
        %v4383 = vpop.f32.mrb[0].mxu0
        %v4384 = vpop.f32.mrb[0].mxu0
        %v4385 = vadd.f32 %v4224, %v4384
        %v4386 = vpop.f32.mrb[0].mxu0
        %4387 = vmatprep.mubr.bf16.mxu0 %v3167
        %4388 = vmatmul.mubr.bf16.gmra.mrb[0].mxu0 %v3166
        %v4389 = vpop.f32.mrb[0].mxu0
        %v4390 = vadd.f32 %v4229, %v4389
        %v4391 = vpop.f32.mrb[0].mxu0
        %v4392 = vpop.f32.mrb[0].mxu0
        %v4393 = vadd.f32 %v4232, %v4392
        %v4394 = vpop.f32.mrb[0].mxu0
        %4395 = vmatprep.mubr.bf16.mxu0 %v3176
        %4396 = vmatmul.mubr.bf16.gmra.mrb[0].mxu0 %v3175
        %v4397 = vpop.f32.mrb[0].mxu0
        %v4398 = vadd.f32 %v4237, %v4397
        %v4399 = vpop.f32.mrb[0].mxu0
        %v4400 = vpop.f32.mrb[0].mxu0
        %v4401 = vadd.f32 %v4240, %v4400
        %v4402 = vpop.f32.mrb[0].mxu0
        %4403 = vmatprep.mubr.bf16.mxu0 %v3185
        %4404 = vmatmul.mubr.bf16.gmra.mrb[0].mxu0 %v3184
        %v4405 = vpop.f32.mrb[0].mxu0
        %v4406 = vadd.f32 %v4245, %v4405
        %v4407 = vpop.f32.mrb[0].mxu0
        %v4408 = vpop.f32.mrb[0].mxu0
        %v4409 = vadd.f32 %v4248, %v4408
        %v4410 = vpop.f32.mrb[0].mxu0
        %4411 = vmatprep.mubr.bf16.mxu0 %v3194
        %4412 = vmatmul.mubr.bf16.gmra.mrb[0].mxu0 %v3193
        %v4413 = vpop.f32.mrb[0].mxu0
        %v4414 = vadd.f32 %v4253, %v4413
        %v4415 = vpop.f32.mrb[0].mxu0
        %v4416 = vpop.f32.mrb[0].mxu0
        %v4417 = vadd.f32 %v4256, %v4416
        %v4418 = vpop.f32.mrb[0].mxu0
        %4419 = vmatprep.mubr.bf16.mxu0 %v3203
        %4420 = vmatmul.mubr.bf16.gmra.mrb[0].mxu0 %v3202
        %v4421 = vpop.f32.mrb[0].mxu0
        %v4422 = vadd.f32 %v4261, %v4421
        %v4423 = vpop.f32.mrb[0].mxu0
        %v4424 = vpop.f32.mrb[0].mxu0
        %v4425 = vadd.f32 %v4264, %v4424
        %v4426 = vpop.f32.mrb[0].mxu0
        %4427 = vmatprep.mubr.bf16.mxu0 %v3212
        %4428 = vmatmul.mubr.bf16.gmra.mrb[0].mxu0 %v3211
        %v4429 = vpop.f32.mrb[0].mxu0
        %v4430 = vadd.f32 %v4269, %v4429
        %v4431 = vpop.f32.mrb[0].mxu0
        %v4432 = vpop.f32.mrb[0].mxu0
        %v4433 = vadd.f32 %v4272, %v4432
        %v4434 = vpop.f32.mrb[0].mxu0
        %4435 = vmatprep.mubr.bf16.mxu0 %v3221
        %4436 = vmatmul.mubr.bf16.gmra.mrb[0].mxu0 %v3220
        %v4437 = vpop.f32.mrb[0].mxu0
        %v4438 = vadd.f32 %v4277, %v4437
        %v4439 = vpop.f32.mrb[0].mxu0
        %v4440 = vpop.f32.mrb[0].mxu0
        %v4441 = vadd.f32 %v4280, %v4440
        %v4442 = vpop.f32.mrb[0].mxu0
        %4443 = vmatprep.mubr.bf16.mxu0 %v3230
        %4444 = vmatmul.mubr.bf16.gmra.mrb[0].mxu0 %v3229
        %v4445 = vpop.f32.mrb[0].mxu0
        %v4446 = vadd.f32 %v4285, %v4445
        %v4447 = vpop.f32.mrb[0].mxu0
        %v4448 = vpop.f32.mrb[0].mxu0
        %v4449 = vadd.f32 %v4288, %v4448
        %v4450 = vpop.f32.mrb[0].mxu0
        %4451 = vdwg.mxu0
        %4452 = vmatprep.subr.bf16.mxu0 0
        %4453 = vmatpush1.bf16.msra.mxu0 %v3728
        %4454 = vmatprep.subr.bf16.mxu0 0
        %4455 = vmatpush1.bf16.msra.mxu0 %v3729
        %4456 = vmatprep.subr.bf16.mxu0 0
        %4457 = vmatpush1.bf16.msra.mxu0 %v3730
        %4458 = vmatprep.subr.bf16.mxu0 0
        %4459 = vmatpush1.bf16.msra.mxu0 %v3731
        %4460 = vmatprep.subr.bf16.mxu0 0
        %4461 = vmatpush1.bf16.msra.mxu0 %v3732
        %4462 = vmatprep.subr.bf16.mxu0 0
        %4463 = vmatpush1.bf16.msra.mxu0 %v3733
        %4464 = vmatprep.subr.bf16.mxu0 0
        %4465 = vmatpush1.bf16.msra.mxu0 %v3734
        %4466 = vmatprep.subr.bf16.mxu0 0
        %4467 = vmatpush1.bf16.msra.mxu0 %v3735
        %4468 = vmatprep.subr.bf16.mxu0 0
        %4469 = vmatpush1.bf16.msra.mxu0 0
        %4470 = vmatprep.subr.bf16.mxu0 0
        %4471 = vmatpush1.bf16.msra.mxu0 0
        %4472 = vmatprep.subr.bf16.mxu0 0
        %4473 = vmatpush1.bf16.msra.mxu0 0
        %4474 = vmatprep.subr.bf16.mxu0 0
        %4475 = vmatpush1.bf16.msra.mxu0 0
        %4476 = vmatprep.subr.bf16.mxu0 0
        %4477 = vmatpush1.bf16.msra.mxu0 0
        %4478 = vmatprep.subr.bf16.mxu0 0
        %4479 = vmatpush1.bf16.msra.mxu0 0
        %4480 = vmatprep.subr.bf16.mxu0 0
        %4481 = vmatpush1.bf16.msra.mxu0 0
        %4482 = vmatprep.subr.bf16.mxu0 0
        %4483 = vmatpush1.bf16.msra.mxu0 0
        %4484 = vmatprep.mubr.bf16.mxu0 0
        %4485 = vmatmul.mubr.bf16.gmra.mrb[0].mxu0 %v3096
        %v4486 = vpop.f32.mrb[0].mxu0
        %v4487 = vadd.f32 %v4326, %v4486
        %v4488 = vpop.f32.mrb[0].mxu0
        %v4489 = vpop.f32.mrb[0].mxu0
        %v4490 = vadd.f32 %v4329, %v4489
        %v4491 = vpop.f32.mrb[0].mxu0
        %4492 = vmatprep.mubr.bf16.mxu0 0
        %4493 = vmatmul.mubr.bf16.gmra.mrb[0].mxu0 %v3105
        %v4494 = vpop.f32.mrb[0].mxu0
        %v4495 = vadd.f32 %v4334, %v4494
        %v4496 = vpop.f32.mrb[0].mxu0
        %v4497 = vpop.f32.mrb[0].mxu0
        %v4498 = vadd.f32 %v4337, %v4497
        %v4499 = vpop.f32.mrb[0].mxu0
        %4500 = vmatprep.mubr.bf16.mxu0 0
        %4501 = vmatmul.mubr.bf16.gmra.mrb[0].mxu0 %v3114
        %v4502 = vpop.f32.mrb[0].mxu0
        %v4503 = vadd.f32 %v4342, %v4502
        %v4504 = vpop.f32.mrb[0].mxu0
        %v4505 = vpop.f32.mrb[0].mxu0
        %v4506 = vadd.f32 %v4345, %v4505
        %v4507 = vpop.f32.mrb[0].mxu0
        %4508 = vmatprep.mubr.bf16.mxu0 0
        %4509 = vmatmul.mubr.bf16.gmra.mrb[0].mxu0 %v3123
        %v4510 = vpop.f32.mrb[0].mxu0
        %v4511 = vadd.f32 %v4350, %v4510
        %v4512 = vpop.f32.mrb[0].mxu0
        %v4513 = vpop.f32.mrb[0].mxu0
        %v4514 = vadd.f32 %v4353, %v4513
        %v4515 = vpop.f32.mrb[0].mxu0
        %4516 = vmatprep.mubr.bf16.mxu0 0
        %4517 = vmatmul.mubr.bf16.gmra.mrb[0].mxu0 %v3132
        %v4518 = vpop.f32.mrb[0].mxu0
        %v4519 = vadd.f32 %v4358, %v4518
        %v4520 = vpop.f32.mrb[0].mxu0
        %v4521 = vpop.f32.mrb[0].mxu0
        %v4522 = vadd.f32 %v4361, %v4521
        %v4523 = vpop.f32.mrb[0].mxu0
        %4524 = vmatprep.mubr.bf16.mxu0 0
        %4525 = vmatmul.mubr.bf16.gmra.mrb[0].mxu0 %v3141
        %v4526 = vpop.f32.mrb[0].mxu0
        %v4527 = vadd.f32 %v4366, %v4526
        %v4528 = vpop.f32.mrb[0].mxu0
        %v4529 = vpop.f32.mrb[0].mxu0
        %v4530 = vadd.f32 %v4369, %v4529
        %v4531 = vpop.f32.mrb[0].mxu0
        %4532 = vmatprep.mubr.bf16.mxu0 0
        %4533 = vmatmul.mubr.bf16.gmra.mrb[0].mxu0 %v3150
        %v4534 = vpop.f32.mrb[0].mxu0
        %v4535 = vadd.f32 %v4374, %v4534
        %v4536 = vpop.f32.mrb[0].mxu0
        %v4537 = vpop.f32.mrb[0].mxu0
        %v4538 = vadd.f32 %v4377, %v4537
        %v4539 = vpop.f32.mrb[0].mxu0
        %4540 = vmatprep.mubr.bf16.mxu0 0
        %4541 = vmatmul.mubr.bf16.gmra.mrb[0].mxu0 %v3159
        %v4542 = vpop.f32.mrb[0].mxu0
        %v4543 = vadd.f32 %v4382, %v4542
        %v4544 = vpop.f32.mrb[0].mxu0
        %v4545 = vpop.f32.mrb[0].mxu0
        %v4546 = vadd.f32 %v4385, %v4545
        %v4547 = vpop.f32.mrb[0].mxu0
        %4548 = vmatprep.mubr.bf16.mxu0 0
        %4549 = vmatmul.mubr.bf16.gmra.mrb[0].mxu0 %v3168
        %v4550 = vpop.f32.mrb[0].mxu0
        %v4551 = vadd.f32 %v4390, %v4550
        %v4552 = vpop.f32.mrb[0].mxu0
        %v4553 = vpop.f32.mrb[0].mxu0
        %v4554 = vadd.f32 %v4393, %v4553
        %v4555 = vpop.f32.mrb[0].mxu0
        %4556 = vmatprep.mubr.bf16.mxu0 0
        %4557 = vmatmul.mubr.bf16.gmra.mrb[0].mxu0 %v3177
        %v4558 = vpop.f32.mrb[0].mxu0
        %v4559 = vadd.f32 %v4398, %v4558
        %v4560 = vpop.f32.mrb[0].mxu0
        %v4561 = vpop.f32.mrb[0].mxu0
        %v4562 = vadd.f32 %v4401, %v4561
        %v4563 = vpop.f32.mrb[0].mxu0
        %4564 = vmatprep.mubr.bf16.mxu0 0
        %4565 = vmatmul.mubr.bf16.gmra.mrb[0].mxu0 %v3186
        %v4566 = vpop.f32.mrb[0].mxu0
        %v4567 = vadd.f32 %v4406, %v4566
        %v4568 = vpop.f32.mrb[0].mxu0
        %v4569 = vpop.f32.mrb[0].mxu0
        %v4570 = vadd.f32 %v4409, %v4569
        %v4571 = vpop.f32.mrb[0].mxu0
        %4572 = vmatprep.mubr.bf16.mxu0 0
        %4573 = vmatmul.mubr.bf16.gmra.mrb[0].mxu0 %v3195
        %v4574 = vpop.f32.mrb[0].mxu0
        %v4575 = vadd.f32 %v4414, %v4574
        %v4576 = vpop.f32.mrb[0].mxu0
        %v4577 = vpop.f32.mrb[0].mxu0
        %v4578 = vadd.f32 %v4417, %v4577
        %v4579 = vpop.f32.mrb[0].mxu0
        %4580 = vmatprep.mubr.bf16.mxu0 0
        %4581 = vmatmul.mubr.bf16.gmra.mrb[0].mxu0 %v3204
        %v4582 = vpop.f32.mrb[0].mxu0
        %v4583 = vadd.f32 %v4422, %v4582
        %v4584 = vpop.f32.mrb[0].mxu0
        %v4585 = vpop.f32.mrb[0].mxu0
        %v4586 = vadd.f32 %v4425, %v4585
        %v4587 = vpop.f32.mrb[0].mxu0
        %4588 = vmatprep.mubr.bf16.mxu0 0
        %4589 = vmatmul.mubr.bf16.gmra.mrb[0].mxu0 %v3213
        %v4590 = vpop.f32.mrb[0].mxu0
        %v4591 = vadd.f32 %v4430, %v4590
        %v4592 = vpop.f32.mrb[0].mxu0
        %v4593 = vpop.f32.mrb[0].mxu0
        %v4594 = vadd.f32 %v4433, %v4593
        %v4595 = vpop.f32.mrb[0].mxu0
        %4596 = vmatprep.mubr.bf16.mxu0 0
        %4597 = vmatmul.mubr.bf16.gmra.mrb[0].mxu0 %v3222
        %v4598 = vpop.f32.mrb[0].mxu0
        %v4599 = vadd.f32 %v4438, %v4598
        %v4600 = vpop.f32.mrb[0].mxu0
        %v4601 = vpop.f32.mrb[0].mxu0
        %v4602 = vadd.f32 %v4441, %v4601
        %v4603 = vpop.f32.mrb[0].mxu0
        %4604 = vmatprep.mubr.bf16.mxu0 0
        %4605 = vmatmul.mubr.bf16.gmra.mrb[0].mxu0 %v3231
        %v4606 = vpop.f32.mrb[0].mxu0
        %v4607 = vadd.f32 %v4446, %v4606
        %v4608 = vpop.f32.mrb[0].mxu0
        %v4609 = vpop.f32.mrb[0].mxu0
        %v4610 = vadd.f32 %v4449, %v4609
        %v4611 = vpop.f32.mrb[0].mxu0
        %4612 = vdwg.mxu0
        %v4613 = vadd.f32 %v4487, %v4490
        %v4614 = vadd.f32 %v4613, %v4495
        %v4615 = vadd.f32 %v4614, %v4498
        %v4616 = vadd.f32 %v4615, %v4503
        %v4617 = vadd.f32 %v4616, %v4506
        %v4618 = vadd.f32 %v4617, %v4511
        %v4619 = vadd.f32 %v4618, %v4514
        %v4620 = vadd.f32 %v4619, %v4519
        %v4621 = vadd.f32 %v4620, %v4522
        %v4622 = vadd.f32 %v4621, %v4527
        %v4623 = vadd.f32 %v4622, %v4530
        %v4624 = vadd.f32 %v4623, %v4535
        %v4625 = vadd.f32 %v4624, %v4538
        %v4626 = vadd.f32 %v4625, %v4543
        %v4627 = vadd.f32 %v4626, %v4546
        %v4628 = vadd.f32 %v4627, %v4551
        %v4629 = vadd.f32 %v4628, %v4554
        %v4630 = vadd.f32 %v4629, %v4559
        %v4631 = vadd.f32 %v4630, %v4562
        %v4632 = vadd.f32 %v4631, %v4567
        %v4633 = vadd.f32 %v4632, %v4570
        %v4634 = vadd.f32 %v4633, %v4575
        %v4635 = vadd.f32 %v4634, %v4578
        %v4636 = vadd.f32 %v4635, %v4583
        %v4637 = vadd.f32 %v4636, %v4586
        %v4638 = vadd.f32 %v4637, %v4591
        %v4639 = vadd.f32 %v4638, %v4594
        %v4640 = vadd.f32 %v4639, %v4599
        %v4641 = vadd.f32 %v4640, %v4602
        %v4642 = vadd.f32 %v4641, %v4607
        %v4643 = vadd.f32 %v4642, %v4610
        %v4644 = vrot.slane %v4643, 4
        %v4645 = vadd.f32 %v4643, %v4644
        %v4646 = vrot.slane %v4645, 2
        %v4647 = vadd.f32 %v4645, %v4646
        %v4648 = vrot.slane %v4647, 1
        %v4649 = vadd.f32 %v4647, %v4648
        %4650 = vst [vmem:[%s240] sm:$0x1] %v4649
        %v4651 = vmul.f32 %v4487, %v4487
        %v4652 = vmul.f32 %v4490, %v4490
        %v4653 = vmul.f32 %v4495, %v4495
        %v4654 = vmul.f32 %v4498, %v4498
        %v4655 = vmul.f32 %v4503, %v4503
        %v4656 = vmul.f32 %v4506, %v4506
        %v4657 = vmul.f32 %v4511, %v4511
        %v4658 = vmul.f32 %v4514, %v4514
        %v4659 = vmul.f32 %v4519, %v4519
        %v4660 = vmul.f32 %v4522, %v4522
        %v4661 = vmul.f32 %v4527, %v4527
        %v4662 = vmul.f32 %v4530, %v4530
        %v4663 = vmul.f32 %v4535, %v4535
        %v4664 = vmul.f32 %v4538, %v4538
        %v4665 = vmul.f32 %v4543, %v4543
        %v4666 = vmul.f32 %v4546, %v4546
        %v4667 = vmul.f32 %v4551, %v4551
        %v4668 = vmul.f32 %v4554, %v4554
        %v4669 = vmul.f32 %v4559, %v4559
        %v4670 = vmul.f32 %v4562, %v4562
        %v4671 = vmul.f32 %v4567, %v4567
        %v4672 = vmul.f32 %v4570, %v4570
        %v4673 = vmul.f32 %v4575, %v4575
        %v4674 = vmul.f32 %v4578, %v4578
        %v4675 = vmul.f32 %v4583, %v4583
        %v4676 = vmul.f32 %v4586, %v4586
        %v4677 = vmul.f32 %v4591, %v4591
        %v4678 = vmul.f32 %v4594, %v4594
        %v4679 = vmul.f32 %v4599, %v4599
        %v4680 = vmul.f32 %v4602, %v4602
        %v4681 = vmul.f32 %v4607, %v4607
        %v4682 = vmul.f32 %v4610, %v4610
        %v4683 = vadd.f32 %v4651, %v4652
        %v4684 = vadd.f32 %v4683, %v4653
        %v4685 = vadd.f32 %v4684, %v4654
        %v4686 = vadd.f32 %v4685, %v4655
        %v4687 = vadd.f32 %v4686, %v4656
        %v4688 = vadd.f32 %v4687, %v4657
        %v4689 = vadd.f32 %v4688, %v4658
        %v4690 = vadd.f32 %v4689, %v4659
        %v4691 = vadd.f32 %v4690, %v4660
        %v4692 = vadd.f32 %v4691, %v4661
        %v4693 = vadd.f32 %v4692, %v4662
        %v4694 = vadd.f32 %v4693, %v4663
        %v4695 = vadd.f32 %v4694, %v4664
        %v4696 = vadd.f32 %v4695, %v4665
        %v4697 = vadd.f32 %v4696, %v4666
        %v4698 = vadd.f32 %v4697, %v4667
        %v4699 = vadd.f32 %v4698, %v4668
        %v4700 = vadd.f32 %v4699, %v4669
        %v4701 = vadd.f32 %v4700, %v4670
        %v4702 = vadd.f32 %v4701, %v4671
        %v4703 = vadd.f32 %v4702, %v4672
        %v4704 = vadd.f32 %v4703, %v4673
        %v4705 = vadd.f32 %v4704, %v4674
        %v4706 = vadd.f32 %v4705, %v4675
        %v4707 = vadd.f32 %v4706, %v4676
        %v4708 = vadd.f32 %v4707, %v4677
        %v4709 = vadd.f32 %v4708, %v4678
        %v4710 = vadd.f32 %v4709, %v4679
        %v4711 = vadd.f32 %v4710, %v4680
        %v4712 = vadd.f32 %v4711, %v4681
        %v4713 = vadd.f32 %v4712, %v4682
        %v4714 = vrot.slane %v4713, 4
        %v4715 = vadd.f32 %v4713, %v4714
        %v4716 = vrot.slane %v4715, 2
        %v4717 = vadd.f32 %v4715, %v4716
        %v4718 = vrot.slane %v4717, 1
        %v4719 = vadd.f32 %v4717, %v4718
        %4720 = vst [vmem:[%s246] sm:$0x1] %v4719
        %v4721 = vpack.c.bf16 %v4490, %v4487
        %v4722 = vpack.c.bf16 %v4498, %v4495
        %v4723 = vpack.c.bf16 %v4506, %v4503
        %v4724 = vpack.c.bf16 %v4514, %v4511
        %v4725 = vpack.c.bf16 %v4522, %v4519
        %v4726 = vpack.c.bf16 %v4530, %v4527
        %v4727 = vpack.c.bf16 %v4538, %v4535
        %v4728 = vpack.c.bf16 %v4546, %v4543
        %v4729 = vpack.c.bf16 %v4554, %v4551
        %v4730 = vpack.c.bf16 %v4562, %v4559
        %v4731 = vpack.c.bf16 %v4570, %v4567
        %v4732 = vpack.c.bf16 %v4578, %v4575
        %v4733 = vpack.c.bf16 %v4586, %v4583
        %v4734 = vpack.c.bf16 %v4594, %v4591
        %v4735 = vpack.c.bf16 %v4602, %v4599
        %v4736 = vpack.c.bf16 %v4610, %v4607
        %v4753 = vunpack.c.l.b16 %v4721
        %v4754 = vunpack.c.h.b16 %v4721
        %v4755 = vunpack.c.l.b16 %v4722
        %v4756 = vunpack.c.h.b16 %v4722
        %v4757 = vunpack.c.l.b16 %v4723
        %v4758 = vunpack.c.h.b16 %v4723
        %v4759 = vunpack.c.l.b16 %v4724
        %v4760 = vunpack.c.h.b16 %v4724
        %v4761 = vunpack.c.l.b16 %v4725
        %v4762 = vunpack.c.h.b16 %v4725
        %v4763 = vunpack.c.l.b16 %v4726
        %v4764 = vunpack.c.h.b16 %v4726
        %v4765 = vunpack.c.l.b16 %v4727
        %v4766 = vunpack.c.h.b16 %v4727
        %v4767 = vunpack.c.l.b16 %v4728
        %v4768 = vunpack.c.h.b16 %v4728
        %v4769 = vunpack.c.l.b16 %v4729
        %v4770 = vunpack.c.h.b16 %v4729
        %v4771 = vunpack.c.l.b16 %v4730
        %v4772 = vunpack.c.h.b16 %v4730
        %v4773 = vunpack.c.l.b16 %v4731
        %v4774 = vunpack.c.h.b16 %v4731
        %v4775 = vunpack.c.l.b16 %v4732
        %v4776 = vunpack.c.h.b16 %v4732
        %v4777 = vunpack.c.l.b16 %v4733
        %v4778 = vunpack.c.h.b16 %v4733
        %v4779 = vunpack.c.l.b16 %v4734
        %v4780 = vunpack.c.h.b16 %v4734
        %v4781 = vunpack.c.l.b16 %v4735
        %v4782 = vunpack.c.h.b16 %v4735
        %v4783 = vunpack.c.l.b16 %v4736
        %v4784 = vunpack.c.h.b16 %v4736
        %v4785 = vpack.c.b16 %v4753, %v4753
        %v4786 = vpack.c.b16 %v4754, %v4754
        %v4787 = vpack.c.b16 %v4755, %v4755
        %v4788 = vpack.c.b16 %v4756, %v4756
        %v4789 = vpack.c.b16 %v4757, %v4757
        %v4790 = vpack.c.b16 %v4758, %v4758
        %v4791 = vpack.c.b16 %v4759, %v4759
        %v4792 = vpack.c.b16 %v4760, %v4760
        %v4793 = vpack.c.b16 %v4761, %v4761
        %v4794 = vpack.c.b16 %v4762, %v4762
        %v4795 = vpack.c.b16 %v4763, %v4763
        %v4796 = vpack.c.b16 %v4764, %v4764
        %v4797 = vpack.c.b16 %v4765, %v4765
        %v4798 = vpack.c.b16 %v4766, %v4766
        %v4799 = vpack.c.b16 %v4767, %v4767
        %v4800 = vpack.c.b16 %v4768, %v4768
        %v4801 = vpack.c.b16 %v4769, %v4769
        %v4802 = vpack.c.b16 %v4770, %v4770
        %v4803 = vpack.c.b16 %v4771, %v4771
        %v4804 = vpack.c.b16 %v4772, %v4772
        %v4805 = vpack.c.b16 %v4773, %v4773
        %v4806 = vpack.c.b16 %v4774, %v4774
        %v4807 = vpack.c.b16 %v4775, %v4775
        %v4808 = vpack.c.b16 %v4776, %v4776
        %v4809 = vpack.c.b16 %v4777, %v4777
        %v4810 = vpack.c.b16 %v4778, %v4778
        %v4811 = vpack.c.b16 %v4779, %v4779
        %v4812 = vpack.c.b16 %v4780, %v4780
        %v4813 = vpack.c.b16 %v4781, %v4781
        %v4814 = vpack.c.b16 %v4782, %v4782
        %v4815 = vpack.c.b16 %v4783, %v4783
        %v4816 = vpack.c.b16 %v4784, %v4784
        %4849 = vst [vmem:[%s234] sm:$0xf] %v4785
        %4850 = vst [vmem:[%s234 + $0x4] sm:$0xf] %v4786
        %4851 = vst [vmem:[%s234 + $0x8] sm:$0xf] %v4787
        %4852 = vst [vmem:[%s234 + $0xc] sm:$0xf] %v4788
        %4853 = vst [vmem:[%s234 + $0x10] sm:$0xf] %v4789
        %4854 = vst [vmem:[%s234 + $0x14] sm:$0xf] %v4790
        %4855 = vst [vmem:[%s234 + $0x18] sm:$0xf] %v4791
        %4856 = vst [vmem:[%s234 + $0x1c] sm:$0xf] %v4792
        %4857 = vst [vmem:[%s234 + $0x20] sm:$0xf] %v4793
        %4858 = vst [vmem:[%s234 + $0x24] sm:$0xf] %v4794
        %4859 = vst [vmem:[%s234 + $0x28] sm:$0xf] %v4795
        %4860 = vst [vmem:[%s234 + $0x2c] sm:$0xf] %v4796
        %4861 = vst [vmem:[%s234 + $0x30] sm:$0xf] %v4797
        %4862 = vst [vmem:[%s234 + $0x34] sm:$0xf] %v4798
        %4863 = vst [vmem:[%s234 + $0x38] sm:$0xf] %v4799
        %4864 = vst [vmem:[%s234 + $0x3c] sm:$0xf] %v4800
        %4865 = vst [vmem:[%s234 + $0x40] sm:$0xf] %v4801
        %4866 = vst [vmem:[%s234 + $0x44] sm:$0xf] %v4802
        %4867 = vst [vmem:[%s234 + $0x48] sm:$0xf] %v4803
        %4868 = vst [vmem:[%s234 + $0x4c] sm:$0xf] %v4804
        %4869 = vst [vmem:[%s234 + $0x50] sm:$0xf] %v4805
        %4870 = vst [vmem:[%s234 + $0x54] sm:$0xf] %v4806
        %4871 = vst [vmem:[%s234 + $0x58] sm:$0xf] %v4807
        %4872 = vst [vmem:[%s234 + $0x5c] sm:$0xf] %v4808
        %4873 = vst [vmem:[%s234 + $0x60] sm:$0xf] %v4809
        %4874 = vst [vmem:[%s234 + $0x64] sm:$0xf] %v4810
        %4875 = vst [vmem:[%s234 + $0x68] sm:$0xf] %v4811
        %4876 = vst [vmem:[%s234 + $0x6c] sm:$0xf] %v4812
        %4877 = vst [vmem:[%s234 + $0x70] sm:$0xf] %v4813
        %4878 = vst [vmem:[%s234 + $0x74] sm:$0xf] %v4814
        %4879 = vst [vmem:[%s234 + $0x78] sm:$0xf] %v4815
        %4880 = vst [vmem:[%s234 + $0x7c] sm:$0xf] %v4816
        %s4881 = sand.u32 %s81, 1
        %s4882 = scalar_lea.sflag [#allocation5], %s4881
        %s4883 = sand.u32 %s81, 1
        %s4884 = smul.addr %s4883, 128
        %s4885 = scalar_lea.vmem [#allocation8], %s4884
        %s4886 = sand.u32 %s26, 1
        %s4887 = scalar_lea.sflag [#allocation10], %s4886
        %s4888 = sand.u32 %s107, 1
        %s4889 = scalar_lea.vmem [#allocation9], %s4888
        %s4890 = sand.u32 %s26, 1
        %s4891 = scalar_lea.sflag [#allocation10], %s4890
        %s4892 = sand.u32 %s133, 1
        %s4893 = scalar_lea.vmem [#allocation11], %s4892
        // Predicated region
        $region37: #{basic_block.3} parent=27 // pred_check
          %p4894 = pneg %p91
        $region38: #{basic_block.3} parent=27 // pred_check_branch
          %4896 = sbr.rel (%p4894) target = $region40
        $region39: #{basic_block.3} parent=27 // pred_region
          %s4898 = ssub.s32 2048, 2048
          %4899 = vsyncadd %s4882, %s4898
          %s4900 = smul.addr %s26, 32
          %s4901 = smul.addr %s4900, 64
          %s4902 = scalar_lea.hbm %s2, %s4901
          %s4903 = sshll.u32 %s4885, 4
          %s4904 = int_to_ptr.vmem [resolvable:$true] %s4903
          %4909 = dma.vmem_to_hbm [thread:$0]  %s4904, 2048, %s4902, %s4882, 64, 64, 4
        $region40: #{basic_block.3} parent=27 // pred_fallthru
          _
        // Predicated region
        $region41: #{basic_block.3} parent=27 // pred_check
          %p4910 = pneg %p117
        $region42: #{basic_block.3} parent=27 // pred_check_branch
          %4912 = sbr.rel (%p4910) target = $region44
        $region43: #{basic_block.3} parent=27 // pred_region
          %s4914 = ssub.s32 16, 16
          %4915 = vsyncadd %s4887, %s4914
          %s4916 = smul.addr %s26, 16
          %s4917 = scalar_lea.hbm %s3, %s4916
          %s4919 = sshll.u32 %s4889, 4
          %s4920 = int_to_ptr.vmem [resolvable:$true] %s4919
          %4922 = dma.vmem_to_hbm [thread:$0]  %s4920, 16, %s4917, %s4887
        $region44: #{basic_block.3} parent=27 // pred_fallthru
          _
        // Predicated region
        $region45: #{basic_block.3} parent=27 // pred_check
          %p4923 = pneg %p143
        $region46: #{basic_block.3} parent=27 // pred_check_branch
          %4925 = sbr.rel (%p4923) target = $region48
        $region47: #{basic_block.3} parent=27 // pred_region
          %s4927 = ssub.s32 16, 16
          %4928 = vsyncadd %s4891, %s4927
          %s4929 = smul.addr %s26, 16
          %s4930 = scalar_lea.hbm %s4, %s4929
          %s4932 = sshll.u32 %s4893, 4
          %s4933 = int_to_ptr.vmem [resolvable:$true] %s4932
          %4935 = dma.vmem_to_hbm [thread:$0]  %s4933, 16, %s4930, %s4891
        $region48: #{basic_block.3} parent=27 // pred_fallthru
          _
      $region28: #{basic_block.3} parent=5 // pred_fallthru
        _
      %p4936 = scmp.le.s32.totalorder 2, %s21
      // Predicated region
      $region49: #{basic_block.3} parent=5 // pred_check
        %p4937 = pneg %p4936
      $region50: #{basic_block.3} parent=5 // pred_check_branch
        %4939 = sbr.rel (%p4937) target = $region52
      $region51: #{basic_block.3} parent=5 // pred_region
        %s4940 = ssub.s32 %s21, 2
        // Predicated region
        $region53: #{basic_block.3} parent=51 // pred_check
          %p4941 = pneg %p97
        $region54: #{basic_block.3} parent=51 // pred_check_branch
          %4943 = sbr.rel (%p4941) target = $region56
        $region55: #{basic_block.3} parent=51 // pred_region
          %s4944 = sand.u32 %s82, 1
          %s4945 = scalar_lea.sflag [#allocation5], %s4944
          %s4946 = sand.u32 %s82, 1
          %s4947 = smul.addr %s4946, 128
          %s4948 = scalar_lea.vmem [#allocation8], %s4947
          %4949 = dma.done %s4945, 2048
        $region56: #{basic_block.3} parent=51 // pred_fallthru
          _
        // Predicated region
        $region57: #{basic_block.3} parent=51 // pred_check
          %p4950 = pneg %p123
        $region58: #{basic_block.3} parent=51 // pred_check_branch
          %4952 = sbr.rel (%p4950) target = $region60
        $region59: #{basic_block.3} parent=51 // pred_region
          %s4953 = sand.u32 %s27, 1
          %s4954 = scalar_lea.sflag [#allocation10], %s4953
          %s4955 = sand.u32 %s108, 1
          %s4956 = scalar_lea.vmem [#allocation9], %s4955
          %4957 = dma.done %s4954, 16
        $region60: #{basic_block.3} parent=51 // pred_fallthru
          _
        // Predicated region
        $region61: #{basic_block.3} parent=51 // pred_check
          %p4958 = pneg %p149
        $region62: #{basic_block.3} parent=51 // pred_check_branch
          %4960 = sbr.rel (%p4958) target = $region64
        $region63: #{basic_block.3} parent=51 // pred_region
          %s4961 = sand.u32 %s27, 1
          %s4962 = scalar_lea.sflag [#allocation10], %s4961
          %s4963 = sand.u32 %s134, 1
          %s4964 = scalar_lea.vmem [#allocation11], %s4963
          %4965 = dma.done %s4962, 16
        $region64: #{basic_block.3} parent=51 // pred_fallthru
          _
      $region52: #{basic_block.3} parent=5 // pred_fallthru
        _
    $region6: #{basic_block.3} parent=1 // loop_footer
      %s25 = sadd.s32 1, %s21
    $region7: #{basic_block.3} parent=1 // loop_footer_branch
      %20 = sbr.rel target = $region3
    $region8: #{basic_block.3} parent=1 // loop_exit
      _
    %4966 = vsyncpa [#allocation4], 1
    %s4967 = scalar_lea.sflag [#allocation4], 1
    %4968 = vsyncpa %s4967, 1
    %4969 = vsyncpa [#allocation7], 1
    %4970 = vsyncpa [#allocation5], 1
    %s4971 = scalar_lea.sflag [#allocation5], 1
    %4972 = vsyncpa %s4971, 1
    %4973 = vsyncpa [#allocation10], 1
    %s4974 = scalar_lea.sflag [#allocation10], 1
    %4975 = vsyncpa %s4974, 1

// kernel: basic_block.4
$region0: #{basic_block.4}
  #allocation0 [shape = 'u32[]', space=smem, size = 0x4, offset = 0x4, fixed_abs, tag = 'smem constant byte address 0x4 - core index']
  #allocation1 [shape = 'u32[144,128]{1,0:T(1,128)}', space=vmem, size = 0x12000, scoped, tag = 'internal scratch']
  #allocation2 [shape = 'bf16[1,18,24,128]{3,2,1,0:T(8,128)(2,1)}', space=vmem, size = 0x1b000, scoped, tag = 'scratch operand']
  #allocation3 [shape = 'bf16[256,1152]{1,0:T(16,128)(2,1)}', space=vmem, size = 0x90000, scoped, tag = 'scratch operand']
  %s0 = inlined_call_operand.hbm [shape: f32[1,128], index: 0, kind: input, shape index: {}]
  %s1 = inlined_call_operand.hbm [shape: f32[1,128], index: 1, kind: input, shape index: {}]
  %s2 = inlined_call_operand.hbm [shape: bf16[2,16,16,128], index: 2, kind: input, shape index: {}]
  %s3 = inlined_call_operand.hbm [shape: bf16[1152,128], index: 3, kind: input, shape index: {}]
  %s4 = inlined_call_operand.hbm [shape: bf16[512,128], index: 4, kind: output, shape index: {0}]
  %s5 = inlined_call_operand.hbm [shape: f32[2,1,128], index: 5, kind: output, shape index: {1}]
  %s6 = inlined_call_operand.hbm [shape: f32[2,1,128], index: 6, kind: output, shape index: {2}]
  %7 = xla_tuple %s4, %s5, %s6
  %s8 = sld [smem:[#allocation0]]
  $region81: #{basic_block.4} parent=0
    _
  %s10 = ssub.s32 1, %s8
  %s11 = scalar_select 0, %s10, %s8
  $region1: #{basic_block.4} parent=0
    #allocation4 [shape = 'u8[512]{0}', space=vmem, size = 0x400, scoped, tag = 'input window, operand 0, single buffered']
    #allocation5 [shape = 's32[2]{0}', space=sflag, size = 0x8, scoped, tag = 'scoped memory for basic_block.4']
    #allocation6 [shape = 's32[2]{0}', space=sflag, size = 0x8, scoped, tag = 'scoped memory for basic_block.4']
    #allocation7 [shape = 'u8[512]{0}', space=vmem, size = 0x400, scoped, tag = 'input window, operand 1, single buffered']
    #allocation8 [shape = 's32[1]{0}', space=sflag, size = 0x4, scoped, tag = 'scoped memory for basic_block.4']
    #allocation9 [shape = 'u8[131072]{0}', space=vmem, size = 0x20000, scoped, tag = 'input window, operand 2']
    #allocation10 [shape = 'u8[294912]{0}', space=vmem, size = 0x48000, scoped, tag = 'input window, operand 3, single buffered']
    #allocation11 [shape = 'u8[131072]{0}', space=vmem, size = 0x20000, scoped, tag = 'output window, operand 0']
    #allocation12 [shape = 'u8[1024]{0}', space=vmem, size = 0x400, scoped, tag = 'output window, operand 1']
    #allocation13 [shape = 's32[2]{0}', space=sflag, size = 0x8, scoped, tag = 'scoped memory for basic_block.4']
    #allocation14 [shape = 'u8[1024]{0}', space=vmem, size = 0x400, scoped, tag = 'output window, operand 2']
    %12 = vsyncpa [#allocation5], 0
    %13 = vsyncpa [#allocation8], 0
    %14 = vsyncpa [#allocation6], 0
    %s15 = scalar_lea.sflag [#allocation6], 1
    %16 = vsyncpa %s15, 0
    %17 = vsyncpa [#allocation13], 0
    %s18 = scalar_lea.sflag [#allocation13], 1
    %19 = vsyncpa %s18, 0
    loop: start=0, step=1, limit=4
    $region2: #{basic_block.4} parent=1 // loop_pre_header
      _
    $region3: #{basic_block.4} parent=1 // loop_header
      %s21 = sphi 0, %s25
      %p22 = scmp.ge.s32.totalorder %s21, 4
      %s29 = sphi 0, %s29
      %s31 = sphi 0, %s29
      %s32 = sphi 0, %s31
      %s46 = sphi 0, %s32
      %s50 = sphi 0, %s50
      %s52 = sphi 0, %s50
      %s53 = sphi 0, %s52
      %s67 = sphi 0, %s53
      %s73 = sphi 0, %s75
      %s76 = sphi 0, %s73
      %s77 = sphi 0, %s76
      %s93 = sphi 0, %s77
      %s97 = sphi 0, %s97
      %s99 = sphi 0, %s97
      %s100 = sphi 0, %s99
      %s114 = sphi 0, %s100
      %s120 = sphi 0, %s122
      %s123 = sphi 0, %s120
      %s124 = sphi 0, %s123
      %s140 = sphi 0, %s124
      %s146 = sphi 0, %s148
      %s149 = sphi 0, %s146
      %s150 = sphi 0, %s149
      %s166 = sphi 0, %s150
      %s172 = sphi 0, %s174
      %s175 = sphi 0, %s172
      %s176 = sphi 0, %s175
      %s192 = sphi 0, %s176
    $region4: #{basic_block.4} parent=1 // loop_header_branch
      %24 = sbr.rel (%p22) target = $region8
    $region5: #{basic_block.4} parent=1 // loop_body
      %s26 = ssub.s32 %s21, 1
      %s27 = ssub.s32 %s21, 2
      %s28 = sadd.s32 %s21, 1
      %s30 = sadd.s32 %s29, 1
      %p33 = scmp.eq.s32.totalorder %s21, 1
      %p34 = scmp.ne.s32.totalorder %s29, %s31
      %p35 = scmp.eq.s32.totalorder %s21, 0
      %p36 = por %p34, %p35
      %p37 = scmp.ne.s32.totalorder %s29, %s31
      %p38 = scmp.eq.s32.totalorder %s26, 1
      %p39 = por %p37, %p38
      %p40 = scmp.ne.s32.totalorder %s31, %s32
      %p41 = scmp.eq.s32.totalorder %s26, 0
      %p42 = por %p40, %p41
      %p43 = scmp.ne.s32.totalorder %s31, %s32
      %p44 = scmp.eq.s32.totalorder %s27, 1
      %p45 = por %p43, %p44
      %p47 = scmp.ne.s32.totalorder %s32, %s46
      %p48 = scmp.eq.s32.totalorder %s27, 0
      %p49 = por %p47, %p48
      %s51 = sadd.s32 %s50, 1
      %p54 = scmp.eq.s32.totalorder %s21, 1
      %p55 = scmp.ne.s32.totalorder %s50, %s52
      %p56 = scmp.eq.s32.totalorder %s21, 0
      %p57 = por %p55, %p56
      %p58 = scmp.ne.s32.totalorder %s50, %s52
      %p59 = scmp.eq.s32.totalorder %s26, 1
      %p60 = por %p58, %p59
      %p61 = scmp.ne.s32.totalorder %s52, %s53
      %p62 = scmp.eq.s32.totalorder %s26, 0
      %p63 = por %p61, %p62
      %p64 = scmp.ne.s32.totalorder %s52, %s53
      %p65 = scmp.eq.s32.totalorder %s27, 1
      %p66 = por %p64, %p65
      %p68 = scmp.ne.s32.totalorder %s53, %s67
      %p69 = scmp.eq.s32.totalorder %s27, 0
      %p70 = por %p68, %p69
      %s71 = ssub.s32 %s21, %s28
      %p72 = scmp.eq.s32.totalorder %s71, 0
      %s74 = sadd.s32 %s73, 1
      %s75 = scalar_select %p72, %s73, %s74
      %p78 = pneg %p72
      %p79 = scmp.eq.s32.totalorder %s21, 1
      %p80 = por %p78, %p79
      %p81 = scmp.ne.s32.totalorder %s73, %s76
      %p82 = scmp.eq.s32.totalorder %s21, 0
      %p83 = por %p81, %p82
      %p84 = scmp.ne.s32.totalorder %s73, %s76
      %p85 = scmp.eq.s32.totalorder %s26, 1
      %p86 = por %p84, %p85
      %p87 = scmp.ne.s32.totalorder %s76, %s77
      %p88 = scmp.eq.s32.totalorder %s26, 0
      %p89 = por %p87, %p88
      %p90 = scmp.ne.s32.totalorder %s76, %s77
      %p91 = scmp.eq.s32.totalorder %s27, 1
      %p92 = por %p90, %p91
      %p94 = scmp.ne.s32.totalorder %s77, %s93
      %p95 = scmp.eq.s32.totalorder %s27, 0
      %p96 = por %p94, %p95
      %s98 = sadd.s32 %s97, 1
      %p101 = scmp.eq.s32.totalorder %s21, 1
      %p102 = scmp.ne.s32.totalorder %s97, %s99
      %p103 = scmp.eq.s32.totalorder %s21, 0
      %p104 = por %p102, %p103
      %p105 = scmp.ne.s32.totalorder %s97, %s99
      %p106 = scmp.eq.s32.totalorder %s26, 1
      %p107 = por %p105, %p106
      %p108 = scmp.ne.s32.totalorder %s99, %s100
      %p109 = scmp.eq.s32.totalorder %s26, 0
      %p110 = por %p108, %p109
      %p111 = scmp.ne.s32.totalorder %s99, %s100
      %p112 = scmp.eq.s32.totalorder %s27, 1
      %p113 = por %p111, %p112
      %p115 = scmp.ne.s32.totalorder %s100, %s114
      %p116 = scmp.eq.s32.totalorder %s27, 0
      %p117 = por %p115, %p116
      %s118 = ssub.s32 %s21, %s28
      %p119 = scmp.eq.s32.totalorder %s118, 0
      %s121 = sadd.s32 %s120, 1
      %s122 = scalar_select %p119, %s120, %s121
      %p125 = pneg %p119
      %p126 = scmp.eq.s32.totalorder %s21, 1
      %p127 = por %p125, %p126
      %p128 = scmp.ne.s32.totalorder %s120, %s123
      %p129 = scmp.eq.s32.totalorder %s21, 0
      %p130 = por %p128, %p129
      %p131 = scmp.ne.s32.totalorder %s120, %s123
      %p132 = scmp.eq.s32.totalorder %s26, 1
      %p133 = por %p131, %p132
      %p134 = scmp.ne.s32.totalorder %s123, %s124
      %p135 = scmp.eq.s32.totalorder %s26, 0
      %p136 = por %p134, %p135
      %p137 = scmp.ne.s32.totalorder %s123, %s124
      %p138 = scmp.eq.s32.totalorder %s27, 1
      %p139 = por %p137, %p138
      %p141 = scmp.ne.s32.totalorder %s124, %s140
      %p142 = scmp.eq.s32.totalorder %s27, 0
      %p143 = por %p141, %p142
      %s144 = ssub.s32 %s21, %s28
      %p145 = scmp.eq.s32.totalorder %s144, 0
      %s147 = sadd.s32 %s146, 1
      %s148 = scalar_select %p145, %s146, %s147
      %p151 = pneg %p145
      %p152 = scmp.eq.s32.totalorder %s21, 1
      %p153 = por %p151, %p152
      %p154 = scmp.ne.s32.totalorder %s146, %s149
      %p155 = scmp.eq.s32.totalorder %s21, 0
      %p156 = por %p154, %p155
      %p157 = scmp.ne.s32.totalorder %s146, %s149
      %p158 = scmp.eq.s32.totalorder %s26, 1
      %p159 = por %p157, %p158
      %p160 = scmp.ne.s32.totalorder %s149, %s150
      %p161 = scmp.eq.s32.totalorder %s26, 0
      %p162 = por %p160, %p161
      %p163 = scmp.ne.s32.totalorder %s149, %s150
      %p164 = scmp.eq.s32.totalorder %s27, 1
      %p165 = por %p163, %p164
      %p167 = scmp.ne.s32.totalorder %s150, %s166
      %p168 = scmp.eq.s32.totalorder %s27, 0
      %p169 = por %p167, %p168
      %s170 = ssub.s32 %s21, %s28
      %p171 = scmp.eq.s32.totalorder %s170, 0
      %s173 = sadd.s32 %s172, 1
      %s174 = scalar_select %p171, %s172, %s173
      %p177 = pneg %p171
      %p178 = scmp.eq.s32.totalorder %s21, 1
      %p179 = por %p177, %p178
      %p180 = scmp.ne.s32.totalorder %s172, %s175
      %p181 = scmp.eq.s32.totalorder %s21, 0
      %p182 = por %p180, %p181
      %p183 = scmp.ne.s32.totalorder %s172, %s175
      %p184 = scmp.eq.s32.totalorder %s26, 1
      %p185 = por %p183, %p184
      %p186 = scmp.ne.s32.totalorder %s175, %s176
      %p187 = scmp.eq.s32.totalorder %s26, 0
      %p188 = por %p186, %p187
      %p189 = scmp.ne.s32.totalorder %s175, %s176
      %p190 = scmp.eq.s32.totalorder %s27, 1
      %p191 = por %p189, %p190
      %p193 = scmp.ne.s32.totalorder %s176, %s192
      %p194 = scmp.eq.s32.totalorder %s27, 0
      %p195 = por %p193, %p194
      %p196 = scmp.le.s32.totalorder 1, %s21
      %p197 = scmp.lt.s32.totalorder %s21, 3
      %p198 = pnand %p196, %p197
      %p199 = pneg %p198
      // Predicated region
      $region9: #{basic_block.4} parent=5 // pred_check
        _
      $region10: #{basic_block.4} parent=5 // pred_check_branch
        %201 = sbr.rel (%p198) target = $region12
      $region11: #{basic_block.4} parent=5 // pred_region
        %s202 = ssub.s32 %s21, 1
        // Predicated region
        $region13: #{basic_block.4} parent=11 // pred_check
          %p203 = pneg %p42
        $region14: #{basic_block.4} parent=11 // pred_check_branch
          %205 = sbr.rel (%p203) target = $region16
        $region15: #{basic_block.4} parent=11 // pred_region
          %s207 = ssub.s32 16, 16
          %208 = vsyncadd [#allocation5], %s207
          %s210 = sshll.u32 [#allocation4], 4
          %s211 = int_to_ptr.vmem [resolvable:$true] %s210
          %213 = dma.hbm_to_vmem [thread:$0]  %s0, 16, %s211, [#allocation5]
        $region16: #{basic_block.4} parent=11 // pred_fallthru
          _
        // Predicated region
        $region17: #{basic_block.4} parent=11 // pred_check
          %p214 = pneg %p63
        $region18: #{basic_block.4} parent=11 // pred_check_branch
          %216 = sbr.rel (%p214) target = $region20
        $region19: #{basic_block.4} parent=11 // pred_region
          %s218 = ssub.s32 16, 16
          %219 = vsyncadd [#allocation8], %s218
          %s221 = sshll.u32 [#allocation7], 4
          %s222 = int_to_ptr.vmem [resolvable:$true] %s221
          %224 = dma.hbm_to_vmem [thread:$0]  %s1, 16, %s222, [#allocation8]
        $region20: #{basic_block.4} parent=11 // pred_fallthru
          _
        // Predicated region
        $region21: #{basic_block.4} parent=11 // pred_check
          %p225 = pneg %p110
        $region22: #{basic_block.4} parent=11 // pred_check_branch
          %227 = sbr.rel (%p225) target = $region24
        $region23: #{basic_block.4} parent=11 // pred_region
          %s229 = ssub.s32 9216, 9216
          %230 = vsyncadd [#allocation8], %s229
          %s231 = sshll.u32 [#allocation10], 4
          %s232 = int_to_ptr.vmem [resolvable:$true] %s231
          %237 = dma.hbm_to_vmem [thread:$0]  %s3, 9216, %s232, [#allocation8], 64, 64, 4
        $region24: #{basic_block.4} parent=11 // pred_fallthru
          _
      $region12: #{basic_block.4} parent=5 // pred_fallthru
        _
      %p238 = scmp.lt.s32.totalorder %s21, 2
      // Predicated region
      $region25: #{basic_block.4} parent=5 // pred_check
        %p239 = pneg %p238
      $region26: #{basic_block.4} parent=5 // pred_check_branch
        %241 = sbr.rel (%p239) target = $region28
      $region27: #{basic_block.4} parent=5 // pred_region
        // Predicated region
        $region29: #{basic_block.4} parent=27 // pred_check
          %p242 = pneg %p83
        $region30: #{basic_block.4} parent=27 // pred_check_branch
          %244 = sbr.rel (%p242) target = $region32
        $region31: #{basic_block.4} parent=27 // pred_region
          %s245 = sand.u32 %s21, 1
          %s246 = scalar_lea.sflag [#allocation5], %s245
          %s247 = sand.u32 %s73, 1
          %s248 = smul.addr %s247, 128
          %s249 = scalar_lea.vmem [#allocation9], %s248
          %s251 = ssub.s32 2048, 2048
          %252 = vsyncadd %s246, %s251
          %s253 = smul.addr %s21, 32
          %s254 = smul.addr %s253, 64
          %s255 = scalar_lea.hbm %s2, %s254
          %s256 = sshll.u32 %s249, 4
          %s257 = int_to_ptr.vmem [resolvable:$true] %s256
          %262 = dma.hbm_to_vmem [thread:$0]  %s255, 2048, %s257, %s246, 64, 64, 4
        $region32: #{basic_block.4} parent=27 // pred_fallthru
          _
      $region28: #{basic_block.4} parent=5 // pred_fallthru
        _
      %p263 = scmp.le.s32.totalorder 1, %s21
      %p264 = scmp.lt.s32.totalorder %s21, 3
      %p265 = pnand %p263, %p264
      %p266 = pneg %p265
      // Predicated region
      $region33: #{basic_block.4} parent=5 // pred_check
        _
      $region34: #{basic_block.4} parent=5 // pred_check_branch
        %268 = sbr.rel (%p265) target = $region36
      $region35: #{basic_block.4} parent=5 // pred_region
        %s269 = ssub.s32 %s21, 1
        // Predicated region
        $region37: #{basic_block.4} parent=35 // pred_check
          %p270 = pneg %p42
        $region38: #{basic_block.4} parent=35 // pred_check_branch
          %272 = sbr.rel (%p270) target = $region40
        $region39: #{basic_block.4} parent=35 // pred_region
          %273 = dma.done [#allocation5], 16
        $region40: #{basic_block.4} parent=35 // pred_fallthru
          _
        // Predicated region
        $region41: #{basic_block.4} parent=35 // pred_check
          %p274 = pneg %p63
        $region42: #{basic_block.4} parent=35 // pred_check_branch
          %276 = sbr.rel (%p274) target = $region44
        $region43: #{basic_block.4} parent=35 // pred_region
          %277 = dma.done [#allocation8], 16
        $region44: #{basic_block.4} parent=35 // pred_fallthru
          _
        %s278 = sand.u32 %s26, 1
        %s279 = scalar_lea.sflag [#allocation5], %s278
        %s280 = sand.u32 %s76, 1
        %s281 = smul.addr %s280, 128
        %s282 = scalar_lea.vmem [#allocation9], %s281
        // Predicated region
        $region45: #{basic_block.4} parent=35 // pred_check
          %p283 = pneg %p89
        $region46: #{basic_block.4} parent=35 // pred_check_branch
          %285 = sbr.rel (%p283) target = $region48
        $region47: #{basic_block.4} parent=35 // pred_region
          %286 = dma.done %s279, 2048
        $region48: #{basic_block.4} parent=35 // pred_fallthru
          _
        // Predicated region
        $region49: #{basic_block.4} parent=35 // pred_check
          %p287 = pneg %p110
        $region50: #{basic_block.4} parent=35 // pred_check_branch
          %289 = sbr.rel (%p287) target = $region52
        $region51: #{basic_block.4} parent=35 // pred_region
          %290 = dma.done [#allocation8], 9216
        $region52: #{basic_block.4} parent=35 // pred_fallthru
          _
        %p291 = pneg %p42
        %p292 = pneg %p39
        %p293 = pneg %p63
        %p294 = pneg %p60
        %s295 = sand.u32 %s26, 1
        %s296 = scalar_lea.sflag [#allocation5], %s295
        %s297 = sand.u32 %s76, 1
        %s298 = smul.addr %s297, 128
        %s299 = scalar_lea.vmem [#allocation9], %s298
        %p300 = pneg %p89
        %p301 = pneg %p86
        %p302 = pneg %p110
        %p303 = pneg %p107
        %p304 = pneg %p136
        %p305 = pneg %p133
        %s306 = sand.u32 %s123, 1
        %s307 = scalar_lea.sflag [#allocation6], %s306
        %s308 = sand.u32 %s123, 1
        %s309 = smul.addr %s308, 128
        %s310 = scalar_lea.vmem [#allocation11], %s309
        %p311 = pneg %p162
        %p312 = pneg %p159
        %s313 = sand.u32 %s26, 1
        %s314 = scalar_lea.sflag [#allocation13], %s313
        %s315 = sand.u32 %s149, 1
        %s316 = scalar_lea.vmem [#allocation12], %s315
        %p317 = pneg %p188
        %p318 = pneg %p185
        %s319 = sand.u32 %s26, 1
        %s320 = scalar_lea.sflag [#allocation13], %s319
        %s321 = sand.u32 %s175, 1
        %s322 = scalar_lea.vmem [#allocation14], %s321
        %s323 = smul.u32 32, %s26
        %325 = vst [vmem:[#allocation2] sm:$0xf] 0
        %326 = vst [vmem:[#allocation2 + $0x4] sm:$0xf] 0
        %327 = vst [vmem:[#allocation2 + $0x8] sm:$0xf] 0
        %328 = vst [vmem:[#allocation2 + $0xc] sm:$0xf] 0
        %329 = vst [vmem:[#allocation2 + $0x10] sm:$0xf] 0
        %330 = vst [vmem:[#allocation2 + $0x14] sm:$0xf] 0
        %331 = vst [vmem:[#allocation2 + $0x18] sm:$0xf] 0
        %332 = vst [vmem:[#allocation2 + $0x1c] sm:$0xf] 0
        %333 = vst [vmem:[#allocation2 + $0x20] sm:$0xf] 0
        %334 = vst [vmem:[#allocation2 + $0x24] sm:$0xf] 0
        %335 = vst [vmem:[#allocation2 + $0x28] sm:$0xf] 0
        %336 = vst [vmem:[#allocation2 + $0x2c] sm:$0xf] 0
        %337 = vst [vmem:[#allocation2 + $0x30] sm:$0xf] 0
        %338 = vst [vmem:[#allocation2 + $0x34] sm:$0xf] 0
        %339 = vst [vmem:[#allocation2 + $0x38] sm:$0xf] 0
        %340 = vst [vmem:[#allocation2 + $0x3c] sm:$0xf] 0
        %341 = vst [vmem:[#allocation2 + $0x40] sm:$0xf] 0
        %342 = vst [vmem:[#allocation2 + $0x44] sm:$0xf] 0
        %343 = vst [vmem:[#allocation2 + $0x48] sm:$0xf] 0
        %344 = vst [vmem:[#allocation2 + $0x4c] sm:$0xf] 0
        %345 = vst [vmem:[#allocation2 + $0x50] sm:$0xf] 0
        %346 = vst [vmem:[#allocation2 + $0x54] sm:$0xf] 0
        %347 = vst [vmem:[#allocation2 + $0x58] sm:$0xf] 0
        %348 = vst [vmem:[#allocation2 + $0x5c] sm:$0xf] 0
        %349 = vst [vmem:[#allocation2 + $0x60] sm:$0xf] 0
        %350 = vst [vmem:[#allocation2 + $0x64] sm:$0xf] 0
        %351 = vst [vmem:[#allocation2 + $0x68] sm:$0xf] 0
        %352 = vst [vmem:[#allocation2 + $0x6c] sm:$0xf] 0
        %353 = vst [vmem:[#allocation2 + $0x70] sm:$0xf] 0
        %354 = vst [vmem:[#allocation2 + $0x74] sm:$0xf] 0
        %355 = vst [vmem:[#allocation2 + $0x78] sm:$0xf] 0
        %356 = vst [vmem:[#allocation2 + $0x7c] sm:$0xf] 0
        %357 = vst [vmem:[#allocation2 + $0x80] sm:$0xf] 0
        %358 = vst [vmem:[#allocation2 + $0x84] sm:$0xf] 0
        %359 = vst [vmem:[#allocation2 + $0x88] sm:$0xf] 0
        %360 = vst [vmem:[#allocation2 + $0x8c] sm:$0xf] 0
        %361 = vst [vmem:[#allocation2 + $0x90] sm:$0xf] 0
        %362 = vst [vmem:[#allocation2 + $0x94] sm:$0xf] 0
        %363 = vst [vmem:[#allocation2 + $0x98] sm:$0xf] 0
        %364 = vst [vmem:[#allocation2 + $0x9c] sm:$0xf] 0
        %365 = vst [vmem:[#allocation2 + $0xa0] sm:$0xf] 0
        %366 = vst [vmem:[#allocation2 + $0xa4] sm:$0xf] 0
        %367 = vst [vmem:[#allocation2 + $0xa8] sm:$0xf] 0
        %368 = vst [vmem:[#allocation2 + $0xac] sm:$0xf] 0
        %369 = vst [vmem:[#allocation2 + $0xb0] sm:$0xf] 0
        %370 = vst [vmem:[#allocation2 + $0xb4] sm:$0xf] 0
        %371 = vst [vmem:[#allocation2 + $0xb8] sm:$0xf] 0
        %372 = vst [vmem:[#allocation2 + $0xbc] sm:$0xf] 0
        %373 = vst [vmem:[#allocation2 + $0xc0] sm:$0xf] 0
        %374 = vst [vmem:[#allocation2 + $0xc4] sm:$0xf] 0
        %375 = vst [vmem:[#allocation2 + $0xc8] sm:$0xf] 0
        %376 = vst [vmem:[#allocation2 + $0xcc] sm:$0xf] 0
        %377 = vst [vmem:[#allocation2 + $0xd0] sm:$0xf] 0
        %378 = vst [vmem:[#allocation2 + $0xd4] sm:$0xf] 0
        %v379 = vld [vmem:[%s282] sm:$0xf]
        %v380 = vld [vmem:[%s282 + $0x4] sm:$0xf]
        %v381 = vld [vmem:[%s282 + $0x8] sm:$0xf]
        %v382 = vld [vmem:[%s282 + $0xc] sm:$0xf]
        %v383 = vld [vmem:[%s282 + $0x10] sm:$0xf]
        %v384 = vld [vmem:[%s282 + $0x14] sm:$0xf]
        %v385 = vld [vmem:[%s282 + $0x18] sm:$0xf]
        %v386 = vld [vmem:[%s282 + $0x1c] sm:$0xf]
        %v387 = vld [vmem:[%s282 + $0x20] sm:$0xf]
        %v388 = vld [vmem:[%s282 + $0x24] sm:$0xf]
        %v389 = vld [vmem:[%s282 + $0x28] sm:$0xf]
        %v390 = vld [vmem:[%s282 + $0x2c] sm:$0xf]
        %v391 = vld [vmem:[%s282 + $0x30] sm:$0xf]
        %v392 = vld [vmem:[%s282 + $0x34] sm:$0xf]
        %v393 = vld [vmem:[%s282 + $0x38] sm:$0xf]
        %v394 = vld [vmem:[%s282 + $0x3c] sm:$0xf]
        %v395 = vld [vmem:[%s282 + $0x40] sm:$0xf]
        %v396 = vld [vmem:[%s282 + $0x44] sm:$0xf]
        %v397 = vld [vmem:[%s282 + $0x48] sm:$0xf]
        %v398 = vld [vmem:[%s282 + $0x4c] sm:$0xf]
        %v399 = vld [vmem:[%s282 + $0x50] sm:$0xf]
        %v400 = vld [vmem:[%s282 + $0x54] sm:$0xf]
        %v401 = vld [vmem:[%s282 + $0x58] sm:$0xf]
        %v402 = vld [vmem:[%s282 + $0x5c] sm:$0xf]
        %v403 = vld [vmem:[%s282 + $0x60] sm:$0xf]
        %v404 = vld [vmem:[%s282 + $0x64] sm:$0xf]
        %v405 = vld [vmem:[%s282 + $0x68] sm:$0xf]
        %v406 = vld [vmem:[%s282 + $0x6c] sm:$0xf]
        %v407 = vld [vmem:[%s282 + $0x70] sm:$0xf]
        %v408 = vld [vmem:[%s282 + $0x74] sm:$0xf]
        %v409 = vld [vmem:[%s282 + $0x78] sm:$0xf]
        %v410 = vld [vmem:[%s282 + $0x7c] sm:$0xf]
        %v411 = vunpack.c.l.bf16 %v379
        %v412 = vunpack.c.l.bf16 %v380
        %v413 = vunpack.c.l.bf16 %v381
        %v414 = vunpack.c.l.bf16 %v382
        %v415 = vunpack.c.l.bf16 %v383
        %v416 = vunpack.c.l.bf16 %v384
        %v417 = vunpack.c.l.bf16 %v385
        %v418 = vunpack.c.l.bf16 %v386
        %v419 = vunpack.c.l.bf16 %v387
        %v420 = vunpack.c.l.bf16 %v388
        %v421 = vunpack.c.l.bf16 %v389
        %v422 = vunpack.c.l.bf16 %v390
        %v423 = vunpack.c.l.bf16 %v391
        %v424 = vunpack.c.l.bf16 %v392
        %v425 = vunpack.c.l.bf16 %v393
        %v426 = vunpack.c.l.bf16 %v394
        %v427 = vunpack.c.l.bf16 %v395
        %v428 = vunpack.c.l.bf16 %v396
        %v429 = vunpack.c.l.bf16 %v397
        %v430 = vunpack.c.l.bf16 %v398
        %v431 = vunpack.c.l.bf16 %v399
        %v432 = vunpack.c.l.bf16 %v400
        %v433 = vunpack.c.l.bf16 %v401
        %v434 = vunpack.c.l.bf16 %v402
        %v435 = vunpack.c.l.bf16 %v403
        %v436 = vunpack.c.l.bf16 %v404
        %v437 = vunpack.c.l.bf16 %v405
        %v438 = vunpack.c.l.bf16 %v406
        %v439 = vunpack.c.l.bf16 %v407
        %v440 = vunpack.c.l.bf16 %v408
        %v441 = vunpack.c.l.bf16 %v409
        %v442 = vunpack.c.l.bf16 %v410
        %v443 = vld [vmem:[#allocation4] sm:$0x1]
        %v445 = vlaneseq
        %v446 = vshrl.u32 %v445, 7
        %v447 = vsub.s32 0, %v446
        %v448 = vrot.slane %v443, %v447
        %v450 = vmul.f32 %v411, %v448
        %v451 = vmul.f32 %v412, %v448
        %v452 = vmul.f32 %v413, %v448
        %v453 = vmul.f32 %v414, %v448
        %v454 = vmul.f32 %v415, %v448
        %v455 = vmul.f32 %v416, %v448
        %v456 = vmul.f32 %v417, %v448
        %v457 = vmul.f32 %v418, %v448
        %v458 = vmul.f32 %v419, %v448
        %v459 = vmul.f32 %v420, %v448
        %v460 = vmul.f32 %v421, %v448
        %v461 = vmul.f32 %v422, %v448
        %v462 = vmul.f32 %v423, %v448
        %v463 = vmul.f32 %v424, %v448
        %v464 = vmul.f32 %v425, %v448
        %v465 = vmul.f32 %v426, %v448
        %v466 = vmul.f32 %v427, %v448
        %v467 = vmul.f32 %v428, %v448
        %v468 = vmul.f32 %v429, %v448
        %v469 = vmul.f32 %v430, %v448
        %v470 = vmul.f32 %v431, %v448
        %v471 = vmul.f32 %v432, %v448
        %v472 = vmul.f32 %v433, %v448
        %v473 = vmul.f32 %v434, %v448
        %v474 = vmul.f32 %v435, %v448
        %v475 = vmul.f32 %v436, %v448
        %v476 = vmul.f32 %v437, %v448
        %v477 = vmul.f32 %v438, %v448
        %v478 = vmul.f32 %v439, %v448
        %v479 = vmul.f32 %v440, %v448
        %v480 = vmul.f32 %v441, %v448
        %v481 = vmul.f32 %v442, %v448
        %v482 = vld [vmem:[#allocation7] sm:$0x1]
        %v484 = vlaneseq
        %v485 = vshrl.u32 %v484, 7
        %v486 = vsub.s32 0, %v485
        %v487 = vrot.slane %v482, %v486
        %v489 = vadd.f32 %v450, %v487
        %v490 = vadd.f32 %v451, %v487
        %v491 = vadd.f32 %v452, %v487
        %v492 = vadd.f32 %v453, %v487
        %v493 = vadd.f32 %v454, %v487
        %v494 = vadd.f32 %v455, %v487
        %v495 = vadd.f32 %v456, %v487
        %v496 = vadd.f32 %v457, %v487
        %v497 = vadd.f32 %v458, %v487
        %v498 = vadd.f32 %v459, %v487
        %v499 = vadd.f32 %v460, %v487
        %v500 = vadd.f32 %v461, %v487
        %v501 = vadd.f32 %v462, %v487
        %v502 = vadd.f32 %v463, %v487
        %v503 = vadd.f32 %v464, %v487
        %v504 = vadd.f32 %v465, %v487
        %v505 = vadd.f32 %v466, %v487
        %v506 = vadd.f32 %v467, %v487
        %v507 = vadd.f32 %v468, %v487
        %v508 = vadd.f32 %v469, %v487
        %v509 = vadd.f32 %v470, %v487
        %v510 = vadd.f32 %v471, %v487
        %v511 = vadd.f32 %v472, %v487
        %v512 = vadd.f32 %v473, %v487
        %v513 = vadd.f32 %v474, %v487
        %v514 = vadd.f32 %v475, %v487
        %v515 = vadd.f32 %v476, %v487
        %v516 = vadd.f32 %v477, %v487
        %v517 = vadd.f32 %v478, %v487
        %v518 = vadd.f32 %v479, %v487
        %v519 = vadd.f32 %v480, %v487
        %v520 = vadd.f32 %v481, %v487
        %v521 = vmax.f32 %v489, 0.0
        %v522 = vmax.f32 %v490, 0.0
        %v523 = vmax.f32 %v491, 0.0
        %v524 = vmax.f32 %v492, 0.0
        %v525 = vmax.f32 %v493, 0.0
        %v526 = vmax.f32 %v494, 0.0
        %v527 = vmax.f32 %v495, 0.0
        %v528 = vmax.f32 %v496, 0.0
        %v529 = vmax.f32 %v497, 0.0
        %v530 = vmax.f32 %v498, 0.0
        %v531 = vmax.f32 %v499, 0.0
        %v532 = vmax.f32 %v500, 0.0
        %v533 = vmax.f32 %v501, 0.0
        %v534 = vmax.f32 %v502, 0.0
        %v535 = vmax.f32 %v503, 0.0
        %v536 = vmax.f32 %v504, 0.0
        %v537 = vmax.f32 %v505, 0.0
        %v538 = vmax.f32 %v506, 0.0
        %v539 = vmax.f32 %v507, 0.0
        %v540 = vmax.f32 %v508, 0.0
        %v541 = vmax.f32 %v509, 0.0
        %v542 = vmax.f32 %v510, 0.0
        %v543 = vmax.f32 %v511, 0.0
        %v544 = vmax.f32 %v512, 0.0
        %v545 = vmax.f32 %v513, 0.0
        %v546 = vmax.f32 %v514, 0.0
        %v547 = vmax.f32 %v515, 0.0
        %v548 = vmax.f32 %v516, 0.0
        %v549 = vmax.f32 %v517, 0.0
        %v550 = vmax.f32 %v518, 0.0
        %v551 = vmax.f32 %v519, 0.0
        %v552 = vmax.f32 %v520, 0.0
        %v553 = vpack.c.bf16 %v522, %v521
        %v554 = vpack.c.bf16 %v524, %v523
        %v555 = vpack.c.bf16 %v526, %v525
        %v556 = vpack.c.bf16 %v528, %v527
        %v557 = vpack.c.bf16 %v530, %v529
        %v558 = vpack.c.bf16 %v532, %v531
        %v559 = vpack.c.bf16 %v534, %v533
        %v560 = vpack.c.bf16 %v536, %v535
        %v561 = vpack.c.bf16 %v538, %v537
        %v562 = vpack.c.bf16 %v540, %v539
        %v563 = vpack.c.bf16 %v542, %v541
        %v564 = vpack.c.bf16 %v544, %v543
        %v565 = vpack.c.bf16 %v546, %v545
        %v566 = vpack.c.bf16 %v548, %v547
        %v567 = vpack.c.bf16 %v550, %v549
        %v568 = vpack.c.bf16 %v552, %v551
        %v585 = vunpack.c.l.b16 %v553
        %v586 = vunpack.c.h.b16 %v553
        %v587 = vunpack.c.l.b16 %v554
        %v588 = vunpack.c.h.b16 %v554
        %v589 = vunpack.c.l.b16 %v555
        %v590 = vunpack.c.h.b16 %v555
        %v591 = vunpack.c.l.b16 %v556
        %v592 = vunpack.c.h.b16 %v556
        %v593 = vunpack.c.l.b16 %v557
        %v594 = vunpack.c.h.b16 %v557
        %v595 = vunpack.c.l.b16 %v558
        %v596 = vunpack.c.h.b16 %v558
        %v597 = vunpack.c.l.b16 %v559
        %v598 = vunpack.c.h.b16 %v559
        %v599 = vunpack.c.l.b16 %v560
        %v600 = vunpack.c.h.b16 %v560
        %v601 = vunpack.c.l.b16 %v561
        %v602 = vunpack.c.h.b16 %v561
        %v603 = vunpack.c.l.b16 %v562
        %v604 = vunpack.c.h.b16 %v562
        %v605 = vunpack.c.l.b16 %v563
        %v606 = vunpack.c.h.b16 %v563
        %v607 = vunpack.c.l.b16 %v564
        %v608 = vunpack.c.h.b16 %v564
        %v609 = vunpack.c.l.b16 %v565
        %v610 = vunpack.c.h.b16 %v565
        %v611 = vunpack.c.l.b16 %v566
        %v612 = vunpack.c.h.b16 %v566
        %v613 = vunpack.c.l.b16 %v567
        %v614 = vunpack.c.h.b16 %v567
        %v615 = vunpack.c.l.b16 %v568
        %v616 = vunpack.c.h.b16 %v568
        %v617 = vpack.c.b16 %v585, %v585
        %v618 = vpack.c.b16 %v586, %v586
        %v619 = vpack.c.b16 %v587, %v587
        %v620 = vpack.c.b16 %v588, %v588
        %v621 = vpack.c.b16 %v589, %v589
        %v622 = vpack.c.b16 %v590, %v590
        %v623 = vpack.c.b16 %v591, %v591
        %v624 = vpack.c.b16 %v592, %v592
        %v625 = vpack.c.b16 %v593, %v593
        %v626 = vpack.c.b16 %v594, %v594
        %v627 = vpack.c.b16 %v595, %v595
        %v628 = vpack.c.b16 %v596, %v596
        %v629 = vpack.c.b16 %v597, %v597
        %v630 = vpack.c.b16 %v598, %v598
        %v631 = vpack.c.b16 %v599, %v599
        %v632 = vpack.c.b16 %v600, %v600
        %v633 = vpack.c.b16 %v601, %v601
        %v634 = vpack.c.b16 %v602, %v602
        %v635 = vpack.c.b16 %v603, %v603
        %v636 = vpack.c.b16 %v604, %v604
        %v637 = vpack.c.b16 %v605, %v605
        %v638 = vpack.c.b16 %v606, %v606
        %v639 = vpack.c.b16 %v607, %v607
        %v640 = vpack.c.b16 %v608, %v608
        %v641 = vpack.c.b16 %v609, %v609
        %v642 = vpack.c.b16 %v610, %v610
        %v643 = vpack.c.b16 %v611, %v611
        %v644 = vpack.c.b16 %v612, %v612
        %v645 = vpack.c.b16 %v613, %v613
        %v646 = vpack.c.b16 %v614, %v614
        %v647 = vpack.c.b16 %v615, %v615
        %v648 = vpack.c.b16 %v616, %v616
        %vm649 = vsmask.f32 256
        %vm650 = vsmask.f32 4368
        %vm651 = vmor %vm649, %vm650
        %v653 = vshrl.u32 %v617, 16
        %v655 = vrot.slane %v653, 7
        %v656 = vshll.u32 %v617, 16
        %v658 = vor.u32 %v655, %v656
        %v659 = vrot.slane %v655, 4
        %v661 = vshrl.u32 %v618, 16
        %v663 = vrot.slane %v661, 7
        %v664 = vshll.u32 %v618, 16
        %v666 = vor.u32 %v663, %v664
        %v667 = vsel %vm651, %v659, %v666
        %v668 = vrot.slane %v663, 4
        %v670 = vshrl.u32 %v619, 16
        %v672 = vrot.slane %v670, 7
        %v673 = vshll.u32 %v619, 16
        %v675 = vor.u32 %v672, %v673
        %v676 = vrot.slane %v672, 4
        %v678 = vshrl.u32 %v620, 16
        %v680 = vrot.slane %v678, 7
        %v681 = vshll.u32 %v620, 16
        %v683 = vor.u32 %v680, %v681
        %v684 = vsel %vm651, %v676, %v683
        %v685 = vrot.slane %v680, 4
        %v687 = vshrl.u32 %v621, 16
        %v689 = vrot.slane %v687, 7
        %v690 = vshll.u32 %v621, 16
        %v692 = vor.u32 %v689, %v690
        %v693 = vrot.slane %v689, 4
        %v695 = vshrl.u32 %v622, 16
        %v697 = vrot.slane %v695, 7
        %v698 = vshll.u32 %v622, 16
        %v700 = vor.u32 %v697, %v698
        %v701 = vsel %vm651, %v693, %v700
        %v702 = vrot.slane %v697, 4
        %v704 = vshrl.u32 %v623, 16
        %v706 = vrot.slane %v704, 7
        %v707 = vshll.u32 %v623, 16
        %v709 = vor.u32 %v706, %v707
        %v710 = vrot.slane %v706, 4
        %v712 = vshrl.u32 %v624, 16
        %v714 = vrot.slane %v712, 7
        %v715 = vshll.u32 %v624, 16
        %v717 = vor.u32 %v714, %v715
        %v718 = vsel %vm651, %v710, %v717
        %v719 = vrot.slane %v714, 4
        %v721 = vshrl.u32 %v625, 16
        %v723 = vrot.slane %v721, 7
        %v724 = vshll.u32 %v625, 16
        %v726 = vor.u32 %v723, %v724
        %v727 = vrot.slane %v723, 4
        %v729 = vshrl.u32 %v626, 16
        %v731 = vrot.slane %v729, 7
        %v732 = vshll.u32 %v626, 16
        %v734 = vor.u32 %v731, %v732
        %v735 = vsel %vm651, %v727, %v734
        %v736 = vrot.slane %v731, 4
        %v738 = vshrl.u32 %v627, 16
        %v740 = vrot.slane %v738, 7
        %v741 = vshll.u32 %v627, 16
        %v743 = vor.u32 %v740, %v741
        %v744 = vrot.slane %v740, 4
        %v746 = vshrl.u32 %v628, 16
        %v748 = vrot.slane %v746, 7
        %v749 = vshll.u32 %v628, 16
        %v751 = vor.u32 %v748, %v749
        %v752 = vsel %vm651, %v744, %v751
        %v753 = vrot.slane %v748, 4
        %v755 = vshrl.u32 %v629, 16
        %v757 = vrot.slane %v755, 7
        %v758 = vshll.u32 %v629, 16
        %v760 = vor.u32 %v757, %v758
        %v761 = vrot.slane %v757, 4
        %v763 = vshrl.u32 %v630, 16
        %v765 = vrot.slane %v763, 7
        %v766 = vshll.u32 %v630, 16
        %v768 = vor.u32 %v765, %v766
        %v769 = vsel %vm651, %v761, %v768
        %v770 = vrot.slane %v765, 4
        %v772 = vshrl.u32 %v631, 16
        %v774 = vrot.slane %v772, 7
        %v775 = vshll.u32 %v631, 16
        %v777 = vor.u32 %v774, %v775
        %v778 = vrot.slane %v774, 4
        %v780 = vshrl.u32 %v632, 16
        %v782 = vrot.slane %v780, 7
        %v783 = vshll.u32 %v632, 16
        %v785 = vor.u32 %v782, %v783
        %v786 = vsel %vm651, %v778, %v785
        %v787 = vrot.slane %v782, 4
        %v789 = vshrl.u32 %v633, 16
        %v791 = vrot.slane %v789, 7
        %v792 = vshll.u32 %v633, 16
        %v794 = vor.u32 %v791, %v792
        %v795 = vrot.slane %v791, 4
        %v797 = vshrl.u32 %v634, 16
        %v799 = vrot.slane %v797, 7
        %v800 = vshll.u32 %v634, 16
        %v802 = vor.u32 %v799, %v800
        %v803 = vsel %vm651, %v795, %v802
        %v804 = vrot.slane %v799, 4
        %v806 = vshrl.u32 %v635, 16
        %v808 = vrot.slane %v806, 7
        %v809 = vshll.u32 %v635, 16
        %v811 = vor.u32 %v808, %v809
        %v812 = vrot.slane %v808, 4
        %v814 = vshrl.u32 %v636, 16
        %v816 = vrot.slane %v814, 7
        %v817 = vshll.u32 %v636, 16
        %v819 = vor.u32 %v816, %v817
        %v820 = vsel %vm651, %v812, %v819
        %v821 = vrot.slane %v816, 4
        %v823 = vshrl.u32 %v637, 16
        %v825 = vrot.slane %v823, 7
        %v826 = vshll.u32 %v637, 16
        %v828 = vor.u32 %v825, %v826
        %v829 = vrot.slane %v825, 4
        %v831 = vshrl.u32 %v638, 16
        %v833 = vrot.slane %v831, 7
        %v834 = vshll.u32 %v638, 16
        %v836 = vor.u32 %v833, %v834
        %v837 = vsel %vm651, %v829, %v836
        %v838 = vrot.slane %v833, 4
        %v840 = vshrl.u32 %v639, 16
        %v842 = vrot.slane %v840, 7
        %v843 = vshll.u32 %v639, 16
        %v845 = vor.u32 %v842, %v843
        %v846 = vrot.slane %v842, 4
        %v848 = vshrl.u32 %v640, 16
        %v850 = vrot.slane %v848, 7
        %v851 = vshll.u32 %v640, 16
        %v853 = vor.u32 %v850, %v851
        %v854 = vsel %vm651, %v846, %v853
        %v855 = vrot.slane %v850, 4
        %v857 = vshrl.u32 %v641, 16
        %v859 = vrot.slane %v857, 7
        %v860 = vshll.u32 %v641, 16
        %v862 = vor.u32 %v859, %v860
        %v863 = vrot.slane %v859, 4
        %v865 = vshrl.u32 %v642, 16
        %v867 = vrot.slane %v865, 7
        %v868 = vshll.u32 %v642, 16
        %v870 = vor.u32 %v867, %v868
        %v871 = vsel %vm651, %v863, %v870
        %v872 = vrot.slane %v867, 4
        %v874 = vshrl.u32 %v643, 16
        %v876 = vrot.slane %v874, 7
        %v877 = vshll.u32 %v643, 16
        %v879 = vor.u32 %v876, %v877
        %v880 = vrot.slane %v876, 4
        %v882 = vshrl.u32 %v644, 16
        %v884 = vrot.slane %v882, 7
        %v885 = vshll.u32 %v644, 16
        %v887 = vor.u32 %v884, %v885
        %v888 = vsel %vm651, %v880, %v887
        %v889 = vrot.slane %v884, 4
        %v891 = vshrl.u32 %v645, 16
        %v893 = vrot.slane %v891, 7
        %v894 = vshll.u32 %v645, 16
        %v896 = vor.u32 %v893, %v894
        %v897 = vrot.slane %v893, 4
        %v899 = vshrl.u32 %v646, 16
        %v901 = vrot.slane %v899, 7
        %v902 = vshll.u32 %v646, 16
        %v904 = vor.u32 %v901, %v902
        %v905 = vsel %vm651, %v897, %v904
        %v906 = vrot.slane %v901, 4
        %v908 = vshrl.u32 %v647, 16
        %v910 = vrot.slane %v908, 7
        %v911 = vshll.u32 %v647, 16
        %v913 = vor.u32 %v910, %v911
        %v914 = vrot.slane %v910, 4
        %v916 = vshrl.u32 %v648, 16
        %v918 = vrot.slane %v916, 7
        %v919 = vshll.u32 %v648, 16
        %v921 = vor.u32 %v918, %v919
        %v922 = vsel %vm651, %v914, %v921
        %v923 = vrot.slane %v918, 4
        %s972 = scalar_lea.vmem [#allocation2], 12
        %vm973 = vcmask 1043456
        %vm974 = vsmask.f32 7938
        %vm975 = vmand %vm973, %vm974
        %v976 = vld [vmem:[%s972] sm:$0xf]
        %v977 = vsel %vm975, %v658, %v976
        %978 = vst [vmem:[%s972] sm:$0xf] %v977
        %979 = vst [vmem:[%s972 + $0x4] sm:$0xf] %v667
        %vm980 = vcmask 1040384
        %vm981 = vmand %vm980, %vm649
        %v982 = vld [vmem:[%s972 + $0x8] sm:$0x1]
        %v983 = vsel %vm981, %v668, %v982
        %984 = vst [vmem:[%s972 + $0x8] sm:$0x1] %v983
        %v985 = vld [vmem:[%s972 + $0xc] sm:$0xf]
        %v986 = vsel %vm975, %v675, %v985
        %987 = vst [vmem:[%s972 + $0xc] sm:$0xf] %v986
        %988 = vst [vmem:[%s972 + $0x10] sm:$0xf] %v684
        %v989 = vld [vmem:[%s972 + $0x14] sm:$0x1]
        %v990 = vsel %vm981, %v685, %v989
        %991 = vst [vmem:[%s972 + $0x14] sm:$0x1] %v990
        %v992 = vld [vmem:[%s972 + $0x18] sm:$0xf]
        %v993 = vsel %vm975, %v692, %v992
        %994 = vst [vmem:[%s972 + $0x18] sm:$0xf] %v993
        %995 = vst [vmem:[%s972 + $0x1c] sm:$0xf] %v701
        %v996 = vld [vmem:[%s972 + $0x20] sm:$0x1]
        %v997 = vsel %vm981, %v702, %v996
        %998 = vst [vmem:[%s972 + $0x20] sm:$0x1] %v997
        %v999 = vld [vmem:[%s972 + $0x24] sm:$0xf]
        %v1000 = vsel %vm975, %v709, %v999
        %1001 = vst [vmem:[%s972 + $0x24] sm:$0xf] %v1000
        %1002 = vst [vmem:[%s972 + $0x28] sm:$0xf] %v718
        %v1003 = vld [vmem:[%s972 + $0x2c] sm:$0x1]
        %v1004 = vsel %vm981, %v719, %v1003
        %1005 = vst [vmem:[%s972 + $0x2c] sm:$0x1] %v1004
        %v1006 = vld [vmem:[%s972 + $0x30] sm:$0xf]
        %v1007 = vsel %vm975, %v726, %v1006
        %1008 = vst [vmem:[%s972 + $0x30] sm:$0xf] %v1007
        %1009 = vst [vmem:[%s972 + $0x34] sm:$0xf] %v735
        %v1010 = vld [vmem:[%s972 + $0x38] sm:$0x1]
        %v1011 = vsel %vm981, %v736, %v1010
        %1012 = vst [vmem:[%s972 + $0x38] sm:$0x1] %v1011
        %v1013 = vld [vmem:[%s972 + $0x3c] sm:$0xf]
        %v1014 = vsel %vm975, %v743, %v1013
        %1015 = vst [vmem:[%s972 + $0x3c] sm:$0xf] %v1014
        %1016 = vst [vmem:[%s972 + $0x40] sm:$0xf] %v752
        %v1017 = vld [vmem:[%s972 + $0x44] sm:$0x1]
        %v1018 = vsel %vm981, %v753, %v1017
        %1019 = vst [vmem:[%s972 + $0x44] sm:$0x1] %v1018
        %v1020 = vld [vmem:[%s972 + $0x48] sm:$0xf]
        %v1021 = vsel %vm975, %v760, %v1020
        %1022 = vst [vmem:[%s972 + $0x48] sm:$0xf] %v1021
        %1023 = vst [vmem:[%s972 + $0x4c] sm:$0xf] %v769
        %v1024 = vld [vmem:[%s972 + $0x50] sm:$0x1]
        %v1025 = vsel %vm981, %v770, %v1024
        %1026 = vst [vmem:[%s972 + $0x50] sm:$0x1] %v1025
        %v1027 = vld [vmem:[%s972 + $0x54] sm:$0xf]
        %v1028 = vsel %vm975, %v777, %v1027
        %1029 = vst [vmem:[%s972 + $0x54] sm:$0xf] %v1028
        %1030 = vst [vmem:[%s972 + $0x58] sm:$0xf] %v786
        %v1031 = vld [vmem:[%s972 + $0x5c] sm:$0x1]
        %v1032 = vsel %vm981, %v787, %v1031
        %1033 = vst [vmem:[%s972 + $0x5c] sm:$0x1] %v1032
        %v1034 = vld [vmem:[%s972 + $0x60] sm:$0xf]
        %v1035 = vsel %vm975, %v794, %v1034
        %1036 = vst [vmem:[%s972 + $0x60] sm:$0xf] %v1035
        %1037 = vst [vmem:[%s972 + $0x64] sm:$0xf] %v803
        %v1038 = vld [vmem:[%s972 + $0x68] sm:$0x1]
        %v1039 = vsel %vm981, %v804, %v1038
        %1040 = vst [vmem:[%s972 + $0x68] sm:$0x1] %v1039
        %v1041 = vld [vmem:[%s972 + $0x6c] sm:$0xf]
        %v1042 = vsel %vm975, %v811, %v1041
        %1043 = vst [vmem:[%s972 + $0x6c] sm:$0xf] %v1042
        %1044 = vst [vmem:[%s972 + $0x70] sm:$0xf] %v820
        %v1045 = vld [vmem:[%s972 + $0x74] sm:$0x1]
        %v1046 = vsel %vm981, %v821, %v1045
        %1047 = vst [vmem:[%s972 + $0x74] sm:$0x1] %v1046
        %v1048 = vld [vmem:[%s972 + $0x78] sm:$0xf]
        %v1049 = vsel %vm975, %v828, %v1048
        %1050 = vst [vmem:[%s972 + $0x78] sm:$0xf] %v1049
        %1051 = vst [vmem:[%s972 + $0x7c] sm:$0xf] %v837
        %v1052 = vld [vmem:[%s972 + $0x80] sm:$0x1]
        %v1053 = vsel %vm981, %v838, %v1052
        %1054 = vst [vmem:[%s972 + $0x80] sm:$0x1] %v1053
        %v1055 = vld [vmem:[%s972 + $0x84] sm:$0xf]
        %v1056 = vsel %vm975, %v845, %v1055
        %1057 = vst [vmem:[%s972 + $0x84] sm:$0xf] %v1056
        %1058 = vst [vmem:[%s972 + $0x88] sm:$0xf] %v854
        %v1059 = vld [vmem:[%s972 + $0x8c] sm:$0x1]
        %v1060 = vsel %vm981, %v855, %v1059
        %1061 = vst [vmem:[%s972 + $0x8c] sm:$0x1] %v1060
        %v1062 = vld [vmem:[%s972 + $0x90] sm:$0xf]
        %v1063 = vsel %vm975, %v862, %v1062
        %1064 = vst [vmem:[%s972 + $0x90] sm:$0xf] %v1063
        %1065 = vst [vmem:[%s972 + $0x94] sm:$0xf] %v871
        %v1066 = vld [vmem:[%s972 + $0x98] sm:$0x1]
        %v1067 = vsel %vm981, %v872, %v1066
        %1068 = vst [vmem:[%s972 + $0x98] sm:$0x1] %v1067
        %v1069 = vld [vmem:[%s972 + $0x9c] sm:$0xf]
        %v1070 = vsel %vm975, %v879, %v1069
        %1071 = vst [vmem:[%s972 + $0x9c] sm:$0xf] %v1070
        %1072 = vst [vmem:[%s972 + $0xa0] sm:$0xf] %v888
        %v1073 = vld [vmem:[%s972 + $0xa4] sm:$0x1]
        %v1074 = vsel %vm981, %v889, %v1073
        %1075 = vst [vmem:[%s972 + $0xa4] sm:$0x1] %v1074
        %v1076 = vld [vmem:[%s972 + $0xa8] sm:$0xf]
        %v1077 = vsel %vm975, %v896, %v1076
        %1078 = vst [vmem:[%s972 + $0xa8] sm:$0xf] %v1077
        %1079 = vst [vmem:[%s972 + $0xac] sm:$0xf] %v905
        %v1080 = vld [vmem:[%s972 + $0xb0] sm:$0x1]
        %v1081 = vsel %vm981, %v906, %v1080
        %1082 = vst [vmem:[%s972 + $0xb0] sm:$0x1] %v1081
        %v1083 = vld [vmem:[%s972 + $0xb4] sm:$0xf]
        %v1084 = vsel %vm975, %v913, %v1083
        %1085 = vst [vmem:[%s972 + $0xb4] sm:$0xf] %v1084
        %1086 = vst [vmem:[%s972 + $0xb8] sm:$0xf] %v922
        %v1087 = vld [vmem:[%s972 + $0xbc] sm:$0x1]
        %v1088 = vsel %vm981, %v923, %v1087
        %1089 = vst [vmem:[%s972 + $0xbc] sm:$0x1] %v1088
        %v1090 = vld [vmem:[#allocation2] sm:$0xf]
        %v1091 = vld [vmem:[#allocation2 + $0x4] sm:$0xf]
        %v1092 = vld [vmem:[#allocation2 + $0xc] sm:$0xf]
        %v1093 = vld [vmem:[#allocation2 + $0x10] sm:$0xf]
        %v1094 = vld [vmem:[#allocation2 + $0x18] sm:$0xf]
        %v1095 = vld [vmem:[#allocation2 + $0x1c] sm:$0xf]
        %v1096 = vld [vmem:[#allocation2 + $0x24] sm:$0xf]
        %v1097 = vld [vmem:[#allocation2 + $0x28] sm:$0xf]
        %v1098 = vld [vmem:[#allocation2 + $0x30] sm:$0xf]
        %v1099 = vld [vmem:[#allocation2 + $0x34] sm:$0xf]
        %v1100 = vld [vmem:[#allocation2 + $0x3c] sm:$0xf]
        %v1101 = vld [vmem:[#allocation2 + $0x40] sm:$0xf]
        %v1102 = vld [vmem:[#allocation2 + $0x48] sm:$0xf]
        %v1103 = vld [vmem:[#allocation2 + $0x4c] sm:$0xf]
        %v1104 = vld [vmem:[#allocation2 + $0x54] sm:$0xf]
        %v1105 = vld [vmem:[#allocation2 + $0x58] sm:$0xf]
        %v1106 = vld [vmem:[#allocation2 + $0x60] sm:$0xf]
        %v1107 = vld [vmem:[#allocation2 + $0x64] sm:$0xf]
        %v1108 = vld [vmem:[#allocation2 + $0x6c] sm:$0xf]
        %v1109 = vld [vmem:[#allocation2 + $0x70] sm:$0xf]
        %v1110 = vld [vmem:[#allocation2 + $0x78] sm:$0xf]
        %v1111 = vld [vmem:[#allocation2 + $0x7c] sm:$0xf]
        %v1112 = vld [vmem:[#allocation2 + $0x84] sm:$0xf]
        %v1113 = vld [vmem:[#allocation2 + $0x88] sm:$0xf]
        %v1114 = vld [vmem:[#allocation2 + $0x90] sm:$0xf]
        %v1115 = vld [vmem:[#allocation2 + $0x94] sm:$0xf]
        %v1116 = vld [vmem:[#allocation2 + $0x9c] sm:$0xf]
        %v1117 = vld [vmem:[#allocation2 + $0xa0] sm:$0xf]
        %v1118 = vld [vmem:[#allocation2 + $0xa8] sm:$0xf]
        %v1119 = vld [vmem:[#allocation2 + $0xac] sm:$0xf]
        %v1120 = vld [vmem:[#allocation2 + $0xb4] sm:$0xf]
        %v1121 = vld [vmem:[#allocation2 + $0xb8] sm:$0xf]
        %v1154 = vunpack.c.l.b16 %v1090
        %v1155 = vunpack.c.l.b16 %v1091
        %v1156 = vunpack.c.l.b16 %v1092
        %v1157 = vunpack.c.l.b16 %v1093
        %v1158 = vunpack.c.l.b16 %v1094
        %v1159 = vunpack.c.l.b16 %v1095
        %v1160 = vunpack.c.l.b16 %v1096
        %v1161 = vunpack.c.l.b16 %v1097
        %v1162 = vunpack.c.l.b16 %v1098
        %v1163 = vunpack.c.l.b16 %v1099
        %v1164 = vunpack.c.l.b16 %v1100
        %v1165 = vunpack.c.l.b16 %v1101
        %v1166 = vunpack.c.l.b16 %v1102
        %v1167 = vunpack.c.l.b16 %v1103
        %v1168 = vunpack.c.l.b16 %v1104
        %v1169 = vunpack.c.l.b16 %v1105
        %v1170 = vunpack.c.l.b16 %v1106
        %v1171 = vunpack.c.l.b16 %v1107
        %v1172 = vunpack.c.l.b16 %v1108
        %v1173 = vunpack.c.l.b16 %v1109
        %v1174 = vunpack.c.l.b16 %v1110
        %v1175 = vunpack.c.l.b16 %v1111
        %v1176 = vunpack.c.l.b16 %v1112
        %v1177 = vunpack.c.l.b16 %v1113
        %v1178 = vunpack.c.l.b16 %v1114
        %v1179 = vunpack.c.l.b16 %v1115
        %v1180 = vunpack.c.l.b16 %v1116
        %v1181 = vunpack.c.l.b16 %v1117
        %v1182 = vunpack.c.l.b16 %v1118
        %v1183 = vunpack.c.l.b16 %v1119
        %v1184 = vunpack.c.l.b16 %v1120
        %v1185 = vunpack.c.l.b16 %v1121
        %v1186 = vpack.c.b16 %v1155, %v1154
        %v1187 = vpack.c.b16 %v1157, %v1156
        %v1188 = vpack.c.b16 %v1159, %v1158
        %v1189 = vpack.c.b16 %v1161, %v1160
        %v1190 = vpack.c.b16 %v1163, %v1162
        %v1191 = vpack.c.b16 %v1165, %v1164
        %v1192 = vpack.c.b16 %v1167, %v1166
        %v1193 = vpack.c.b16 %v1169, %v1168
        %v1194 = vpack.c.b16 %v1171, %v1170
        %v1195 = vpack.c.b16 %v1173, %v1172
        %v1196 = vpack.c.b16 %v1175, %v1174
        %v1197 = vpack.c.b16 %v1177, %v1176
        %v1198 = vpack.c.b16 %v1179, %v1178
        %v1199 = vpack.c.b16 %v1181, %v1180
        %v1200 = vpack.c.b16 %v1183, %v1182
        %v1201 = vpack.c.b16 %v1185, %v1184
        %1218 = vst [vmem:[#allocation3] sm:$0xff] %v1186
        %1219 = vst [vmem:[#allocation3 + $0x48] sm:$0xff] %v1187
        %1220 = vst [vmem:[#allocation3 + $0x90] sm:$0xff] %v1188
        %1221 = vst [vmem:[#allocation3 + $0xd8] sm:$0xff] %v1189
        %1222 = vst [vmem:[#allocation3 + $0x120] sm:$0xff] %v1190
        %1223 = vst [vmem:[#allocation3 + $0x168] sm:$0xff] %v1191
        %1224 = vst [vmem:[#allocation3 + $0x1b0] sm:$0xff] %v1192
        %1225 = vst [vmem:[#allocation3 + $0x1f8] sm:$0xff] %v1193
        %1226 = vst [vmem:[#allocation3 + $0x240] sm:$0xff] %v1194
        %1227 = vst [vmem:[#allocation3 + $0x288] sm:$0xff] %v1195
        %1228 = vst [vmem:[#allocation3 + $0x2d0] sm:$0xff] %v1196
        %1229 = vst [vmem:[#allocation3 + $0x318] sm:$0xff] %v1197
        %1230 = vst [vmem:[#allocation3 + $0x360] sm:$0xff] %v1198
        %1231 = vst [vmem:[#allocation3 + $0x3a8] sm:$0xff] %v1199
        %1232 = vst [vmem:[#allocation3 + $0x3f0] sm:$0xff] %v1200
        %1233 = vst [vmem:[#allocation3 + $0x438] sm:$0xff] %v1201
        %v1234 = vld [vmem:[#allocation2] sm:$0xf]
        %v1235 = vld [vmem:[#allocation2 + $0x4] sm:$0xf]
        %v1236 = vld [vmem:[#allocation2 + $0x8] sm:$0x1]
        %v1237 = vld [vmem:[#allocation2 + $0xc] sm:$0xf]
        %v1238 = vld [vmem:[#allocation2 + $0x10] sm:$0xf]
        %v1239 = vld [vmem:[#allocation2 + $0x14] sm:$0x1]
        %v1240 = vld [vmem:[#allocation2 + $0x18] sm:$0xf]
        %v1241 = vld [vmem:[#allocation2 + $0x1c] sm:$0xf]
        %v1242 = vld [vmem:[#allocation2 + $0x20] sm:$0x1]
        %v1243 = vld [vmem:[#allocation2 + $0x24] sm:$0xf]
        %v1244 = vld [vmem:[#allocation2 + $0x28] sm:$0xf]
        %v1245 = vld [vmem:[#allocation2 + $0x2c] sm:$0x1]
        %v1246 = vld [vmem:[#allocation2 + $0x30] sm:$0xf]
        %v1247 = vld [vmem:[#allocation2 + $0x34] sm:$0xf]
        %v1248 = vld [vmem:[#allocation2 + $0x38] sm:$0x1]
        %v1249 = vld [vmem:[#allocation2 + $0x3c] sm:$0xf]
        %v1250 = vld [vmem:[#allocation2 + $0x40] sm:$0xf]
        %v1251 = vld [vmem:[#allocation2 + $0x44] sm:$0x1]
        %v1252 = vld [vmem:[#allocation2 + $0x48] sm:$0xf]
        %v1253 = vld [vmem:[#allocation2 + $0x4c] sm:$0xf]
        %v1254 = vld [vmem:[#allocation2 + $0x50] sm:$0x1]
        %v1255 = vld [vmem:[#allocation2 + $0x54] sm:$0xf]
        %v1256 = vld [vmem:[#allocation2 + $0x58] sm:$0xf]
        %v1257 = vld [vmem:[#allocation2 + $0x5c] sm:$0x1]
        %v1258 = vld [vmem:[#allocation2 + $0x60] sm:$0xf]
        %v1259 = vld [vmem:[#allocation2 + $0x64] sm:$0xf]
        %v1260 = vld [vmem:[#allocation2 + $0x68] sm:$0x1]
        %v1261 = vld [vmem:[#allocation2 + $0x6c] sm:$0xf]
        %v1262 = vld [vmem:[#allocation2 + $0x70] sm:$0xf]
        %v1263 = vld [vmem:[#allocation2 + $0x74] sm:$0x1]
        %v1264 = vld [vmem:[#allocation2 + $0x78] sm:$0xf]
        %v1265 = vld [vmem:[#allocation2 + $0x7c] sm:$0xf]
        %v1266 = vld [vmem:[#allocation2 + $0x80] sm:$0x1]
        %v1267 = vld [vmem:[#allocation2 + $0x84] sm:$0xf]
        %v1268 = vld [vmem:[#allocation2 + $0x88] sm:$0xf]
        %v1269 = vld [vmem:[#allocation2 + $0x8c] sm:$0x1]
        %v1270 = vld [vmem:[#allocation2 + $0x90] sm:$0xf]
        %v1271 = vld [vmem:[#allocation2 + $0x94] sm:$0xf]
        %v1272 = vld [vmem:[#allocation2 + $0x98] sm:$0x1]
        %v1273 = vld [vmem:[#allocation2 + $0x9c] sm:$0xf]
        %v1274 = vld [vmem:[#allocation2 + $0xa0] sm:$0xf]
        %v1275 = vld [vmem:[#allocation2 + $0xa4] sm:$0x1]
        %v1276 = vld [vmem:[#allocation2 + $0xa8] sm:$0xf]
        %v1277 = vld [vmem:[#allocation2 + $0xac] sm:$0xf]
        %v1278 = vld [vmem:[#allocation2 + $0xb0] sm:$0x1]
        %v1279 = vld [vmem:[#allocation2 + $0xb4] sm:$0xf]
        %v1280 = vld [vmem:[#allocation2 + $0xb8] sm:$0xf]
        %v1281 = vld [vmem:[#allocation2 + $0xbc] sm:$0x1]
        %vm1282 = vsmask.f32 3328
        %vm1283 = vsmask.f32 7440
        %vm1284 = vmor %vm1282, %vm1283
        %v1286 = vshrl.u32 %v1234, 16
        %v1288 = vrot.slane %v1286, 4
        %v1289 = vshll.u32 %v1234, 16
        %v1291 = vrot.slane %v1289, 5
        %v1292 = vor.u32 %v1288, %v1291
        %v1293 = vrot.slane %v1292, 4
        %v1295 = vshll.u32 %v1235, 16
        %v1297 = vrot.slane %v1295, 5
        %v1298 = vsel %vm1284, %v1293, %v1297
        %v1299 = vshrl.u32 %v1235, 16
        %v1301 = vrot.slane %v1299, 4
        %v1302 = vor.u32 %v1301, %v1297
        %v1303 = vrot.slane %v1302, 4
        %v1305 = vshll.u32 %v1236, 16
        %v1307 = vrot.slane %v1305, 5
        %v1308 = vsel %vm1284, %v1303, %v1307
        %v1310 = vshrl.u32 %v1237, 16
        %v1312 = vrot.slane %v1310, 4
        %v1313 = vshll.u32 %v1237, 16
        %v1315 = vrot.slane %v1313, 5
        %v1316 = vor.u32 %v1312, %v1315
        %v1317 = vrot.slane %v1316, 4
        %v1319 = vshll.u32 %v1238, 16
        %v1321 = vrot.slane %v1319, 5
        %v1322 = vsel %vm1284, %v1317, %v1321
        %v1323 = vshrl.u32 %v1238, 16
        %v1325 = vrot.slane %v1323, 4
        %v1326 = vor.u32 %v1325, %v1321
        %v1327 = vrot.slane %v1326, 4
        %v1329 = vshll.u32 %v1239, 16
        %v1331 = vrot.slane %v1329, 5
        %v1332 = vsel %vm1284, %v1327, %v1331
        %v1334 = vshrl.u32 %v1240, 16
        %v1336 = vrot.slane %v1334, 4
        %v1337 = vshll.u32 %v1240, 16
        %v1339 = vrot.slane %v1337, 5
        %v1340 = vor.u32 %v1336, %v1339
        %v1341 = vrot.slane %v1340, 4
        %v1343 = vshll.u32 %v1241, 16
        %v1345 = vrot.slane %v1343, 5
        %v1346 = vsel %vm1284, %v1341, %v1345
        %v1347 = vshrl.u32 %v1241, 16
        %v1349 = vrot.slane %v1347, 4
        %v1350 = vor.u32 %v1349, %v1345
        %v1351 = vrot.slane %v1350, 4
        %v1353 = vshll.u32 %v1242, 16
        %v1355 = vrot.slane %v1353, 5
        %v1356 = vsel %vm1284, %v1351, %v1355
        %v1358 = vshrl.u32 %v1243, 16
        %v1360 = vrot.slane %v1358, 4
        %v1361 = vshll.u32 %v1243, 16
        %v1363 = vrot.slane %v1361, 5
        %v1364 = vor.u32 %v1360, %v1363
        %v1365 = vrot.slane %v1364, 4
        %v1367 = vshll.u32 %v1244, 16
        %v1369 = vrot.slane %v1367, 5
        %v1370 = vsel %vm1284, %v1365, %v1369
        %v1371 = vshrl.u32 %v1244, 16
        %v1373 = vrot.slane %v1371, 4
        %v1374 = vor.u32 %v1373, %v1369
        %v1375 = vrot.slane %v1374, 4
        %v1377 = vshll.u32 %v1245, 16
        %v1379 = vrot.slane %v1377, 5
        %v1380 = vsel %vm1284, %v1375, %v1379
        %v1382 = vshrl.u32 %v1246, 16
        %v1384 = vrot.slane %v1382, 4
        %v1385 = vshll.u32 %v1246, 16
        %v1387 = vrot.slane %v1385, 5
        %v1388 = vor.u32 %v1384, %v1387
        %v1389 = vrot.slane %v1388, 4
        %v1391 = vshll.u32 %v1247, 16
        %v1393 = vrot.slane %v1391, 5
        %v1394 = vsel %vm1284, %v1389, %v1393
        %v1395 = vshrl.u32 %v1247, 16
        %v1397 = vrot.slane %v1395, 4
        %v1398 = vor.u32 %v1397, %v1393
        %v1399 = vrot.slane %v1398, 4
        %v1401 = vshll.u32 %v1248, 16
        %v1403 = vrot.slane %v1401, 5
        %v1404 = vsel %vm1284, %v1399, %v1403
        %v1406 = vshrl.u32 %v1249, 16
        %v1408 = vrot.slane %v1406, 4
        %v1409 = vshll.u32 %v1249, 16
        %v1411 = vrot.slane %v1409, 5
        %v1412 = vor.u32 %v1408, %v1411
        %v1413 = vrot.slane %v1412, 4
        %v1415 = vshll.u32 %v1250, 16
        %v1417 = vrot.slane %v1415, 5
        %v1418 = vsel %vm1284, %v1413, %v1417
        %v1419 = vshrl.u32 %v1250, 16
        %v1421 = vrot.slane %v1419, 4
        %v1422 = vor.u32 %v1421, %v1417
        %v1423 = vrot.slane %v1422, 4
        %v1425 = vshll.u32 %v1251, 16
        %v1427 = vrot.slane %v1425, 5
        %v1428 = vsel %vm1284, %v1423, %v1427
        %v1430 = vshrl.u32 %v1252, 16
        %v1432 = vrot.slane %v1430, 4
        %v1433 = vshll.u32 %v1252, 16
        %v1435 = vrot.slane %v1433, 5
        %v1436 = vor.u32 %v1432, %v1435
        %v1437 = vrot.slane %v1436, 4
        %v1439 = vshll.u32 %v1253, 16
        %v1441 = vrot.slane %v1439, 5
        %v1442 = vsel %vm1284, %v1437, %v1441
        %v1443 = vshrl.u32 %v1253, 16
        %v1445 = vrot.slane %v1443, 4
        %v1446 = vor.u32 %v1445, %v1441
        %v1447 = vrot.slane %v1446, 4
        %v1449 = vshll.u32 %v1254, 16
        %v1451 = vrot.slane %v1449, 5
        %v1452 = vsel %vm1284, %v1447, %v1451
        %v1454 = vshrl.u32 %v1255, 16
        %v1456 = vrot.slane %v1454, 4
        %v1457 = vshll.u32 %v1255, 16
        %v1459 = vrot.slane %v1457, 5
        %v1460 = vor.u32 %v1456, %v1459
        %v1461 = vrot.slane %v1460, 4
        %v1463 = vshll.u32 %v1256, 16
        %v1465 = vrot.slane %v1463, 5
        %v1466 = vsel %vm1284, %v1461, %v1465
        %v1467 = vshrl.u32 %v1256, 16
        %v1469 = vrot.slane %v1467, 4
        %v1470 = vor.u32 %v1469, %v1465
        %v1471 = vrot.slane %v1470, 4
        %v1473 = vshll.u32 %v1257, 16
        %v1475 = vrot.slane %v1473, 5
        %v1476 = vsel %vm1284, %v1471, %v1475
        %v1478 = vshrl.u32 %v1258, 16
        %v1480 = vrot.slane %v1478, 4
        %v1481 = vshll.u32 %v1258, 16
        %v1483 = vrot.slane %v1481, 5
        %v1484 = vor.u32 %v1480, %v1483
        %v1485 = vrot.slane %v1484, 4
        %v1487 = vshll.u32 %v1259, 16
        %v1489 = vrot.slane %v1487, 5
        %v1490 = vsel %vm1284, %v1485, %v1489
        %v1491 = vshrl.u32 %v1259, 16
        %v1493 = vrot.slane %v1491, 4
        %v1494 = vor.u32 %v1493, %v1489
        %v1495 = vrot.slane %v1494, 4
        %v1497 = vshll.u32 %v1260, 16
        %v1499 = vrot.slane %v1497, 5
        %v1500 = vsel %vm1284, %v1495, %v1499
        %v1502 = vshrl.u32 %v1261, 16
        %v1504 = vrot.slane %v1502, 4
        %v1505 = vshll.u32 %v1261, 16
        %v1507 = vrot.slane %v1505, 5
        %v1508 = vor.u32 %v1504, %v1507
        %v1509 = vrot.slane %v1508, 4
        %v1511 = vshll.u32 %v1262, 16
        %v1513 = vrot.slane %v1511, 5
        %v1514 = vsel %vm1284, %v1509, %v1513
        %v1515 = vshrl.u32 %v1262, 16
        %v1517 = vrot.slane %v1515, 4
        %v1518 = vor.u32 %v1517, %v1513
        %v1519 = vrot.slane %v1518, 4
        %v1521 = vshll.u32 %v1263, 16
        %v1523 = vrot.slane %v1521, 5
        %v1524 = vsel %vm1284, %v1519, %v1523
        %v1526 = vshrl.u32 %v1264, 16
        %v1528 = vrot.slane %v1526, 4
        %v1529 = vshll.u32 %v1264, 16
        %v1531 = vrot.slane %v1529, 5
        %v1532 = vor.u32 %v1528, %v1531
        %v1533 = vrot.slane %v1532, 4
        %v1535 = vshll.u32 %v1265, 16
        %v1537 = vrot.slane %v1535, 5
        %v1538 = vsel %vm1284, %v1533, %v1537
        %v1539 = vshrl.u32 %v1265, 16
        %v1541 = vrot.slane %v1539, 4
        %v1542 = vor.u32 %v1541, %v1537
        %v1543 = vrot.slane %v1542, 4
        %v1545 = vshll.u32 %v1266, 16
        %v1547 = vrot.slane %v1545, 5
        %v1548 = vsel %vm1284, %v1543, %v1547
        %v1550 = vshrl.u32 %v1267, 16
        %v1552 = vrot.slane %v1550, 4
        %v1553 = vshll.u32 %v1267, 16
        %v1555 = vrot.slane %v1553, 5
        %v1556 = vor.u32 %v1552, %v1555
        %v1557 = vrot.slane %v1556, 4
        %v1559 = vshll.u32 %v1268, 16
        %v1561 = vrot.slane %v1559, 5
        %v1562 = vsel %vm1284, %v1557, %v1561
        %v1563 = vshrl.u32 %v1268, 16
        %v1565 = vrot.slane %v1563, 4
        %v1566 = vor.u32 %v1565, %v1561
        %v1567 = vrot.slane %v1566, 4
        %v1569 = vshll.u32 %v1269, 16
        %v1571 = vrot.slane %v1569, 5
        %v1572 = vsel %vm1284, %v1567, %v1571
        %v1574 = vshrl.u32 %v1270, 16
        %v1576 = vrot.slane %v1574, 4
        %v1577 = vshll.u32 %v1270, 16
        %v1579 = vrot.slane %v1577, 5
        %v1580 = vor.u32 %v1576, %v1579
        %v1581 = vrot.slane %v1580, 4
        %v1583 = vshll.u32 %v1271, 16
        %v1585 = vrot.slane %v1583, 5
        %v1586 = vsel %vm1284, %v1581, %v1585
        %v1587 = vshrl.u32 %v1271, 16
        %v1589 = vrot.slane %v1587, 4
        %v1590 = vor.u32 %v1589, %v1585
        %v1591 = vrot.slane %v1590, 4
        %v1593 = vshll.u32 %v1272, 16
        %v1595 = vrot.slane %v1593, 5
        %v1596 = vsel %vm1284, %v1591, %v1595
        %v1598 = vshrl.u32 %v1273, 16
        %v1600 = vrot.slane %v1598, 4
        %v1601 = vshll.u32 %v1273, 16
        %v1603 = vrot.slane %v1601, 5
        %v1604 = vor.u32 %v1600, %v1603
        %v1605 = vrot.slane %v1604, 4
        %v1607 = vshll.u32 %v1274, 16
        %v1609 = vrot.slane %v1607, 5
        %v1610 = vsel %vm1284, %v1605, %v1609
        %v1611 = vshrl.u32 %v1274, 16
        %v1613 = vrot.slane %v1611, 4
        %v1614 = vor.u32 %v1613, %v1609
        %v1615 = vrot.slane %v1614, 4
        %v1617 = vshll.u32 %v1275, 16
        %v1619 = vrot.slane %v1617, 5
        %v1620 = vsel %vm1284, %v1615, %v1619
        %v1622 = vshrl.u32 %v1276, 16
        %v1624 = vrot.slane %v1622, 4
        %v1625 = vshll.u32 %v1276, 16
        %v1627 = vrot.slane %v1625, 5
        %v1628 = vor.u32 %v1624, %v1627
        %v1629 = vrot.slane %v1628, 4
        %v1631 = vshll.u32 %v1277, 16
        %v1633 = vrot.slane %v1631, 5
        %v1634 = vsel %vm1284, %v1629, %v1633
        %v1635 = vshrl.u32 %v1277, 16
        %v1637 = vrot.slane %v1635, 4
        %v1638 = vor.u32 %v1637, %v1633
        %v1639 = vrot.slane %v1638, 4
        %v1641 = vshll.u32 %v1278, 16
        %v1643 = vrot.slane %v1641, 5
        %v1644 = vsel %vm1284, %v1639, %v1643
        %v1646 = vshrl.u32 %v1279, 16
        %v1648 = vrot.slane %v1646, 4
        %v1649 = vshll.u32 %v1279, 16
        %v1651 = vrot.slane %v1649, 5
        %v1652 = vor.u32 %v1648, %v1651
        %v1653 = vrot.slane %v1652, 4
        %v1655 = vshll.u32 %v1280, 16
        %v1657 = vrot.slane %v1655, 5
        %v1658 = vsel %vm1284, %v1653, %v1657
        %v1659 = vshrl.u32 %v1280, 16
        %v1661 = vrot.slane %v1659, 4
        %v1662 = vor.u32 %v1661, %v1657
        %v1663 = vrot.slane %v1662, 4
        %v1665 = vshll.u32 %v1281, 16
        %v1667 = vrot.slane %v1665, 5
        %v1668 = vsel %vm1284, %v1663, %v1667
        %v1669 = vunpack.c.l.b16 %v1298
        %v1670 = vunpack.c.l.b16 %v1308
        %v1671 = vunpack.c.l.b16 %v1322
        %v1672 = vunpack.c.l.b16 %v1332
        %v1673 = vunpack.c.l.b16 %v1346
        %v1674 = vunpack.c.l.b16 %v1356
        %v1675 = vunpack.c.l.b16 %v1370
        %v1676 = vunpack.c.l.b16 %v1380
        %v1677 = vunpack.c.l.b16 %v1394
        %v1678 = vunpack.c.l.b16 %v1404
        %v1679 = vunpack.c.l.b16 %v1418
        %v1680 = vunpack.c.l.b16 %v1428
        %v1681 = vunpack.c.l.b16 %v1442
        %v1682 = vunpack.c.l.b16 %v1452
        %v1683 = vunpack.c.l.b16 %v1466
        %v1684 = vunpack.c.l.b16 %v1476
        %v1685 = vunpack.c.l.b16 %v1490
        %v1686 = vunpack.c.l.b16 %v1500
        %v1687 = vunpack.c.l.b16 %v1514
        %v1688 = vunpack.c.l.b16 %v1524
        %v1689 = vunpack.c.l.b16 %v1538
        %v1690 = vunpack.c.l.b16 %v1548
        %v1691 = vunpack.c.l.b16 %v1562
        %v1692 = vunpack.c.l.b16 %v1572
        %v1693 = vunpack.c.l.b16 %v1586
        %v1694 = vunpack.c.l.b16 %v1596
        %v1695 = vunpack.c.l.b16 %v1610
        %v1696 = vunpack.c.l.b16 %v1620
        %v1697 = vunpack.c.l.b16 %v1634
        %v1698 = vunpack.c.l.b16 %v1644
        %v1699 = vunpack.c.l.b16 %v1658
        %v1700 = vunpack.c.l.b16 %v1668
        %v1701 = vpack.c.b16 %v1670, %v1669
        %v1702 = vpack.c.b16 %v1672, %v1671
        %v1703 = vpack.c.b16 %v1674, %v1673
        %v1704 = vpack.c.b16 %v1676, %v1675
        %v1705 = vpack.c.b16 %v1678, %v1677
        %v1706 = vpack.c.b16 %v1680, %v1679
        %v1707 = vpack.c.b16 %v1682, %v1681
        %v1708 = vpack.c.b16 %v1684, %v1683
        %v1709 = vpack.c.b16 %v1686, %v1685
        %v1710 = vpack.c.b16 %v1688, %v1687
        %v1711 = vpack.c.b16 %v1690, %v1689
        %v1712 = vpack.c.b16 %v1692, %v1691
        %v1713 = vpack.c.b16 %v1694, %v1693
        %v1714 = vpack.c.b16 %v1696, %v1695
        %v1715 = vpack.c.b16 %v1698, %v1697
        %v1716 = vpack.c.b16 %v1700, %v1699
        %1733 = vst [vmem:[#allocation3 + $0x8] sm:$0xff] %v1701
        %1734 = vst [vmem:[#allocation3 + $0x50] sm:$0xff] %v1702
        %1735 = vst [vmem:[#allocation3 + $0x98] sm:$0xff] %v1703
        %1736 = vst [vmem:[#allocation3 + $0xe0] sm:$0xff] %v1704
        %1737 = vst [vmem:[#allocation3 + $0x128] sm:$0xff] %v1705
        %1738 = vst [vmem:[#allocation3 + $0x170] sm:$0xff] %v1706
        %1739 = vst [vmem:[#allocation3 + $0x1b8] sm:$0xff] %v1707
        %1740 = vst [vmem:[#allocation3 + $0x200] sm:$0xff] %v1708
        %1741 = vst [vmem:[#allocation3 + $0x248] sm:$0xff] %v1709
        %1742 = vst [vmem:[#allocation3 + $0x290] sm:$0xff] %v1710
        %1743 = vst [vmem:[#allocation3 + $0x2d8] sm:$0xff] %v1711
        %1744 = vst [vmem:[#allocation3 + $0x320] sm:$0xff] %v1712
        %1745 = vst [vmem:[#allocation3 + $0x368] sm:$0xff] %v1713
        %1746 = vst [vmem:[#allocation3 + $0x3b0] sm:$0xff] %v1714
        %1747 = vst [vmem:[#allocation3 + $0x3f8] sm:$0xff] %v1715
        %1748 = vst [vmem:[#allocation3 + $0x440] sm:$0xff] %v1716
        %v1749 = vld [vmem:[#allocation2] sm:$0xe]
        %v1750 = vld [vmem:[#allocation2 + $0x4] sm:$0xf]
        %v1751 = vld [vmem:[#allocation2 + $0x8] sm:$0x1]
        %v1752 = vld [vmem:[#allocation2 + $0xc] sm:$0xe]
        %v1753 = vld [vmem:[#allocation2 + $0x10] sm:$0xf]
        %v1754 = vld [vmem:[#allocation2 + $0x14] sm:$0x1]
        %v1755 = vld [vmem:[#allocation2 + $0x18] sm:$0xe]
        %v1756 = vld [vmem:[#allocation2 + $0x1c] sm:$0xf]
        %v1757 = vld [vmem:[#allocation2 + $0x20] sm:$0x1]
        %v1758 = vld [vmem:[#allocation2 + $0x24] sm:$0xe]
        %v1759 = vld [vmem:[#allocation2 + $0x28] sm:$0xf]
        %v1760 = vld [vmem:[#allocation2 + $0x2c] sm:$0x1]
        %v1761 = vld [vmem:[#allocation2 + $0x30] sm:$0xe]
        %v1762 = vld [vmem:[#allocation2 + $0x34] sm:$0xf]
        %v1763 = vld [vmem:[#allocation2 + $0x38] sm:$0x1]
        %v1764 = vld [vmem:[#allocation2 + $0x3c] sm:$0xe]
        %v1765 = vld [vmem:[#allocation2 + $0x40] sm:$0xf]
        %v1766 = vld [vmem:[#allocation2 + $0x44] sm:$0x1]
        %v1767 = vld [vmem:[#allocation2 + $0x48] sm:$0xe]
        %v1768 = vld [vmem:[#allocation2 + $0x4c] sm:$0xf]
        %v1769 = vld [vmem:[#allocation2 + $0x50] sm:$0x1]
        %v1770 = vld [vmem:[#allocation2 + $0x54] sm:$0xe]
        %v1771 = vld [vmem:[#allocation2 + $0x58] sm:$0xf]
        %v1772 = vld [vmem:[#allocation2 + $0x5c] sm:$0x1]
        %v1773 = vld [vmem:[#allocation2 + $0x60] sm:$0xe]
        %v1774 = vld [vmem:[#allocation2 + $0x64] sm:$0xf]
        %v1775 = vld [vmem:[#allocation2 + $0x68] sm:$0x1]
        %v1776 = vld [vmem:[#allocation2 + $0x6c] sm:$0xe]
        %v1777 = vld [vmem:[#allocation2 + $0x70] sm:$0xf]
        %v1778 = vld [vmem:[#allocation2 + $0x74] sm:$0x1]
        %v1779 = vld [vmem:[#allocation2 + $0x78] sm:$0xe]
        %v1780 = vld [vmem:[#allocation2 + $0x7c] sm:$0xf]
        %v1781 = vld [vmem:[#allocation2 + $0x80] sm:$0x1]
        %v1782 = vld [vmem:[#allocation2 + $0x84] sm:$0xe]
        %v1783 = vld [vmem:[#allocation2 + $0x88] sm:$0xf]
        %v1784 = vld [vmem:[#allocation2 + $0x8c] sm:$0x1]
        %v1785 = vld [vmem:[#allocation2 + $0x90] sm:$0xe]
        %v1786 = vld [vmem:[#allocation2 + $0x94] sm:$0xf]
        %v1787 = vld [vmem:[#allocation2 + $0x98] sm:$0x1]
        %v1788 = vld [vmem:[#allocation2 + $0x9c] sm:$0xe]
        %v1789 = vld [vmem:[#allocation2 + $0xa0] sm:$0xf]
        %v1790 = vld [vmem:[#allocation2 + $0xa4] sm:$0x1]
        %v1791 = vld [vmem:[#allocation2 + $0xa8] sm:$0xe]
        %v1792 = vld [vmem:[#allocation2 + $0xac] sm:$0xf]
        %v1793 = vld [vmem:[#allocation2 + $0xb0] sm:$0x1]
        %v1794 = vld [vmem:[#allocation2 + $0xb4] sm:$0xe]
        %v1795 = vld [vmem:[#allocation2 + $0xb8] sm:$0xf]
        %v1796 = vld [vmem:[#allocation2 + $0xbc] sm:$0x1]
        %vm1845 = vcmask 1042432
        %vm1846 = vcmask 1046532
        %vm1847 = vmor %vm1845, %vm1846
        %v1848 = vrot.slane %v1749, 5
        %v1849 = vrot.slane %v1848, 4
        %v1850 = vrot.slane %v1750, 5
        %v1851 = vsel %vm1847, %v1849, %v1850
        %v1852 = vrot.slane %v1850, 4
        %v1853 = vrot.slane %v1751, 5
        %v1854 = vsel %vm1847, %v1852, %v1853
        %v1855 = vrot.slane %v1752, 5
        %v1856 = vrot.slane %v1855, 4
        %v1857 = vrot.slane %v1753, 5
        %v1858 = vsel %vm1847, %v1856, %v1857
        %v1859 = vrot.slane %v1857, 4
        %v1860 = vrot.slane %v1754, 5
        %v1861 = vsel %vm1847, %v1859, %v1860
        %v1862 = vrot.slane %v1755, 5
        %v1863 = vrot.slane %v1862, 4
        %v1864 = vrot.slane %v1756, 5
        %v1865 = vsel %vm1847, %v1863, %v1864
        %v1866 = vrot.slane %v1864, 4
        %v1867 = vrot.slane %v1757, 5
        %v1868 = vsel %vm1847, %v1866, %v1867
        %v1869 = vrot.slane %v1758, 5
        %v1870 = vrot.slane %v1869, 4
        %v1871 = vrot.slane %v1759, 5
        %v1872 = vsel %vm1847, %v1870, %v1871
        %v1873 = vrot.slane %v1871, 4
        %v1874 = vrot.slane %v1760, 5
        %v1875 = vsel %vm1847, %v1873, %v1874
        %v1876 = vrot.slane %v1761, 5
        %v1877 = vrot.slane %v1876, 4
        %v1878 = vrot.slane %v1762, 5
        %v1879 = vsel %vm1847, %v1877, %v1878
        %v1880 = vrot.slane %v1878, 4
        %v1881 = vrot.slane %v1763, 5
        %v1882 = vsel %vm1847, %v1880, %v1881
        %v1883 = vrot.slane %v1764, 5
        %v1884 = vrot.slane %v1883, 4
        %v1885 = vrot.slane %v1765, 5
        %v1886 = vsel %vm1847, %v1884, %v1885
        %v1887 = vrot.slane %v1885, 4
        %v1888 = vrot.slane %v1766, 5
        %v1889 = vsel %vm1847, %v1887, %v1888
        %v1890 = vrot.slane %v1767, 5
        %v1891 = vrot.slane %v1890, 4
        %v1892 = vrot.slane %v1768, 5
        %v1893 = vsel %vm1847, %v1891, %v1892
        %v1894 = vrot.slane %v1892, 4
        %v1895 = vrot.slane %v1769, 5
        %v1896 = vsel %vm1847, %v1894, %v1895
        %v1897 = vrot.slane %v1770, 5
        %v1898 = vrot.slane %v1897, 4
        %v1899 = vrot.slane %v1771, 5
        %v1900 = vsel %vm1847, %v1898, %v1899
        %v1901 = vrot.slane %v1899, 4
        %v1902 = vrot.slane %v1772, 5
        %v1903 = vsel %vm1847, %v1901, %v1902
        %v1904 = vrot.slane %v1773, 5
        %v1905 = vrot.slane %v1904, 4
        %v1906 = vrot.slane %v1774, 5
        %v1907 = vsel %vm1847, %v1905, %v1906
        %v1908 = vrot.slane %v1906, 4
        %v1909 = vrot.slane %v1775, 5
        %v1910 = vsel %vm1847, %v1908, %v1909
        %v1911 = vrot.slane %v1776, 5
        %v1912 = vrot.slane %v1911, 4
        %v1913 = vrot.slane %v1777, 5
        %v1914 = vsel %vm1847, %v1912, %v1913
        %v1915 = vrot.slane %v1913, 4
        %v1916 = vrot.slane %v1778, 5
        %v1917 = vsel %vm1847, %v1915, %v1916
        %v1918 = vrot.slane %v1779, 5
        %v1919 = vrot.slane %v1918, 4
        %v1920 = vrot.slane %v1780, 5
        %v1921 = vsel %vm1847, %v1919, %v1920
        %v1922 = vrot.slane %v1920, 4
        %v1923 = vrot.slane %v1781, 5
        %v1924 = vsel %vm1847, %v1922, %v1923
        %v1925 = vrot.slane %v1782, 5
        %v1926 = vrot.slane %v1925, 4
        %v1927 = vrot.slane %v1783, 5
        %v1928 = vsel %vm1847, %v1926, %v1927
        %v1929 = vrot.slane %v1927, 4
        %v1930 = vrot.slane %v1784, 5
        %v1931 = vsel %vm1847, %v1929, %v1930
        %v1932 = vrot.slane %v1785, 5
        %v1933 = vrot.slane %v1932, 4
        %v1934 = vrot.slane %v1786, 5
        %v1935 = vsel %vm1847, %v1933, %v1934
        %v1936 = vrot.slane %v1934, 4
        %v1937 = vrot.slane %v1787, 5
        %v1938 = vsel %vm1847, %v1936, %v1937
        %v1939 = vrot.slane %v1788, 5
        %v1940 = vrot.slane %v1939, 4
        %v1941 = vrot.slane %v1789, 5
        %v1942 = vsel %vm1847, %v1940, %v1941
        %v1943 = vrot.slane %v1941, 4
        %v1944 = vrot.slane %v1790, 5
        %v1945 = vsel %vm1847, %v1943, %v1944
        %v1946 = vrot.slane %v1791, 5
        %v1947 = vrot.slane %v1946, 4
        %v1948 = vrot.slane %v1792, 5
        %v1949 = vsel %vm1847, %v1947, %v1948
        %v1950 = vrot.slane %v1948, 4
        %v1951 = vrot.slane %v1793, 5
        %v1952 = vsel %vm1847, %v1950, %v1951
        %v1953 = vrot.slane %v1794, 5
        %v1954 = vrot.slane %v1953, 4
        %v1955 = vrot.slane %v1795, 5
        %v1956 = vsel %vm1847, %v1954, %v1955
        %v1957 = vrot.slane %v1955, 4
        %v1958 = vrot.slane %v1796, 5
        %v1959 = vsel %vm1847, %v1957, %v1958
        %v1960 = vunpack.c.l.b16 %v1851
        %v1961 = vunpack.c.l.b16 %v1854
        %v1962 = vunpack.c.l.b16 %v1858
        %v1963 = vunpack.c.l.b16 %v1861
        %v1964 = vunpack.c.l.b16 %v1865
        %v1965 = vunpack.c.l.b16 %v1868
        %v1966 = vunpack.c.l.b16 %v1872
        %v1967 = vunpack.c.l.b16 %v1875
        %v1968 = vunpack.c.l.b16 %v1879
        %v1969 = vunpack.c.l.b16 %v1882
        %v1970 = vunpack.c.l.b16 %v1886
        %v1971 = vunpack.c.l.b16 %v1889
        %v1972 = vunpack.c.l.b16 %v1893
        %v1973 = vunpack.c.l.b16 %v1896
        %v1974 = vunpack.c.l.b16 %v1900
        %v1975 = vunpack.c.l.b16 %v1903
        %v1976 = vunpack.c.l.b16 %v1907
        %v1977 = vunpack.c.l.b16 %v1910
        %v1978 = vunpack.c.l.b16 %v1914
        %v1979 = vunpack.c.l.b16 %v1917
        %v1980 = vunpack.c.l.b16 %v1921
        %v1981 = vunpack.c.l.b16 %v1924
        %v1982 = vunpack.c.l.b16 %v1928
        %v1983 = vunpack.c.l.b16 %v1931
        %v1984 = vunpack.c.l.b16 %v1935
        %v1985 = vunpack.c.l.b16 %v1938
        %v1986 = vunpack.c.l.b16 %v1942
        %v1987 = vunpack.c.l.b16 %v1945
        %v1988 = vunpack.c.l.b16 %v1949
        %v1989 = vunpack.c.l.b16 %v1952
        %v1990 = vunpack.c.l.b16 %v1956
        %v1991 = vunpack.c.l.b16 %v1959
        %v1992 = vpack.c.b16 %v1961, %v1960
        %v1993 = vpack.c.b16 %v1963, %v1962
        %v1994 = vpack.c.b16 %v1965, %v1964
        %v1995 = vpack.c.b16 %v1967, %v1966
        %v1996 = vpack.c.b16 %v1969, %v1968
        %v1997 = vpack.c.b16 %v1971, %v1970
        %v1998 = vpack.c.b16 %v1973, %v1972
        %v1999 = vpack.c.b16 %v1975, %v1974
        %v2000 = vpack.c.b16 %v1977, %v1976
        %v2001 = vpack.c.b16 %v1979, %v1978
        %v2002 = vpack.c.b16 %v1981, %v1980
        %v2003 = vpack.c.b16 %v1983, %v1982
        %v2004 = vpack.c.b16 %v1985, %v1984
        %v2005 = vpack.c.b16 %v1987, %v1986
        %v2006 = vpack.c.b16 %v1989, %v1988
        %v2007 = vpack.c.b16 %v1991, %v1990
        %2024 = vst [vmem:[#allocation3 + $0x10] sm:$0xff] %v1992
        %2025 = vst [vmem:[#allocation3 + $0x58] sm:$0xff] %v1993
        %2026 = vst [vmem:[#allocation3 + $0xa0] sm:$0xff] %v1994
        %2027 = vst [vmem:[#allocation3 + $0xe8] sm:$0xff] %v1995
        %2028 = vst [vmem:[#allocation3 + $0x130] sm:$0xff] %v1996
        %2029 = vst [vmem:[#allocation3 + $0x178] sm:$0xff] %v1997
        %2030 = vst [vmem:[#allocation3 + $0x1c0] sm:$0xff] %v1998
        %2031 = vst [vmem:[#allocation3 + $0x208] sm:$0xff] %v1999
        %2032 = vst [vmem:[#allocation3 + $0x250] sm:$0xff] %v2000
        %2033 = vst [vmem:[#allocation3 + $0x298] sm:$0xff] %v2001
        %2034 = vst [vmem:[#allocation3 + $0x2e0] sm:$0xff] %v2002
        %2035 = vst [vmem:[#allocation3 + $0x328] sm:$0xff] %v2003
        %2036 = vst [vmem:[#allocation3 + $0x370] sm:$0xff] %v2004
        %2037 = vst [vmem:[#allocation3 + $0x3b8] sm:$0xff] %v2005
        %2038 = vst [vmem:[#allocation3 + $0x400] sm:$0xff] %v2006
        %2039 = vst [vmem:[#allocation3 + $0x448] sm:$0xff] %v2007
        %v2040 = vld [vmem:[%s972] sm:$0xf]
        %v2041 = vld [vmem:[%s972 + $0x4] sm:$0xf]
        %v2042 = vld [vmem:[%s972 + $0xc] sm:$0xf]
        %v2043 = vld [vmem:[%s972 + $0x10] sm:$0xf]
        %v2044 = vld [vmem:[%s972 + $0x18] sm:$0xf]
        %v2045 = vld [vmem:[%s972 + $0x1c] sm:$0xf]
        %v2046 = vld [vmem:[%s972 + $0x24] sm:$0xf]
        %v2047 = vld [vmem:[%s972 + $0x28] sm:$0xf]
        %v2048 = vld [vmem:[%s972 + $0x30] sm:$0xf]
        %v2049 = vld [vmem:[%s972 + $0x34] sm:$0xf]
        %v2050 = vld [vmem:[%s972 + $0x3c] sm:$0xf]
        %v2051 = vld [vmem:[%s972 + $0x40] sm:$0xf]
        %v2052 = vld [vmem:[%s972 + $0x48] sm:$0xf]
        %v2053 = vld [vmem:[%s972 + $0x4c] sm:$0xf]
        %v2054 = vld [vmem:[%s972 + $0x54] sm:$0xf]
        %v2055 = vld [vmem:[%s972 + $0x58] sm:$0xf]
        %v2056 = vld [vmem:[%s972 + $0x60] sm:$0xf]
        %v2057 = vld [vmem:[%s972 + $0x64] sm:$0xf]
        %v2058 = vld [vmem:[%s972 + $0x6c] sm:$0xf]
        %v2059 = vld [vmem:[%s972 + $0x70] sm:$0xf]
        %v2060 = vld [vmem:[%s972 + $0x78] sm:$0xf]
        %v2061 = vld [vmem:[%s972 + $0x7c] sm:$0xf]
        %v2062 = vld [vmem:[%s972 + $0x84] sm:$0xf]
        %v2063 = vld [vmem:[%s972 + $0x88] sm:$0xf]
        %v2064 = vld [vmem:[%s972 + $0x90] sm:$0xf]
        %v2065 = vld [vmem:[%s972 + $0x94] sm:$0xf]
        %v2066 = vld [vmem:[%s972 + $0x9c] sm:$0xf]
        %v2067 = vld [vmem:[%s972 + $0xa0] sm:$0xf]
        %v2068 = vld [vmem:[%s972 + $0xa8] sm:$0xf]
        %v2069 = vld [vmem:[%s972 + $0xac] sm:$0xf]
        %v2070 = vld [vmem:[%s972 + $0xb4] sm:$0xf]
        %v2071 = vld [vmem:[%s972 + $0xb8] sm:$0xf]
        %v2104 = vunpack.c.l.b16 %v2040
        %v2105 = vunpack.c.l.b16 %v2041
        %v2106 = vunpack.c.l.b16 %v2042
        %v2107 = vunpack.c.l.b16 %v2043
        %v2108 = vunpack.c.l.b16 %v2044
        %v2109 = vunpack.c.l.b16 %v2045
        %v2110 = vunpack.c.l.b16 %v2046
        %v2111 = vunpack.c.l.b16 %v2047
        %v2112 = vunpack.c.l.b16 %v2048
        %v2113 = vunpack.c.l.b16 %v2049
        %v2114 = vunpack.c.l.b16 %v2050
        %v2115 = vunpack.c.l.b16 %v2051
        %v2116 = vunpack.c.l.b16 %v2052
        %v2117 = vunpack.c.l.b16 %v2053
        %v2118 = vunpack.c.l.b16 %v2054
        %v2119 = vunpack.c.l.b16 %v2055
        %v2120 = vunpack.c.l.b16 %v2056
        %v2121 = vunpack.c.l.b16 %v2057
        %v2122 = vunpack.c.l.b16 %v2058
        %v2123 = vunpack.c.l.b16 %v2059
        %v2124 = vunpack.c.l.b16 %v2060
        %v2125 = vunpack.c.l.b16 %v2061
        %v2126 = vunpack.c.l.b16 %v2062
        %v2127 = vunpack.c.l.b16 %v2063
        %v2128 = vunpack.c.l.b16 %v2064
        %v2129 = vunpack.c.l.b16 %v2065
        %v2130 = vunpack.c.l.b16 %v2066
        %v2131 = vunpack.c.l.b16 %v2067
        %v2132 = vunpack.c.l.b16 %v2068
        %v2133 = vunpack.c.l.b16 %v2069
        %v2134 = vunpack.c.l.b16 %v2070
        %v2135 = vunpack.c.l.b16 %v2071
        %v2136 = vpack.c.b16 %v2105, %v2104
        %v2137 = vpack.c.b16 %v2107, %v2106
        %v2138 = vpack.c.b16 %v2109, %v2108
        %v2139 = vpack.c.b16 %v2111, %v2110
        %v2140 = vpack.c.b16 %v2113, %v2112
        %v2141 = vpack.c.b16 %v2115, %v2114
        %v2142 = vpack.c.b16 %v2117, %v2116
        %v2143 = vpack.c.b16 %v2119, %v2118
        %v2144 = vpack.c.b16 %v2121, %v2120
        %v2145 = vpack.c.b16 %v2123, %v2122
        %v2146 = vpack.c.b16 %v2125, %v2124
        %v2147 = vpack.c.b16 %v2127, %v2126
        %v2148 = vpack.c.b16 %v2129, %v2128
        %v2149 = vpack.c.b16 %v2131, %v2130
        %v2150 = vpack.c.b16 %v2133, %v2132
        %v2151 = vpack.c.b16 %v2135, %v2134
        %2168 = vst [vmem:[#allocation3 + $0x18] sm:$0xff] %v2136
        %2169 = vst [vmem:[#allocation3 + $0x60] sm:$0xff] %v2137
        %2170 = vst [vmem:[#allocation3 + $0xa8] sm:$0xff] %v2138
        %2171 = vst [vmem:[#allocation3 + $0xf0] sm:$0xff] %v2139
        %2172 = vst [vmem:[#allocation3 + $0x138] sm:$0xff] %v2140
        %2173 = vst [vmem:[#allocation3 + $0x180] sm:$0xff] %v2141
        %2174 = vst [vmem:[#allocation3 + $0x1c8] sm:$0xff] %v2142
        %2175 = vst [vmem:[#allocation3 + $0x210] sm:$0xff] %v2143
        %2176 = vst [vmem:[#allocation3 + $0x258] sm:$0xff] %v2144
        %2177 = vst [vmem:[#allocation3 + $0x2a0] sm:$0xff] %v2145
        %2178 = vst [vmem:[#allocation3 + $0x2e8] sm:$0xff] %v2146
        %2179 = vst [vmem:[#allocation3 + $0x330] sm:$0xff] %v2147
        %2180 = vst [vmem:[#allocation3 + $0x378] sm:$0xff] %v2148
        %2181 = vst [vmem:[#allocation3 + $0x3c0] sm:$0xff] %v2149
        %2182 = vst [vmem:[#allocation3 + $0x408] sm:$0xff] %v2150
        %2183 = vst [vmem:[#allocation3 + $0x450] sm:$0xff] %v2151
        %v2184 = vld [vmem:[%s972] sm:$0xf]
        %v2185 = vld [vmem:[%s972 + $0x4] sm:$0xf]
        %v2186 = vld [vmem:[%s972 + $0x8] sm:$0x1]
        %v2187 = vld [vmem:[%s972 + $0xc] sm:$0xf]
        %v2188 = vld [vmem:[%s972 + $0x10] sm:$0xf]
        %v2189 = vld [vmem:[%s972 + $0x14] sm:$0x1]
        %v2190 = vld [vmem:[%s972 + $0x18] sm:$0xf]
        %v2191 = vld [vmem:[%s972 + $0x1c] sm:$0xf]
        %v2192 = vld [vmem:[%s972 + $0x20] sm:$0x1]
        %v2193 = vld [vmem:[%s972 + $0x24] sm:$0xf]
        %v2194 = vld [vmem:[%s972 + $0x28] sm:$0xf]
        %v2195 = vld [vmem:[%s972 + $0x2c] sm:$0x1]
        %v2196 = vld [vmem:[%s972 + $0x30] sm:$0xf]
        %v2197 = vld [vmem:[%s972 + $0x34] sm:$0xf]
        %v2198 = vld [vmem:[%s972 + $0x38] sm:$0x1]
        %v2199 = vld [vmem:[%s972 + $0x3c] sm:$0xf]
        %v2200 = vld [vmem:[%s972 + $0x40] sm:$0xf]
        %v2201 = vld [vmem:[%s972 + $0x44] sm:$0x1]
        %v2202 = vld [vmem:[%s972 + $0x48] sm:$0xf]
        %v2203 = vld [vmem:[%s972 + $0x4c] sm:$0xf]
        %v2204 = vld [vmem:[%s972 + $0x50] sm:$0x1]
        %v2205 = vld [vmem:[%s972 + $0x54] sm:$0xf]
        %v2206 = vld [vmem:[%s972 + $0x58] sm:$0xf]
        %v2207 = vld [vmem:[%s972 + $0x5c] sm:$0x1]
        %v2208 = vld [vmem:[%s972 + $0x60] sm:$0xf]
        %v2209 = vld [vmem:[%s972 + $0x64] sm:$0xf]
        %v2210 = vld [vmem:[%s972 + $0x68] sm:$0x1]
        %v2211 = vld [vmem:[%s972 + $0x6c] sm:$0xf]
        %v2212 = vld [vmem:[%s972 + $0x70] sm:$0xf]
        %v2213 = vld [vmem:[%s972 + $0x74] sm:$0x1]
        %v2214 = vld [vmem:[%s972 + $0x78] sm:$0xf]
        %v2215 = vld [vmem:[%s972 + $0x7c] sm:$0xf]
        %v2216 = vld [vmem:[%s972 + $0x80] sm:$0x1]
        %v2217 = vld [vmem:[%s972 + $0x84] sm:$0xf]
        %v2218 = vld [vmem:[%s972 + $0x88] sm:$0xf]
        %v2219 = vld [vmem:[%s972 + $0x8c] sm:$0x1]
        %v2220 = vld [vmem:[%s972 + $0x90] sm:$0xf]
        %v2221 = vld [vmem:[%s972 + $0x94] sm:$0xf]
        %v2222 = vld [vmem:[%s972 + $0x98] sm:$0x1]
        %v2223 = vld [vmem:[%s972 + $0x9c] sm:$0xf]
        %v2224 = vld [vmem:[%s972 + $0xa0] sm:$0xf]
        %v2225 = vld [vmem:[%s972 + $0xa4] sm:$0x1]
        %v2226 = vld [vmem:[%s972 + $0xa8] sm:$0xf]
        %v2227 = vld [vmem:[%s972 + $0xac] sm:$0xf]
        %v2228 = vld [vmem:[%s972 + $0xb0] sm:$0x1]
        %v2229 = vld [vmem:[%s972 + $0xb4] sm:$0xf]
        %v2230 = vld [vmem:[%s972 + $0xb8] sm:$0xf]
        %v2231 = vld [vmem:[%s972 + $0xbc] sm:$0x1]
        %v2233 = vshrl.u32 %v2184, 16
        %v2235 = vrot.slane %v2233, 4
        %v2236 = vshll.u32 %v2184, 16
        %v2238 = vrot.slane %v2236, 5
        %v2239 = vor.u32 %v2235, %v2238
        %v2240 = vrot.slane %v2239, 4
        %v2242 = vshll.u32 %v2185, 16
        %v2244 = vrot.slane %v2242, 5
        %v2245 = vsel %vm1284, %v2240, %v2244
        %v2246 = vshrl.u32 %v2185, 16
        %v2248 = vrot.slane %v2246, 4
        %v2249 = vor.u32 %v2248, %v2244
        %v2250 = vrot.slane %v2249, 4
        %v2252 = vshll.u32 %v2186, 16
        %v2254 = vrot.slane %v2252, 5
        %v2255 = vsel %vm1284, %v2250, %v2254
        %v2257 = vshrl.u32 %v2187, 16
        %v2259 = vrot.slane %v2257, 4
        %v2260 = vshll.u32 %v2187, 16
        %v2262 = vrot.slane %v2260, 5
        %v2263 = vor.u32 %v2259, %v2262
        %v2264 = vrot.slane %v2263, 4
        %v2266 = vshll.u32 %v2188, 16
        %v2268 = vrot.slane %v2266, 5
        %v2269 = vsel %vm1284, %v2264, %v2268
        %v2270 = vshrl.u32 %v2188, 16
        %v2272 = vrot.slane %v2270, 4
        %v2273 = vor.u32 %v2272, %v2268
        %v2274 = vrot.slane %v2273, 4
        %v2276 = vshll.u32 %v2189, 16
        %v2278 = vrot.slane %v2276, 5
        %v2279 = vsel %vm1284, %v2274, %v2278
        %v2281 = vshrl.u32 %v2190, 16
        %v2283 = vrot.slane %v2281, 4
        %v2284 = vshll.u32 %v2190, 16
        %v2286 = vrot.slane %v2284, 5
        %v2287 = vor.u32 %v2283, %v2286
        %v2288 = vrot.slane %v2287, 4
        %v2290 = vshll.u32 %v2191, 16
        %v2292 = vrot.slane %v2290, 5
        %v2293 = vsel %vm1284, %v2288, %v2292
        %v2294 = vshrl.u32 %v2191, 16
        %v2296 = vrot.slane %v2294, 4
        %v2297 = vor.u32 %v2296, %v2292
        %v2298 = vrot.slane %v2297, 4
        %v2300 = vshll.u32 %v2192, 16
        %v2302 = vrot.slane %v2300, 5
        %v2303 = vsel %vm1284, %v2298, %v2302
        %v2305 = vshrl.u32 %v2193, 16
        %v2307 = vrot.slane %v2305, 4
        %v2308 = vshll.u32 %v2193, 16
        %v2310 = vrot.slane %v2308, 5
        %v2311 = vor.u32 %v2307, %v2310
        %v2312 = vrot.slane %v2311, 4
        %v2314 = vshll.u32 %v2194, 16
        %v2316 = vrot.slane %v2314, 5
        %v2317 = vsel %vm1284, %v2312, %v2316
        %v2318 = vshrl.u32 %v2194, 16
        %v2320 = vrot.slane %v2318, 4
        %v2321 = vor.u32 %v2320, %v2316
        %v2322 = vrot.slane %v2321, 4
        %v2324 = vshll.u32 %v2195, 16
        %v2326 = vrot.slane %v2324, 5
        %v2327 = vsel %vm1284, %v2322, %v2326
        %v2329 = vshrl.u32 %v2196, 16
        %v2331 = vrot.slane %v2329, 4
        %v2332 = vshll.u32 %v2196, 16
        %v2334 = vrot.slane %v2332, 5
        %v2335 = vor.u32 %v2331, %v2334
        %v2336 = vrot.slane %v2335, 4
        %v2338 = vshll.u32 %v2197, 16
        %v2340 = vrot.slane %v2338, 5
        %v2341 = vsel %vm1284, %v2336, %v2340
        %v2342 = vshrl.u32 %v2197, 16
        %v2344 = vrot.slane %v2342, 4
        %v2345 = vor.u32 %v2344, %v2340
        %v2346 = vrot.slane %v2345, 4
        %v2348 = vshll.u32 %v2198, 16
        %v2350 = vrot.slane %v2348, 5
        %v2351 = vsel %vm1284, %v2346, %v2350
        %v2353 = vshrl.u32 %v2199, 16
        %v2355 = vrot.slane %v2353, 4
        %v2356 = vshll.u32 %v2199, 16
        %v2358 = vrot.slane %v2356, 5
        %v2359 = vor.u32 %v2355, %v2358
        %v2360 = vrot.slane %v2359, 4
        %v2362 = vshll.u32 %v2200, 16
        %v2364 = vrot.slane %v2362, 5
        %v2365 = vsel %vm1284, %v2360, %v2364
        %v2366 = vshrl.u32 %v2200, 16
        %v2368 = vrot.slane %v2366, 4
        %v2369 = vor.u32 %v2368, %v2364
        %v2370 = vrot.slane %v2369, 4
        %v2372 = vshll.u32 %v2201, 16
        %v2374 = vrot.slane %v2372, 5
        %v2375 = vsel %vm1284, %v2370, %v2374
        %v2377 = vshrl.u32 %v2202, 16
        %v2379 = vrot.slane %v2377, 4
        %v2380 = vshll.u32 %v2202, 16
        %v2382 = vrot.slane %v2380, 5
        %v2383 = vor.u32 %v2379, %v2382
        %v2384 = vrot.slane %v2383, 4
        %v2386 = vshll.u32 %v2203, 16
        %v2388 = vrot.slane %v2386, 5
        %v2389 = vsel %vm1284, %v2384, %v2388
        %v2390 = vshrl.u32 %v2203, 16
        %v2392 = vrot.slane %v2390, 4
        %v2393 = vor.u32 %v2392, %v2388
        %v2394 = vrot.slane %v2393, 4
        %v2396 = vshll.u32 %v2204, 16
        %v2398 = vrot.slane %v2396, 5
        %v2399 = vsel %vm1284, %v2394, %v2398
        %v2401 = vshrl.u32 %v2205, 16
        %v2403 = vrot.slane %v2401, 4
        %v2404 = vshll.u32 %v2205, 16
        %v2406 = vrot.slane %v2404, 5
        %v2407 = vor.u32 %v2403, %v2406
        %v2408 = vrot.slane %v2407, 4
        %v2410 = vshll.u32 %v2206, 16
        %v2412 = vrot.slane %v2410, 5
        %v2413 = vsel %vm1284, %v2408, %v2412
        %v2414 = vshrl.u32 %v2206, 16
        %v2416 = vrot.slane %v2414, 4
        %v2417 = vor.u32 %v2416, %v2412
        %v2418 = vrot.slane %v2417, 4
        %v2420 = vshll.u32 %v2207, 16
        %v2422 = vrot.slane %v2420, 5
        %v2423 = vsel %vm1284, %v2418, %v2422
        %v2425 = vshrl.u32 %v2208, 16
        %v2427 = vrot.slane %v2425, 4
        %v2428 = vshll.u32 %v2208, 16
        %v2430 = vrot.slane %v2428, 5
        %v2431 = vor.u32 %v2427, %v2430
        %v2432 = vrot.slane %v2431, 4
        %v2434 = vshll.u32 %v2209, 16
        %v2436 = vrot.slane %v2434, 5
        %v2437 = vsel %vm1284, %v2432, %v2436
        %v2438 = vshrl.u32 %v2209, 16
        %v2440 = vrot.slane %v2438, 4
        %v2441 = vor.u32 %v2440, %v2436
        %v2442 = vrot.slane %v2441, 4
        %v2444 = vshll.u32 %v2210, 16
        %v2446 = vrot.slane %v2444, 5
        %v2447 = vsel %vm1284, %v2442, %v2446
        %v2449 = vshrl.u32 %v2211, 16
        %v2451 = vrot.slane %v2449, 4
        %v2452 = vshll.u32 %v2211, 16
        %v2454 = vrot.slane %v2452, 5
        %v2455 = vor.u32 %v2451, %v2454
        %v2456 = vrot.slane %v2455, 4
        %v2458 = vshll.u32 %v2212, 16
        %v2460 = vrot.slane %v2458, 5
        %v2461 = vsel %vm1284, %v2456, %v2460
        %v2462 = vshrl.u32 %v2212, 16
        %v2464 = vrot.slane %v2462, 4
        %v2465 = vor.u32 %v2464, %v2460
        %v2466 = vrot.slane %v2465, 4
        %v2468 = vshll.u32 %v2213, 16
        %v2470 = vrot.slane %v2468, 5
        %v2471 = vsel %vm1284, %v2466, %v2470
        %v2473 = vshrl.u32 %v2214, 16
        %v2475 = vrot.slane %v2473, 4
        %v2476 = vshll.u32 %v2214, 16
        %v2478 = vrot.slane %v2476, 5
        %v2479 = vor.u32 %v2475, %v2478
        %v2480 = vrot.slane %v2479, 4
        %v2482 = vshll.u32 %v2215, 16
        %v2484 = vrot.slane %v2482, 5
        %v2485 = vsel %vm1284, %v2480, %v2484
        %v2486 = vshrl.u32 %v2215, 16
        %v2488 = vrot.slane %v2486, 4
        %v2489 = vor.u32 %v2488, %v2484
        %v2490 = vrot.slane %v2489, 4
        %v2492 = vshll.u32 %v2216, 16
        %v2494 = vrot.slane %v2492, 5
        %v2495 = vsel %vm1284, %v2490, %v2494
        %v2497 = vshrl.u32 %v2217, 16
        %v2499 = vrot.slane %v2497, 4
        %v2500 = vshll.u32 %v2217, 16
        %v2502 = vrot.slane %v2500, 5
        %v2503 = vor.u32 %v2499, %v2502
        %v2504 = vrot.slane %v2503, 4
        %v2506 = vshll.u32 %v2218, 16
        %v2508 = vrot.slane %v2506, 5
        %v2509 = vsel %vm1284, %v2504, %v2508
        %v2510 = vshrl.u32 %v2218, 16
        %v2512 = vrot.slane %v2510, 4
        %v2513 = vor.u32 %v2512, %v2508
        %v2514 = vrot.slane %v2513, 4
        %v2516 = vshll.u32 %v2219, 16
        %v2518 = vrot.slane %v2516, 5
        %v2519 = vsel %vm1284, %v2514, %v2518
        %v2521 = vshrl.u32 %v2220, 16
        %v2523 = vrot.slane %v2521, 4
        %v2524 = vshll.u32 %v2220, 16
        %v2526 = vrot.slane %v2524, 5
        %v2527 = vor.u32 %v2523, %v2526
        %v2528 = vrot.slane %v2527, 4
        %v2530 = vshll.u32 %v2221, 16
        %v2532 = vrot.slane %v2530, 5
        %v2533 = vsel %vm1284, %v2528, %v2532
        %v2534 = vshrl.u32 %v2221, 16
        %v2536 = vrot.slane %v2534, 4
        %v2537 = vor.u32 %v2536, %v2532
        %v2538 = vrot.slane %v2537, 4
        %v2540 = vshll.u32 %v2222, 16
        %v2542 = vrot.slane %v2540, 5
        %v2543 = vsel %vm1284, %v2538, %v2542
        %v2545 = vshrl.u32 %v2223, 16
        %v2547 = vrot.slane %v2545, 4
        %v2548 = vshll.u32 %v2223, 16
        %v2550 = vrot.slane %v2548, 5
        %v2551 = vor.u32 %v2547, %v2550
        %v2552 = vrot.slane %v2551, 4
        %v2554 = vshll.u32 %v2224, 16
        %v2556 = vrot.slane %v2554, 5
        %v2557 = vsel %vm1284, %v2552, %v2556
        %v2558 = vshrl.u32 %v2224, 16
        %v2560 = vrot.slane %v2558, 4
        %v2561 = vor.u32 %v2560, %v2556
        %v2562 = vrot.slane %v2561, 4
        %v2564 = vshll.u32 %v2225, 16
        %v2566 = vrot.slane %v2564, 5
        %v2567 = vsel %vm1284, %v2562, %v2566
        %v2569 = vshrl.u32 %v2226, 16
        %v2571 = vrot.slane %v2569, 4
        %v2572 = vshll.u32 %v2226, 16
        %v2574 = vrot.slane %v2572, 5
        %v2575 = vor.u32 %v2571, %v2574
        %v2576 = vrot.slane %v2575, 4
        %v2578 = vshll.u32 %v2227, 16
        %v2580 = vrot.slane %v2578, 5
        %v2581 = vsel %vm1284, %v2576, %v2580
        %v2582 = vshrl.u32 %v2227, 16
        %v2584 = vrot.slane %v2582, 4
        %v2585 = vor.u32 %v2584, %v2580
        %v2586 = vrot.slane %v2585, 4
        %v2588 = vshll.u32 %v2228, 16
        %v2590 = vrot.slane %v2588, 5
        %v2591 = vsel %vm1284, %v2586, %v2590
        %v2593 = vshrl.u32 %v2229, 16
        %v2595 = vrot.slane %v2593, 4
        %v2596 = vshll.u32 %v2229, 16
        %v2598 = vrot.slane %v2596, 5
        %v2599 = vor.u32 %v2595, %v2598
        %v2600 = vrot.slane %v2599, 4
        %v2602 = vshll.u32 %v2230, 16
        %v2604 = vrot.slane %v2602, 5
        %v2605 = vsel %vm1284, %v2600, %v2604
        %v2606 = vshrl.u32 %v2230, 16
        %v2608 = vrot.slane %v2606, 4
        %v2609 = vor.u32 %v2608, %v2604
        %v2610 = vrot.slane %v2609, 4
        %v2612 = vshll.u32 %v2231, 16
        %v2614 = vrot.slane %v2612, 5
        %v2615 = vsel %vm1284, %v2610, %v2614
        %v2616 = vunpack.c.l.b16 %v2245
        %v2617 = vunpack.c.l.b16 %v2255
        %v2618 = vunpack.c.l.b16 %v2269
        %v2619 = vunpack.c.l.b16 %v2279
        %v2620 = vunpack.c.l.b16 %v2293
        %v2621 = vunpack.c.l.b16 %v2303
        %v2622 = vunpack.c.l.b16 %v2317
        %v2623 = vunpack.c.l.b16 %v2327
        %v2624 = vunpack.c.l.b16 %v2341
        %v2625 = vunpack.c.l.b16 %v2351
        %v2626 = vunpack.c.l.b16 %v2365
        %v2627 = vunpack.c.l.b16 %v2375
        %v2628 = vunpack.c.l.b16 %v2389
        %v2629 = vunpack.c.l.b16 %v2399
        %v2630 = vunpack.c.l.b16 %v2413
        %v2631 = vunpack.c.l.b16 %v2423
        %v2632 = vunpack.c.l.b16 %v2437
        %v2633 = vunpack.c.l.b16 %v2447
        %v2634 = vunpack.c.l.b16 %v2461
        %v2635 = vunpack.c.l.b16 %v2471
        %v2636 = vunpack.c.l.b16 %v2485
        %v2637 = vunpack.c.l.b16 %v2495
        %v2638 = vunpack.c.l.b16 %v2509
        %v2639 = vunpack.c.l.b16 %v2519
        %v2640 = vunpack.c.l.b16 %v2533
        %v2641 = vunpack.c.l.b16 %v2543
        %v2642 = vunpack.c.l.b16 %v2557
        %v2643 = vunpack.c.l.b16 %v2567
        %v2644 = vunpack.c.l.b16 %v2581
        %v2645 = vunpack.c.l.b16 %v2591
        %v2646 = vunpack.c.l.b16 %v2605
        %v2647 = vunpack.c.l.b16 %v2615
        %v2648 = vpack.c.b16 %v2617, %v2616
        %v2649 = vpack.c.b16 %v2619, %v2618
        %v2650 = vpack.c.b16 %v2621, %v2620
        %v2651 = vpack.c.b16 %v2623, %v2622
        %v2652 = vpack.c.b16 %v2625, %v2624
        %v2653 = vpack.c.b16 %v2627, %v2626
        %v2654 = vpack.c.b16 %v2629, %v2628
        %v2655 = vpack.c.b16 %v2631, %v2630
        %v2656 = vpack.c.b16 %v2633, %v2632
        %v2657 = vpack.c.b16 %v2635, %v2634
        %v2658 = vpack.c.b16 %v2637, %v2636
        %v2659 = vpack.c.b16 %v2639, %v2638
        %v2660 = vpack.c.b16 %v2641, %v2640
        %v2661 = vpack.c.b16 %v2643, %v2642
        %v2662 = vpack.c.b16 %v2645, %v2644
        %v2663 = vpack.c.b16 %v2647, %v2646
        %2680 = vst [vmem:[#allocation3 + $0x20] sm:$0xff] %v2648
        %2681 = vst [vmem:[#allocation3 + $0x68] sm:$0xff] %v2649
        %2682 = vst [vmem:[#allocation3 + $0xb0] sm:$0xff] %v2650
        %2683 = vst [vmem:[#allocation3 + $0xf8] sm:$0xff] %v2651
        %2684 = vst [vmem:[#allocation3 + $0x140] sm:$0xff] %v2652
        %2685 = vst [vmem:[#allocation3 + $0x188] sm:$0xff] %v2653
        %2686 = vst [vmem:[#allocation3 + $0x1d0] sm:$0xff] %v2654
        %2687 = vst [vmem:[#allocation3 + $0x218] sm:$0xff] %v2655
        %2688 = vst [vmem:[#allocation3 + $0x260] sm:$0xff] %v2656
        %2689 = vst [vmem:[#allocation3 + $0x2a8] sm:$0xff] %v2657
        %2690 = vst [vmem:[#allocation3 + $0x2f0] sm:$0xff] %v2658
        %2691 = vst [vmem:[#allocation3 + $0x338] sm:$0xff] %v2659
        %2692 = vst [vmem:[#allocation3 + $0x380] sm:$0xff] %v2660
        %2693 = vst [vmem:[#allocation3 + $0x3c8] sm:$0xff] %v2661
        %2694 = vst [vmem:[#allocation3 + $0x410] sm:$0xff] %v2662
        %2695 = vst [vmem:[#allocation3 + $0x458] sm:$0xff] %v2663
        %v2696 = vld [vmem:[%s972] sm:$0xe]
        %v2697 = vld [vmem:[%s972 + $0x4] sm:$0xf]
        %v2698 = vld [vmem:[%s972 + $0x8] sm:$0x1]
        %v2699 = vld [vmem:[%s972 + $0xc] sm:$0xe]
        %v2700 = vld [vmem:[%s972 + $0x10] sm:$0xf]
        %v2701 = vld [vmem:[%s972 + $0x14] sm:$0x1]
        %v2702 = vld [vmem:[%s972 + $0x18] sm:$0xe]
        %v2703 = vld [vmem:[%s972 + $0x1c] sm:$0xf]
        %v2704 = vld [vmem:[%s972 + $0x20] sm:$0x1]
        %v2705 = vld [vmem:[%s972 + $0x24] sm:$0xe]
        %v2706 = vld [vmem:[%s972 + $0x28] sm:$0xf]
        %v2707 = vld [vmem:[%s972 + $0x2c] sm:$0x1]
        %v2708 = vld [vmem:[%s972 + $0x30] sm:$0xe]
        %v2709 = vld [vmem:[%s972 + $0x34] sm:$0xf]
        %v2710 = vld [vmem:[%s972 + $0x38] sm:$0x1]
        %v2711 = vld [vmem:[%s972 + $0x3c] sm:$0xe]
        %v2712 = vld [vmem:[%s972 + $0x40] sm:$0xf]
        %v2713 = vld [vmem:[%s972 + $0x44] sm:$0x1]
        %v2714 = vld [vmem:[%s972 + $0x48] sm:$0xe]
        %v2715 = vld [vmem:[%s972 + $0x4c] sm:$0xf]
        %v2716 = vld [vmem:[%s972 + $0x50] sm:$0x1]
        %v2717 = vld [vmem:[%s972 + $0x54] sm:$0xe]
        %v2718 = vld [vmem:[%s972 + $0x58] sm:$0xf]
        %v2719 = vld [vmem:[%s972 + $0x5c] sm:$0x1]
        %v2720 = vld [vmem:[%s972 + $0x60] sm:$0xe]
        %v2721 = vld [vmem:[%s972 + $0x64] sm:$0xf]
        %v2722 = vld [vmem:[%s972 + $0x68] sm:$0x1]
        %v2723 = vld [vmem:[%s972 + $0x6c] sm:$0xe]
        %v2724 = vld [vmem:[%s972 + $0x70] sm:$0xf]
        %v2725 = vld [vmem:[%s972 + $0x74] sm:$0x1]
        %v2726 = vld [vmem:[%s972 + $0x78] sm:$0xe]
        %v2727 = vld [vmem:[%s972 + $0x7c] sm:$0xf]
        %v2728 = vld [vmem:[%s972 + $0x80] sm:$0x1]
        %v2729 = vld [vmem:[%s972 + $0x84] sm:$0xe]
        %v2730 = vld [vmem:[%s972 + $0x88] sm:$0xf]
        %v2731 = vld [vmem:[%s972 + $0x8c] sm:$0x1]
        %v2732 = vld [vmem:[%s972 + $0x90] sm:$0xe]
        %v2733 = vld [vmem:[%s972 + $0x94] sm:$0xf]
        %v2734 = vld [vmem:[%s972 + $0x98] sm:$0x1]
        %v2735 = vld [vmem:[%s972 + $0x9c] sm:$0xe]
        %v2736 = vld [vmem:[%s972 + $0xa0] sm:$0xf]
        %v2737 = vld [vmem:[%s972 + $0xa4] sm:$0x1]
        %v2738 = vld [vmem:[%s972 + $0xa8] sm:$0xe]
        %v2739 = vld [vmem:[%s972 + $0xac] sm:$0xf]
        %v2740 = vld [vmem:[%s972 + $0xb0] sm:$0x1]
        %v2741 = vld [vmem:[%s972 + $0xb4] sm:$0xe]
        %v2742 = vld [vmem:[%s972 + $0xb8] sm:$0xf]
        %v2743 = vld [vmem:[%s972 + $0xbc] sm:$0x1]
        %v2792 = vrot.slane %v2696, 5
        %v2793 = vrot.slane %v2792, 4
        %v2794 = vrot.slane %v2697, 5
        %v2795 = vsel %vm1847, %v2793, %v2794
        %v2796 = vrot.slane %v2794, 4
        %v2797 = vrot.slane %v2698, 5
        %v2798 = vsel %vm1847, %v2796, %v2797
        %v2799 = vrot.slane %v2699, 5
        %v2800 = vrot.slane %v2799, 4
        %v2801 = vrot.slane %v2700, 5
        %v2802 = vsel %vm1847, %v2800, %v2801
        %v2803 = vrot.slane %v2801, 4
        %v2804 = vrot.slane %v2701, 5
        %v2805 = vsel %vm1847, %v2803, %v2804
        %v2806 = vrot.slane %v2702, 5
        %v2807 = vrot.slane %v2806, 4
        %v2808 = vrot.slane %v2703, 5
        %v2809 = vsel %vm1847, %v2807, %v2808
        %v2810 = vrot.slane %v2808, 4
        %v2811 = vrot.slane %v2704, 5
        %v2812 = vsel %vm1847, %v2810, %v2811
        %v2813 = vrot.slane %v2705, 5
        %v2814 = vrot.slane %v2813, 4
        %v2815 = vrot.slane %v2706, 5
        %v2816 = vsel %vm1847, %v2814, %v2815
        %v2817 = vrot.slane %v2815, 4
        %v2818 = vrot.slane %v2707, 5
        %v2819 = vsel %vm1847, %v2817, %v2818
        %v2820 = vrot.slane %v2708, 5
        %v2821 = vrot.slane %v2820, 4
        %v2822 = vrot.slane %v2709, 5
        %v2823 = vsel %vm1847, %v2821, %v2822
        %v2824 = vrot.slane %v2822, 4
        %v2825 = vrot.slane %v2710, 5
        %v2826 = vsel %vm1847, %v2824, %v2825
        %v2827 = vrot.slane %v2711, 5
        %v2828 = vrot.slane %v2827, 4
        %v2829 = vrot.slane %v2712, 5
        %v2830 = vsel %vm1847, %v2828, %v2829
        %v2831 = vrot.slane %v2829, 4
        %v2832 = vrot.slane %v2713, 5
        %v2833 = vsel %vm1847, %v2831, %v2832
        %v2834 = vrot.slane %v2714, 5
        %v2835 = vrot.slane %v2834, 4
        %v2836 = vrot.slane %v2715, 5
        %v2837 = vsel %vm1847, %v2835, %v2836
        %v2838 = vrot.slane %v2836, 4
        %v2839 = vrot.slane %v2716, 5
        %v2840 = vsel %vm1847, %v2838, %v2839
        %v2841 = vrot.slane %v2717, 5
        %v2842 = vrot.slane %v2841, 4
        %v2843 = vrot.slane %v2718, 5
        %v2844 = vsel %vm1847, %v2842, %v2843
        %v2845 = vrot.slane %v2843, 4
        %v2846 = vrot.slane %v2719, 5
        %v2847 = vsel %vm1847, %v2845, %v2846
        %v2848 = vrot.slane %v2720, 5
        %v2849 = vrot.slane %v2848, 4
        %v2850 = vrot.slane %v2721, 5
        %v2851 = vsel %vm1847, %v2849, %v2850
        %v2852 = vrot.slane %v2850, 4
        %v2853 = vrot.slane %v2722, 5
        %v2854 = vsel %vm1847, %v2852, %v2853
        %v2855 = vrot.slane %v2723, 5
        %v2856 = vrot.slane %v2855, 4
        %v2857 = vrot.slane %v2724, 5
        %v2858 = vsel %vm1847, %v2856, %v2857
        %v2859 = vrot.slane %v2857, 4
        %v2860 = vrot.slane %v2725, 5
        %v2861 = vsel %vm1847, %v2859, %v2860
        %v2862 = vrot.slane %v2726, 5
        %v2863 = vrot.slane %v2862, 4
        %v2864 = vrot.slane %v2727, 5
        %v2865 = vsel %vm1847, %v2863, %v2864
        %v2866 = vrot.slane %v2864, 4
        %v2867 = vrot.slane %v2728, 5
        %v2868 = vsel %vm1847, %v2866, %v2867
        %v2869 = vrot.slane %v2729, 5
        %v2870 = vrot.slane %v2869, 4
        %v2871 = vrot.slane %v2730, 5
        %v2872 = vsel %vm1847, %v2870, %v2871
        %v2873 = vrot.slane %v2871, 4
        %v2874 = vrot.slane %v2731, 5
        %v2875 = vsel %vm1847, %v2873, %v2874
        %v2876 = vrot.slane %v2732, 5
        %v2877 = vrot.slane %v2876, 4
        %v2878 = vrot.slane %v2733, 5
        %v2879 = vsel %vm1847, %v2877, %v2878
        %v2880 = vrot.slane %v2878, 4
        %v2881 = vrot.slane %v2734, 5
        %v2882 = vsel %vm1847, %v2880, %v2881
        %v2883 = vrot.slane %v2735, 5
        %v2884 = vrot.slane %v2883, 4
        %v2885 = vrot.slane %v2736, 5
        %v2886 = vsel %vm1847, %v2884, %v2885
        %v2887 = vrot.slane %v2885, 4
        %v2888 = vrot.slane %v2737, 5
        %v2889 = vsel %vm1847, %v2887, %v2888
        %v2890 = vrot.slane %v2738, 5
        %v2891 = vrot.slane %v2890, 4
        %v2892 = vrot.slane %v2739, 5
        %v2893 = vsel %vm1847, %v2891, %v2892
        %v2894 = vrot.slane %v2892, 4
        %v2895 = vrot.slane %v2740, 5
        %v2896 = vsel %vm1847, %v2894, %v2895
        %v2897 = vrot.slane %v2741, 5
        %v2898 = vrot.slane %v2897, 4
        %v2899 = vrot.slane %v2742, 5
        %v2900 = vsel %vm1847, %v2898, %v2899
        %v2901 = vrot.slane %v2899, 4
        %v2902 = vrot.slane %v2743, 5
        %v2903 = vsel %vm1847, %v2901, %v2902
        %v2904 = vunpack.c.l.b16 %v2795
        %v2905 = vunpack.c.l.b16 %v2798
        %v2906 = vunpack.c.l.b16 %v2802
        %v2907 = vunpack.c.l.b16 %v2805
        %v2908 = vunpack.c.l.b16 %v2809
        %v2909 = vunpack.c.l.b16 %v2812
        %v2910 = vunpack.c.l.b16 %v2816
        %v2911 = vunpack.c.l.b16 %v2819
        %v2912 = vunpack.c.l.b16 %v2823
        %v2913 = vunpack.c.l.b16 %v2826
        %v2914 = vunpack.c.l.b16 %v2830
        %v2915 = vunpack.c.l.b16 %v2833
        %v2916 = vunpack.c.l.b16 %v2837
        %v2917 = vunpack.c.l.b16 %v2840
        %v2918 = vunpack.c.l.b16 %v2844
        %v2919 = vunpack.c.l.b16 %v2847
        %v2920 = vunpack.c.l.b16 %v2851
        %v2921 = vunpack.c.l.b16 %v2854
        %v2922 = vunpack.c.l.b16 %v2858
        %v2923 = vunpack.c.l.b16 %v2861
        %v2924 = vunpack.c.l.b16 %v2865
        %v2925 = vunpack.c.l.b16 %v2868
        %v2926 = vunpack.c.l.b16 %v2872
        %v2927 = vunpack.c.l.b16 %v2875
        %v2928 = vunpack.c.l.b16 %v2879
        %v2929 = vunpack.c.l.b16 %v2882
        %v2930 = vunpack.c.l.b16 %v2886
        %v2931 = vunpack.c.l.b16 %v2889
        %v2932 = vunpack.c.l.b16 %v2893
        %v2933 = vunpack.c.l.b16 %v2896
        %v2934 = vunpack.c.l.b16 %v2900
        %v2935 = vunpack.c.l.b16 %v2903
        %v2936 = vpack.c.b16 %v2905, %v2904
        %v2937 = vpack.c.b16 %v2907, %v2906
        %v2938 = vpack.c.b16 %v2909, %v2908
        %v2939 = vpack.c.b16 %v2911, %v2910
        %v2940 = vpack.c.b16 %v2913, %v2912
        %v2941 = vpack.c.b16 %v2915, %v2914
        %v2942 = vpack.c.b16 %v2917, %v2916
        %v2943 = vpack.c.b16 %v2919, %v2918
        %v2944 = vpack.c.b16 %v2921, %v2920
        %v2945 = vpack.c.b16 %v2923, %v2922
        %v2946 = vpack.c.b16 %v2925, %v2924
        %v2947 = vpack.c.b16 %v2927, %v2926
        %v2948 = vpack.c.b16 %v2929, %v2928
        %v2949 = vpack.c.b16 %v2931, %v2930
        %v2950 = vpack.c.b16 %v2933, %v2932
        %v2951 = vpack.c.b16 %v2935, %v2934
        %2968 = vst [vmem:[#allocation3 + $0x28] sm:$0xff] %v2936
        %2969 = vst [vmem:[#allocation3 + $0x70] sm:$0xff] %v2937
        %2970 = vst [vmem:[#allocation3 + $0xb8] sm:$0xff] %v2938
        %2971 = vst [vmem:[#allocation3 + $0x100] sm:$0xff] %v2939
        %2972 = vst [vmem:[#allocation3 + $0x148] sm:$0xff] %v2940
        %2973 = vst [vmem:[#allocation3 + $0x190] sm:$0xff] %v2941
        %2974 = vst [vmem:[#allocation3 + $0x1d8] sm:$0xff] %v2942
        %2975 = vst [vmem:[#allocation3 + $0x220] sm:$0xff] %v2943
        %2976 = vst [vmem:[#allocation3 + $0x268] sm:$0xff] %v2944
        %2977 = vst [vmem:[#allocation3 + $0x2b0] sm:$0xff] %v2945
        %2978 = vst [vmem:[#allocation3 + $0x2f8] sm:$0xff] %v2946
        %2979 = vst [vmem:[#allocation3 + $0x340] sm:$0xff] %v2947
        %2980 = vst [vmem:[#allocation3 + $0x388] sm:$0xff] %v2948
        %2981 = vst [vmem:[#allocation3 + $0x3d0] sm:$0xff] %v2949
        %2982 = vst [vmem:[#allocation3 + $0x418] sm:$0xff] %v2950
        %2983 = vst [vmem:[#allocation3 + $0x460] sm:$0xff] %v2951
        %s2984 = scalar_lea.vmem [#allocation2], 24
        %v2985 = vld [vmem:[%s2984] sm:$0xf]
        %v2986 = vld [vmem:[%s2984 + $0x4] sm:$0xf]
        %v2987 = vld [vmem:[%s2984 + $0xc] sm:$0xf]
        %v2988 = vld [vmem:[%s2984 + $0x10] sm:$0xf]
        %v2989 = vld [vmem:[%s2984 + $0x18] sm:$0xf]
        %v2990 = vld [vmem:[%s2984 + $0x1c] sm:$0xf]
        %v2991 = vld [vmem:[%s2984 + $0x24] sm:$0xf]
        %v2992 = vld [vmem:[%s2984 + $0x28] sm:$0xf]
        %v2993 = vld [vmem:[%s2984 + $0x30] sm:$0xf]
        %v2994 = vld [vmem:[%s2984 + $0x34] sm:$0xf]
        %v2995 = vld [vmem:[%s2984 + $0x3c] sm:$0xf]
        %v2996 = vld [vmem:[%s2984 + $0x40] sm:$0xf]
        %v2997 = vld [vmem:[%s2984 + $0x48] sm:$0xf]
        %v2998 = vld [vmem:[%s2984 + $0x4c] sm:$0xf]
        %v2999 = vld [vmem:[%s2984 + $0x54] sm:$0xf]
        %v3000 = vld [vmem:[%s2984 + $0x58] sm:$0xf]
        %v3001 = vld [vmem:[%s2984 + $0x60] sm:$0xf]
        %v3002 = vld [vmem:[%s2984 + $0x64] sm:$0xf]
        %v3003 = vld [vmem:[%s2984 + $0x6c] sm:$0xf]
        %v3004 = vld [vmem:[%s2984 + $0x70] sm:$0xf]
        %v3005 = vld [vmem:[%s2984 + $0x78] sm:$0xf]
        %v3006 = vld [vmem:[%s2984 + $0x7c] sm:$0xf]
        %v3007 = vld [vmem:[%s2984 + $0x84] sm:$0xf]
        %v3008 = vld [vmem:[%s2984 + $0x88] sm:$0xf]
        %v3009 = vld [vmem:[%s2984 + $0x90] sm:$0xf]
        %v3010 = vld [vmem:[%s2984 + $0x94] sm:$0xf]
        %v3011 = vld [vmem:[%s2984 + $0x9c] sm:$0xf]
        %v3012 = vld [vmem:[%s2984 + $0xa0] sm:$0xf]
        %v3013 = vld [vmem:[%s2984 + $0xa8] sm:$0xf]
        %v3014 = vld [vmem:[%s2984 + $0xac] sm:$0xf]
        %v3015 = vld [vmem:[%s2984 + $0xb4] sm:$0xf]
        %v3016 = vld [vmem:[%s2984 + $0xb8] sm:$0xf]
        %v3049 = vunpack.c.l.b16 %v2985
        %v3050 = vunpack.c.l.b16 %v2986
        %v3051 = vunpack.c.l.b16 %v2987
        %v3052 = vunpack.c.l.b16 %v2988
        %v3053 = vunpack.c.l.b16 %v2989
        %v3054 = vunpack.c.l.b16 %v2990
        %v3055 = vunpack.c.l.b16 %v2991
        %v3056 = vunpack.c.l.b16 %v2992
        %v3057 = vunpack.c.l.b16 %v2993
        %v3058 = vunpack.c.l.b16 %v2994
        %v3059 = vunpack.c.l.b16 %v2995
        %v3060 = vunpack.c.l.b16 %v2996
        %v3061 = vunpack.c.l.b16 %v2997
        %v3062 = vunpack.c.l.b16 %v2998
        %v3063 = vunpack.c.l.b16 %v2999
        %v3064 = vunpack.c.l.b16 %v3000
        %v3065 = vunpack.c.l.b16 %v3001
        %v3066 = vunpack.c.l.b16 %v3002
        %v3067 = vunpack.c.l.b16 %v3003
        %v3068 = vunpack.c.l.b16 %v3004
        %v3069 = vunpack.c.l.b16 %v3005
        %v3070 = vunpack.c.l.b16 %v3006
        %v3071 = vunpack.c.l.b16 %v3007
        %v3072 = vunpack.c.l.b16 %v3008
        %v3073 = vunpack.c.l.b16 %v3009
        %v3074 = vunpack.c.l.b16 %v3010
        %v3075 = vunpack.c.l.b16 %v3011
        %v3076 = vunpack.c.l.b16 %v3012
        %v3077 = vunpack.c.l.b16 %v3013
        %v3078 = vunpack.c.l.b16 %v3014
        %v3079 = vunpack.c.l.b16 %v3015
        %v3080 = vunpack.c.l.b16 %v3016
        %v3081 = vpack.c.b16 %v3050, %v3049
        %v3082 = vpack.c.b16 %v3052, %v3051
        %v3083 = vpack.c.b16 %v3054, %v3053
        %v3084 = vpack.c.b16 %v3056, %v3055
        %v3085 = vpack.c.b16 %v3058, %v3057
        %v3086 = vpack.c.b16 %v3060, %v3059
        %v3087 = vpack.c.b16 %v3062, %v3061
        %v3088 = vpack.c.b16 %v3064, %v3063
        %v3089 = vpack.c.b16 %v3066, %v3065
        %v3090 = vpack.c.b16 %v3068, %v3067
        %v3091 = vpack.c.b16 %v3070, %v3069
        %v3092 = vpack.c.b16 %v3072, %v3071
        %v3093 = vpack.c.b16 %v3074, %v3073
        %v3094 = vpack.c.b16 %v3076, %v3075
        %v3095 = vpack.c.b16 %v3078, %v3077
        %v3096 = vpack.c.b16 %v3080, %v3079
        %3113 = vst [vmem:[#allocation3 + $0x30] sm:$0xff] %v3081
        %3114 = vst [vmem:[#allocation3 + $0x78] sm:$0xff] %v3082
        %3115 = vst [vmem:[#allocation3 + $0xc0] sm:$0xff] %v3083
        %3116 = vst [vmem:[#allocation3 + $0x108] sm:$0xff] %v3084
        %3117 = vst [vmem:[#allocation3 + $0x150] sm:$0xff] %v3085
        %3118 = vst [vmem:[#allocation3 + $0x198] sm:$0xff] %v3086
        %3119 = vst [vmem:[#allocation3 + $0x1e0] sm:$0xff] %v3087
        %3120 = vst [vmem:[#allocation3 + $0x228] sm:$0xff] %v3088
        %3121 = vst [vmem:[#allocation3 + $0x270] sm:$0xff] %v3089
        %3122 = vst [vmem:[#allocation3 + $0x2b8] sm:$0xff] %v3090
        %3123 = vst [vmem:[#allocation3 + $0x300] sm:$0xff] %v3091
        %3124 = vst [vmem:[#allocation3 + $0x348] sm:$0xff] %v3092
        %3125 = vst [vmem:[#allocation3 + $0x390] sm:$0xff] %v3093
        %3126 = vst [vmem:[#allocation3 + $0x3d8] sm:$0xff] %v3094
        %3127 = vst [vmem:[#allocation3 + $0x420] sm:$0xff] %v3095
        %3128 = vst [vmem:[#allocation3 + $0x468] sm:$0xff] %v3096
        %v3129 = vld [vmem:[%s2984] sm:$0xf]
        %v3130 = vld [vmem:[%s2984 + $0x4] sm:$0xf]
        %v3131 = vld [vmem:[%s2984 + $0x8] sm:$0x1]
        %v3132 = vld [vmem:[%s2984 + $0xc] sm:$0xf]
        %v3133 = vld [vmem:[%s2984 + $0x10] sm:$0xf]
        %v3134 = vld [vmem:[%s2984 + $0x14] sm:$0x1]
        %v3135 = vld [vmem:[%s2984 + $0x18] sm:$0xf]
        %v3136 = vld [vmem:[%s2984 + $0x1c] sm:$0xf]
        %v3137 = vld [vmem:[%s2984 + $0x20] sm:$0x1]
        %v3138 = vld [vmem:[%s2984 + $0x24] sm:$0xf]
        %v3139 = vld [vmem:[%s2984 + $0x28] sm:$0xf]
        %v3140 = vld [vmem:[%s2984 + $0x2c] sm:$0x1]
        %v3141 = vld [vmem:[%s2984 + $0x30] sm:$0xf]
        %v3142 = vld [vmem:[%s2984 + $0x34] sm:$0xf]
        %v3143 = vld [vmem:[%s2984 + $0x38] sm:$0x1]
        %v3144 = vld [vmem:[%s2984 + $0x3c] sm:$0xf]
        %v3145 = vld [vmem:[%s2984 + $0x40] sm:$0xf]
        %v3146 = vld [vmem:[%s2984 + $0x44] sm:$0x1]
        %v3147 = vld [vmem:[%s2984 + $0x48] sm:$0xf]
        %v3148 = vld [vmem:[%s2984 + $0x4c] sm:$0xf]
        %v3149 = vld [vmem:[%s2984 + $0x50] sm:$0x1]
        %v3150 = vld [vmem:[%s2984 + $0x54] sm:$0xf]
        %v3151 = vld [vmem:[%s2984 + $0x58] sm:$0xf]
        %v3152 = vld [vmem:[%s2984 + $0x5c] sm:$0x1]
        %v3153 = vld [vmem:[%s2984 + $0x60] sm:$0xf]
        %v3154 = vld [vmem:[%s2984 + $0x64] sm:$0xf]
        %v3155 = vld [vmem:[%s2984 + $0x68] sm:$0x1]
        %v3156 = vld [vmem:[%s2984 + $0x6c] sm:$0xf]
        %v3157 = vld [vmem:[%s2984 + $0x70] sm:$0xf]
        %v3158 = vld [vmem:[%s2984 + $0x74] sm:$0x1]
        %v3159 = vld [vmem:[%s2984 + $0x78] sm:$0xf]
        %v3160 = vld [vmem:[%s2984 + $0x7c] sm:$0xf]
        %v3161 = vld [vmem:[%s2984 + $0x80] sm:$0x1]
        %v3162 = vld [vmem:[%s2984 + $0x84] sm:$0xf]
        %v3163 = vld [vmem:[%s2984 + $0x88] sm:$0xf]
        %v3164 = vld [vmem:[%s2984 + $0x8c] sm:$0x1]
        %v3165 = vld [vmem:[%s2984 + $0x90] sm:$0xf]
        %v3166 = vld [vmem:[%s2984 + $0x94] sm:$0xf]
        %v3167 = vld [vmem:[%s2984 + $0x98] sm:$0x1]
        %v3168 = vld [vmem:[%s2984 + $0x9c] sm:$0xf]
        %v3169 = vld [vmem:[%s2984 + $0xa0] sm:$0xf]
        %v3170 = vld [vmem:[%s2984 + $0xa4] sm:$0x1]
        %v3171 = vld [vmem:[%s2984 + $0xa8] sm:$0xf]
        %v3172 = vld [vmem:[%s2984 + $0xac] sm:$0xf]
        %v3173 = vld [vmem:[%s2984 + $0xb0] sm:$0x1]
        %v3174 = vld [vmem:[%s2984 + $0xb4] sm:$0xf]
        %v3175 = vld [vmem:[%s2984 + $0xb8] sm:$0xf]
        %v3176 = vld [vmem:[%s2984 + $0xbc] sm:$0x1]
        %v3178 = vshrl.u32 %v3129, 16
        %v3180 = vrot.slane %v3178, 4
        %v3181 = vshll.u32 %v3129, 16
        %v3183 = vrot.slane %v3181, 5
        %v3184 = vor.u32 %v3180, %v3183
        %v3185 = vrot.slane %v3184, 4
        %v3187 = vshll.u32 %v3130, 16
        %v3189 = vrot.slane %v3187, 5
        %v3190 = vsel %vm1284, %v3185, %v3189
        %v3191 = vshrl.u32 %v3130, 16
        %v3193 = vrot.slane %v3191, 4
        %v3194 = vor.u32 %v3193, %v3189
        %v3195 = vrot.slane %v3194, 4
        %v3197 = vshll.u32 %v3131, 16
        %v3199 = vrot.slane %v3197, 5
        %v3200 = vsel %vm1284, %v3195, %v3199
        %v3202 = vshrl.u32 %v3132, 16
        %v3204 = vrot.slane %v3202, 4
        %v3205 = vshll.u32 %v3132, 16
        %v3207 = vrot.slane %v3205, 5
        %v3208 = vor.u32 %v3204, %v3207
        %v3209 = vrot.slane %v3208, 4
        %v3211 = vshll.u32 %v3133, 16
        %v3213 = vrot.slane %v3211, 5
        %v3214 = vsel %vm1284, %v3209, %v3213
        %v3215 = vshrl.u32 %v3133, 16
        %v3217 = vrot.slane %v3215, 4
        %v3218 = vor.u32 %v3217, %v3213
        %v3219 = vrot.slane %v3218, 4
        %v3221 = vshll.u32 %v3134, 16
        %v3223 = vrot.slane %v3221, 5
        %v3224 = vsel %vm1284, %v3219, %v3223
        %v3226 = vshrl.u32 %v3135, 16
        %v3228 = vrot.slane %v3226, 4
        %v3229 = vshll.u32 %v3135, 16
        %v3231 = vrot.slane %v3229, 5
        %v3232 = vor.u32 %v3228, %v3231
        %v3233 = vrot.slane %v3232, 4
        %v3235 = vshll.u32 %v3136, 16
        %v3237 = vrot.slane %v3235, 5
        %v3238 = vsel %vm1284, %v3233, %v3237
        %v3239 = vshrl.u32 %v3136, 16
        %v3241 = vrot.slane %v3239, 4
        %v3242 = vor.u32 %v3241, %v3237
        %v3243 = vrot.slane %v3242, 4
        %v3245 = vshll.u32 %v3137, 16
        %v3247 = vrot.slane %v3245, 5
        %v3248 = vsel %vm1284, %v3243, %v3247
        %v3250 = vshrl.u32 %v3138, 16
        %v3252 = vrot.slane %v3250, 4
        %v3253 = vshll.u32 %v3138, 16
        %v3255 = vrot.slane %v3253, 5
        %v3256 = vor.u32 %v3252, %v3255
        %v3257 = vrot.slane %v3256, 4
        %v3259 = vshll.u32 %v3139, 16
        %v3261 = vrot.slane %v3259, 5
        %v3262 = vsel %vm1284, %v3257, %v3261
        %v3263 = vshrl.u32 %v3139, 16
        %v3265 = vrot.slane %v3263, 4
        %v3266 = vor.u32 %v3265, %v3261
        %v3267 = vrot.slane %v3266, 4
        %v3269 = vshll.u32 %v3140, 16
        %v3271 = vrot.slane %v3269, 5
        %v3272 = vsel %vm1284, %v3267, %v3271
        %v3274 = vshrl.u32 %v3141, 16
        %v3276 = vrot.slane %v3274, 4
        %v3277 = vshll.u32 %v3141, 16
        %v3279 = vrot.slane %v3277, 5
        %v3280 = vor.u32 %v3276, %v3279
        %v3281 = vrot.slane %v3280, 4
        %v3283 = vshll.u32 %v3142, 16
        %v3285 = vrot.slane %v3283, 5
        %v3286 = vsel %vm1284, %v3281, %v3285
        %v3287 = vshrl.u32 %v3142, 16
        %v3289 = vrot.slane %v3287, 4
        %v3290 = vor.u32 %v3289, %v3285
        %v3291 = vrot.slane %v3290, 4
        %v3293 = vshll.u32 %v3143, 16
        %v3295 = vrot.slane %v3293, 5
        %v3296 = vsel %vm1284, %v3291, %v3295
        %v3298 = vshrl.u32 %v3144, 16
        %v3300 = vrot.slane %v3298, 4
        %v3301 = vshll.u32 %v3144, 16
        %v3303 = vrot.slane %v3301, 5
        %v3304 = vor.u32 %v3300, %v3303
        %v3305 = vrot.slane %v3304, 4
        %v3307 = vshll.u32 %v3145, 16
        %v3309 = vrot.slane %v3307, 5
        %v3310 = vsel %vm1284, %v3305, %v3309
        %v3311 = vshrl.u32 %v3145, 16
        %v3313 = vrot.slane %v3311, 4
        %v3314 = vor.u32 %v3313, %v3309
        %v3315 = vrot.slane %v3314, 4
        %v3317 = vshll.u32 %v3146, 16
        %v3319 = vrot.slane %v3317, 5
        %v3320 = vsel %vm1284, %v3315, %v3319
        %v3322 = vshrl.u32 %v3147, 16
        %v3324 = vrot.slane %v3322, 4
        %v3325 = vshll.u32 %v3147, 16
        %v3327 = vrot.slane %v3325, 5
        %v3328 = vor.u32 %v3324, %v3327
        %v3329 = vrot.slane %v3328, 4
        %v3331 = vshll.u32 %v3148, 16
        %v3333 = vrot.slane %v3331, 5
        %v3334 = vsel %vm1284, %v3329, %v3333
        %v3335 = vshrl.u32 %v3148, 16
        %v3337 = vrot.slane %v3335, 4
        %v3338 = vor.u32 %v3337, %v3333
        %v3339 = vrot.slane %v3338, 4
        %v3341 = vshll.u32 %v3149, 16
        %v3343 = vrot.slane %v3341, 5
        %v3344 = vsel %vm1284, %v3339, %v3343
        %v3346 = vshrl.u32 %v3150, 16
        %v3348 = vrot.slane %v3346, 4
        %v3349 = vshll.u32 %v3150, 16
        %v3351 = vrot.slane %v3349, 5
        %v3352 = vor.u32 %v3348, %v3351
        %v3353 = vrot.slane %v3352, 4
        %v3355 = vshll.u32 %v3151, 16
        %v3357 = vrot.slane %v3355, 5
        %v3358 = vsel %vm1284, %v3353, %v3357
        %v3359 = vshrl.u32 %v3151, 16
        %v3361 = vrot.slane %v3359, 4
        %v3362 = vor.u32 %v3361, %v3357
        %v3363 = vrot.slane %v3362, 4
        %v3365 = vshll.u32 %v3152, 16
        %v3367 = vrot.slane %v3365, 5
        %v3368 = vsel %vm1284, %v3363, %v3367
        %v3370 = vshrl.u32 %v3153, 16
        %v3372 = vrot.slane %v3370, 4
        %v3373 = vshll.u32 %v3153, 16
        %v3375 = vrot.slane %v3373, 5
        %v3376 = vor.u32 %v3372, %v3375
        %v3377 = vrot.slane %v3376, 4
        %v3379 = vshll.u32 %v3154, 16
        %v3381 = vrot.slane %v3379, 5
        %v3382 = vsel %vm1284, %v3377, %v3381
        %v3383 = vshrl.u32 %v3154, 16
        %v3385 = vrot.slane %v3383, 4
        %v3386 = vor.u32 %v3385, %v3381
        %v3387 = vrot.slane %v3386, 4
        %v3389 = vshll.u32 %v3155, 16
        %v3391 = vrot.slane %v3389, 5
        %v3392 = vsel %vm1284, %v3387, %v3391
        %v3394 = vshrl.u32 %v3156, 16
        %v3396 = vrot.slane %v3394, 4
        %v3397 = vshll.u32 %v3156, 16
        %v3399 = vrot.slane %v3397, 5
        %v3400 = vor.u32 %v3396, %v3399
        %v3401 = vrot.slane %v3400, 4
        %v3403 = vshll.u32 %v3157, 16
        %v3405 = vrot.slane %v3403, 5
        %v3406 = vsel %vm1284, %v3401, %v3405
        %v3407 = vshrl.u32 %v3157, 16
        %v3409 = vrot.slane %v3407, 4
        %v3410 = vor.u32 %v3409, %v3405
        %v3411 = vrot.slane %v3410, 4
        %v3413 = vshll.u32 %v3158, 16
        %v3415 = vrot.slane %v3413, 5
        %v3416 = vsel %vm1284, %v3411, %v3415
        %v3418 = vshrl.u32 %v3159, 16
        %v3420 = vrot.slane %v3418, 4
        %v3421 = vshll.u32 %v3159, 16
        %v3423 = vrot.slane %v3421, 5
        %v3424 = vor.u32 %v3420, %v3423
        %v3425 = vrot.slane %v3424, 4
        %v3427 = vshll.u32 %v3160, 16
        %v3429 = vrot.slane %v3427, 5
        %v3430 = vsel %vm1284, %v3425, %v3429
        %v3431 = vshrl.u32 %v3160, 16
        %v3433 = vrot.slane %v3431, 4
        %v3434 = vor.u32 %v3433, %v3429
        %v3435 = vrot.slane %v3434, 4
        %v3437 = vshll.u32 %v3161, 16
        %v3439 = vrot.slane %v3437, 5
        %v3440 = vsel %vm1284, %v3435, %v3439
        %v3442 = vshrl.u32 %v3162, 16
        %v3444 = vrot.slane %v3442, 4
        %v3445 = vshll.u32 %v3162, 16
        %v3447 = vrot.slane %v3445, 5
        %v3448 = vor.u32 %v3444, %v3447
        %v3449 = vrot.slane %v3448, 4
        %v3451 = vshll.u32 %v3163, 16
        %v3453 = vrot.slane %v3451, 5
        %v3454 = vsel %vm1284, %v3449, %v3453
        %v3455 = vshrl.u32 %v3163, 16
        %v3457 = vrot.slane %v3455, 4
        %v3458 = vor.u32 %v3457, %v3453
        %v3459 = vrot.slane %v3458, 4
        %v3461 = vshll.u32 %v3164, 16
        %v3463 = vrot.slane %v3461, 5
        %v3464 = vsel %vm1284, %v3459, %v3463
        %v3466 = vshrl.u32 %v3165, 16
        %v3468 = vrot.slane %v3466, 4
        %v3469 = vshll.u32 %v3165, 16
        %v3471 = vrot.slane %v3469, 5
        %v3472 = vor.u32 %v3468, %v3471
        %v3473 = vrot.slane %v3472, 4
        %v3475 = vshll.u32 %v3166, 16
        %v3477 = vrot.slane %v3475, 5
        %v3478 = vsel %vm1284, %v3473, %v3477
        %v3479 = vshrl.u32 %v3166, 16
        %v3481 = vrot.slane %v3479, 4
        %v3482 = vor.u32 %v3481, %v3477
        %v3483 = vrot.slane %v3482, 4
        %v3485 = vshll.u32 %v3167, 16
        %v3487 = vrot.slane %v3485, 5
        %v3488 = vsel %vm1284, %v3483, %v3487
        %v3490 = vshrl.u32 %v3168, 16
        %v3492 = vrot.slane %v3490, 4
        %v3493 = vshll.u32 %v3168, 16
        %v3495 = vrot.slane %v3493, 5
        %v3496 = vor.u32 %v3492, %v3495
        %v3497 = vrot.slane %v3496, 4
        %v3499 = vshll.u32 %v3169, 16
        %v3501 = vrot.slane %v3499, 5
        %v3502 = vsel %vm1284, %v3497, %v3501
        %v3503 = vshrl.u32 %v3169, 16
        %v3505 = vrot.slane %v3503, 4
        %v3506 = vor.u32 %v3505, %v3501
        %v3507 = vrot.slane %v3506, 4
        %v3509 = vshll.u32 %v3170, 16
        %v3511 = vrot.slane %v3509, 5
        %v3512 = vsel %vm1284, %v3507, %v3511
        %v3514 = vshrl.u32 %v3171, 16
        %v3516 = vrot.slane %v3514, 4
        %v3517 = vshll.u32 %v3171, 16
        %v3519 = vrot.slane %v3517, 5
        %v3520 = vor.u32 %v3516, %v3519
        %v3521 = vrot.slane %v3520, 4
        %v3523 = vshll.u32 %v3172, 16
        %v3525 = vrot.slane %v3523, 5
        %v3526 = vsel %vm1284, %v3521, %v3525
        %v3527 = vshrl.u32 %v3172, 16
        %v3529 = vrot.slane %v3527, 4
        %v3530 = vor.u32 %v3529, %v3525
        %v3531 = vrot.slane %v3530, 4
        %v3533 = vshll.u32 %v3173, 16
        %v3535 = vrot.slane %v3533, 5
        %v3536 = vsel %vm1284, %v3531, %v3535
        %v3538 = vshrl.u32 %v3174, 16
        %v3540 = vrot.slane %v3538, 4
        %v3541 = vshll.u32 %v3174, 16
        %v3543 = vrot.slane %v3541, 5
        %v3544 = vor.u32 %v3540, %v3543
        %v3545 = vrot.slane %v3544, 4
        %v3547 = vshll.u32 %v3175, 16
        %v3549 = vrot.slane %v3547, 5
        %v3550 = vsel %vm1284, %v3545, %v3549
        %v3551 = vshrl.u32 %v3175, 16
        %v3553 = vrot.slane %v3551, 4
        %v3554 = vor.u32 %v3553, %v3549
        %v3555 = vrot.slane %v3554, 4
        %v3557 = vshll.u32 %v3176, 16
        %v3559 = vrot.slane %v3557, 5
        %v3560 = vsel %vm1284, %v3555, %v3559
        %v3561 = vunpack.c.l.b16 %v3190
        %v3562 = vunpack.c.l.b16 %v3200
        %v3563 = vunpack.c.l.b16 %v3214
        %v3564 = vunpack.c.l.b16 %v3224
        %v3565 = vunpack.c.l.b16 %v3238
        %v3566 = vunpack.c.l.b16 %v3248
        %v3567 = vunpack.c.l.b16 %v3262
        %v3568 = vunpack.c.l.b16 %v3272
        %v3569 = vunpack.c.l.b16 %v3286
        %v3570 = vunpack.c.l.b16 %v3296
        %v3571 = vunpack.c.l.b16 %v3310
        %v3572 = vunpack.c.l.b16 %v3320
        %v3573 = vunpack.c.l.b16 %v3334
        %v3574 = vunpack.c.l.b16 %v3344
        %v3575 = vunpack.c.l.b16 %v3358
        %v3576 = vunpack.c.l.b16 %v3368
        %v3577 = vunpack.c.l.b16 %v3382
        %v3578 = vunpack.c.l.b16 %v3392
        %v3579 = vunpack.c.l.b16 %v3406
        %v3580 = vunpack.c.l.b16 %v3416
        %v3581 = vunpack.c.l.b16 %v3430
        %v3582 = vunpack.c.l.b16 %v3440
        %v3583 = vunpack.c.l.b16 %v3454
        %v3584 = vunpack.c.l.b16 %v3464
        %v3585 = vunpack.c.l.b16 %v3478
        %v3586 = vunpack.c.l.b16 %v3488
        %v3587 = vunpack.c.l.b16 %v3502
        %v3588 = vunpack.c.l.b16 %v3512
        %v3589 = vunpack.c.l.b16 %v3526
        %v3590 = vunpack.c.l.b16 %v3536
        %v3591 = vunpack.c.l.b16 %v3550
        %v3592 = vunpack.c.l.b16 %v3560
        %v3593 = vpack.c.b16 %v3562, %v3561
        %v3594 = vpack.c.b16 %v3564, %v3563
        %v3595 = vpack.c.b16 %v3566, %v3565
        %v3596 = vpack.c.b16 %v3568, %v3567
        %v3597 = vpack.c.b16 %v3570, %v3569
        %v3598 = vpack.c.b16 %v3572, %v3571
        %v3599 = vpack.c.b16 %v3574, %v3573
        %v3600 = vpack.c.b16 %v3576, %v3575
        %v3601 = vpack.c.b16 %v3578, %v3577
        %v3602 = vpack.c.b16 %v3580, %v3579
        %v3603 = vpack.c.b16 %v3582, %v3581
        %v3604 = vpack.c.b16 %v3584, %v3583
        %v3605 = vpack.c.b16 %v3586, %v3585
        %v3606 = vpack.c.b16 %v3588, %v3587
        %v3607 = vpack.c.b16 %v3590, %v3589
        %v3608 = vpack.c.b16 %v3592, %v3591
        %3625 = vst [vmem:[#allocation3 + $0x38] sm:$0xff] %v3593
        %3626 = vst [vmem:[#allocation3 + $0x80] sm:$0xff] %v3594
        %3627 = vst [vmem:[#allocation3 + $0xc8] sm:$0xff] %v3595
        %3628 = vst [vmem:[#allocation3 + $0x110] sm:$0xff] %v3596
        %3629 = vst [vmem:[#allocation3 + $0x158] sm:$0xff] %v3597
        %3630 = vst [vmem:[#allocation3 + $0x1a0] sm:$0xff] %v3598
        %3631 = vst [vmem:[#allocation3 + $0x1e8] sm:$0xff] %v3599
        %3632 = vst [vmem:[#allocation3 + $0x230] sm:$0xff] %v3600
        %3633 = vst [vmem:[#allocation3 + $0x278] sm:$0xff] %v3601
        %3634 = vst [vmem:[#allocation3 + $0x2c0] sm:$0xff] %v3602
        %3635 = vst [vmem:[#allocation3 + $0x308] sm:$0xff] %v3603
        %3636 = vst [vmem:[#allocation3 + $0x350] sm:$0xff] %v3604
        %3637 = vst [vmem:[#allocation3 + $0x398] sm:$0xff] %v3605
        %3638 = vst [vmem:[#allocation3 + $0x3e0] sm:$0xff] %v3606
        %3639 = vst [vmem:[#allocation3 + $0x428] sm:$0xff] %v3607
        %3640 = vst [vmem:[#allocation3 + $0x470] sm:$0xff] %v3608
        %v3641 = vld [vmem:[%s2984] sm:$0xe]
        %v3642 = vld [vmem:[%s2984 + $0x4] sm:$0xf]
        %v3643 = vld [vmem:[%s2984 + $0x8] sm:$0x1]
        %v3644 = vld [vmem:[%s2984 + $0xc] sm:$0xe]
        %v3645 = vld [vmem:[%s2984 + $0x10] sm:$0xf]
        %v3646 = vld [vmem:[%s2984 + $0x14] sm:$0x1]
        %v3647 = vld [vmem:[%s2984 + $0x18] sm:$0xe]
        %v3648 = vld [vmem:[%s2984 + $0x1c] sm:$0xf]
        %v3649 = vld [vmem:[%s2984 + $0x20] sm:$0x1]
        %v3650 = vld [vmem:[%s2984 + $0x24] sm:$0xe]
        %v3651 = vld [vmem:[%s2984 + $0x28] sm:$0xf]
        %v3652 = vld [vmem:[%s2984 + $0x2c] sm:$0x1]
        %v3653 = vld [vmem:[%s2984 + $0x30] sm:$0xe]
        %v3654 = vld [vmem:[%s2984 + $0x34] sm:$0xf]
        %v3655 = vld [vmem:[%s2984 + $0x38] sm:$0x1]
        %v3656 = vld [vmem:[%s2984 + $0x3c] sm:$0xe]
        %v3657 = vld [vmem:[%s2984 + $0x40] sm:$0xf]
        %v3658 = vld [vmem:[%s2984 + $0x44] sm:$0x1]
        %v3659 = vld [vmem:[%s2984 + $0x48] sm:$0xe]
        %v3660 = vld [vmem:[%s2984 + $0x4c] sm:$0xf]
        %v3661 = vld [vmem:[%s2984 + $0x50] sm:$0x1]
        %v3662 = vld [vmem:[%s2984 + $0x54] sm:$0xe]
        %v3663 = vld [vmem:[%s2984 + $0x58] sm:$0xf]
        %v3664 = vld [vmem:[%s2984 + $0x5c] sm:$0x1]
        %v3665 = vld [vmem:[%s2984 + $0x60] sm:$0xe]
        %v3666 = vld [vmem:[%s2984 + $0x64] sm:$0xf]
        %v3667 = vld [vmem:[%s2984 + $0x68] sm:$0x1]
        %v3668 = vld [vmem:[%s2984 + $0x6c] sm:$0xe]
        %v3669 = vld [vmem:[%s2984 + $0x70] sm:$0xf]
        %v3670 = vld [vmem:[%s2984 + $0x74] sm:$0x1]
        %v3671 = vld [vmem:[%s2984 + $0x78] sm:$0xe]
        %v3672 = vld [vmem:[%s2984 + $0x7c] sm:$0xf]
        %v3673 = vld [vmem:[%s2984 + $0x80] sm:$0x1]
        %v3674 = vld [vmem:[%s2984 + $0x84] sm:$0xe]
        %v3675 = vld [vmem:[%s2984 + $0x88] sm:$0xf]
        %v3676 = vld [vmem:[%s2984 + $0x8c] sm:$0x1]
        %v3677 = vld [vmem:[%s2984 + $0x90] sm:$0xe]
        %v3678 = vld [vmem:[%s2984 + $0x94] sm:$0xf]
        %v3679 = vld [vmem:[%s2984 + $0x98] sm:$0x1]
        %v3680 = vld [vmem:[%s2984 + $0x9c] sm:$0xe]
        %v3681 = vld [vmem:[%s2984 + $0xa0] sm:$0xf]
        %v3682 = vld [vmem:[%s2984 + $0xa4] sm:$0x1]
        %v3683 = vld [vmem:[%s2984 + $0xa8] sm:$0xe]
        %v3684 = vld [vmem:[%s2984 + $0xac] sm:$0xf]
        %v3685 = vld [vmem:[%s2984 + $0xb0] sm:$0x1]
        %v3686 = vld [vmem:[%s2984 + $0xb4] sm:$0xe]
        %v3687 = vld [vmem:[%s2984 + $0xb8] sm:$0xf]
        %v3688 = vld [vmem:[%s2984 + $0xbc] sm:$0x1]
        %v3737 = vrot.slane %v3641, 5
        %v3738 = vrot.slane %v3737, 4
        %v3739 = vrot.slane %v3642, 5
        %v3740 = vsel %vm1847, %v3738, %v3739
        %v3741 = vrot.slane %v3739, 4
        %v3742 = vrot.slane %v3643, 5
        %v3743 = vsel %vm1847, %v3741, %v3742
        %v3744 = vrot.slane %v3644, 5
        %v3745 = vrot.slane %v3744, 4
        %v3746 = vrot.slane %v3645, 5
        %v3747 = vsel %vm1847, %v3745, %v3746
        %v3748 = vrot.slane %v3746, 4
        %v3749 = vrot.slane %v3646, 5
        %v3750 = vsel %vm1847, %v3748, %v3749
        %v3751 = vrot.slane %v3647, 5
        %v3752 = vrot.slane %v3751, 4
        %v3753 = vrot.slane %v3648, 5
        %v3754 = vsel %vm1847, %v3752, %v3753
        %v3755 = vrot.slane %v3753, 4
        %v3756 = vrot.slane %v3649, 5
        %v3757 = vsel %vm1847, %v3755, %v3756
        %v3758 = vrot.slane %v3650, 5
        %v3759 = vrot.slane %v3758, 4
        %v3760 = vrot.slane %v3651, 5
        %v3761 = vsel %vm1847, %v3759, %v3760
        %v3762 = vrot.slane %v3760, 4
        %v3763 = vrot.slane %v3652, 5
        %v3764 = vsel %vm1847, %v3762, %v3763
        %v3765 = vrot.slane %v3653, 5
        %v3766 = vrot.slane %v3765, 4
        %v3767 = vrot.slane %v3654, 5
        %v3768 = vsel %vm1847, %v3766, %v3767
        %v3769 = vrot.slane %v3767, 4
        %v3770 = vrot.slane %v3655, 5
        %v3771 = vsel %vm1847, %v3769, %v3770
        %v3772 = vrot.slane %v3656, 5
        %v3773 = vrot.slane %v3772, 4
        %v3774 = vrot.slane %v3657, 5
        %v3775 = vsel %vm1847, %v3773, %v3774
        %v3776 = vrot.slane %v3774, 4
        %v3777 = vrot.slane %v3658, 5
        %v3778 = vsel %vm1847, %v3776, %v3777
        %v3779 = vrot.slane %v3659, 5
        %v3780 = vrot.slane %v3779, 4
        %v3781 = vrot.slane %v3660, 5
        %v3782 = vsel %vm1847, %v3780, %v3781
        %v3783 = vrot.slane %v3781, 4
        %v3784 = vrot.slane %v3661, 5
        %v3785 = vsel %vm1847, %v3783, %v3784
        %v3786 = vrot.slane %v3662, 5
        %v3787 = vrot.slane %v3786, 4
        %v3788 = vrot.slane %v3663, 5
        %v3789 = vsel %vm1847, %v3787, %v3788
        %v3790 = vrot.slane %v3788, 4
        %v3791 = vrot.slane %v3664, 5
        %v3792 = vsel %vm1847, %v3790, %v3791
        %v3793 = vrot.slane %v3665, 5
        %v3794 = vrot.slane %v3793, 4
        %v3795 = vrot.slane %v3666, 5
        %v3796 = vsel %vm1847, %v3794, %v3795
        %v3797 = vrot.slane %v3795, 4
        %v3798 = vrot.slane %v3667, 5
        %v3799 = vsel %vm1847, %v3797, %v3798
        %v3800 = vrot.slane %v3668, 5
        %v3801 = vrot.slane %v3800, 4
        %v3802 = vrot.slane %v3669, 5
        %v3803 = vsel %vm1847, %v3801, %v3802
        %v3804 = vrot.slane %v3802, 4
        %v3805 = vrot.slane %v3670, 5
        %v3806 = vsel %vm1847, %v3804, %v3805
        %v3807 = vrot.slane %v3671, 5
        %v3808 = vrot.slane %v3807, 4
        %v3809 = vrot.slane %v3672, 5
        %v3810 = vsel %vm1847, %v3808, %v3809
        %v3811 = vrot.slane %v3809, 4
        %v3812 = vrot.slane %v3673, 5
        %v3813 = vsel %vm1847, %v3811, %v3812
        %v3814 = vrot.slane %v3674, 5
        %v3815 = vrot.slane %v3814, 4
        %v3816 = vrot.slane %v3675, 5
        %v3817 = vsel %vm1847, %v3815, %v3816
        %v3818 = vrot.slane %v3816, 4
        %v3819 = vrot.slane %v3676, 5
        %v3820 = vsel %vm1847, %v3818, %v3819
        %v3821 = vrot.slane %v3677, 5
        %v3822 = vrot.slane %v3821, 4
        %v3823 = vrot.slane %v3678, 5
        %v3824 = vsel %vm1847, %v3822, %v3823
        %v3825 = vrot.slane %v3823, 4
        %v3826 = vrot.slane %v3679, 5
        %v3827 = vsel %vm1847, %v3825, %v3826
        %v3828 = vrot.slane %v3680, 5
        %v3829 = vrot.slane %v3828, 4
        %v3830 = vrot.slane %v3681, 5
        %v3831 = vsel %vm1847, %v3829, %v3830
        %v3832 = vrot.slane %v3830, 4
        %v3833 = vrot.slane %v3682, 5
        %v3834 = vsel %vm1847, %v3832, %v3833
        %v3835 = vrot.slane %v3683, 5
        %v3836 = vrot.slane %v3835, 4
        %v3837 = vrot.slane %v3684, 5
        %v3838 = vsel %vm1847, %v3836, %v3837
        %v3839 = vrot.slane %v3837, 4
        %v3840 = vrot.slane %v3685, 5
        %v3841 = vsel %vm1847, %v3839, %v3840
        %v3842 = vrot.slane %v3686, 5
        %v3843 = vrot.slane %v3842, 4
        %v3844 = vrot.slane %v3687, 5
        %v3845 = vsel %vm1847, %v3843, %v3844
        %v3846 = vrot.slane %v3844, 4
        %v3847 = vrot.slane %v3688, 5
        %v3848 = vsel %vm1847, %v3846, %v3847
        %v3849 = vunpack.c.l.b16 %v3740
        %v3850 = vunpack.c.l.b16 %v3743
        %v3851 = vunpack.c.l.b16 %v3747
        %v3852 = vunpack.c.l.b16 %v3750
        %v3853 = vunpack.c.l.b16 %v3754
        %v3854 = vunpack.c.l.b16 %v3757
        %v3855 = vunpack.c.l.b16 %v3761
        %v3856 = vunpack.c.l.b16 %v3764
        %v3857 = vunpack.c.l.b16 %v3768
        %v3858 = vunpack.c.l.b16 %v3771
        %v3859 = vunpack.c.l.b16 %v3775
        %v3860 = vunpack.c.l.b16 %v3778
        %v3861 = vunpack.c.l.b16 %v3782
        %v3862 = vunpack.c.l.b16 %v3785
        %v3863 = vunpack.c.l.b16 %v3789
        %v3864 = vunpack.c.l.b16 %v3792
        %v3865 = vunpack.c.l.b16 %v3796
        %v3866 = vunpack.c.l.b16 %v3799
        %v3867 = vunpack.c.l.b16 %v3803
        %v3868 = vunpack.c.l.b16 %v3806
        %v3869 = vunpack.c.l.b16 %v3810
        %v3870 = vunpack.c.l.b16 %v3813
        %v3871 = vunpack.c.l.b16 %v3817
        %v3872 = vunpack.c.l.b16 %v3820
        %v3873 = vunpack.c.l.b16 %v3824
        %v3874 = vunpack.c.l.b16 %v3827
        %v3875 = vunpack.c.l.b16 %v3831
        %v3876 = vunpack.c.l.b16 %v3834
        %v3877 = vunpack.c.l.b16 %v3838
        %v3878 = vunpack.c.l.b16 %v3841
        %v3879 = vunpack.c.l.b16 %v3845
        %v3880 = vunpack.c.l.b16 %v3848
        %v3881 = vpack.c.b16 %v3850, %v3849
        %v3882 = vpack.c.b16 %v3852, %v3851
        %v3883 = vpack.c.b16 %v3854, %v3853
        %v3884 = vpack.c.b16 %v3856, %v3855
        %v3885 = vpack.c.b16 %v3858, %v3857
        %v3886 = vpack.c.b16 %v3860, %v3859
        %v3887 = vpack.c.b16 %v3862, %v3861
        %v3888 = vpack.c.b16 %v3864, %v3863
        %v3889 = vpack.c.b16 %v3866, %v3865
        %v3890 = vpack.c.b16 %v3868, %v3867
        %v3891 = vpack.c.b16 %v3870, %v3869
        %v3892 = vpack.c.b16 %v3872, %v3871
        %v3893 = vpack.c.b16 %v3874, %v3873
        %v3894 = vpack.c.b16 %v3876, %v3875
        %v3895 = vpack.c.b16 %v3878, %v3877
        %v3896 = vpack.c.b16 %v3880, %v3879
        %3913 = vst [vmem:[#allocation3 + $0x40] sm:$0xff] %v3881
        %3914 = vst [vmem:[#allocation3 + $0x88] sm:$0xff] %v3882
        %3915 = vst [vmem:[#allocation3 + $0xd0] sm:$0xff] %v3883
        %3916 = vst [vmem:[#allocation3 + $0x118] sm:$0xff] %v3884
        %3917 = vst [vmem:[#allocation3 + $0x160] sm:$0xff] %v3885
        %3918 = vst [vmem:[#allocation3 + $0x1a8] sm:$0xff] %v3886
        %3919 = vst [vmem:[#allocation3 + $0x1f0] sm:$0xff] %v3887
        %3920 = vst [vmem:[#allocation3 + $0x238] sm:$0xff] %v3888
        %3921 = vst [vmem:[#allocation3 + $0x280] sm:$0xff] %v3889
        %3922 = vst [vmem:[#allocation3 + $0x2c8] sm:$0xff] %v3890
        %3923 = vst [vmem:[#allocation3 + $0x310] sm:$0xff] %v3891
        %3924 = vst [vmem:[#allocation3 + $0x358] sm:$0xff] %v3892
        %3925 = vst [vmem:[#allocation3 + $0x3a0] sm:$0xff] %v3893
        %3926 = vst [vmem:[#allocation3 + $0x3e8] sm:$0xff] %v3894
        %3927 = vst [vmem:[#allocation3 + $0x430] sm:$0xff] %v3895
        %3928 = vst [vmem:[#allocation3 + $0x478] sm:$0xff] %v3896
        %v3929 = vld [vmem:[#allocation3] sm:$0xff]
        %v3930 = vld [vmem:[#allocation3 + $0x8] sm:$0xff]
        %v3931 = vld [vmem:[#allocation3 + $0x10] sm:$0xff]
        %v3932 = vld [vmem:[#allocation3 + $0x18] sm:$0xff]
        %v3933 = vld [vmem:[#allocation3 + $0x20] sm:$0xff]
        %v3934 = vld [vmem:[#allocation3 + $0x28] sm:$0xff]
        %v3935 = vld [vmem:[#allocation3 + $0x30] sm:$0xff]
        %v3936 = vld [vmem:[#allocation3 + $0x38] sm:$0xff]
        %v3937 = vld [vmem:[#allocation3 + $0x40] sm:$0xff]
        %v3938 = vld [vmem:[#allocation3 + $0x48] sm:$0xff]
        %v3939 = vld [vmem:[#allocation3 + $0x50] sm:$0xff]
        %v3940 = vld [vmem:[#allocation3 + $0x58] sm:$0xff]
        %v3941 = vld [vmem:[#allocation3 + $0x60] sm:$0xff]
        %v3942 = vld [vmem:[#allocation3 + $0x68] sm:$0xff]
        %v3943 = vld [vmem:[#allocation3 + $0x70] sm:$0xff]
        %v3944 = vld [vmem:[#allocation3 + $0x78] sm:$0xff]
        %v3945 = vld [vmem:[#allocation3 + $0x80] sm:$0xff]
        %v3946 = vld [vmem:[#allocation3 + $0x88] sm:$0xff]
        %v3947 = vld [vmem:[#allocation3 + $0x90] sm:$0xff]
        %v3948 = vld [vmem:[#allocation3 + $0x98] sm:$0xff]
        %v3949 = vld [vmem:[#allocation3 + $0xa0] sm:$0xff]
        %v3950 = vld [vmem:[#allocation3 + $0xa8] sm:$0xff]
        %v3951 = vld [vmem:[#allocation3 + $0xb0] sm:$0xff]
        %v3952 = vld [vmem:[#allocation3 + $0xb8] sm:$0xff]
        %v3953 = vld [vmem:[#allocation3 + $0xc0] sm:$0xff]
        %v3954 = vld [vmem:[#allocation3 + $0xc8] sm:$0xff]
        %v3955 = vld [vmem:[#allocation3 + $0xd0] sm:$0xff]
        %v3956 = vld [vmem:[#allocation3 + $0xd8] sm:$0xff]
        %v3957 = vld [vmem:[#allocation3 + $0xe0] sm:$0xff]
        %v3958 = vld [vmem:[#allocation3 + $0xe8] sm:$0xff]
        %v3959 = vld [vmem:[#allocation3 + $0xf0] sm:$0xff]
        %v3960 = vld [vmem:[#allocation3 + $0xf8] sm:$0xff]
        %v3961 = vld [vmem:[#allocation3 + $0x100] sm:$0xff]
        %v3962 = vld [vmem:[#allocation3 + $0x108] sm:$0xff]
        %v3963 = vld [vmem:[#allocation3 + $0x110] sm:$0xff]
        %v3964 = vld [vmem:[#allocation3 + $0x118] sm:$0xff]
        %v3965 = vld [vmem:[#allocation3 + $0x120] sm:$0xff]
        %v3966 = vld [vmem:[#allocation3 + $0x128] sm:$0xff]
        %v3967 = vld [vmem:[#allocation3 + $0x130] sm:$0xff]
        %v3968 = vld [vmem:[#allocation3 + $0x138] sm:$0xff]
        %v3969 = vld [vmem:[#allocation3 + $0x140] sm:$0xff]
        %v3970 = vld [vmem:[#allocation3 + $0x148] sm:$0xff]
        %v3971 = vld [vmem:[#allocation3 + $0x150] sm:$0xff]
        %v3972 = vld [vmem:[#allocation3 + $0x158] sm:$0xff]
        %v3973 = vld [vmem:[#allocation3 + $0x160] sm:$0xff]
        %v3974 = vld [vmem:[#allocation3 + $0x168] sm:$0xff]
        %v3975 = vld [vmem:[#allocation3 + $0x170] sm:$0xff]
        %v3976 = vld [vmem:[#allocation3 + $0x178] sm:$0xff]
        %v3977 = vld [vmem:[#allocation3 + $0x180] sm:$0xff]
        %v3978 = vld [vmem:[#allocation3 + $0x188] sm:$0xff]
        %v3979 = vld [vmem:[#allocation3 + $0x190] sm:$0xff]
        %v3980 = vld [vmem:[#allocation3 + $0x198] sm:$0xff]
        %v3981 = vld [vmem:[#allocation3 + $0x1a0] sm:$0xff]
        %v3982 = vld [vmem:[#allocation3 + $0x1a8] sm:$0xff]
        %v3983 = vld [vmem:[#allocation3 + $0x1b0] sm:$0xff]
        %v3984 = vld [vmem:[#allocation3 + $0x1b8] sm:$0xff]
        %v3985 = vld [vmem:[#allocation3 + $0x1c0] sm:$0xff]
        %v3986 = vld [vmem:[#allocation3 + $0x1c8] sm:$0xff]
        %v3987 = vld [vmem:[#allocation3 + $0x1d0] sm:$0xff]
        %v3988 = vld [vmem:[#allocation3 + $0x1d8] sm:$0xff]
        %v3989 = vld [vmem:[#allocation3 + $0x1e0] sm:$0xff]
        %v3990 = vld [vmem:[#allocation3 + $0x1e8] sm:$0xff]
        %v3991 = vld [vmem:[#allocation3 + $0x1f0] sm:$0xff]
        %v3992 = vld [vmem:[#allocation3 + $0x1f8] sm:$0xff]
        %v3993 = vld [vmem:[#allocation3 + $0x200] sm:$0xff]
        %v3994 = vld [vmem:[#allocation3 + $0x208] sm:$0xff]
        %v3995 = vld [vmem:[#allocation3 + $0x210] sm:$0xff]
        %v3996 = vld [vmem:[#allocation3 + $0x218] sm:$0xff]
        %v3997 = vld [vmem:[#allocation3 + $0x220] sm:$0xff]
        %v3998 = vld [vmem:[#allocation3 + $0x228] sm:$0xff]
        %v3999 = vld [vmem:[#allocation3 + $0x230] sm:$0xff]
        %v4000 = vld [vmem:[#allocation3 + $0x238] sm:$0xff]
        %v4001 = vld [vmem:[#allocation3 + $0x240] sm:$0xff]
        %v4002 = vld [vmem:[#allocation3 + $0x248] sm:$0xff]
        %v4003 = vld [vmem:[#allocation3 + $0x250] sm:$0xff]
        %v4004 = vld [vmem:[#allocation3 + $0x258] sm:$0xff]
        %v4005 = vld [vmem:[#allocation3 + $0x260] sm:$0xff]
        %v4006 = vld [vmem:[#allocation3 + $0x268] sm:$0xff]
        %v4007 = vld [vmem:[#allocation3 + $0x270] sm:$0xff]
        %v4008 = vld [vmem:[#allocation3 + $0x278] sm:$0xff]
        %v4009 = vld [vmem:[#allocation3 + $0x280] sm:$0xff]
        %v4010 = vld [vmem:[#allocation3 + $0x288] sm:$0xff]
        %v4011 = vld [vmem:[#allocation3 + $0x290] sm:$0xff]
        %v4012 = vld [vmem:[#allocation3 + $0x298] sm:$0xff]
        %v4013 = vld [vmem:[#allocation3 + $0x2a0] sm:$0xff]
        %v4014 = vld [vmem:[#allocation3 + $0x2a8] sm:$0xff]
        %v4015 = vld [vmem:[#allocation3 + $0x2b0] sm:$0xff]
        %v4016 = vld [vmem:[#allocation3 + $0x2b8] sm:$0xff]
        %v4017 = vld [vmem:[#allocation3 + $0x2c0] sm:$0xff]
        %v4018 = vld [vmem:[#allocation3 + $0x2c8] sm:$0xff]
        %v4019 = vld [vmem:[#allocation3 + $0x2d0] sm:$0xff]
        %v4020 = vld [vmem:[#allocation3 + $0x2d8] sm:$0xff]
        %v4021 = vld [vmem:[#allocation3 + $0x2e0] sm:$0xff]
        %v4022 = vld [vmem:[#allocation3 + $0x2e8] sm:$0xff]
        %v4023 = vld [vmem:[#allocation3 + $0x2f0] sm:$0xff]
        %v4024 = vld [vmem:[#allocation3 + $0x2f8] sm:$0xff]
        %v4025 = vld [vmem:[#allocation3 + $0x300] sm:$0xff]
        %v4026 = vld [vmem:[#allocation3 + $0x308] sm:$0xff]
        %v4027 = vld [vmem:[#allocation3 + $0x310] sm:$0xff]
        %v4028 = vld [vmem:[#allocation3 + $0x318] sm:$0xff]
        %v4029 = vld [vmem:[#allocation3 + $0x320] sm:$0xff]
        %v4030 = vld [vmem:[#allocation3 + $0x328] sm:$0xff]
        %v4031 = vld [vmem:[#allocation3 + $0x330] sm:$0xff]
        %v4032 = vld [vmem:[#allocation3 + $0x338] sm:$0xff]
        %v4033 = vld [vmem:[#allocation3 + $0x340] sm:$0xff]
        %v4034 = vld [vmem:[#allocation3 + $0x348] sm:$0xff]
        %v4035 = vld [vmem:[#allocation3 + $0x350] sm:$0xff]
        %v4036 = vld [vmem:[#allocation3 + $0x358] sm:$0xff]
        %v4037 = vld [vmem:[#allocation3 + $0x360] sm:$0xff]
        %v4038 = vld [vmem:[#allocation3 + $0x368] sm:$0xff]
        %v4039 = vld [vmem:[#allocation3 + $0x370] sm:$0xff]
        %v4040 = vld [vmem:[#allocation3 + $0x378] sm:$0xff]
        %v4041 = vld [vmem:[#allocation3 + $0x380] sm:$0xff]
        %v4042 = vld [vmem:[#allocation3 + $0x388] sm:$0xff]
        %v4043 = vld [vmem:[#allocation3 + $0x390] sm:$0xff]
        %v4044 = vld [vmem:[#allocation3 + $0x398] sm:$0xff]
        %v4045 = vld [vmem:[#allocation3 + $0x3a0] sm:$0xff]
        %v4046 = vld [vmem:[#allocation3 + $0x3a8] sm:$0xff]
        %v4047 = vld [vmem:[#allocation3 + $0x3b0] sm:$0xff]
        %v4048 = vld [vmem:[#allocation3 + $0x3b8] sm:$0xff]
        %v4049 = vld [vmem:[#allocation3 + $0x3c0] sm:$0xff]
        %v4050 = vld [vmem:[#allocation3 + $0x3c8] sm:$0xff]
        %v4051 = vld [vmem:[#allocation3 + $0x3d0] sm:$0xff]
        %v4052 = vld [vmem:[#allocation3 + $0x3d8] sm:$0xff]
        %v4053 = vld [vmem:[#allocation3 + $0x3e0] sm:$0xff]
        %v4054 = vld [vmem:[#allocation3 + $0x3e8] sm:$0xff]
        %v4055 = vld [vmem:[#allocation3 + $0x3f0] sm:$0xff]
        %v4056 = vld [vmem:[#allocation3 + $0x3f8] sm:$0xff]
        %v4057 = vld [vmem:[#allocation3 + $0x400] sm:$0xff]
        %v4058 = vld [vmem:[#allocation3 + $0x408] sm:$0xff]
        %v4059 = vld [vmem:[#allocation3 + $0x410] sm:$0xff]
        %v4060 = vld [vmem:[#allocation3 + $0x418] sm:$0xff]
        %v4061 = vld [vmem:[#allocation3 + $0x420] sm:$0xff]
        %v4062 = vld [vmem:[#allocation3 + $0x428] sm:$0xff]
        %v4063 = vld [vmem:[#allocation3 + $0x430] sm:$0xff]
        %v4064 = vld [vmem:[#allocation3 + $0x438] sm:$0xff]
        %v4065 = vld [vmem:[#allocation3 + $0x440] sm:$0xff]
        %v4066 = vld [vmem:[#allocation3 + $0x448] sm:$0xff]
        %v4067 = vld [vmem:[#allocation3 + $0x450] sm:$0xff]
        %v4068 = vld [vmem:[#allocation3 + $0x458] sm:$0xff]
        %v4069 = vld [vmem:[#allocation3 + $0x460] sm:$0xff]
        %v4070 = vld [vmem:[#allocation3 + $0x468] sm:$0xff]
        %v4071 = vld [vmem:[#allocation3 + $0x470] sm:$0xff]
        %v4072 = vld [vmem:[#allocation3 + $0x478] sm:$0xff]
        %v4073 = vld [vmem:[#allocation10] sm:$0xf]
        %v4074 = vld [vmem:[#allocation10 + $0x4] sm:$0xf]
        %v4075 = vld [vmem:[#allocation10 + $0x8] sm:$0xf]
        %v4076 = vld [vmem:[#allocation10 + $0xc] sm:$0xf]
        %v4077 = vld [vmem:[#allocation10 + $0x10] sm:$0xf]
        %v4078 = vld [vmem:[#allocation10 + $0x14] sm:$0xf]
        %v4079 = vld [vmem:[#allocation10 + $0x18] sm:$0xf]
        %v4080 = vld [vmem:[#allocation10 + $0x1c] sm:$0xf]
        %v4081 = vld [vmem:[#allocation10 + $0x20] sm:$0xf]
        %v4082 = vld [vmem:[#allocation10 + $0x24] sm:$0xf]
        %v4083 = vld [vmem:[#allocation10 + $0x28] sm:$0xf]
        %v4084 = vld [vmem:[#allocation10 + $0x2c] sm:$0xf]
        %v4085 = vld [vmem:[#allocation10 + $0x30] sm:$0xf]
        %v4086 = vld [vmem:[#allocation10 + $0x34] sm:$0xf]
        %v4087 = vld [vmem:[#allocation10 + $0x38] sm:$0xf]
        %v4088 = vld [vmem:[#allocation10 + $0x3c] sm:$0xf]
        %v4089 = vld [vmem:[#allocation10 + $0x40] sm:$0xf]
        %v4090 = vld [vmem:[#allocation10 + $0x44] sm:$0xf]
        %v4091 = vld [vmem:[#allocation10 + $0x48] sm:$0xf]
        %v4092 = vld [vmem:[#allocation10 + $0x4c] sm:$0xf]
        %v4093 = vld [vmem:[#allocation10 + $0x50] sm:$0xf]
        %v4094 = vld [vmem:[#allocation10 + $0x54] sm:$0xf]
        %v4095 = vld [vmem:[#allocation10 + $0x58] sm:$0xf]
        %v4096 = vld [vmem:[#allocation10 + $0x5c] sm:$0xf]
        %v4097 = vld [vmem:[#allocation10 + $0x60] sm:$0xf]
        %v4098 = vld [vmem:[#allocation10 + $0x64] sm:$0xf]
        %v4099 = vld [vmem:[#allocation10 + $0x68] sm:$0xf]
        %v4100 = vld [vmem:[#allocation10 + $0x6c] sm:$0xf]
        %v4101 = vld [vmem:[#allocation10 + $0x70] sm:$0xf]
        %v4102 = vld [vmem:[#allocation10 + $0x74] sm:$0xf]
        %v4103 = vld [vmem:[#allocation10 + $0x78] sm:$0xf]
        %v4104 = vld [vmem:[#allocation10 + $0x7c] sm:$0xf]
        %v4105 = vld [vmem:[#allocation10 + $0x80] sm:$0xf]
        %v4106 = vld [vmem:[#allocation10 + $0x84] sm:$0xf]
        %v4107 = vld [vmem:[#allocation10 + $0x88] sm:$0xf]
        %v4108 = vld [vmem:[#allocation10 + $0x8c] sm:$0xf]
        %v4109 = vld [vmem:[#allocation10 + $0x90] sm:$0xf]
        %v4110 = vld [vmem:[#allocation10 + $0x94] sm:$0xf]
        %v4111 = vld [vmem:[#allocation10 + $0x98] sm:$0xf]
        %v4112 = vld [vmem:[#allocation10 + $0x9c] sm:$0xf]
        %v4113 = vld [vmem:[#allocation10 + $0xa0] sm:$0xf]
        %v4114 = vld [vmem:[#allocation10 + $0xa4] sm:$0xf]
        %v4115 = vld [vmem:[#allocation10 + $0xa8] sm:$0xf]
        %v4116 = vld [vmem:[#allocation10 + $0xac] sm:$0xf]
        %v4117 = vld [vmem:[#allocation10 + $0xb0] sm:$0xf]
        %v4118 = vld [vmem:[#allocation10 + $0xb4] sm:$0xf]
        %v4119 = vld [vmem:[#allocation10 + $0xb8] sm:$0xf]
        %v4120 = vld [vmem:[#allocation10 + $0xbc] sm:$0xf]
        %v4121 = vld [vmem:[#allocation10 + $0xc0] sm:$0xf]
        %v4122 = vld [vmem:[#allocation10 + $0xc4] sm:$0xf]
        %v4123 = vld [vmem:[#allocation10 + $0xc8] sm:$0xf]
        %v4124 = vld [vmem:[#allocation10 + $0xcc] sm:$0xf]
        %v4125 = vld [vmem:[#allocation10 + $0xd0] sm:$0xf]
        %v4126 = vld [vmem:[#allocation10 + $0xd4] sm:$0xf]
        %v4127 = vld [vmem:[#allocation10 + $0xd8] sm:$0xf]
        %v4128 = vld [vmem:[#allocation10 + $0xdc] sm:$0xf]
        %v4129 = vld [vmem:[#allocation10 + $0xe0] sm:$0xf]
        %v4130 = vld [vmem:[#allocation10 + $0xe4] sm:$0xf]
        %v4131 = vld [vmem:[#allocation10 + $0xe8] sm:$0xf]
        %v4132 = vld [vmem:[#allocation10 + $0xec] sm:$0xf]
        %v4133 = vld [vmem:[#allocation10 + $0xf0] sm:$0xf]
        %v4134 = vld [vmem:[#allocation10 + $0xf4] sm:$0xf]
        %v4135 = vld [vmem:[#allocation10 + $0xf8] sm:$0xf]
        %v4136 = vld [vmem:[#allocation10 + $0xfc] sm:$0xf]
        %v4137 = vld [vmem:[#allocation10 + $0x100] sm:$0xf]
        %v4138 = vld [vmem:[#allocation10 + $0x104] sm:$0xf]
        %v4139 = vld [vmem:[#allocation10 + $0x108] sm:$0xf]
        %v4140 = vld [vmem:[#allocation10 + $0x10c] sm:$0xf]
        %v4141 = vld [vmem:[#allocation10 + $0x110] sm:$0xf]
        %v4142 = vld [vmem:[#allocation10 + $0x114] sm:$0xf]
        %v4143 = vld [vmem:[#allocation10 + $0x118] sm:$0xf]
        %v4144 = vld [vmem:[#allocation10 + $0x11c] sm:$0xf]
        %v4145 = vld [vmem:[#allocation10 + $0x120] sm:$0xf]
        %v4146 = vld [vmem:[#allocation10 + $0x124] sm:$0xf]
        %v4147 = vld [vmem:[#allocation10 + $0x128] sm:$0xf]
        %v4148 = vld [vmem:[#allocation10 + $0x12c] sm:$0xf]
        %v4149 = vld [vmem:[#allocation10 + $0x130] sm:$0xf]
        %v4150 = vld [vmem:[#allocation10 + $0x134] sm:$0xf]
        %v4151 = vld [vmem:[#allocation10 + $0x138] sm:$0xf]
        %v4152 = vld [vmem:[#allocation10 + $0x13c] sm:$0xf]
        %v4153 = vld [vmem:[#allocation10 + $0x140] sm:$0xf]
        %v4154 = vld [vmem:[#allocation10 + $0x144] sm:$0xf]
        %v4155 = vld [vmem:[#allocation10 + $0x148] sm:$0xf]
        %v4156 = vld [vmem:[#allocation10 + $0x14c] sm:$0xf]
        %v4157 = vld [vmem:[#allocation10 + $0x150] sm:$0xf]
        %v4158 = vld [vmem:[#allocation10 + $0x154] sm:$0xf]
        %v4159 = vld [vmem:[#allocation10 + $0x158] sm:$0xf]
        %v4160 = vld [vmem:[#allocation10 + $0x15c] sm:$0xf]
        %v4161 = vld [vmem:[#allocation10 + $0x160] sm:$0xf]
        %v4162 = vld [vmem:[#allocation10 + $0x164] sm:$0xf]
        %v4163 = vld [vmem:[#allocation10 + $0x168] sm:$0xf]
        %v4164 = vld [vmem:[#allocation10 + $0x16c] sm:$0xf]
        %v4165 = vld [vmem:[#allocation10 + $0x170] sm:$0xf]
        %v4166 = vld [vmem:[#allocation10 + $0x174] sm:$0xf]
        %v4167 = vld [vmem:[#allocation10 + $0x178] sm:$0xf]
        %v4168 = vld [vmem:[#allocation10 + $0x17c] sm:$0xf]
        %v4169 = vld [vmem:[#allocation10 + $0x180] sm:$0xf]
        %v4170 = vld [vmem:[#allocation10 + $0x184] sm:$0xf]
        %v4171 = vld [vmem:[#allocation10 + $0x188] sm:$0xf]
        %v4172 = vld [vmem:[#allocation10 + $0x18c] sm:$0xf]
        %v4173 = vld [vmem:[#allocation10 + $0x190] sm:$0xf]
        %v4174 = vld [vmem:[#allocation10 + $0x194] sm:$0xf]
        %v4175 = vld [vmem:[#allocation10 + $0x198] sm:$0xf]
        %v4176 = vld [vmem:[#allocation10 + $0x19c] sm:$0xf]
        %v4177 = vld [vmem:[#allocation10 + $0x1a0] sm:$0xf]
        %v4178 = vld [vmem:[#allocation10 + $0x1a4] sm:$0xf]
        %v4179 = vld [vmem:[#allocation10 + $0x1a8] sm:$0xf]
        %v4180 = vld [vmem:[#allocation10 + $0x1ac] sm:$0xf]
        %v4181 = vld [vmem:[#allocation10 + $0x1b0] sm:$0xf]
        %v4182 = vld [vmem:[#allocation10 + $0x1b4] sm:$0xf]
        %v4183 = vld [vmem:[#allocation10 + $0x1b8] sm:$0xf]
        %v4184 = vld [vmem:[#allocation10 + $0x1bc] sm:$0xf]
        %v4185 = vld [vmem:[#allocation10 + $0x1c0] sm:$0xf]
        %v4186 = vld [vmem:[#allocation10 + $0x1c4] sm:$0xf]
        %v4187 = vld [vmem:[#allocation10 + $0x1c8] sm:$0xf]
        %v4188 = vld [vmem:[#allocation10 + $0x1cc] sm:$0xf]
        %v4189 = vld [vmem:[#allocation10 + $0x1d0] sm:$0xf]
        %v4190 = vld [vmem:[#allocation10 + $0x1d4] sm:$0xf]
        %v4191 = vld [vmem:[#allocation10 + $0x1d8] sm:$0xf]
        %v4192 = vld [vmem:[#allocation10 + $0x1dc] sm:$0xf]
        %v4193 = vld [vmem:[#allocation10 + $0x1e0] sm:$0xf]
        %v4194 = vld [vmem:[#allocation10 + $0x1e4] sm:$0xf]
        %v4195 = vld [vmem:[#allocation10 + $0x1e8] sm:$0xf]
        %v4196 = vld [vmem:[#allocation10 + $0x1ec] sm:$0xf]
        %v4197 = vld [vmem:[#allocation10 + $0x1f0] sm:$0xf]
        %v4198 = vld [vmem:[#allocation10 + $0x1f4] sm:$0xf]
        %v4199 = vld [vmem:[#allocation10 + $0x1f8] sm:$0xf]
        %v4200 = vld [vmem:[#allocation10 + $0x1fc] sm:$0xf]
        %v4201 = vld [vmem:[#allocation10 + $0x200] sm:$0xf]
        %v4202 = vld [vmem:[#allocation10 + $0x204] sm:$0xf]
        %v4203 = vld [vmem:[#allocation10 + $0x208] sm:$0xf]
        %v4204 = vld [vmem:[#allocation10 + $0x20c] sm:$0xf]
        %v4205 = vld [vmem:[#allocation10 + $0x210] sm:$0xf]
        %v4206 = vld [vmem:[#allocation10 + $0x214] sm:$0xf]
        %v4207 = vld [vmem:[#allocation10 + $0x218] sm:$0xf]
        %v4208 = vld [vmem:[#allocation10 + $0x21c] sm:$0xf]
        %v4209 = vld [vmem:[#allocation10 + $0x220] sm:$0xf]
        %v4210 = vld [vmem:[#allocation10 + $0x224] sm:$0xf]
        %v4211 = vld [vmem:[#allocation10 + $0x228] sm:$0xf]
        %v4212 = vld [vmem:[#allocation10 + $0x22c] sm:$0xf]
        %v4213 = vld [vmem:[#allocation10 + $0x230] sm:$0xf]
        %v4214 = vld [vmem:[#allocation10 + $0x234] sm:$0xf]
        %v4215 = vld [vmem:[#allocation10 + $0x238] sm:$0xf]
        %v4216 = vld [vmem:[#allocation10 + $0x23c] sm:$0xf]
        %v4361 = vunpack.c.l.b16 %v4073
        %v4362 = vunpack.c.l.b16 %v4074
        %v4363 = vunpack.c.l.b16 %v4075
        %v4364 = vunpack.c.l.b16 %v4076
        %v4365 = vunpack.c.l.b16 %v4077
        %v4366 = vunpack.c.l.b16 %v4078
        %v4367 = vunpack.c.l.b16 %v4079
        %v4368 = vunpack.c.l.b16 %v4080
        %v4369 = vunpack.c.l.b16 %v4081
        %v4370 = vunpack.c.l.b16 %v4082
        %v4371 = vunpack.c.l.b16 %v4083
        %v4372 = vunpack.c.l.b16 %v4084
        %v4373 = vunpack.c.l.b16 %v4085
        %v4374 = vunpack.c.l.b16 %v4086
        %v4375 = vunpack.c.l.b16 %v4087
        %v4376 = vunpack.c.l.b16 %v4088
        %v4377 = vunpack.c.l.b16 %v4089
        %v4378 = vunpack.c.l.b16 %v4090
        %v4379 = vunpack.c.l.b16 %v4091
        %v4380 = vunpack.c.l.b16 %v4092
        %v4381 = vunpack.c.l.b16 %v4093
        %v4382 = vunpack.c.l.b16 %v4094
        %v4383 = vunpack.c.l.b16 %v4095
        %v4384 = vunpack.c.l.b16 %v4096
        %v4385 = vunpack.c.l.b16 %v4097
        %v4386 = vunpack.c.l.b16 %v4098
        %v4387 = vunpack.c.l.b16 %v4099
        %v4388 = vunpack.c.l.b16 %v4100
        %v4389 = vunpack.c.l.b16 %v4101
        %v4390 = vunpack.c.l.b16 %v4102
        %v4391 = vunpack.c.l.b16 %v4103
        %v4392 = vunpack.c.l.b16 %v4104
        %v4393 = vunpack.c.l.b16 %v4105
        %v4394 = vunpack.c.l.b16 %v4106
        %v4395 = vunpack.c.l.b16 %v4107
        %v4396 = vunpack.c.l.b16 %v4108
        %v4397 = vunpack.c.l.b16 %v4109
        %v4398 = vunpack.c.l.b16 %v4110
        %v4399 = vunpack.c.l.b16 %v4111
        %v4400 = vunpack.c.l.b16 %v4112
        %v4401 = vunpack.c.l.b16 %v4113
        %v4402 = vunpack.c.l.b16 %v4114
        %v4403 = vunpack.c.l.b16 %v4115
        %v4404 = vunpack.c.l.b16 %v4116
        %v4405 = vunpack.c.l.b16 %v4117
        %v4406 = vunpack.c.l.b16 %v4118
        %v4407 = vunpack.c.l.b16 %v4119
        %v4408 = vunpack.c.l.b16 %v4120
        %v4409 = vunpack.c.l.b16 %v4121
        %v4410 = vunpack.c.l.b16 %v4122
        %v4411 = vunpack.c.l.b16 %v4123
        %v4412 = vunpack.c.l.b16 %v4124
        %v4413 = vunpack.c.l.b16 %v4125
        %v4414 = vunpack.c.l.b16 %v4126
        %v4415 = vunpack.c.l.b16 %v4127
        %v4416 = vunpack.c.l.b16 %v4128
        %v4417 = vunpack.c.l.b16 %v4129
        %v4418 = vunpack.c.l.b16 %v4130
        %v4419 = vunpack.c.l.b16 %v4131
        %v4420 = vunpack.c.l.b16 %v4132
        %v4421 = vunpack.c.l.b16 %v4133
        %v4422 = vunpack.c.l.b16 %v4134
        %v4423 = vunpack.c.l.b16 %v4135
        %v4424 = vunpack.c.l.b16 %v4136
        %v4425 = vunpack.c.l.b16 %v4137
        %v4426 = vunpack.c.l.b16 %v4138
        %v4427 = vunpack.c.l.b16 %v4139
        %v4428 = vunpack.c.l.b16 %v4140
        %v4429 = vunpack.c.l.b16 %v4141
        %v4430 = vunpack.c.l.b16 %v4142
        %v4431 = vunpack.c.l.b16 %v4143
        %v4432 = vunpack.c.l.b16 %v4144
        %v4433 = vunpack.c.l.b16 %v4145
        %v4434 = vunpack.c.l.b16 %v4146
        %v4435 = vunpack.c.l.b16 %v4147
        %v4436 = vunpack.c.l.b16 %v4148
        %v4437 = vunpack.c.l.b16 %v4149
        %v4438 = vunpack.c.l.b16 %v4150
        %v4439 = vunpack.c.l.b16 %v4151
        %v4440 = vunpack.c.l.b16 %v4152
        %v4441 = vunpack.c.l.b16 %v4153
        %v4442 = vunpack.c.l.b16 %v4154
        %v4443 = vunpack.c.l.b16 %v4155
        %v4444 = vunpack.c.l.b16 %v4156
        %v4445 = vunpack.c.l.b16 %v4157
        %v4446 = vunpack.c.l.b16 %v4158
        %v4447 = vunpack.c.l.b16 %v4159
        %v4448 = vunpack.c.l.b16 %v4160
        %v4449 = vunpack.c.l.b16 %v4161
        %v4450 = vunpack.c.l.b16 %v4162
        %v4451 = vunpack.c.l.b16 %v4163
        %v4452 = vunpack.c.l.b16 %v4164
        %v4453 = vunpack.c.l.b16 %v4165
        %v4454 = vunpack.c.l.b16 %v4166
        %v4455 = vunpack.c.l.b16 %v4167
        %v4456 = vunpack.c.l.b16 %v4168
        %v4457 = vunpack.c.l.b16 %v4169
        %v4458 = vunpack.c.l.b16 %v4170
        %v4459 = vunpack.c.l.b16 %v4171
        %v4460 = vunpack.c.l.b16 %v4172
        %v4461 = vunpack.c.l.b16 %v4173
        %v4462 = vunpack.c.l.b16 %v4174
        %v4463 = vunpack.c.l.b16 %v4175
        %v4464 = vunpack.c.l.b16 %v4176
        %v4465 = vunpack.c.l.b16 %v4177
        %v4466 = vunpack.c.l.b16 %v4178
        %v4467 = vunpack.c.l.b16 %v4179
        %v4468 = vunpack.c.l.b16 %v4180
        %v4469 = vunpack.c.l.b16 %v4181
        %v4470 = vunpack.c.l.b16 %v4182
        %v4471 = vunpack.c.l.b16 %v4183
        %v4472 = vunpack.c.l.b16 %v4184
        %v4473 = vunpack.c.l.b16 %v4185
        %v4474 = vunpack.c.l.b16 %v4186
        %v4475 = vunpack.c.l.b16 %v4187
        %v4476 = vunpack.c.l.b16 %v4188
        %v4477 = vunpack.c.l.b16 %v4189
        %v4478 = vunpack.c.l.b16 %v4190
        %v4479 = vunpack.c.l.b16 %v4191
        %v4480 = vunpack.c.l.b16 %v4192
        %v4481 = vunpack.c.l.b16 %v4193
        %v4482 = vunpack.c.l.b16 %v4194
        %v4483 = vunpack.c.l.b16 %v4195
        %v4484 = vunpack.c.l.b16 %v4196
        %v4485 = vunpack.c.l.b16 %v4197
        %v4486 = vunpack.c.l.b16 %v4198
        %v4487 = vunpack.c.l.b16 %v4199
        %v4488 = vunpack.c.l.b16 %v4200
        %v4489 = vunpack.c.l.b16 %v4201
        %v4490 = vunpack.c.l.b16 %v4202
        %v4491 = vunpack.c.l.b16 %v4203
        %v4492 = vunpack.c.l.b16 %v4204
        %v4493 = vunpack.c.l.b16 %v4205
        %v4494 = vunpack.c.l.b16 %v4206
        %v4495 = vunpack.c.l.b16 %v4207
        %v4496 = vunpack.c.l.b16 %v4208
        %v4497 = vunpack.c.l.b16 %v4209
        %v4498 = vunpack.c.l.b16 %v4210
        %v4499 = vunpack.c.l.b16 %v4211
        %v4500 = vunpack.c.l.b16 %v4212
        %v4501 = vunpack.c.l.b16 %v4213
        %v4502 = vunpack.c.l.b16 %v4214
        %v4503 = vunpack.c.l.b16 %v4215
        %v4504 = vunpack.c.l.b16 %v4216
        %v4505 = vpack.c.b16 %v4362, %v4361
        %v4506 = vpack.c.b16 %v4364, %v4363
        %v4507 = vpack.c.b16 %v4366, %v4365
        %v4508 = vpack.c.b16 %v4368, %v4367
        %v4509 = vpack.c.b16 %v4370, %v4369
        %v4510 = vpack.c.b16 %v4372, %v4371
        %v4511 = vpack.c.b16 %v4374, %v4373
        %v4512 = vpack.c.b16 %v4376, %v4375
        %v4513 = vpack.c.b16 %v4378, %v4377
        %v4514 = vpack.c.b16 %v4380, %v4379
        %v4515 = vpack.c.b16 %v4382, %v4381
        %v4516 = vpack.c.b16 %v4384, %v4383
        %v4517 = vpack.c.b16 %v4386, %v4385
        %v4518 = vpack.c.b16 %v4388, %v4387
        %v4519 = vpack.c.b16 %v4390, %v4389
        %v4520 = vpack.c.b16 %v4392, %v4391
        %v4521 = vpack.c.b16 %v4394, %v4393
        %v4522 = vpack.c.b16 %v4396, %v4395
        %v4523 = vpack.c.b16 %v4398, %v4397
        %v4524 = vpack.c.b16 %v4400, %v4399
        %v4525 = vpack.c.b16 %v4402, %v4401
        %v4526 = vpack.c.b16 %v4404, %v4403
        %v4527 = vpack.c.b16 %v4406, %v4405
        %v4528 = vpack.c.b16 %v4408, %v4407
        %v4529 = vpack.c.b16 %v4410, %v4409
        %v4530 = vpack.c.b16 %v4412, %v4411
        %v4531 = vpack.c.b16 %v4414, %v4413
        %v4532 = vpack.c.b16 %v4416, %v4415
        %v4533 = vpack.c.b16 %v4418, %v4417
        %v4534 = vpack.c.b16 %v4420, %v4419
        %v4535 = vpack.c.b16 %v4422, %v4421
        %v4536 = vpack.c.b16 %v4424, %v4423
        %v4537 = vpack.c.b16 %v4426, %v4425
        %v4538 = vpack.c.b16 %v4428, %v4427
        %v4539 = vpack.c.b16 %v4430, %v4429
        %v4540 = vpack.c.b16 %v4432, %v4431
        %v4541 = vpack.c.b16 %v4434, %v4433
        %v4542 = vpack.c.b16 %v4436, %v4435
        %v4543 = vpack.c.b16 %v4438, %v4437
        %v4544 = vpack.c.b16 %v4440, %v4439
        %v4545 = vpack.c.b16 %v4442, %v4441
        %v4546 = vpack.c.b16 %v4444, %v4443
        %v4547 = vpack.c.b16 %v4446, %v4445
        %v4548 = vpack.c.b16 %v4448, %v4447
        %v4549 = vpack.c.b16 %v4450, %v4449
        %v4550 = vpack.c.b16 %v4452, %v4451
        %v4551 = vpack.c.b16 %v4454, %v4453
        %v4552 = vpack.c.b16 %v4456, %v4455
        %v4553 = vpack.c.b16 %v4458, %v4457
        %v4554 = vpack.c.b16 %v4460, %v4459
        %v4555 = vpack.c.b16 %v4462, %v4461
        %v4556 = vpack.c.b16 %v4464, %v4463
        %v4557 = vpack.c.b16 %v4466, %v4465
        %v4558 = vpack.c.b16 %v4468, %v4467
        %v4559 = vpack.c.b16 %v4470, %v4469
        %v4560 = vpack.c.b16 %v4472, %v4471
        %v4561 = vpack.c.b16 %v4474, %v4473
        %v4562 = vpack.c.b16 %v4476, %v4475
        %v4563 = vpack.c.b16 %v4478, %v4477
        %v4564 = vpack.c.b16 %v4480, %v4479
        %v4565 = vpack.c.b16 %v4482, %v4481
        %v4566 = vpack.c.b16 %v4484, %v4483
        %v4567 = vpack.c.b16 %v4486, %v4485
        %v4568 = vpack.c.b16 %v4488, %v4487
        %v4569 = vpack.c.b16 %v4490, %v4489
        %v4570 = vpack.c.b16 %v4492, %v4491
        %v4571 = vpack.c.b16 %v4494, %v4493
        %v4572 = vpack.c.b16 %v4496, %v4495
        %v4573 = vpack.c.b16 %v4498, %v4497
        %v4574 = vpack.c.b16 %v4500, %v4499
        %v4575 = vpack.c.b16 %v4502, %v4501
        %v4576 = vpack.c.b16 %v4504, %v4503
        %4649 = vmatprep.subr.bf16.mxu0 0
        %4650 = vmatpush1.bf16.msra.mxu0 %v4505
        %4651 = vmatprep.subr.bf16.mxu0 0
        %4652 = vmatpush1.bf16.msra.mxu0 %v4506
        %4653 = vmatprep.subr.bf16.mxu0 0
        %4654 = vmatpush1.bf16.msra.mxu0 %v4507
        %4655 = vmatprep.subr.bf16.mxu0 0
        %4656 = vmatpush1.bf16.msra.mxu0 %v4508
        %4657 = vmatprep.subr.bf16.mxu0 0
        %4658 = vmatpush1.bf16.msra.mxu0 %v4509
        %4659 = vmatprep.subr.bf16.mxu0 0
        %4660 = vmatpush1.bf16.msra.mxu0 %v4510
        %4661 = vmatprep.subr.bf16.mxu0 0
        %4662 = vmatpush1.bf16.msra.mxu0 %v4511
        %4663 = vmatprep.subr.bf16.mxu0 0
        %4664 = vmatpush1.bf16.msra.mxu0 %v4512
        %4665 = vmatprep.subr.bf16.mxu0 0
        %4666 = vmatpush1.bf16.msra.mxu0 %v4513
        %4667 = vmatprep.subr.bf16.mxu0 0
        %4668 = vmatpush1.bf16.msra.mxu0 %v4514
        %4669 = vmatprep.subr.bf16.mxu0 0
        %4670 = vmatpush1.bf16.msra.mxu0 %v4515
        %4671 = vmatprep.subr.bf16.mxu0 0
        %4672 = vmatpush1.bf16.msra.mxu0 %v4516
        %4673 = vmatprep.subr.bf16.mxu0 0
        %4674 = vmatpush1.bf16.msra.mxu0 %v4517
        %4675 = vmatprep.subr.bf16.mxu0 0
        %4676 = vmatpush1.bf16.msra.mxu0 %v4518
        %4677 = vmatprep.subr.bf16.mxu0 0
        %4678 = vmatpush1.bf16.msra.mxu0 %v4519
        %4679 = vmatprep.subr.bf16.mxu0 0
        %4680 = vmatpush1.bf16.msra.mxu0 %v4520
        %4681 = vmatprep.mubr.bf16.mxu0 %v3930
        %4682 = vmatmul.mubr.bf16.gmra.mrb[0].mxu0 %v3929
        %v4683 = vpop.f32.mrb[0].mxu0
        %v4684 = vadd.f32 0.0, %v4683
        %v4685 = vpop.f32.mrb[0].mxu0
        %v4686 = vpop.f32.mrb[0].mxu0
        %v4687 = vadd.f32 0.0, %v4686
        %v4688 = vpop.f32.mrb[0].mxu0
        %4689 = vmatprep.mubr.bf16.mxu0 %v3939
        %4690 = vmatmul.mubr.bf16.gmra.mrb[0].mxu0 %v3938
        %v4691 = vpop.f32.mrb[0].mxu0
        %v4692 = vadd.f32 0.0, %v4691
        %v4693 = vpop.f32.mrb[0].mxu0
        %v4694 = vpop.f32.mrb[0].mxu0
        %v4695 = vadd.f32 0.0, %v4694
        %v4696 = vpop.f32.mrb[0].mxu0
        %4697 = vmatprep.mubr.bf16.mxu0 %v3948
        %4698 = vmatmul.mubr.bf16.gmra.mrb[0].mxu0 %v3947
        %v4699 = vpop.f32.mrb[0].mxu0
        %v4700 = vadd.f32 0.0, %v4699
        %v4701 = vpop.f32.mrb[0].mxu0
        %v4702 = vpop.f32.mrb[0].mxu0
        %v4703 = vadd.f32 0.0, %v4702
        %v4704 = vpop.f32.mrb[0].mxu0
        %4705 = vmatprep.mubr.bf16.mxu0 %v3957
        %4706 = vmatmul.mubr.bf16.gmra.mrb[0].mxu0 %v3956
        %v4707 = vpop.f32.mrb[0].mxu0
        %v4708 = vadd.f32 0.0, %v4707
        %v4709 = vpop.f32.mrb[0].mxu0
        %v4710 = vpop.f32.mrb[0].mxu0
        %v4711 = vadd.f32 0.0, %v4710
        %v4712 = vpop.f32.mrb[0].mxu0
        %4713 = vmatprep.mubr.bf16.mxu0 %v3966
        %4714 = vmatmul.mubr.bf16.gmra.mrb[0].mxu0 %v3965
        %v4715 = vpop.f32.mrb[0].mxu0
        %v4716 = vadd.f32 0.0, %v4715
        %v4717 = vpop.f32.mrb[0].mxu0
        %v4718 = vpop.f32.mrb[0].mxu0
        %v4719 = vadd.f32 0.0, %v4718
        %v4720 = vpop.f32.mrb[0].mxu0
        %4721 = vmatprep.mubr.bf16.mxu0 %v3975
        %4722 = vmatmul.mubr.bf16.gmra.mrb[0].mxu0 %v3974
        %v4723 = vpop.f32.mrb[0].mxu0
        %v4724 = vadd.f32 0.0, %v4723
        %v4725 = vpop.f32.mrb[0].mxu0
        %v4726 = vpop.f32.mrb[0].mxu0
        %v4727 = vadd.f32 0.0, %v4726
        %v4728 = vpop.f32.mrb[0].mxu0
        %4729 = vmatprep.mubr.bf16.mxu0 %v3984
        %4730 = vmatmul.mubr.bf16.gmra.mrb[0].mxu0 %v3983
        %v4731 = vpop.f32.mrb[0].mxu0
        %v4732 = vadd.f32 0.0, %v4731
        %v4733 = vpop.f32.mrb[0].mxu0
        %v4734 = vpop.f32.mrb[0].mxu0
        %v4735 = vadd.f32 0.0, %v4734
        %v4736 = vpop.f32.mrb[0].mxu0
        %4737 = vmatprep.mubr.bf16.mxu0 %v3993
        %4738 = vmatmul.mubr.bf16.gmra.mrb[0].mxu0 %v3992
        %v4739 = vpop.f32.mrb[0].mxu0
        %v4740 = vadd.f32 0.0, %v4739
        %v4741 = vpop.f32.mrb[0].mxu0
        %v4742 = vpop.f32.mrb[0].mxu0
        %v4743 = vadd.f32 0.0, %v4742
        %v4744 = vpop.f32.mrb[0].mxu0
        %4745 = vmatprep.mubr.bf16.mxu0 %v4002
        %4746 = vmatmul.mubr.bf16.gmra.mrb[0].mxu0 %v4001
        %v4747 = vpop.f32.mrb[0].mxu0
        %v4748 = vadd.f32 0.0, %v4747
        %v4749 = vpop.f32.mrb[0].mxu0
        %v4750 = vpop.f32.mrb[0].mxu0
        %v4751 = vadd.f32 0.0, %v4750
        %v4752 = vpop.f32.mrb[0].mxu0
        %4753 = vmatprep.mubr.bf16.mxu0 %v4011
        %4754 = vmatmul.mubr.bf16.gmra.mrb[0].mxu0 %v4010
        %v4755 = vpop.f32.mrb[0].mxu0
        %v4756 = vadd.f32 0.0, %v4755
        %v4757 = vpop.f32.mrb[0].mxu0
        %v4758 = vpop.f32.mrb[0].mxu0
        %v4759 = vadd.f32 0.0, %v4758
        %v4760 = vpop.f32.mrb[0].mxu0
        %4761 = vmatprep.mubr.bf16.mxu0 %v4020
        %4762 = vmatmul.mubr.bf16.gmra.mrb[0].mxu0 %v4019
        %v4763 = vpop.f32.mrb[0].mxu0
        %v4764 = vadd.f32 0.0, %v4763
        %v4765 = vpop.f32.mrb[0].mxu0
        %v4766 = vpop.f32.mrb[0].mxu0
        %v4767 = vadd.f32 0.0, %v4766
        %v4768 = vpop.f32.mrb[0].mxu0
        %4769 = vmatprep.mubr.bf16.mxu0 %v4029
        %4770 = vmatmul.mubr.bf16.gmra.mrb[0].mxu0 %v4028
        %v4771 = vpop.f32.mrb[0].mxu0
        %v4772 = vadd.f32 0.0, %v4771
        %v4773 = vpop.f32.mrb[0].mxu0
        %v4774 = vpop.f32.mrb[0].mxu0
        %v4775 = vadd.f32 0.0, %v4774
        %v4776 = vpop.f32.mrb[0].mxu0
        %4777 = vmatprep.mubr.bf16.mxu0 %v4038
        %4778 = vmatmul.mubr.bf16.gmra.mrb[0].mxu0 %v4037
        %v4779 = vpop.f32.mrb[0].mxu0
        %v4780 = vadd.f32 0.0, %v4779
        %v4781 = vpop.f32.mrb[0].mxu0
        %v4782 = vpop.f32.mrb[0].mxu0
        %v4783 = vadd.f32 0.0, %v4782
        %v4784 = vpop.f32.mrb[0].mxu0
        %4785 = vmatprep.mubr.bf16.mxu0 %v4047
        %4786 = vmatmul.mubr.bf16.gmra.mrb[0].mxu0 %v4046
        %v4787 = vpop.f32.mrb[0].mxu0
        %v4788 = vadd.f32 0.0, %v4787
        %v4789 = vpop.f32.mrb[0].mxu0
        %v4790 = vpop.f32.mrb[0].mxu0
        %v4791 = vadd.f32 0.0, %v4790
        %v4792 = vpop.f32.mrb[0].mxu0
        %4793 = vmatprep.mubr.bf16.mxu0 %v4056
        %4794 = vmatmul.mubr.bf16.gmra.mrb[0].mxu0 %v4055
        %v4795 = vpop.f32.mrb[0].mxu0
        %v4796 = vadd.f32 0.0, %v4795
        %v4797 = vpop.f32.mrb[0].mxu0
        %v4798 = vpop.f32.mrb[0].mxu0
        %v4799 = vadd.f32 0.0, %v4798
        %v4800 = vpop.f32.mrb[0].mxu0
        %4801 = vmatprep.mubr.bf16.mxu0 %v4065
        %4802 = vmatmul.mubr.bf16.gmra.mrb[0].mxu0 %v4064
        %v4803 = vpop.f32.mrb[0].mxu0
        %v4804 = vadd.f32 0.0, %v4803
        %v4805 = vpop.f32.mrb[0].mxu0
        %v4806 = vpop.f32.mrb[0].mxu0
        %v4807 = vadd.f32 0.0, %v4806
        %v4808 = vpop.f32.mrb[0].mxu0
        %4809 = vdwg.mxu0
        %4810 = vmatprep.subr.bf16.mxu0 0
        %4811 = vmatpush1.bf16.msra.mxu0 %v4521
        %4812 = vmatprep.subr.bf16.mxu0 0
        %4813 = vmatpush1.bf16.msra.mxu0 %v4522
        %4814 = vmatprep.subr.bf16.mxu0 0
        %4815 = vmatpush1.bf16.msra.mxu0 %v4523
        %4816 = vmatprep.subr.bf16.mxu0 0
        %4817 = vmatpush1.bf16.msra.mxu0 %v4524
        %4818 = vmatprep.subr.bf16.mxu0 0
        %4819 = vmatpush1.bf16.msra.mxu0 %v4525
        %4820 = vmatprep.subr.bf16.mxu0 0
        %4821 = vmatpush1.bf16.msra.mxu0 %v4526
        %4822 = vmatprep.subr.bf16.mxu0 0
        %4823 = vmatpush1.bf16.msra.mxu0 %v4527
        %4824 = vmatprep.subr.bf16.mxu0 0
        %4825 = vmatpush1.bf16.msra.mxu0 %v4528
        %4826 = vmatprep.subr.bf16.mxu0 0
        %4827 = vmatpush1.bf16.msra.mxu0 %v4529
        %4828 = vmatprep.subr.bf16.mxu0 0
        %4829 = vmatpush1.bf16.msra.mxu0 %v4530
        %4830 = vmatprep.subr.bf16.mxu0 0
        %4831 = vmatpush1.bf16.msra.mxu0 %v4531
        %4832 = vmatprep.subr.bf16.mxu0 0
        %4833 = vmatpush1.bf16.msra.mxu0 %v4532
        %4834 = vmatprep.subr.bf16.mxu0 0
        %4835 = vmatpush1.bf16.msra.mxu0 %v4533
        %4836 = vmatprep.subr.bf16.mxu0 0
        %4837 = vmatpush1.bf16.msra.mxu0 %v4534
        %4838 = vmatprep.subr.bf16.mxu0 0
        %4839 = vmatpush1.bf16.msra.mxu0 %v4535
        %4840 = vmatprep.subr.bf16.mxu0 0
        %4841 = vmatpush1.bf16.msra.mxu0 %v4536
        %4842 = vmatprep.mubr.bf16.mxu0 %v3932
        %4843 = vmatmul.mubr.bf16.gmra.mrb[0].mxu0 %v3931
        %v4844 = vpop.f32.mrb[0].mxu0
        %v4845 = vadd.f32 %v4684, %v4844
        %v4846 = vpop.f32.mrb[0].mxu0
        %v4847 = vpop.f32.mrb[0].mxu0
        %v4848 = vadd.f32 %v4687, %v4847
        %v4849 = vpop.f32.mrb[0].mxu0
        %4850 = vmatprep.mubr.bf16.mxu0 %v3941
        %4851 = vmatmul.mubr.bf16.gmra.mrb[0].mxu0 %v3940
        %v4852 = vpop.f32.mrb[0].mxu0
        %v4853 = vadd.f32 %v4692, %v4852
        %v4854 = vpop.f32.mrb[0].mxu0
        %v4855 = vpop.f32.mrb[0].mxu0
        %v4856 = vadd.f32 %v4695, %v4855
        %v4857 = vpop.f32.mrb[0].mxu0
        %4858 = vmatprep.mubr.bf16.mxu0 %v3950
        %4859 = vmatmul.mubr.bf16.gmra.mrb[0].mxu0 %v3949
        %v4860 = vpop.f32.mrb[0].mxu0
        %v4861 = vadd.f32 %v4700, %v4860
        %v4862 = vpop.f32.mrb[0].mxu0
        %v4863 = vpop.f32.mrb[0].mxu0
        %v4864 = vadd.f32 %v4703, %v4863
        %v4865 = vpop.f32.mrb[0].mxu0
        %4866 = vmatprep.mubr.bf16.mxu0 %v3959
        %4867 = vmatmul.mubr.bf16.gmra.mrb[0].mxu0 %v3958
        %v4868 = vpop.f32.mrb[0].mxu0
        %v4869 = vadd.f32 %v4708, %v4868
        %v4870 = vpop.f32.mrb[0].mxu0
        %v4871 = vpop.f32.mrb[0].mxu0
        %v4872 = vadd.f32 %v4711, %v4871
        %v4873 = vpop.f32.mrb[0].mxu0
        %4874 = vmatprep.mubr.bf16.mxu0 %v3968
        %4875 = vmatmul.mubr.bf16.gmra.mrb[0].mxu0 %v3967
        %v4876 = vpop.f32.mrb[0].mxu0
        %v4877 = vadd.f32 %v4716, %v4876
        %v4878 = vpop.f32.mrb[0].mxu0
        %v4879 = vpop.f32.mrb[0].mxu0
        %v4880 = vadd.f32 %v4719, %v4879
        %v4881 = vpop.f32.mrb[0].mxu0
        %4882 = vmatprep.mubr.bf16.mxu0 %v3977
        %4883 = vmatmul.mubr.bf16.gmra.mrb[0].mxu0 %v3976
        %v4884 = vpop.f32.mrb[0].mxu0
        %v4885 = vadd.f32 %v4724, %v4884
        %v4886 = vpop.f32.mrb[0].mxu0
        %v4887 = vpop.f32.mrb[0].mxu0
        %v4888 = vadd.f32 %v4727, %v4887
        %v4889 = vpop.f32.mrb[0].mxu0
        %4890 = vmatprep.mubr.bf16.mxu0 %v3986
        %4891 = vmatmul.mubr.bf16.gmra.mrb[0].mxu0 %v3985
        %v4892 = vpop.f32.mrb[0].mxu0
        %v4893 = vadd.f32 %v4732, %v4892
        %v4894 = vpop.f32.mrb[0].mxu0
        %v4895 = vpop.f32.mrb[0].mxu0
        %v4896 = vadd.f32 %v4735, %v4895
        %v4897 = vpop.f32.mrb[0].mxu0
        %4898 = vmatprep.mubr.bf16.mxu0 %v3995
        %4899 = vmatmul.mubr.bf16.gmra.mrb[0].mxu0 %v3994
        %v4900 = vpop.f32.mrb[0].mxu0
        %v4901 = vadd.f32 %v4740, %v4900
        %v4902 = vpop.f32.mrb[0].mxu0
        %v4903 = vpop.f32.mrb[0].mxu0
        %v4904 = vadd.f32 %v4743, %v4903
        %v4905 = vpop.f32.mrb[0].mxu0
        %4906 = vmatprep.mubr.bf16.mxu0 %v4004
        %4907 = vmatmul.mubr.bf16.gmra.mrb[0].mxu0 %v4003
        %v4908 = vpop.f32.mrb[0].mxu0
        %v4909 = vadd.f32 %v4748, %v4908
        %v4910 = vpop.f32.mrb[0].mxu0
        %v4911 = vpop.f32.mrb[0].mxu0
        %v4912 = vadd.f32 %v4751, %v4911
        %v4913 = vpop.f32.mrb[0].mxu0
        %4914 = vmatprep.mubr.bf16.mxu0 %v4013
        %4915 = vmatmul.mubr.bf16.gmra.mrb[0].mxu0 %v4012
        %v4916 = vpop.f32.mrb[0].mxu0
        %v4917 = vadd.f32 %v4756, %v4916
        %v4918 = vpop.f32.mrb[0].mxu0
        %v4919 = vpop.f32.mrb[0].mxu0
        %v4920 = vadd.f32 %v4759, %v4919
        %v4921 = vpop.f32.mrb[0].mxu0
        %4922 = vmatprep.mubr.bf16.mxu0 %v4022
        %4923 = vmatmul.mubr.bf16.gmra.mrb[0].mxu0 %v4021
        %v4924 = vpop.f32.mrb[0].mxu0
        %v4925 = vadd.f32 %v4764, %v4924
        %v4926 = vpop.f32.mrb[0].mxu0
        %v4927 = vpop.f32.mrb[0].mxu0
        %v4928 = vadd.f32 %v4767, %v4927
        %v4929 = vpop.f32.mrb[0].mxu0
        %4930 = vmatprep.mubr.bf16.mxu0 %v4031
        %4931 = vmatmul.mubr.bf16.gmra.mrb[0].mxu0 %v4030
        %v4932 = vpop.f32.mrb[0].mxu0
        %v4933 = vadd.f32 %v4772, %v4932
        %v4934 = vpop.f32.mrb[0].mxu0
        %v4935 = vpop.f32.mrb[0].mxu0
        %v4936 = vadd.f32 %v4775, %v4935
        %v4937 = vpop.f32.mrb[0].mxu0
        %4938 = vmatprep.mubr.bf16.mxu0 %v4040
        %4939 = vmatmul.mubr.bf16.gmra.mrb[0].mxu0 %v4039
        %v4940 = vpop.f32.mrb[0].mxu0
        %v4941 = vadd.f32 %v4780, %v4940
        %v4942 = vpop.f32.mrb[0].mxu0
        %v4943 = vpop.f32.mrb[0].mxu0
        %v4944 = vadd.f32 %v4783, %v4943
        %v4945 = vpop.f32.mrb[0].mxu0
        %4946 = vmatprep.mubr.bf16.mxu0 %v4049
        %4947 = vmatmul.mubr.bf16.gmra.mrb[0].mxu0 %v4048
        %v4948 = vpop.f32.mrb[0].mxu0
        %v4949 = vadd.f32 %v4788, %v4948
        %v4950 = vpop.f32.mrb[0].mxu0
        %v4951 = vpop.f32.mrb[0].mxu0
        %v4952 = vadd.f32 %v4791, %v4951
        %v4953 = vpop.f32.mrb[0].mxu0
        %4954 = vmatprep.mubr.bf16.mxu0 %v4058
        %4955 = vmatmul.mubr.bf16.gmra.mrb[0].mxu0 %v4057
        %v4956 = vpop.f32.mrb[0].mxu0
        %v4957 = vadd.f32 %v4796, %v4956
        %v4958 = vpop.f32.mrb[0].mxu0
        %v4959 = vpop.f32.mrb[0].mxu0
        %v4960 = vadd.f32 %v4799, %v4959
        %v4961 = vpop.f32.mrb[0].mxu0
        %4962 = vmatprep.mubr.bf16.mxu0 %v4067
        %4963 = vmatmul.mubr.bf16.gmra.mrb[0].mxu0 %v4066
        %v4964 = vpop.f32.mrb[0].mxu0
        %v4965 = vadd.f32 %v4804, %v4964
        %v4966 = vpop.f32.mrb[0].mxu0
        %v4967 = vpop.f32.mrb[0].mxu0
        %v4968 = vadd.f32 %v4807, %v4967
        %v4969 = vpop.f32.mrb[0].mxu0
        %4970 = vdwg.mxu0
        %4971 = vmatprep.subr.bf16.mxu0 0
        %4972 = vmatpush1.bf16.msra.mxu0 %v4537
        %4973 = vmatprep.subr.bf16.mxu0 0
        %4974 = vmatpush1.bf16.msra.mxu0 %v4538
        %4975 = vmatprep.subr.bf16.mxu0 0
        %4976 = vmatpush1.bf16.msra.mxu0 %v4539
        %4977 = vmatprep.subr.bf16.mxu0 0
        %4978 = vmatpush1.bf16.msra.mxu0 %v4540
        %4979 = vmatprep.subr.bf16.mxu0 0
        %4980 = vmatpush1.bf16.msra.mxu0 %v4541
        %4981 = vmatprep.subr.bf16.mxu0 0
        %4982 = vmatpush1.bf16.msra.mxu0 %v4542
        %4983 = vmatprep.subr.bf16.mxu0 0
        %4984 = vmatpush1.bf16.msra.mxu0 %v4543
        %4985 = vmatprep.subr.bf16.mxu0 0
        %4986 = vmatpush1.bf16.msra.mxu0 %v4544
        %4987 = vmatprep.subr.bf16.mxu0 0
        %4988 = vmatpush1.bf16.msra.mxu0 %v4545
        %4989 = vmatprep.subr.bf16.mxu0 0
        %4990 = vmatpush1.bf16.msra.mxu0 %v4546
        %4991 = vmatprep.subr.bf16.mxu0 0
        %4992 = vmatpush1.bf16.msra.mxu0 %v4547
        %4993 = vmatprep.subr.bf16.mxu0 0
        %4994 = vmatpush1.bf16.msra.mxu0 %v4548
        %4995 = vmatprep.subr.bf16.mxu0 0
        %4996 = vmatpush1.bf16.msra.mxu0 %v4549
        %4997 = vmatprep.subr.bf16.mxu0 0
        %4998 = vmatpush1.bf16.msra.mxu0 %v4550
        %4999 = vmatprep.subr.bf16.mxu0 0
        %5000 = vmatpush1.bf16.msra.mxu0 %v4551
        %5001 = vmatprep.subr.bf16.mxu0 0
        %5002 = vmatpush1.bf16.msra.mxu0 %v4552
        %5003 = vmatprep.mubr.bf16.mxu0 %v3934
        %5004 = vmatmul.mubr.bf16.gmra.mrb[0].mxu0 %v3933
        %v5005 = vpop.f32.mrb[0].mxu0
        %v5006 = vadd.f32 %v4845, %v5005
        %v5007 = vpop.f32.mrb[0].mxu0
        %v5008 = vpop.f32.mrb[0].mxu0
        %v5009 = vadd.f32 %v4848, %v5008
        %v5010 = vpop.f32.mrb[0].mxu0
        %5011 = vmatprep.mubr.bf16.mxu0 %v3943
        %5012 = vmatmul.mubr.bf16.gmra.mrb[0].mxu0 %v3942
        %v5013 = vpop.f32.mrb[0].mxu0
        %v5014 = vadd.f32 %v4853, %v5013
        %v5015 = vpop.f32.mrb[0].mxu0
        %v5016 = vpop.f32.mrb[0].mxu0
        %v5017 = vadd.f32 %v4856, %v5016
        %v5018 = vpop.f32.mrb[0].mxu0
        %5019 = vmatprep.mubr.bf16.mxu0 %v3952
        %5020 = vmatmul.mubr.bf16.gmra.mrb[0].mxu0 %v3951
        %v5021 = vpop.f32.mrb[0].mxu0
        %v5022 = vadd.f32 %v4861, %v5021
        %v5023 = vpop.f32.mrb[0].mxu0
        %v5024 = vpop.f32.mrb[0].mxu0
        %v5025 = vadd.f32 %v4864, %v5024
        %v5026 = vpop.f32.mrb[0].mxu0
        %5027 = vmatprep.mubr.bf16.mxu0 %v3961
        %5028 = vmatmul.mubr.bf16.gmra.mrb[0].mxu0 %v3960
        %v5029 = vpop.f32.mrb[0].mxu0
        %v5030 = vadd.f32 %v4869, %v5029
        %v5031 = vpop.f32.mrb[0].mxu0
        %v5032 = vpop.f32.mrb[0].mxu0
        %v5033 = vadd.f32 %v4872, %v5032
        %v5034 = vpop.f32.mrb[0].mxu0
        %5035 = vmatprep.mubr.bf16.mxu0 %v3970
        %5036 = vmatmul.mubr.bf16.gmra.mrb[0].mxu0 %v3969
        %v5037 = vpop.f32.mrb[0].mxu0
        %v5038 = vadd.f32 %v4877, %v5037
        %v5039 = vpop.f32.mrb[0].mxu0
        %v5040 = vpop.f32.mrb[0].mxu0
        %v5041 = vadd.f32 %v4880, %v5040
        %v5042 = vpop.f32.mrb[0].mxu0
        %5043 = vmatprep.mubr.bf16.mxu0 %v3979
        %5044 = vmatmul.mubr.bf16.gmra.mrb[0].mxu0 %v3978
        %v5045 = vpop.f32.mrb[0].mxu0
        %v5046 = vadd.f32 %v4885, %v5045
        %v5047 = vpop.f32.mrb[0].mxu0
        %v5048 = vpop.f32.mrb[0].mxu0
        %v5049 = vadd.f32 %v4888, %v5048
        %v5050 = vpop.f32.mrb[0].mxu0
        %5051 = vmatprep.mubr.bf16.mxu0 %v3988
        %5052 = vmatmul.mubr.bf16.gmra.mrb[0].mxu0 %v3987
        %v5053 = vpop.f32.mrb[0].mxu0
        %v5054 = vadd.f32 %v4893, %v5053
        %v5055 = vpop.f32.mrb[0].mxu0
        %v5056 = vpop.f32.mrb[0].mxu0
        %v5057 = vadd.f32 %v4896, %v5056
        %v5058 = vpop.f32.mrb[0].mxu0
        %5059 = vmatprep.mubr.bf16.mxu0 %v3997
        %5060 = vmatmul.mubr.bf16.gmra.mrb[0].mxu0 %v3996
        %v5061 = vpop.f32.mrb[0].mxu0
        %v5062 = vadd.f32 %v4901, %v5061
        %v5063 = vpop.f32.mrb[0].mxu0
        %v5064 = vpop.f32.mrb[0].mxu0
        %v5065 = vadd.f32 %v4904, %v5064
        %v5066 = vpop.f32.mrb[0].mxu0
        %5067 = vmatprep.mubr.bf16.mxu0 %v4006
        %5068 = vmatmul.mubr.bf16.gmra.mrb[0].mxu0 %v4005
        %v5069 = vpop.f32.mrb[0].mxu0
        %v5070 = vadd.f32 %v4909, %v5069
        %v5071 = vpop.f32.mrb[0].mxu0
        %v5072 = vpop.f32.mrb[0].mxu0
        %v5073 = vadd.f32 %v4912, %v5072
        %v5074 = vpop.f32.mrb[0].mxu0
        %5075 = vmatprep.mubr.bf16.mxu0 %v4015
        %5076 = vmatmul.mubr.bf16.gmra.mrb[0].mxu0 %v4014
        %v5077 = vpop.f32.mrb[0].mxu0
        %v5078 = vadd.f32 %v4917, %v5077
        %v5079 = vpop.f32.mrb[0].mxu0
        %v5080 = vpop.f32.mrb[0].mxu0
        %v5081 = vadd.f32 %v4920, %v5080
        %v5082 = vpop.f32.mrb[0].mxu0
        %5083 = vmatprep.mubr.bf16.mxu0 %v4024
        %5084 = vmatmul.mubr.bf16.gmra.mrb[0].mxu0 %v4023
        %v5085 = vpop.f32.mrb[0].mxu0
        %v5086 = vadd.f32 %v4925, %v5085
        %v5087 = vpop.f32.mrb[0].mxu0
        %v5088 = vpop.f32.mrb[0].mxu0
        %v5089 = vadd.f32 %v4928, %v5088
        %v5090 = vpop.f32.mrb[0].mxu0
        %5091 = vmatprep.mubr.bf16.mxu0 %v4033
        %5092 = vmatmul.mubr.bf16.gmra.mrb[0].mxu0 %v4032
        %v5093 = vpop.f32.mrb[0].mxu0
        %v5094 = vadd.f32 %v4933, %v5093
        %v5095 = vpop.f32.mrb[0].mxu0
        %v5096 = vpop.f32.mrb[0].mxu0
        %v5097 = vadd.f32 %v4936, %v5096
        %v5098 = vpop.f32.mrb[0].mxu0
        %5099 = vmatprep.mubr.bf16.mxu0 %v4042
        %5100 = vmatmul.mubr.bf16.gmra.mrb[0].mxu0 %v4041
        %v5101 = vpop.f32.mrb[0].mxu0
        %v5102 = vadd.f32 %v4941, %v5101
        %v5103 = vpop.f32.mrb[0].mxu0
        %v5104 = vpop.f32.mrb[0].mxu0
        %v5105 = vadd.f32 %v4944, %v5104
        %v5106 = vpop.f32.mrb[0].mxu0
        %5107 = vmatprep.mubr.bf16.mxu0 %v4051
        %5108 = vmatmul.mubr.bf16.gmra.mrb[0].mxu0 %v4050
        %v5109 = vpop.f32.mrb[0].mxu0
        %v5110 = vadd.f32 %v4949, %v5109
        %v5111 = vpop.f32.mrb[0].mxu0
        %v5112 = vpop.f32.mrb[0].mxu0
        %v5113 = vadd.f32 %v4952, %v5112
        %v5114 = vpop.f32.mrb[0].mxu0
        %5115 = vmatprep.mubr.bf16.mxu0 %v4060
        %5116 = vmatmul.mubr.bf16.gmra.mrb[0].mxu0 %v4059
        %v5117 = vpop.f32.mrb[0].mxu0
        %v5118 = vadd.f32 %v4957, %v5117
        %v5119 = vpop.f32.mrb[0].mxu0
        %v5120 = vpop.f32.mrb[0].mxu0
        %v5121 = vadd.f32 %v4960, %v5120
        %v5122 = vpop.f32.mrb[0].mxu0
        %5123 = vmatprep.mubr.bf16.mxu0 %v4069
        %5124 = vmatmul.mubr.bf16.gmra.mrb[0].mxu0 %v4068
        %v5125 = vpop.f32.mrb[0].mxu0
        %v5126 = vadd.f32 %v4965, %v5125
        %v5127 = vpop.f32.mrb[0].mxu0
        %v5128 = vpop.f32.mrb[0].mxu0
        %v5129 = vadd.f32 %v4968, %v5128
        %v5130 = vpop.f32.mrb[0].mxu0
        %5131 = vdwg.mxu0
        %5132 = vmatprep.subr.bf16.mxu0 0
        %5133 = vmatpush1.bf16.msra.mxu0 %v4553
        %5134 = vmatprep.subr.bf16.mxu0 0
        %5135 = vmatpush1.bf16.msra.mxu0 %v4554
        %5136 = vmatprep.subr.bf16.mxu0 0
        %5137 = vmatpush1.bf16.msra.mxu0 %v4555
        %5138 = vmatprep.subr.bf16.mxu0 0
        %5139 = vmatpush1.bf16.msra.mxu0 %v4556
        %5140 = vmatprep.subr.bf16.mxu0 0
        %5141 = vmatpush1.bf16.msra.mxu0 %v4557
        %5142 = vmatprep.subr.bf16.mxu0 0
        %5143 = vmatpush1.bf16.msra.mxu0 %v4558
        %5144 = vmatprep.subr.bf16.mxu0 0
        %5145 = vmatpush1.bf16.msra.mxu0 %v4559
        %5146 = vmatprep.subr.bf16.mxu0 0
        %5147 = vmatpush1.bf16.msra.mxu0 %v4560
        %5148 = vmatprep.subr.bf16.mxu0 0
        %5149 = vmatpush1.bf16.msra.mxu0 %v4561
        %5150 = vmatprep.subr.bf16.mxu0 0
        %5151 = vmatpush1.bf16.msra.mxu0 %v4562
        %5152 = vmatprep.subr.bf16.mxu0 0
        %5153 = vmatpush1.bf16.msra.mxu0 %v4563
        %5154 = vmatprep.subr.bf16.mxu0 0
        %5155 = vmatpush1.bf16.msra.mxu0 %v4564
        %5156 = vmatprep.subr.bf16.mxu0 0
        %5157 = vmatpush1.bf16.msra.mxu0 %v4565
        %5158 = vmatprep.subr.bf16.mxu0 0
        %5159 = vmatpush1.bf16.msra.mxu0 %v4566
        %5160 = vmatprep.subr.bf16.mxu0 0
        %5161 = vmatpush1.bf16.msra.mxu0 %v4567
        %5162 = vmatprep.subr.bf16.mxu0 0
        %5163 = vmatpush1.bf16.msra.mxu0 %v4568
        %5164 = vmatprep.mubr.bf16.mxu0 %v3936
        %5165 = vmatmul.mubr.bf16.gmra.mrb[0].mxu0 %v3935
        %v5166 = vpop.f32.mrb[0].mxu0
        %v5167 = vadd.f32 %v5006, %v5166
        %v5168 = vpop.f32.mrb[0].mxu0
        %v5169 = vpop.f32.mrb[0].mxu0
        %v5170 = vadd.f32 %v5009, %v5169
        %v5171 = vpop.f32.mrb[0].mxu0
        %5172 = vmatprep.mubr.bf16.mxu0 %v3945
        %5173 = vmatmul.mubr.bf16.gmra.mrb[0].mxu0 %v3944
        %v5174 = vpop.f32.mrb[0].mxu0
        %v5175 = vadd.f32 %v5014, %v5174
        %v5176 = vpop.f32.mrb[0].mxu0
        %v5177 = vpop.f32.mrb[0].mxu0
        %v5178 = vadd.f32 %v5017, %v5177
        %v5179 = vpop.f32.mrb[0].mxu0
        %5180 = vmatprep.mubr.bf16.mxu0 %v3954
        %5181 = vmatmul.mubr.bf16.gmra.mrb[0].mxu0 %v3953
        %v5182 = vpop.f32.mrb[0].mxu0
        %v5183 = vadd.f32 %v5022, %v5182
        %v5184 = vpop.f32.mrb[0].mxu0
        %v5185 = vpop.f32.mrb[0].mxu0
        %v5186 = vadd.f32 %v5025, %v5185
        %v5187 = vpop.f32.mrb[0].mxu0
        %5188 = vmatprep.mubr.bf16.mxu0 %v3963
        %5189 = vmatmul.mubr.bf16.gmra.mrb[0].mxu0 %v3962
        %v5190 = vpop.f32.mrb[0].mxu0
        %v5191 = vadd.f32 %v5030, %v5190
        %v5192 = vpop.f32.mrb[0].mxu0
        %v5193 = vpop.f32.mrb[0].mxu0
        %v5194 = vadd.f32 %v5033, %v5193
        %v5195 = vpop.f32.mrb[0].mxu0
        %5196 = vmatprep.mubr.bf16.mxu0 %v3972
        %5197 = vmatmul.mubr.bf16.gmra.mrb[0].mxu0 %v3971
        %v5198 = vpop.f32.mrb[0].mxu0
        %v5199 = vadd.f32 %v5038, %v5198
        %v5200 = vpop.f32.mrb[0].mxu0
        %v5201 = vpop.f32.mrb[0].mxu0
        %v5202 = vadd.f32 %v5041, %v5201
        %v5203 = vpop.f32.mrb[0].mxu0
        %5204 = vmatprep.mubr.bf16.mxu0 %v3981
        %5205 = vmatmul.mubr.bf16.gmra.mrb[0].mxu0 %v3980
        %v5206 = vpop.f32.mrb[0].mxu0
        %v5207 = vadd.f32 %v5046, %v5206
        %v5208 = vpop.f32.mrb[0].mxu0
        %v5209 = vpop.f32.mrb[0].mxu0
        %v5210 = vadd.f32 %v5049, %v5209
        %v5211 = vpop.f32.mrb[0].mxu0
        %5212 = vmatprep.mubr.bf16.mxu0 %v3990
        %5213 = vmatmul.mubr.bf16.gmra.mrb[0].mxu0 %v3989
        %v5214 = vpop.f32.mrb[0].mxu0
        %v5215 = vadd.f32 %v5054, %v5214
        %v5216 = vpop.f32.mrb[0].mxu0
        %v5217 = vpop.f32.mrb[0].mxu0
        %v5218 = vadd.f32 %v5057, %v5217
        %v5219 = vpop.f32.mrb[0].mxu0
        %5220 = vmatprep.mubr.bf16.mxu0 %v3999
        %5221 = vmatmul.mubr.bf16.gmra.mrb[0].mxu0 %v3998
        %v5222 = vpop.f32.mrb[0].mxu0
        %v5223 = vadd.f32 %v5062, %v5222
        %v5224 = vpop.f32.mrb[0].mxu0
        %v5225 = vpop.f32.mrb[0].mxu0
        %v5226 = vadd.f32 %v5065, %v5225
        %v5227 = vpop.f32.mrb[0].mxu0
        %5228 = vmatprep.mubr.bf16.mxu0 %v4008
        %5229 = vmatmul.mubr.bf16.gmra.mrb[0].mxu0 %v4007
        %v5230 = vpop.f32.mrb[0].mxu0
        %v5231 = vadd.f32 %v5070, %v5230
        %v5232 = vpop.f32.mrb[0].mxu0
        %v5233 = vpop.f32.mrb[0].mxu0
        %v5234 = vadd.f32 %v5073, %v5233
        %v5235 = vpop.f32.mrb[0].mxu0
        %5236 = vmatprep.mubr.bf16.mxu0 %v4017
        %5237 = vmatmul.mubr.bf16.gmra.mrb[0].mxu0 %v4016
        %v5238 = vpop.f32.mrb[0].mxu0
        %v5239 = vadd.f32 %v5078, %v5238
        %v5240 = vpop.f32.mrb[0].mxu0
        %v5241 = vpop.f32.mrb[0].mxu0
        %v5242 = vadd.f32 %v5081, %v5241
        %v5243 = vpop.f32.mrb[0].mxu0
        %5244 = vmatprep.mubr.bf16.mxu0 %v4026
        %5245 = vmatmul.mubr.bf16.gmra.mrb[0].mxu0 %v4025
        %v5246 = vpop.f32.mrb[0].mxu0
        %v5247 = vadd.f32 %v5086, %v5246
        %v5248 = vpop.f32.mrb[0].mxu0
        %v5249 = vpop.f32.mrb[0].mxu0
        %v5250 = vadd.f32 %v5089, %v5249
        %v5251 = vpop.f32.mrb[0].mxu0
        %5252 = vmatprep.mubr.bf16.mxu0 %v4035
        %5253 = vmatmul.mubr.bf16.gmra.mrb[0].mxu0 %v4034
        %v5254 = vpop.f32.mrb[0].mxu0
        %v5255 = vadd.f32 %v5094, %v5254
        %v5256 = vpop.f32.mrb[0].mxu0
        %v5257 = vpop.f32.mrb[0].mxu0
        %v5258 = vadd.f32 %v5097, %v5257
        %v5259 = vpop.f32.mrb[0].mxu0
        %5260 = vmatprep.mubr.bf16.mxu0 %v4044
        %5261 = vmatmul.mubr.bf16.gmra.mrb[0].mxu0 %v4043
        %v5262 = vpop.f32.mrb[0].mxu0
        %v5263 = vadd.f32 %v5102, %v5262
        %v5264 = vpop.f32.mrb[0].mxu0
        %v5265 = vpop.f32.mrb[0].mxu0
        %v5266 = vadd.f32 %v5105, %v5265
        %v5267 = vpop.f32.mrb[0].mxu0
        %5268 = vmatprep.mubr.bf16.mxu0 %v4053
        %5269 = vmatmul.mubr.bf16.gmra.mrb[0].mxu0 %v4052
        %v5270 = vpop.f32.mrb[0].mxu0
        %v5271 = vadd.f32 %v5110, %v5270
        %v5272 = vpop.f32.mrb[0].mxu0
        %v5273 = vpop.f32.mrb[0].mxu0
        %v5274 = vadd.f32 %v5113, %v5273
        %v5275 = vpop.f32.mrb[0].mxu0
        %5276 = vmatprep.mubr.bf16.mxu0 %v4062
        %5277 = vmatmul.mubr.bf16.gmra.mrb[0].mxu0 %v4061
        %v5278 = vpop.f32.mrb[0].mxu0
        %v5279 = vadd.f32 %v5118, %v5278
        %v5280 = vpop.f32.mrb[0].mxu0
        %v5281 = vpop.f32.mrb[0].mxu0
        %v5282 = vadd.f32 %v5121, %v5281
        %v5283 = vpop.f32.mrb[0].mxu0
        %5284 = vmatprep.mubr.bf16.mxu0 %v4071
        %5285 = vmatmul.mubr.bf16.gmra.mrb[0].mxu0 %v4070
        %v5286 = vpop.f32.mrb[0].mxu0
        %v5287 = vadd.f32 %v5126, %v5286
        %v5288 = vpop.f32.mrb[0].mxu0
        %v5289 = vpop.f32.mrb[0].mxu0
        %v5290 = vadd.f32 %v5129, %v5289
        %v5291 = vpop.f32.mrb[0].mxu0
        %5292 = vdwg.mxu0
        %5293 = vmatprep.subr.bf16.mxu0 0
        %5294 = vmatpush1.bf16.msra.mxu0 %v4569
        %5295 = vmatprep.subr.bf16.mxu0 0
        %5296 = vmatpush1.bf16.msra.mxu0 %v4570
        %5297 = vmatprep.subr.bf16.mxu0 0
        %5298 = vmatpush1.bf16.msra.mxu0 %v4571
        %5299 = vmatprep.subr.bf16.mxu0 0
        %5300 = vmatpush1.bf16.msra.mxu0 %v4572
        %5301 = vmatprep.subr.bf16.mxu0 0
        %5302 = vmatpush1.bf16.msra.mxu0 %v4573
        %5303 = vmatprep.subr.bf16.mxu0 0
        %5304 = vmatpush1.bf16.msra.mxu0 %v4574
        %5305 = vmatprep.subr.bf16.mxu0 0
        %5306 = vmatpush1.bf16.msra.mxu0 %v4575
        %5307 = vmatprep.subr.bf16.mxu0 0
        %5308 = vmatpush1.bf16.msra.mxu0 %v4576
        %5309 = vmatprep.subr.bf16.mxu0 0
        %5310 = vmatpush1.bf16.msra.mxu0 0
        %5311 = vmatprep.subr.bf16.mxu0 0
        %5312 = vmatpush1.bf16.msra.mxu0 0
        %5313 = vmatprep.subr.bf16.mxu0 0
        %5314 = vmatpush1.bf16.msra.mxu0 0
        %5315 = vmatprep.subr.bf16.mxu0 0
        %5316 = vmatpush1.bf16.msra.mxu0 0
        %5317 = vmatprep.subr.bf16.mxu0 0
        %5318 = vmatpush1.bf16.msra.mxu0 0
        %5319 = vmatprep.subr.bf16.mxu0 0
        %5320 = vmatpush1.bf16.msra.mxu0 0
        %5321 = vmatprep.subr.bf16.mxu0 0
        %5322 = vmatpush1.bf16.msra.mxu0 0
        %5323 = vmatprep.subr.bf16.mxu0 0
        %5324 = vmatpush1.bf16.msra.mxu0 0
        %5325 = vmatprep.mubr.bf16.mxu0 0
        %5326 = vmatmul.mubr.bf16.gmra.mrb[0].mxu0 %v3937
        %v5327 = vpop.f32.mrb[0].mxu0
        %v5328 = vadd.f32 %v5167, %v5327
        %v5329 = vpop.f32.mrb[0].mxu0
        %v5330 = vpop.f32.mrb[0].mxu0
        %v5331 = vadd.f32 %v5170, %v5330
        %v5332 = vpop.f32.mrb[0].mxu0
        %5333 = vmatprep.mubr.bf16.mxu0 0
        %5334 = vmatmul.mubr.bf16.gmra.mrb[0].mxu0 %v3946
        %v5335 = vpop.f32.mrb[0].mxu0
        %v5336 = vadd.f32 %v5175, %v5335
        %v5337 = vpop.f32.mrb[0].mxu0
        %v5338 = vpop.f32.mrb[0].mxu0
        %v5339 = vadd.f32 %v5178, %v5338
        %v5340 = vpop.f32.mrb[0].mxu0
        %5341 = vmatprep.mubr.bf16.mxu0 0
        %5342 = vmatmul.mubr.bf16.gmra.mrb[0].mxu0 %v3955
        %v5343 = vpop.f32.mrb[0].mxu0
        %v5344 = vadd.f32 %v5183, %v5343
        %v5345 = vpop.f32.mrb[0].mxu0
        %v5346 = vpop.f32.mrb[0].mxu0
        %v5347 = vadd.f32 %v5186, %v5346
        %v5348 = vpop.f32.mrb[0].mxu0
        %5349 = vmatprep.mubr.bf16.mxu0 0
        %5350 = vmatmul.mubr.bf16.gmra.mrb[0].mxu0 %v3964
        %v5351 = vpop.f32.mrb[0].mxu0
        %v5352 = vadd.f32 %v5191, %v5351
        %v5353 = vpop.f32.mrb[0].mxu0
        %v5354 = vpop.f32.mrb[0].mxu0
        %v5355 = vadd.f32 %v5194, %v5354
        %v5356 = vpop.f32.mrb[0].mxu0
        %5357 = vmatprep.mubr.bf16.mxu0 0
        %5358 = vmatmul.mubr.bf16.gmra.mrb[0].mxu0 %v3973
        %v5359 = vpop.f32.mrb[0].mxu0
        %v5360 = vadd.f32 %v5199, %v5359
        %v5361 = vpop.f32.mrb[0].mxu0
        %v5362 = vpop.f32.mrb[0].mxu0
        %v5363 = vadd.f32 %v5202, %v5362
        %v5364 = vpop.f32.mrb[0].mxu0
        %5365 = vmatprep.mubr.bf16.mxu0 0
        %5366 = vmatmul.mubr.bf16.gmra.mrb[0].mxu0 %v3982
        %v5367 = vpop.f32.mrb[0].mxu0
        %v5368 = vadd.f32 %v5207, %v5367
        %v5369 = vpop.f32.mrb[0].mxu0
        %v5370 = vpop.f32.mrb[0].mxu0
        %v5371 = vadd.f32 %v5210, %v5370
        %v5372 = vpop.f32.mrb[0].mxu0
        %5373 = vmatprep.mubr.bf16.mxu0 0
        %5374 = vmatmul.mubr.bf16.gmra.mrb[0].mxu0 %v3991
        %v5375 = vpop.f32.mrb[0].mxu0
        %v5376 = vadd.f32 %v5215, %v5375
        %v5377 = vpop.f32.mrb[0].mxu0
        %v5378 = vpop.f32.mrb[0].mxu0
        %v5379 = vadd.f32 %v5218, %v5378
        %v5380 = vpop.f32.mrb[0].mxu0
        %5381 = vmatprep.mubr.bf16.mxu0 0
        %5382 = vmatmul.mubr.bf16.gmra.mrb[0].mxu0 %v4000
        %v5383 = vpop.f32.mrb[0].mxu0
        %v5384 = vadd.f32 %v5223, %v5383
        %v5385 = vpop.f32.mrb[0].mxu0
        %v5386 = vpop.f32.mrb[0].mxu0
        %v5387 = vadd.f32 %v5226, %v5386
        %v5388 = vpop.f32.mrb[0].mxu0
        %5389 = vmatprep.mubr.bf16.mxu0 0
        %5390 = vmatmul.mubr.bf16.gmra.mrb[0].mxu0 %v4009
        %v5391 = vpop.f32.mrb[0].mxu0
        %v5392 = vadd.f32 %v5231, %v5391
        %v5393 = vpop.f32.mrb[0].mxu0
        %v5394 = vpop.f32.mrb[0].mxu0
        %v5395 = vadd.f32 %v5234, %v5394
        %v5396 = vpop.f32.mrb[0].mxu0
        %5397 = vmatprep.mubr.bf16.mxu0 0
        %5398 = vmatmul.mubr.bf16.gmra.mrb[0].mxu0 %v4018
        %v5399 = vpop.f32.mrb[0].mxu0
        %v5400 = vadd.f32 %v5239, %v5399
        %v5401 = vpop.f32.mrb[0].mxu0
        %v5402 = vpop.f32.mrb[0].mxu0
        %v5403 = vadd.f32 %v5242, %v5402
        %v5404 = vpop.f32.mrb[0].mxu0
        %5405 = vmatprep.mubr.bf16.mxu0 0
        %5406 = vmatmul.mubr.bf16.gmra.mrb[0].mxu0 %v4027
        %v5407 = vpop.f32.mrb[0].mxu0
        %v5408 = vadd.f32 %v5247, %v5407
        %v5409 = vpop.f32.mrb[0].mxu0
        %v5410 = vpop.f32.mrb[0].mxu0
        %v5411 = vadd.f32 %v5250, %v5410
        %v5412 = vpop.f32.mrb[0].mxu0
        %5413 = vmatprep.mubr.bf16.mxu0 0
        %5414 = vmatmul.mubr.bf16.gmra.mrb[0].mxu0 %v4036
        %v5415 = vpop.f32.mrb[0].mxu0
        %v5416 = vadd.f32 %v5255, %v5415
        %v5417 = vpop.f32.mrb[0].mxu0
        %v5418 = vpop.f32.mrb[0].mxu0
        %v5419 = vadd.f32 %v5258, %v5418
        %v5420 = vpop.f32.mrb[0].mxu0
        %5421 = vmatprep.mubr.bf16.mxu0 0
        %5422 = vmatmul.mubr.bf16.gmra.mrb[0].mxu0 %v4045
        %v5423 = vpop.f32.mrb[0].mxu0
        %v5424 = vadd.f32 %v5263, %v5423
        %v5425 = vpop.f32.mrb[0].mxu0
        %v5426 = vpop.f32.mrb[0].mxu0
        %v5427 = vadd.f32 %v5266, %v5426
        %v5428 = vpop.f32.mrb[0].mxu0
        %5429 = vmatprep.mubr.bf16.mxu0 0
        %5430 = vmatmul.mubr.bf16.gmra.mrb[0].mxu0 %v4054
        %v5431 = vpop.f32.mrb[0].mxu0
        %v5432 = vadd.f32 %v5271, %v5431
        %v5433 = vpop.f32.mrb[0].mxu0
        %v5434 = vpop.f32.mrb[0].mxu0
        %v5435 = vadd.f32 %v5274, %v5434
        %v5436 = vpop.f32.mrb[0].mxu0
        %5437 = vmatprep.mubr.bf16.mxu0 0
        %5438 = vmatmul.mubr.bf16.gmra.mrb[0].mxu0 %v4063
        %v5439 = vpop.f32.mrb[0].mxu0
        %v5440 = vadd.f32 %v5279, %v5439
        %v5441 = vpop.f32.mrb[0].mxu0
        %v5442 = vpop.f32.mrb[0].mxu0
        %v5443 = vadd.f32 %v5282, %v5442
        %v5444 = vpop.f32.mrb[0].mxu0
        %5445 = vmatprep.mubr.bf16.mxu0 0
        %5446 = vmatmul.mubr.bf16.gmra.mrb[0].mxu0 %v4072
        %v5447 = vpop.f32.mrb[0].mxu0
        %v5448 = vadd.f32 %v5287, %v5447
        %v5449 = vpop.f32.mrb[0].mxu0
        %v5450 = vpop.f32.mrb[0].mxu0
        %v5451 = vadd.f32 %v5290, %v5450
        %v5452 = vpop.f32.mrb[0].mxu0
        %5453 = vdwg.mxu0
        %v5454 = vadd.f32 %v5328, %v5331
        %v5455 = vadd.f32 %v5454, %v5336
        %v5456 = vadd.f32 %v5455, %v5339
        %v5457 = vadd.f32 %v5456, %v5344
        %v5458 = vadd.f32 %v5457, %v5347
        %v5459 = vadd.f32 %v5458, %v5352
        %v5460 = vadd.f32 %v5459, %v5355
        %v5461 = vadd.f32 %v5460, %v5360
        %v5462 = vadd.f32 %v5461, %v5363
        %v5463 = vadd.f32 %v5462, %v5368
        %v5464 = vadd.f32 %v5463, %v5371
        %v5465 = vadd.f32 %v5464, %v5376
        %v5466 = vadd.f32 %v5465, %v5379
        %v5467 = vadd.f32 %v5466, %v5384
        %v5468 = vadd.f32 %v5467, %v5387
        %v5469 = vadd.f32 %v5468, %v5392
        %v5470 = vadd.f32 %v5469, %v5395
        %v5471 = vadd.f32 %v5470, %v5400
        %v5472 = vadd.f32 %v5471, %v5403
        %v5473 = vadd.f32 %v5472, %v5408
        %v5474 = vadd.f32 %v5473, %v5411
        %v5475 = vadd.f32 %v5474, %v5416
        %v5476 = vadd.f32 %v5475, %v5419
        %v5477 = vadd.f32 %v5476, %v5424
        %v5478 = vadd.f32 %v5477, %v5427
        %v5479 = vadd.f32 %v5478, %v5432
        %v5480 = vadd.f32 %v5479, %v5435
        %v5481 = vadd.f32 %v5480, %v5440
        %v5482 = vadd.f32 %v5481, %v5443
        %v5483 = vadd.f32 %v5482, %v5448
        %v5484 = vadd.f32 %v5483, %v5451
        %v5485 = vrot.slane %v5484, 4
        %v5486 = vadd.f32 %v5484, %v5485
        %v5487 = vrot.slane %v5486, 2
        %v5488 = vadd.f32 %v5486, %v5487
        %v5489 = vrot.slane %v5488, 1
        %v5490 = vadd.f32 %v5488, %v5489
        %5491 = vst [vmem:[%s316] sm:$0x1] %v5490
        %v5492 = vmul.f32 %v5328, %v5328
        %v5493 = vmul.f32 %v5331, %v5331
        %v5494 = vmul.f32 %v5336, %v5336
        %v5495 = vmul.f32 %v5339, %v5339
        %v5496 = vmul.f32 %v5344, %v5344
        %v5497 = vmul.f32 %v5347, %v5347
        %v5498 = vmul.f32 %v5352, %v5352
        %v5499 = vmul.f32 %v5355, %v5355
        %v5500 = vmul.f32 %v5360, %v5360
        %v5501 = vmul.f32 %v5363, %v5363
        %v5502 = vmul.f32 %v5368, %v5368
        %v5503 = vmul.f32 %v5371, %v5371
        %v5504 = vmul.f32 %v5376, %v5376
        %v5505 = vmul.f32 %v5379, %v5379
        %v5506 = vmul.f32 %v5384, %v5384
        %v5507 = vmul.f32 %v5387, %v5387
        %v5508 = vmul.f32 %v5392, %v5392
        %v5509 = vmul.f32 %v5395, %v5395
        %v5510 = vmul.f32 %v5400, %v5400
        %v5511 = vmul.f32 %v5403, %v5403
        %v5512 = vmul.f32 %v5408, %v5408
        %v5513 = vmul.f32 %v5411, %v5411
        %v5514 = vmul.f32 %v5416, %v5416
        %v5515 = vmul.f32 %v5419, %v5419
        %v5516 = vmul.f32 %v5424, %v5424
        %v5517 = vmul.f32 %v5427, %v5427
        %v5518 = vmul.f32 %v5432, %v5432
        %v5519 = vmul.f32 %v5435, %v5435
        %v5520 = vmul.f32 %v5440, %v5440
        %v5521 = vmul.f32 %v5443, %v5443
        %v5522 = vmul.f32 %v5448, %v5448
        %v5523 = vmul.f32 %v5451, %v5451
        %v5524 = vadd.f32 %v5492, %v5493
        %v5525 = vadd.f32 %v5524, %v5494
        %v5526 = vadd.f32 %v5525, %v5495
        %v5527 = vadd.f32 %v5526, %v5496
        %v5528 = vadd.f32 %v5527, %v5497
        %v5529 = vadd.f32 %v5528, %v5498
        %v5530 = vadd.f32 %v5529, %v5499
        %v5531 = vadd.f32 %v5530, %v5500
        %v5532 = vadd.f32 %v5531, %v5501
        %v5533 = vadd.f32 %v5532, %v5502
        %v5534 = vadd.f32 %v5533, %v5503
        %v5535 = vadd.f32 %v5534, %v5504
        %v5536 = vadd.f32 %v5535, %v5505
        %v5537 = vadd.f32 %v5536, %v5506
        %v5538 = vadd.f32 %v5537, %v5507
        %v5539 = vadd.f32 %v5538, %v5508
        %v5540 = vadd.f32 %v5539, %v5509
        %v5541 = vadd.f32 %v5540, %v5510
        %v5542 = vadd.f32 %v5541, %v5511
        %v5543 = vadd.f32 %v5542, %v5512
        %v5544 = vadd.f32 %v5543, %v5513
        %v5545 = vadd.f32 %v5544, %v5514
        %v5546 = vadd.f32 %v5545, %v5515
        %v5547 = vadd.f32 %v5546, %v5516
        %v5548 = vadd.f32 %v5547, %v5517
        %v5549 = vadd.f32 %v5548, %v5518
        %v5550 = vadd.f32 %v5549, %v5519
        %v5551 = vadd.f32 %v5550, %v5520
        %v5552 = vadd.f32 %v5551, %v5521
        %v5553 = vadd.f32 %v5552, %v5522
        %v5554 = vadd.f32 %v5553, %v5523
        %v5555 = vrot.slane %v5554, 4
        %v5556 = vadd.f32 %v5554, %v5555
        %v5557 = vrot.slane %v5556, 2
        %v5558 = vadd.f32 %v5556, %v5557
        %v5559 = vrot.slane %v5558, 1
        %v5560 = vadd.f32 %v5558, %v5559
        %5561 = vst [vmem:[%s322] sm:$0x1] %v5560
        %v5562 = vpack.c.bf16 %v5331, %v5328
        %v5563 = vpack.c.bf16 %v5339, %v5336
        %v5564 = vpack.c.bf16 %v5347, %v5344
        %v5565 = vpack.c.bf16 %v5355, %v5352
        %v5566 = vpack.c.bf16 %v5363, %v5360
        %v5567 = vpack.c.bf16 %v5371, %v5368
        %v5568 = vpack.c.bf16 %v5379, %v5376
        %v5569 = vpack.c.bf16 %v5387, %v5384
        %v5570 = vpack.c.bf16 %v5395, %v5392
        %v5571 = vpack.c.bf16 %v5403, %v5400
        %v5572 = vpack.c.bf16 %v5411, %v5408
        %v5573 = vpack.c.bf16 %v5419, %v5416
        %v5574 = vpack.c.bf16 %v5427, %v5424
        %v5575 = vpack.c.bf16 %v5435, %v5432
        %v5576 = vpack.c.bf16 %v5443, %v5440
        %v5577 = vpack.c.bf16 %v5451, %v5448
        %v5594 = vunpack.c.l.b16 %v5562
        %v5595 = vunpack.c.h.b16 %v5562
        %v5596 = vunpack.c.l.b16 %v5563
        %v5597 = vunpack.c.h.b16 %v5563
        %v5598 = vunpack.c.l.b16 %v5564
        %v5599 = vunpack.c.h.b16 %v5564
        %v5600 = vunpack.c.l.b16 %v5565
        %v5601 = vunpack.c.h.b16 %v5565
        %v5602 = vunpack.c.l.b16 %v5566
        %v5603 = vunpack.c.h.b16 %v5566
        %v5604 = vunpack.c.l.b16 %v5567
        %v5605 = vunpack.c.h.b16 %v5567
        %v5606 = vunpack.c.l.b16 %v5568
        %v5607 = vunpack.c.h.b16 %v5568
        %v5608 = vunpack.c.l.b16 %v5569
        %v5609 = vunpack.c.h.b16 %v5569
        %v5610 = vunpack.c.l.b16 %v5570
        %v5611 = vunpack.c.h.b16 %v5570
        %v5612 = vunpack.c.l.b16 %v5571
        %v5613 = vunpack.c.h.b16 %v5571
        %v5614 = vunpack.c.l.b16 %v5572
        %v5615 = vunpack.c.h.b16 %v5572
        %v5616 = vunpack.c.l.b16 %v5573
        %v5617 = vunpack.c.h.b16 %v5573
        %v5618 = vunpack.c.l.b16 %v5574
        %v5619 = vunpack.c.h.b16 %v5574
        %v5620 = vunpack.c.l.b16 %v5575
        %v5621 = vunpack.c.h.b16 %v5575
        %v5622 = vunpack.c.l.b16 %v5576
        %v5623 = vunpack.c.h.b16 %v5576
        %v5624 = vunpack.c.l.b16 %v5577
        %v5625 = vunpack.c.h.b16 %v5577
        %v5626 = vpack.c.b16 %v5594, %v5594
        %v5627 = vpack.c.b16 %v5595, %v5595
        %v5628 = vpack.c.b16 %v5596, %v5596
        %v5629 = vpack.c.b16 %v5597, %v5597
        %v5630 = vpack.c.b16 %v5598, %v5598
        %v5631 = vpack.c.b16 %v5599, %v5599
        %v5632 = vpack.c.b16 %v5600, %v5600
        %v5633 = vpack.c.b16 %v5601, %v5601
        %v5634 = vpack.c.b16 %v5602, %v5602
        %v5635 = vpack.c.b16 %v5603, %v5603
        %v5636 = vpack.c.b16 %v5604, %v5604
        %v5637 = vpack.c.b16 %v5605, %v5605
        %v5638 = vpack.c.b16 %v5606, %v5606
        %v5639 = vpack.c.b16 %v5607, %v5607
        %v5640 = vpack.c.b16 %v5608, %v5608
        %v5641 = vpack.c.b16 %v5609, %v5609
        %v5642 = vpack.c.b16 %v5610, %v5610
        %v5643 = vpack.c.b16 %v5611, %v5611
        %v5644 = vpack.c.b16 %v5612, %v5612
        %v5645 = vpack.c.b16 %v5613, %v5613
        %v5646 = vpack.c.b16 %v5614, %v5614
        %v5647 = vpack.c.b16 %v5615, %v5615
        %v5648 = vpack.c.b16 %v5616, %v5616
        %v5649 = vpack.c.b16 %v5617, %v5617
        %v5650 = vpack.c.b16 %v5618, %v5618
        %v5651 = vpack.c.b16 %v5619, %v5619
        %v5652 = vpack.c.b16 %v5620, %v5620
        %v5653 = vpack.c.b16 %v5621, %v5621
        %v5654 = vpack.c.b16 %v5622, %v5622
        %v5655 = vpack.c.b16 %v5623, %v5623
        %v5656 = vpack.c.b16 %v5624, %v5624
        %v5657 = vpack.c.b16 %v5625, %v5625
        %5690 = vst [vmem:[%s310] sm:$0xf] %v5626
        %5691 = vst [vmem:[%s310 + $0x4] sm:$0xf] %v5627
        %5692 = vst [vmem:[%s310 + $0x8] sm:$0xf] %v5628
        %5693 = vst [vmem:[%s310 + $0xc] sm:$0xf] %v5629
        %5694 = vst [vmem:[%s310 + $0x10] sm:$0xf] %v5630
        %5695 = vst [vmem:[%s310 + $0x14] sm:$0xf] %v5631
        %5696 = vst [vmem:[%s310 + $0x18] sm:$0xf] %v5632
        %5697 = vst [vmem:[%s310 + $0x1c] sm:$0xf] %v5633
        %5698 = vst [vmem:[%s310 + $0x20] sm:$0xf] %v5634
        %5699 = vst [vmem:[%s310 + $0x24] sm:$0xf] %v5635
        %5700 = vst [vmem:[%s310 + $0x28] sm:$0xf] %v5636
        %5701 = vst [vmem:[%s310 + $0x2c] sm:$0xf] %v5637
        %5702 = vst [vmem:[%s310 + $0x30] sm:$0xf] %v5638
        %5703 = vst [vmem:[%s310 + $0x34] sm:$0xf] %v5639
        %5704 = vst [vmem:[%s310 + $0x38] sm:$0xf] %v5640
        %5705 = vst [vmem:[%s310 + $0x3c] sm:$0xf] %v5641
        %5706 = vst [vmem:[%s310 + $0x40] sm:$0xf] %v5642
        %5707 = vst [vmem:[%s310 + $0x44] sm:$0xf] %v5643
        %5708 = vst [vmem:[%s310 + $0x48] sm:$0xf] %v5644
        %5709 = vst [vmem:[%s310 + $0x4c] sm:$0xf] %v5645
        %5710 = vst [vmem:[%s310 + $0x50] sm:$0xf] %v5646
        %5711 = vst [vmem:[%s310 + $0x54] sm:$0xf] %v5647
        %5712 = vst [vmem:[%s310 + $0x58] sm:$0xf] %v5648
        %5713 = vst [vmem:[%s310 + $0x5c] sm:$0xf] %v5649
        %5714 = vst [vmem:[%s310 + $0x60] sm:$0xf] %v5650
        %5715 = vst [vmem:[%s310 + $0x64] sm:$0xf] %v5651
        %5716 = vst [vmem:[%s310 + $0x68] sm:$0xf] %v5652
        %5717 = vst [vmem:[%s310 + $0x6c] sm:$0xf] %v5653
        %5718 = vst [vmem:[%s310 + $0x70] sm:$0xf] %v5654
        %5719 = vst [vmem:[%s310 + $0x74] sm:$0xf] %v5655
        %5720 = vst [vmem:[%s310 + $0x78] sm:$0xf] %v5656
        %5721 = vst [vmem:[%s310 + $0x7c] sm:$0xf] %v5657
        %s5722 = sand.u32 %s123, 1
        %s5723 = scalar_lea.sflag [#allocation6], %s5722
        %s5724 = sand.u32 %s123, 1
        %s5725 = smul.addr %s5724, 128
        %s5726 = scalar_lea.vmem [#allocation11], %s5725
        %s5727 = sand.u32 %s26, 1
        %s5728 = scalar_lea.sflag [#allocation13], %s5727
        %s5729 = sand.u32 %s149, 1
        %s5730 = scalar_lea.vmem [#allocation12], %s5729
        %s5731 = sand.u32 %s26, 1
        %s5732 = scalar_lea.sflag [#allocation13], %s5731
        %s5733 = sand.u32 %s175, 1
        %s5734 = scalar_lea.vmem [#allocation14], %s5733
        // Predicated region
        $region53: #{basic_block.4} parent=35 // pred_check
          %p5735 = pneg %p133
        $region54: #{basic_block.4} parent=35 // pred_check_branch
          %5737 = sbr.rel (%p5735) target = $region56
        $region55: #{basic_block.4} parent=35 // pred_region
          %s5738 = smul.u32 32, %s26
          %s5740 = ssub.s32 2048, 2048
          %5741 = vsyncadd %s5723, %s5740
          %s5742 = smul.addr %s5738, 64
          %s5743 = scalar_lea.hbm %s4, %s5742
          %s5744 = sshll.u32 %s5726, 4
          %s5745 = int_to_ptr.vmem [resolvable:$true] %s5744
          %5750 = dma.vmem_to_hbm [thread:$0]  %s5745, 2048, %s5743, %s5723, 64, 64, 4
        $region56: #{basic_block.4} parent=35 // pred_fallthru
          _
        // Predicated region
        $region57: #{basic_block.4} parent=35 // pred_check
          %p5751 = pneg %p159
        $region58: #{basic_block.4} parent=35 // pred_check_branch
          %5753 = sbr.rel (%p5751) target = $region60
        $region59: #{basic_block.4} parent=35 // pred_region
          %s5755 = ssub.s32 16, 16
          %5756 = vsyncadd %s5728, %s5755
          %s5757 = smul.addr %s26, 16
          %s5758 = scalar_lea.hbm %s5, %s5757
          %s5760 = sshll.u32 %s5730, 4
          %s5761 = int_to_ptr.vmem [resolvable:$true] %s5760
          %5763 = dma.vmem_to_hbm [thread:$0]  %s5761, 16, %s5758, %s5728
        $region60: #{basic_block.4} parent=35 // pred_fallthru
          _
        // Predicated region
        $region61: #{basic_block.4} parent=35 // pred_check
          %p5764 = pneg %p185
        $region62: #{basic_block.4} parent=35 // pred_check_branch
          %5766 = sbr.rel (%p5764) target = $region64
        $region63: #{basic_block.4} parent=35 // pred_region
          %s5768 = ssub.s32 16, 16
          %5769 = vsyncadd %s5732, %s5768
          %s5770 = smul.addr %s26, 16
          %s5771 = scalar_lea.hbm %s6, %s5770
          %s5773 = sshll.u32 %s5734, 4
          %s5774 = int_to_ptr.vmem [resolvable:$true] %s5773
          %5776 = dma.vmem_to_hbm [thread:$0]  %s5774, 16, %s5771, %s5732
        $region64: #{basic_block.4} parent=35 // pred_fallthru
          _
      $region36: #{basic_block.4} parent=5 // pred_fallthru
        _
      %p5777 = scmp.le.s32.totalorder 2, %s21
      // Predicated region
      $region65: #{basic_block.4} parent=5 // pred_check
        %p5778 = pneg %p5777
      $region66: #{basic_block.4} parent=5 // pred_check_branch
        %5780 = sbr.rel (%p5778) target = $region68
      $region67: #{basic_block.4} parent=5 // pred_region
        %s5781 = ssub.s32 %s21, 2
        // Predicated region
        $region69: #{basic_block.4} parent=67 // pred_check
          %p5782 = pneg %p139
        $region70: #{basic_block.4} parent=67 // pred_check_branch
          %5784 = sbr.rel (%p5782) target = $region72
        $region71: #{basic_block.4} parent=67 // pred_region
          %s5785 = sand.u32 %s124, 1
          %s5786 = scalar_lea.sflag [#allocation6], %s5785
          %s5787 = sand.u32 %s124, 1
          %s5788 = smul.addr %s5787, 128
          %s5789 = scalar_lea.vmem [#allocation11], %s5788
          %5790 = dma.done %s5786, 2048
        $region72: #{basic_block.4} parent=67 // pred_fallthru
          _
        // Predicated region
        $region73: #{basic_block.4} parent=67 // pred_check
          %p5791 = pneg %p165
        $region74: #{basic_block.4} parent=67 // pred_check_branch
          %5793 = sbr.rel (%p5791) target = $region76
        $region75: #{basic_block.4} parent=67 // pred_region
          %s5794 = sand.u32 %s27, 1
          %s5795 = scalar_lea.sflag [#allocation13], %s5794
          %s5796 = sand.u32 %s150, 1
          %s5797 = scalar_lea.vmem [#allocation12], %s5796
          %5798 = dma.done %s5795, 16
        $region76: #{basic_block.4} parent=67 // pred_fallthru
          _
        // Predicated region
        $region77: #{basic_block.4} parent=67 // pred_check
          %p5799 = pneg %p191
        $region78: #{basic_block.4} parent=67 // pred_check_branch
          %5801 = sbr.rel (%p5799) target = $region80
        $region79: #{basic_block.4} parent=67 // pred_region
          %s5802 = sand.u32 %s27, 1
          %s5803 = scalar_lea.sflag [#allocation13], %s5802
          %s5804 = sand.u32 %s176, 1
          %s5805 = scalar_lea.vmem [#allocation14], %s5804
          %5806 = dma.done %s5803, 16
        $region80: #{basic_block.4} parent=67 // pred_fallthru
          _
      $region68: #{basic_block.4} parent=5 // pred_fallthru
        _
    $region6: #{basic_block.4} parent=1 // loop_footer
      %s25 = sadd.s32 1, %s21
    $region7: #{basic_block.4} parent=1 // loop_footer_branch
      %20 = sbr.rel target = $region3
    $region8: #{basic_block.4} parent=1 // loop_exit
      _
    %5807 = vsyncpa [#allocation5], 1
    %s5808 = scalar_lea.sflag [#allocation5], 1
    %5809 = vsyncpa %s5808, 1
    %5810 = vsyncpa [#allocation8], 1
    %5811 = vsyncpa [#allocation6], 1
    %s5812 = scalar_lea.sflag [#allocation6], 1
    %5813 = vsyncpa %s5812, 1
    %5814 = vsyncpa [#allocation13], 1
    %s5815 = scalar_lea.sflag [#allocation13], 1
    %5816 = vsyncpa %s5815, 1

</llo_original>
